<compile_context>
chip_gen: v7x
topology: tpu7x:2x2x1
jax: 0.10.0
libtpu: 0.0.40
codegen_flags: <defaults>
</compile_context>

<pallas_src>
import functools

import jax
import jax.numpy as jnp
from jax import lax
from jax.experimental import pallas as pl
from jax.experimental.pallas import tpu as pltpu

_BN_EPS = 1e-5


def _consumers(steps):
    """consumers[j] = edge indices (PyTorch Cell ordering) fed by state j."""
    return [[i * (i + 1) // 2 + j for i in range(j, steps)]
            for j in range(steps)]


# ----------------------------------------------------------------------------
# the single fused Cell kernel
# ----------------------------------------------------------------------------
def make_cell_kernel(steps, H, W, C):
    Hp, Wp = H + 2, W + 2
    NHW = H * W
    consumers = _consumers(steps)

    def kernel(x_ref, wpre_ref, bpre_ref, alpha_ref, *rest):
        group_refs = rest[:2 * steps]            # (wg_0, bg_0, wg_1, bg_1, ...)
        o_ref = rest[2 * steps]                  # (1, H, W, C) output block
        patch_ref = rest[2 * steps + 1]          # VMEM (H*W, 9C) f32 scratch
        sbuf_refs = rest[2 * steps + 2:]         # steps x VMEM (1,Hp,Wp,C) f32

        # Zero-init: provides the zero halo for conv-3x3 / avg-pool and turns
        # the per-step edge sums into in-place accumulations.
        for j in range(steps):
            sbuf_refs[j][...] = jnp.zeros_like(sbuf_refs[j])
        o_ref[...] = jnp.zeros_like(o_ref)

        # avg_pool_3x3 divisor (count_include_pad=False): computed ONCE per
        # kernel, kept as a reciprocal so each pool is a single multiply.
        row = lax.broadcasted_iota(jnp.int32, (1, H, W, 1), 1)
        col = lax.broadcasted_iota(jnp.int32, (1, H, W, 1), 2)
        cnt_h = (3.0 - (row == 0).astype(jnp.float32)
                 - (row == H - 1).astype(jnp.float32))
        cnt_w = (3.0 - (col == 0).astype(jnp.float32)
                 - (col == W - 1).astype(jnp.float32))
        inv_cnt = 1.0 / (cnt_h * cnt_w)

        # preprocess = ReLU -> 1x1 conv -> BN (eval; scale folded into the
        # bf16 weight, bias added in f32).  Result -> interior of state 0.
        rx = jnp.maximum(x_ref[...], 0.0).reshape(NHW, x_ref.shape[-1])
        s0 = jnp.dot(rx.astype(jnp.bfloat16), wpre_ref[...],
                     preferred_element_type=jnp.float32) + bpre_ref[...]
        sbuf_refs[0][:, 1:H + 1, 1:W + 1, :] = s0.reshape(1, H, W, C)

        def process_state(j):
            """MixedOp outputs of every edge consuming state j.

            All consumer edges share one patch build, one avg-pool and ONE
            fused MXU matmul (H*W, 9C) x (9C, C*n_edges).  nor_conv_1x1 lives
            in the centre-tap rows of the fused weight; BN scale and the conv
            architecture weights are pre-folded on the host.
            """
            edges = consumers[j]
            sb = sbuf_refs[j]
            psum = jnp.zeros((1, H, W, C), jnp.float32)
            center = None
            for dy in range(3):
                for dx in range(3):
                    k = dy * 3 + dx
                    tap = sb[:, dy:dy + H, dx:dx + W, :]      # windowed load
                    psum = psum + tap                          # pool sum
                    patch_ref[:, k * C:(k + 1) * C] = (
                        jnp.maximum(tap, 0.0).reshape(NHW, C))  # ReLU'd patch
                    if k == 4:
                        center = tap
            x2d = center.reshape(NHW, C)                 # skip_connect
            pool2d = (psum * inv_cnt).reshape(NHW, C)    # avg_pool_3x3

            wg = group_refs[2 * j][...]                  # (9C, C*n) bf16
            bg = group_refs[2 * j + 1][...]              # (1, C*n)  f32
            y = jnp.dot(patch_ref[...].astype(jnp.bfloat16), wg,
                        preferred_element_type=jnp.float32) + bg

            for t, e in enumerate(edges):
                step_i = j + t                           # step this edge feeds
                a_skip = alpha_ref[e, 1]                 # skip_connect
                a_pool = alpha_ref[e, 4]                 # avg_pool_3x3
                # primitive 0 ('none') contributes exactly zero; the conv
                # alphas (indices 2, 3) are already folded into wg / bg.
                contrib = (y[:, t * C:(t + 1) * C]
                           + a_skip * x2d + a_pool * pool2d)
                if step_i + 1 < steps:
                    sbuf_refs[step_i + 1][:, 1:H + 1, 1:W + 1, :] += (
                        contrib.reshape(1, H, W, C))
                else:
                    o_ref[...] += contrib.reshape(1, H, W, C)

        for j in range(steps):
            process_state(j)

    return kernel


# ----------------------------------------------------------------------------
# host-side folding of BN (eval) + conv architecture weights into the
# per-state fused matmul operands
# ----------------------------------------------------------------------------
def _fold_group_params(edge_params, alphas, consumers, C):
    groups = []
    for edges in consumers:
        w_cols, b_cols = [], []
        for e in edges:
            p = edge_params[e]
            a1 = alphas[e, 2]                      # nor_conv_1x1
            a3 = alphas[e, 3]                      # nor_conv_3x3
            w3 = (a3 * p["w3"] * p["s3"][None, None, :]).reshape(9 * C, C)
            w1 = a1 * p["w1"] * p["s1"][None, :]
            w_cols.append(w3.at[4 * C:5 * C, :].add(w1))   # 1x1 -> centre tap
            b_cols.append(a3 * p["b3"] + a1 * p["b1"])
        groups.append((jnp.concatenate(w_cols, axis=1).astype(jnp.bfloat16),
                       jnp.concatenate(b_cols, axis=0).reshape(1, -1)
                       .astype(jnp.float32)))
    return groups


@functools.partial(jax.jit, static_argnames=("steps",))
def cell_forward(x_nhwc, weights, pre_params, edge_params, steps):
    N, H, W, C_prev = x_nhwc.shape
    C = pre_params["w"].shape[1]
    Hp, Wp = H + 2, W + 2
    consumers = _consumers(steps)

    wpre = (pre_params["w"] * pre_params["scale"][None, :]).astype(jnp.bfloat16)
    bpre = pre_params["bias"].reshape(1, C).astype(jnp.float32)
    groups = _fold_group_params(edge_params, weights, consumers, C)

    in_specs = [
        pl.BlockSpec((1, H, W, C_prev), lambda n: (n, 0, 0, 0)),   # x (per-batch)
        pl.BlockSpec((C_prev, C), lambda n: (0, 0)),               # wpre (bf16)
        pl.BlockSpec((1, C), lambda n: (0, 0)),                    # bpre
        pl.BlockSpec(memory_space=pltpu.MemorySpace.SMEM),         # alphas (E,5)
    ]
    args = [x_nhwc, wpre, bpre, weights]
    for wg, bg in groups:
        in_specs.append(pl.BlockSpec(wg.shape, lambda n: (0, 0)))
        args.append(wg)
        in_specs.append(pl.BlockSpec(bg.shape, lambda n: (0, 0)))
        args.append(bg)

    scratch_shapes = (
        [pltpu.VMEM((H * W, 9 * C), jnp.float32)]                  # patch matrix
        + [pltpu.VMEM((1, Hp, Wp, C), jnp.float32) for _ in range(steps)])

    return pl.pallas_call(
        make_cell_kernel(steps, H, W, C),
        out_shape=jax.ShapeDtypeStruct((N, H, W, C), jnp.float32),
        grid=(N,),
        in_specs=in_specs,
        out_specs=pl.BlockSpec((1, H, W, C), lambda n: (n, 0, 0, 0)),
        scratch_shapes=scratch_shapes,
        compiler_params=pltpu.CompilerParams(
            dimension_semantics=("parallel",)),   # v7x: shard batch over 2 TCs
    )(*args)


# ----------------------------------------------------------------------------
# pure-JAX f32 reference (for a loose numerical check against the bf16 MXU)
# ----------------------------------------------------------------------------
def cell_reference(x, weights, pre, edges, steps):
    def conv1(h, w, s, b):
        return jnp.einsum("nhwc,cd->nhwd", jnp.maximum(h, 0.0), w) * s + b

    def conv3(h, w3, s, b):
        Hh, Ww = h.shape[1], h.shape[2]
        hp = jnp.pad(jnp.maximum(h, 0.0), ((0, 0), (1, 1), (1, 1), (0, 0)))
        y = 0.0
        for k in range(9):
            dy, dx = k // 3, k % 3
            y = y + jnp.einsum("nhwc,cd->nhwd",
                               hp[:, dy:dy + Hh, dx:dx + Ww, :], w3[k])
        return y * s + b

    def pool3(h):
        Hh, Ww = h.shape[1], h.shape[2]
        hp = jnp.pad(h, ((0, 0), (1, 1), (1, 1), (0, 0)))
        acc = 0.0
        for k in range(9):
            dy, dx = k // 3, k % 3
            acc = acc + hp[:, dy:dy + Hh, dx:dx + Ww, :]
        r = jnp.arange(Hh)
        c = jnp.arange(Ww)
        ch = 3.0 - (r == 0).astype(jnp.float32) - (r == Hh - 1).astype(jnp.float32)
        cw = 3.0 - (c == 0).astype(jnp.float32) - (c == Ww - 1).astype(jnp.float32)
        cnt = ch[:, None] * cw[None, :]
        return acc / cnt[None, :, :, None]

    def mixed(h, p, a):
        return (a[1] * h
                + a[2] * conv1(h, p["w1"], p["s1"], p["b1"])
                + a[3] * conv3(h, p["w3"], p["s3"], p["b3"])
                + a[4] * pool3(h))

    s = conv1(x, pre["w"], pre["scale"], pre["bias"])
    states = [s]
    offset = 0
    for i in range(steps):
        acc = sum(mixed(h, edges[offset + j], weights[offset + j])
                  for j, h in enumerate(states))
        offset += len(states)
        states.append(acc)
    return states[-1]


# ----------------------------------------------------------------------------
# deterministic parameter construction (eval-mode BN folded to scale/bias)
# ----------------------------------------------------------------------------
def make_preprocess_params(key, c_prev, c):
    k1, k2, k3 = jax.random.split(key, 3)
    w = 0.1 * jax.random.normal(k1, (c_prev, c), jnp.float32)
    gamma = 1.0 + 0.05 * jax.random.normal(k2, (c,), jnp.float32)
    beta = 0.05 * jax.random.normal(k3, (c,), jnp.float32)
    return {"w": w, "scale": gamma / jnp.sqrt(1.0 + _BN_EPS), "bias": beta}


def make_edge_params(key, c):
    k1, k2, k3, k4, k5, k6 = jax.random.split(key, 6)
    inv = 1.0 / jnp.sqrt(1.0 + _BN_EPS)
    w1 = 0.1 * jax.random.normal(k1, (c, c), jnp.float32)
    g1 = 1.0 + 0.05 * jax.random.normal(k2, (c,), jnp.float32)
    b1 = 0.05 * jax.random.normal(k3, (c,), jnp.float32)
    w3 = 0.1 * jax.random.normal(k4, (9, c, c), jnp.float32)
    g3 = 1.0 + 0.05 * jax.random.normal(k5, (c,), jnp.float32)
    b3 = 0.05 * jax.random.normal(k6, (c,), jnp.float32)
    return {"w1": w1, "s1": g1 * inv, "b1": b1,
            "w3": w3, "s3": g3 * inv, "b3": b3}


# ----------------------------------------------------------------------------
if __name__ == "__main__":
    N, C_prev, C, H, W = 2, 8, 8, 16, 16
    STEPS = 3
    NUM_EDGES = sum(1 + i for i in range(STEPS))      # 6
    NUM_PRIMS = 5

    root = jax.random.PRNGKey(0)
    kx, kw, kp, *ke = jax.random.split(root, 3 + NUM_EDGES)

    # PyTorch-style NCHW input, transposed to NHWC for the kernel.
    x_nchw = jax.random.normal(kx, (N, C_prev, H, W), jnp.float32)
    x_nhwc = jnp.transpose(x_nchw, (0, 2, 3, 1))

    # architecture weights: softmax over primitives per edge
    logits = jax.random.normal(kw, (NUM_EDGES, NUM_PRIMS), jnp.float32)
    weights = jax.nn.softmax(logits, axis=-1)

    pre_params = make_preprocess_params(kp, C_prev, C)
    edge_params = [make_edge_params(ke[e], C) for e in range(NUM_EDGES)]

    out = cell_forward(x_nhwc, weights, pre_params, edge_params, STEPS)
    out = jax.block_until_ready(out)

    assert out.shape == (N, H, W, C), out.shape
    assert bool(jnp.all(jnp.isfinite(out)))

    # loose tolerance vs. f32 reference (kernel uses bf16 MXU inputs)
    ref = cell_reference(x_nhwc, weights, pre_params, edge_params, STEPS)
    max_err = float(jnp.max(jnp.abs(out - ref)))
    assert max_err < 5e-2, max_err

    print("KERNEL_OK")
</pallas_src>

<mosaic_0001>
module attributes {stable_mosaic.version = 11 : i64} {
  func.func @kernel(%arg0: i32, %arg1: memref<1x16x16x8xf32, #tpu.memory_space<vmem>>, %arg2: memref<8x8xbf16, #tpu.memory_space<vmem>>, %arg3: memref<1x8xf32, #tpu.memory_space<vmem>>, %arg4: memref<6x5xf32, #tpu.memory_space<smem>>, %arg5: memref<72x24xbf16, #tpu.memory_space<vmem>>, %arg6: memref<1x24xf32, #tpu.memory_space<vmem>>, %arg7: memref<72x16xbf16, #tpu.memory_space<vmem>>, %arg8: memref<1x16xf32, #tpu.memory_space<vmem>>, %arg9: memref<72x8xbf16, #tpu.memory_space<vmem>>, %arg10: memref<1x8xf32, #tpu.memory_space<vmem>>, %arg11: memref<1x16x16x8xf32, #tpu.memory_space<vmem>>, %arg12: memref<256x72xf32, #tpu.memory_space<vmem>>, %arg13: memref<1x18x18x8xf32, #tpu.memory_space<vmem>>, %arg14: memref<1x18x18x8xf32, #tpu.memory_space<vmem>>, %arg15: memref<1x18x18x8xf32, #tpu.memory_space<vmem>>) attributes {dimension_semantics = [#tpu.dimension_semantics<parallel>], iteration_bounds = array<i64: 2>, scalar_prefetch = 0 : i64, scratch_operands = 4 : i64, tpu.core_type = #tpu.core_type<tc>, window_params = [{transform_indices = @transform_0, window_bounds = array<i64: 1, 16, 16, 8>}, {pipeline_mode = #tpu.pipeline_mode<synchronous>, transform_indices = @transform_1, window_bounds = array<i64: 8, 8>}, {pipeline_mode = #tpu.pipeline_mode<synchronous>, transform_indices = @transform_2, window_bounds = array<i64: 1, 8>}, {transform_indices = @transform_3, window_bounds = array<i64: 6, 5>}, {pipeline_mode = #tpu.pipeline_mode<synchronous>, transform_indices = @transform_4, window_bounds = array<i64: 72, 24>}, {pipeline_mode = #tpu.pipeline_mode<synchronous>, transform_indices = @transform_5, window_bounds = array<i64: 1, 24>}, {pipeline_mode = #tpu.pipeline_mode<synchronous>, transform_indices = @transform_6, window_bounds = array<i64: 72, 16>}, {pipeline_mode = #tpu.pipeline_mode<synchronous>, transform_indices = @transform_7, window_bounds = array<i64: 1, 16>}, {pipeline_mode = #tpu.pipeline_mode<synchronous>, transform_indices = @transform_8, window_bounds = array<i64: 72, 8>}, {pipeline_mode = #tpu.pipeline_mode<synchronous>, transform_indices = @transform_9, window_bounds = array<i64: 1, 8>}, {transform_indices = @transform_10, window_bounds = array<i64: 1, 16, 16, 8>}]} {
    %cst = arith.constant 0.000000e+00 : f32
    %0 = vector.broadcast %cst : f32 to vector<1x18x18x8xf32>
    %c0 = arith.constant 0 : index
    %c0_0 = arith.constant 0 : index
    %c0_1 = arith.constant 0 : index
    %c0_2 = arith.constant 0 : index
    %1 = vector.load %arg13[%c0, %c0_0, %c0_1, %c0_2] : memref<1x18x18x8xf32, #tpu.memory_space<vmem>>, vector<1x18x18x8xf32>
    tpu.vector_store %arg13[%c0, %c0_0, %c0_1, %c0_2], %0 {strides = array<i32>} : memref<1x18x18x8xf32, #tpu.memory_space<vmem>>, vector<1x18x18x8xf32>,
    %cst_3 = arith.constant 0.000000e+00 : f32
    %2 = vector.broadcast %cst_3 : f32 to vector<1x18x18x8xf32>
    %c0_4 = arith.constant 0 : index
    %c0_5 = arith.constant 0 : index
    %c0_6 = arith.constant 0 : index
    %c0_7 = arith.constant 0 : index
    %3 = vector.load %arg14[%c0_4, %c0_5, %c0_6, %c0_7] : memref<1x18x18x8xf32, #tpu.memory_space<vmem>>, vector<1x18x18x8xf32>
    tpu.vector_store %arg14[%c0_4, %c0_5, %c0_6, %c0_7], %2 {strides = array<i32>} : memref<1x18x18x8xf32, #tpu.memory_space<vmem>>, vector<1x18x18x8xf32>,
    %cst_8 = arith.constant 0.000000e+00 : f32
    %4 = vector.broadcast %cst_8 : f32 to vector<1x18x18x8xf32>
    %c0_9 = arith.constant 0 : index
    %c0_10 = arith.constant 0 : index
    %c0_11 = arith.constant 0 : index
    %c0_12 = arith.constant 0 : index
    %5 = vector.load %arg15[%c0_9, %c0_10, %c0_11, %c0_12] : memref<1x18x18x8xf32, #tpu.memory_space<vmem>>, vector<1x18x18x8xf32>
    tpu.vector_store %arg15[%c0_9, %c0_10, %c0_11, %c0_12], %4 {strides = array<i32>} : memref<1x18x18x8xf32, #tpu.memory_space<vmem>>, vector<1x18x18x8xf32>,
    %cst_13 = arith.constant 0.000000e+00 : f32
    %6 = vector.broadcast %cst_13 : f32 to vector<1x16x16x8xf32>
    %c0_14 = arith.constant 0 : index
    %c0_15 = arith.constant 0 : index
    %c0_16 = arith.constant 0 : index
    %c0_17 = arith.constant 0 : index
    %7 = vector.load %arg11[%c0_14, %c0_15, %c0_16, %c0_17] : memref<1x16x16x8xf32, #tpu.memory_space<vmem>>, vector<1x16x16x8xf32>
    tpu.vector_store %arg11[%c0_14, %c0_15, %c0_16, %c0_17], %6 {strides = array<i32>} : memref<1x16x16x8xf32, #tpu.memory_space<vmem>>, vector<1x16x16x8xf32>,
    %8 = tpu.iota {dimensions = array<i32: 1>} : vector<1x16x16x1xi32>
    %9 = tpu.iota {dimensions = array<i32: 2>} : vector<1x16x16x1xi32>
    %c0_i32 = arith.constant 0 : i32
    %10 = vector.broadcast %c0_i32 : i32 to vector<1x16x16x1xi32>
    %11 = arith.cmpi eq, %8, %10 : vector<1x16x16x1xi32>
    %12 = arith.extui %11 : vector<1x16x16x1xi1> to vector<1x16x16x1xi32>
    %13 = arith.sitofp %12 : vector<1x16x16x1xi32> to vector<1x16x16x1xf32>
    %cst_18 = arith.constant 3.000000e+00 : f32
    %14 = vector.broadcast %cst_18 : f32 to vector<1x16x16x1xf32>
    %15 = arith.subf %14, %13 : vector<1x16x16x1xf32>
    %c15_i32 = arith.constant 15 : i32
    %16 = vector.broadcast %c15_i32 : i32 to vector<1x16x16x1xi32>
    %17 = arith.cmpi eq, %8, %16 : vector<1x16x16x1xi32>
    %18 = arith.extui %17 : vector<1x16x16x1xi1> to vector<1x16x16x1xi32>
    %19 = arith.sitofp %18 : vector<1x16x16x1xi32> to vector<1x16x16x1xf32>
    %20 = arith.subf %15, %19 : vector<1x16x16x1xf32>
    %c0_i32_19 = arith.constant 0 : i32
    %21 = vector.broadcast %c0_i32_19 : i32 to vector<1x16x16x1xi32>
    %22 = arith.cmpi eq, %9, %21 : vector<1x16x16x1xi32>
    %23 = arith.extui %22 : vector<1x16x16x1xi1> to vector<1x16x16x1xi32>
    %24 = arith.sitofp %23 : vector<1x16x16x1xi32> to vector<1x16x16x1xf32>
    %cst_20 = arith.constant 3.000000e+00 : f32
    %25 = vector.broadcast %cst_20 : f32 to vector<1x16x16x1xf32>
    %26 = arith.subf %25, %24 : vector<1x16x16x1xf32>
    %c15_i32_21 = arith.constant 15 : i32
    %27 = vector.broadcast %c15_i32_21 : i32 to vector<1x16x16x1xi32>
    %28 = arith.cmpi eq, %9, %27 : vector<1x16x16x1xi32>
    %29 = arith.extui %28 : vector<1x16x16x1xi1> to vector<1x16x16x1xi32>
    %30 = arith.sitofp %29 : vector<1x16x16x1xi32> to vector<1x16x16x1xf32>
    %31 = arith.subf %26, %30 : vector<1x16x16x1xf32>
    %32 = arith.mulf %20, %31 : vector<1x16x16x1xf32>
    %cst_22 = arith.constant 1.000000e+00 : f32
    %33 = vector.broadcast %cst_22 : f32 to vector<1x16x16x1xf32>
    %34 = arith.divf %33, %32 : vector<1x16x16x1xf32>
    %c0_23 = arith.constant 0 : index
    %c0_24 = arith.constant 0 : index
    %c0_25 = arith.constant 0 : index
    %c0_26 = arith.constant 0 : index
    %35 = vector.load %arg1[%c0_23, %c0_24, %c0_25, %c0_26] : memref<1x16x16x8xf32, #tpu.memory_space<vmem>>, vector<1x16x16x8xf32>
    %cst_27 = arith.constant 0.000000e+00 : f32
    %36 = vector.broadcast %cst_27 : f32 to vector<1x16x16x8xf32>
    %37 = arith.maximumf %35, %36 : vector<1x16x16x8xf32>
    %38 = vector.shape_cast %37 : vector<1x16x16x8xf32> to vector<256x8xf32>
    %39 = arith.truncf %38 : vector<256x8xf32> to vector<256x8xbf16>
    %c0_28 = arith.constant 0 : index
    %c0_29 = arith.constant 0 : index
    %40 = vector.load %arg2[%c0_28, %c0_29] : memref<8x8xbf16, #tpu.memory_space<vmem>>, vector<8x8xbf16>
    %cst_30 = arith.constant dense<0.000000e+00> : vector<256x8xf32>
    %41 = tpu.matmul %39, %40, %cst_30 {dimension_numbers = #tpu.dot_dimension_numbers<[1], [0], [0], [1], [0, 0, 1, 1], [], []>} : vector<256x8xbf16>, vector<8x8xbf16>, vector<256x8xf32> -> vector<256x8xf32>
    %c0_31 = arith.constant 0 : index
    %c0_32 = arith.constant 0 : index
    %42 = vector.load %arg3[%c0_31, %c0_32] : memref<1x8xf32, #tpu.memory_space<vmem>>, vector<1x8xf32>
    %43 = vector.broadcast %42 : vector<1x8xf32> to vector<256x8xf32>
    %44 = arith.addf %41, %43 : vector<256x8xf32>
    %45 = vector.shape_cast %44 : vector<256x8xf32> to vector<1x16x16x8xf32>
    %c0_33 = arith.constant 0 : index
    %c1 = arith.constant 1 : index
    %c1_34 = arith.constant 1 : index
    %c0_35 = arith.constant 0 : index
    %46 = vector.load %arg13[%c0_33, %c1, %c1_34, %c0_35] : memref<1x18x18x8xf32, #tpu.memory_space<vmem>>, vector<1x16x16x8xf32>
    tpu.vector_store %arg13[%c0_33, %c1, %c1_34, %c0_35], %45 {strides = array<i32>} : memref<1x18x18x8xf32, #tpu.memory_space<vmem>>, vector<1x16x16x8xf32>,
    %cst_36 = arith.constant 0.000000e+00 : f32
    %47 = vector.broadcast %cst_36 : f32 to vector<1x16x16x8xf32>
    %c0_37 = arith.constant 0 : index
    %c0_38 = arith.constant 0 : index
    %c0_39 = arith.constant 0 : index
    %c0_40 = arith.constant 0 : index
    %48 = vector.load %arg13[%c0_37, %c0_38, %c0_39, %c0_40] : memref<1x18x18x8xf32, #tpu.memory_space<vmem>>, vector<1x16x16x8xf32>
    %49 = arith.addf %47, %48 : vector<1x16x16x8xf32>
    %cst_41 = arith.constant 0.000000e+00 : f32
    %50 = vector.broadcast %cst_41 : f32 to vector<1x16x16x8xf32>
    %51 = arith.maximumf %48, %50 : vector<1x16x16x8xf32>
    %52 = vector.shape_cast %51 : vector<1x16x16x8xf32> to vector<256x8xf32>
    %c0_42 = arith.constant 0 : index
    %c0_43 = arith.constant 0 : index
    %53 = vector.load %arg12[%c0_42, %c0_43] : memref<256x72xf32, #tpu.memory_space<vmem>>, vector<256x8xf32>
    tpu.vector_store %arg12[%c0_42, %c0_43], %52 {strides = array<i32>} : memref<256x72xf32, #tpu.memory_space<vmem>>, vector<256x8xf32>,
    %c0_44 = arith.constant 0 : index
    %c0_45 = arith.constant 0 : index
    %c1_46 = arith.constant 1 : index
    %c0_47 = arith.constant 0 : index
    %54 = vector.load %arg13[%c0_44, %c0_45, %c1_46, %c0_47] : memref<1x18x18x8xf32, #tpu.memory_space<vmem>>, vector<1x16x16x8xf32>
    %55 = arith.addf %49, %54 : vector<1x16x16x8xf32>
    %cst_48 = arith.constant 0.000000e+00 : f32
    %56 = vector.broadcast %cst_48 : f32 to vector<1x16x16x8xf32>
    %57 = arith.maximumf %54, %56 : vector<1x16x16x8xf32>
    %58 = vector.shape_cast %57 : vector<1x16x16x8xf32> to vector<256x8xf32>
    %c0_49 = arith.constant 0 : index
    %c8 = arith.constant 8 : index
    %59 = vector.load %arg12[%c0_49, %c8] : memref<256x72xf32, #tpu.memory_space<vmem>>, vector<256x8xf32>
    tpu.vector_store %arg12[%c0_49, %c8], %58 {strides = array<i32>} : memref<256x72xf32, #tpu.memory_space<vmem>>, vector<256x8xf32>,
    %c0_50 = arith.constant 0 : index
    %c0_51 = arith.constant 0 : index
    %c2 = arith.constant 2 : index
    %c0_52 = arith.constant 0 : index
    %60 = vector.load %arg13[%c0_50, %c0_51, %c2, %c0_52] : memref<1x18x18x8xf32, #tpu.memory_space<vmem>>, vector<1x16x16x8xf32>
    %61 = arith.addf %55, %60 : vector<1x16x16x8xf32>
    %cst_53 = arith.constant 0.000000e+00 : f32
    %62 = vector.broadcast %cst_53 : f32 to vector<1x16x16x8xf32>
    %63 = arith.maximumf %60, %62 : vector<1x16x16x8xf32>
    %64 = vector.shape_cast %63 : vector<1x16x16x8xf32> to vector<256x8xf32>
    %c0_54 = arith.constant 0 : index
    %c16 = arith.constant 16 : index
    %65 = vector.load %arg12[%c0_54, %c16] : memref<256x72xf32, #tpu.memory_space<vmem>>, vector<256x8xf32>
    tpu.vector_store %arg12[%c0_54, %c16], %64 {strides = array<i32>} : memref<256x72xf32, #tpu.memory_space<vmem>>, vector<256x8xf32>,
    %c0_55 = arith.constant 0 : index
    %c1_56 = arith.constant 1 : index
    %c0_57 = arith.constant 0 : index
    %c0_58 = arith.constant 0 : index
    %66 = vector.load %arg13[%c0_55, %c1_56, %c0_57, %c0_58] : memref<1x18x18x8xf32, #tpu.memory_space<vmem>>, vector<1x16x16x8xf32>
    %67 = arith.addf %61, %66 : vector<1x16x16x8xf32>
    %cst_59 = arith.constant 0.000000e+00 : f32
    %68 = vector.broadcast %cst_59 : f32 to vector<1x16x16x8xf32>
    %69 = arith.maximumf %66, %68 : vector<1x16x16x8xf32>
    %70 = vector.shape_cast %69 : vector<1x16x16x8xf32> to vector<256x8xf32>
    %c0_60 = arith.constant 0 : index
    %c24 = arith.constant 24 : index
    %71 = vector.load %arg12[%c0_60, %c24] : memref<256x72xf32, #tpu.memory_space<vmem>>, vector<256x8xf32>
    tpu.vector_store %arg12[%c0_60, %c24], %70 {strides = array<i32>} : memref<256x72xf32, #tpu.memory_space<vmem>>, vector<256x8xf32>,
    %c0_61 = arith.constant 0 : index
    %c1_62 = arith.constant 1 : index
    %c1_63 = arith.constant 1 : index
    %c0_64 = arith.constant 0 : index
    %72 = vector.load %arg13[%c0_61, %c1_62, %c1_63, %c0_64] : memref<1x18x18x8xf32, #tpu.memory_space<vmem>>, vector<1x16x16x8xf32>
    %73 = arith.addf %67, %72 : vector<1x16x16x8xf32>
    %cst_65 = arith.constant 0.000000e+00 : f32
    %74 = vector.broadcast %cst_65 : f32 to vector<1x16x16x8xf32>
    %75 = arith.maximumf %72, %74 : vector<1x16x16x8xf32>
    %76 = vector.shape_cast %75 : vector<1x16x16x8xf32> to vector<256x8xf32>
    %c0_66 = arith.constant 0 : index
    %c32 = arith.constant 32 : index
    %77 = vector.load %arg12[%c0_66, %c32] : memref<256x72xf32, #tpu.memory_space<vmem>>, vector<256x8xf32>
    tpu.vector_store %arg12[%c0_66, %c32], %76 {strides = array<i32>} : memref<256x72xf32, #tpu.memory_space<vmem>>, vector<256x8xf32>,
    %c0_67 = arith.constant 0 : index
    %c1_68 = arith.constant 1 : index
    %c2_69 = arith.constant 2 : index
    %c0_70 = arith.constant 0 : index
    %78 = vector.load %arg13[%c0_67, %c1_68, %c2_69, %c0_70] : memref<1x18x18x8xf32, #tpu.memory_space<vmem>>, vector<1x16x16x8xf32>
    %79 = arith.addf %73, %78 : vector<1x16x16x8xf32>
    %cst_71 = arith.constant 0.000000e+00 : f32
    %80 = vector.broadcast %cst_71 : f32 to vector<1x16x16x8xf32>
    %81 = arith.maximumf %78, %80 : vector<1x16x16x8xf32>
    %82 = vector.shape_cast %81 : vector<1x16x16x8xf32> to vector<256x8xf32>
    %c0_72 = arith.constant 0 : index
    %c40 = arith.constant 40 : index
    %83 = vector.load %arg12[%c0_72, %c40] : memref<256x72xf32, #tpu.memory_space<vmem>>, vector<256x8xf32>
    tpu.vector_store %arg12[%c0_72, %c40], %82 {strides = array<i32>} : memref<256x72xf32, #tpu.memory_space<vmem>>, vector<256x8xf32>,
    %c0_73 = arith.constant 0 : index
    %c2_74 = arith.constant 2 : index
    %c0_75 = arith.constant 0 : index
    %c0_76 = arith.constant 0 : index
    %84 = vector.load %arg13[%c0_73, %c2_74, %c0_75, %c0_76] : memref<1x18x18x8xf32, #tpu.memory_space<vmem>>, vector<1x16x16x8xf32>
    %85 = arith.addf %79, %84 : vector<1x16x16x8xf32>
    %cst_77 = arith.constant 0.000000e+00 : f32
    %86 = vector.broadcast %cst_77 : f32 to vector<1x16x16x8xf32>
    %87 = arith.maximumf %84, %86 : vector<1x16x16x8xf32>
    %88 = vector.shape_cast %87 : vector<1x16x16x8xf32> to vector<256x8xf32>
    %c0_78 = arith.constant 0 : index
    %c48 = arith.constant 48 : index
    %89 = vector.load %arg12[%c0_78, %c48] : memref<256x72xf32, #tpu.memory_space<vmem>>, vector<256x8xf32>
    tpu.vector_store %arg12[%c0_78, %c48], %88 {strides = array<i32>} : memref<256x72xf32, #tpu.memory_space<vmem>>, vector<256x8xf32>,
    %c0_79 = arith.constant 0 : index
    %c2_80 = arith.constant 2 : index
    %c1_81 = arith.constant 1 : index
    %c0_82 = arith.constant 0 : index
    %90 = vector.load %arg13[%c0_79, %c2_80, %c1_81, %c0_82] : memref<1x18x18x8xf32, #tpu.memory_space<vmem>>, vector<1x16x16x8xf32>
    %91 = arith.addf %85, %90 : vector<1x16x16x8xf32>
    %cst_83 = arith.constant 0.000000e+00 : f32
    %92 = vector.broadcast %cst_83 : f32 to vector<1x16x16x8xf32>
    %93 = arith.maximumf %90, %92 : vector<1x16x16x8xf32>
    %94 = vector.shape_cast %93 : vector<1x16x16x8xf32> to vector<256x8xf32>
    %c0_84 = arith.constant 0 : index
    %c56 = arith.constant 56 : index
    %95 = vector.load %arg12[%c0_84, %c56] : memref<256x72xf32, #tpu.memory_space<vmem>>, vector<256x8xf32>
    tpu.vector_store %arg12[%c0_84, %c56], %94 {strides = array<i32>} : memref<256x72xf32, #tpu.memory_space<vmem>>, vector<256x8xf32>,
    %c0_85 = arith.constant 0 : index
    %c2_86 = arith.constant 2 : index
    %c2_87 = arith.constant 2 : index
    %c0_88 = arith.constant 0 : index
    %96 = vector.load %arg13[%c0_85, %c2_86, %c2_87, %c0_88] : memref<1x18x18x8xf32, #tpu.memory_space<vmem>>, vector<1x16x16x8xf32>
    %97 = arith.addf %91, %96 : vector<1x16x16x8xf32>
    %cst_89 = arith.constant 0.000000e+00 : f32
    %98 = vector.broadcast %cst_89 : f32 to vector<1x16x16x8xf32>
    %99 = arith.maximumf %96, %98 : vector<1x16x16x8xf32>
    %100 = vector.shape_cast %99 : vector<1x16x16x8xf32> to vector<256x8xf32>
    %c0_90 = arith.constant 0 : index
    %c64 = arith.constant 64 : index
    %101 = vector.load %arg12[%c0_90, %c64] : memref<256x72xf32, #tpu.memory_space<vmem>>, vector<256x8xf32>
    tpu.vector_store %arg12[%c0_90, %c64], %100 {strides = array<i32>} : memref<256x72xf32, #tpu.memory_space<vmem>>, vector<256x8xf32>,
    %102 = vector.shape_cast %72 : vector<1x16x16x8xf32> to vector<256x8xf32>
    %103 = vector.broadcast %34 : vector<1x16x16x1xf32> to vector<1x16x16x8xf32>
    %104 = arith.mulf %97, %103 : vector<1x16x16x8xf32>
    %105 = vector.shape_cast %104 : vector<1x16x16x8xf32> to vector<256x8xf32>
    %c0_91 = arith.constant 0 : index
    %c0_92 = arith.constant 0 : index
    %106 = vector.load %arg5[%c0_91, %c0_92] : memref<72x24xbf16, #tpu.memory_space<vmem>>, vector<72x24xbf16>
    %c0_93 = arith.constant 0 : index
    %c0_94 = arith.constant 0 : index
    %107 = vector.load %arg6[%c0_93, %c0_94] : memref<1x24xf32, #tpu.memory_space<vmem>>, vector<1x24xf32>
    %c0_95 = arith.constant 0 : index
    %c0_96 = arith.constant 0 : index
    %108 = vector.load %arg12[%c0_95, %c0_96] : memref<256x72xf32, #tpu.memory_space<vmem>>, vector<256x72xf32>
    %109 = arith.truncf %108 : vector<256x72xf32> to vector<256x72xbf16>
    %cst_97 = arith.constant dense<0.000000e+00> : vector<256x24xf32>
    %110 = tpu.matmul %109, %106, %cst_97 {dimension_numbers = #tpu.dot_dimension_numbers<[1], [0], [0], [1], [0, 0, 1, 1], [], []>} : vector<256x72xbf16>, vector<72x24xbf16>, vector<256x24xf32> -> vector<256x24xf32>
    %111 = vector.broadcast %107 : vector<1x24xf32> to vector<256x24xf32>
    %112 = arith.addf %110, %111 : vector<256x24xf32>
    %c0_98 = arith.constant 0 : index
    %c1_99 = arith.constant 1 : index
    %113 = memref.load %arg4[%c0_98, %c1_99] : memref<6x5xf32, #tpu.memory_space<smem>>
    %c0_100 = arith.constant 0 : index
    %c4 = arith.constant 4 : index
    %114 = memref.load %arg4[%c0_100, %c4] : memref<6x5xf32, #tpu.memory_space<smem>>
    %115 = vector.extract_strided_slice %112 {offsets = [0, 0], sizes = [256, 8], strides = [1, 1]} : vector<256x24xf32> to vector<256x8xf32>
    %116 = vector.broadcast %113 : f32 to vector<256x8xf32>
    %117 = arith.mulf %116, %102 : vector<256x8xf32>
    %118 = arith.addf %115, %117 : vector<256x8xf32>
    %119 = vector.broadcast %114 : f32 to vector<256x8xf32>
    %120 = arith.mulf %119, %105 : vector<256x8xf32>
    %121 = arith.addf %118, %120 : vector<256x8xf32>
    %c0_101 = arith.constant 0 : index
    %c1_102 = arith.constant 1 : index
    %c1_103 = arith.constant 1 : index
    %c0_104 = arith.constant 0 : index
    %122 = vector.load %arg14[%c0_101, %c1_102, %c1_103, %c0_104] : memref<1x18x18x8xf32, #tpu.memory_space<vmem>>, vector<1x16x16x8xf32>
    %123 = vector.shape_cast %121 : vector<256x8xf32> to vector<1x16x16x8xf32>
    %124 = arith.addf %122, %123 : vector<1x16x16x8xf32>
    %c0_105 = arith.constant 0 : index
    %c1_106 = arith.constant 1 : index
    %c1_107 = arith.constant 1 : index
    %c0_108 = arith.constant 0 : index
    %125 = vector.load %arg14[%c0_105, %c1_106, %c1_107, %c0_108] : memref<1x18x18x8xf32, #tpu.memory_space<vmem>>, vector<1x16x16x8xf32>
    tpu.vector_store %arg14[%c0_105, %c1_106, %c1_107, %c0_108], %124 {strides = array<i32>} : memref<1x18x18x8xf32, #tpu.memory_space<vmem>>, vector<1x16x16x8xf32>,
    %c1_109 = arith.constant 1 : index
    %c1_110 = arith.constant 1 : index
    %126 = memref.load %arg4[%c1_109, %c1_110] : memref<6x5xf32, #tpu.memory_space<smem>>
    %c1_111 = arith.constant 1 : index
    %c4_112 = arith.constant 4 : index
    %127 = memref.load %arg4[%c1_111, %c4_112] : memref<6x5xf32, #tpu.memory_space<smem>>
    %128 = vector.extract_strided_slice %112 {offsets = [0, 8], sizes = [256, 8], strides = [1, 1]} : vector<256x24xf32> to vector<256x8xf32>
    %129 = vector.broadcast %126 : f32 to vector<256x8xf32>
    %130 = arith.mulf %129, %102 : vector<256x8xf32>
    %131 = arith.addf %128, %130 : vector<256x8xf32>
    %132 = vector.broadcast %127 : f32 to vector<256x8xf32>
    %133 = arith.mulf %132, %105 : vector<256x8xf32>
    %134 = arith.addf %131, %133 : vector<256x8xf32>
    %c0_113 = arith.constant 0 : index
    %c1_114 = arith.constant 1 : index
    %c1_115 = arith.constant 1 : index
    %c0_116 = arith.constant 0 : index
    %135 = vector.load %arg15[%c0_113, %c1_114, %c1_115, %c0_116] : memref<1x18x18x8xf32, #tpu.memory_space<vmem>>, vector<1x16x16x8xf32>
    %136 = vector.shape_cast %134 : vector<256x8xf32> to vector<1x16x16x8xf32>
    %137 = arith.addf %135, %136 : vector<1x16x16x8xf32>
    %c0_117 = arith.constant 0 : index
    %c1_118 = arith.constant 1 : index
    %c1_119 = arith.constant 1 : index
    %c0_120 = arith.constant 0 : index
    %138 = vector.load %arg15[%c0_117, %c1_118, %c1_119, %c0_120] : memref<1x18x18x8xf32, #tpu.memory_space<vmem>>, vector<1x16x16x8xf32>
    tpu.vector_store %arg15[%c0_117, %c1_118, %c1_119, %c0_120], %137 {strides = array<i32>} : memref<1x18x18x8xf32, #tpu.memory_space<vmem>>, vector<1x16x16x8xf32>,
    %c3 = arith.constant 3 : index
    %c1_121 = arith.constant 1 : index
    %139 = memref.load %arg4[%c3, %c1_121] : memref<6x5xf32, #tpu.memory_space<smem>>
    %c3_122 = arith.constant 3 : index
    %c4_123 = arith.constant 4 : index
    %140 = memref.load %arg4[%c3_122, %c4_123] : memref<6x5xf32, #tpu.memory_space<smem>>
    %141 = vector.extract_strided_slice %112 {offsets = [0, 16], sizes = [256, 8], strides = [1, 1]} : vector<256x24xf32> to vector<256x8xf32>
    %142 = vector.broadcast %139 : f32 to vector<256x8xf32>
    %143 = arith.mulf %142, %102 : vector<256x8xf32>
    %144 = arith.addf %141, %143 : vector<256x8xf32>
    %145 = vector.broadcast %140 : f32 to vector<256x8xf32>
    %146 = arith.mulf %145, %105 : vector<256x8xf32>
    %147 = arith.addf %144, %146 : vector<256x8xf32>
    %c0_124 = arith.constant 0 : index
    %c0_125 = arith.constant 0 : index
    %c0_126 = arith.constant 0 : index
    %c0_127 = arith.constant 0 : index
    %148 = vector.load %arg11[%c0_124, %c0_125, %c0_126, %c0_127] : memref<1x16x16x8xf32, #tpu.memory_space<vmem>>, vector<1x16x16x8xf32>
    %149 = vector.shape_cast %147 : vector<256x8xf32> to vector<1x16x16x8xf32>
    %150 = arith.addf %148, %149 : vector<1x16x16x8xf32>
    %c0_128 = arith.constant 0 : index
    %c0_129 = arith.constant 0 : index
    %c0_130 = arith.constant 0 : index
    %c0_131 = arith.constant 0 : index
    %151 = vector.load %arg11[%c0_128, %c0_129, %c0_130, %c0_131] : memref<1x16x16x8xf32, #tpu.memory_space<vmem>>, vector<1x16x16x8xf32>
    tpu.vector_store %arg11[%c0_128, %c0_129, %c0_130, %c0_131], %150 {strides = array<i32>} : memref<1x16x16x8xf32, #tpu.memory_space<vmem>>, vector<1x16x16x8xf32>,
    %cst_132 = arith.constant 0.000000e+00 : f32
    %152 = vector.broadcast %cst_132 : f32 to vector<1x16x16x8xf32>
    %c0_133 = arith.constant 0 : index
    %c0_134 = arith.constant 0 : index
    %c0_135 = arith.constant 0 : index
    %c0_136 = arith.constant 0 : index
    %153 = vector.load %arg14[%c0_133, %c0_134, %c0_135, %c0_136] : memref<1x18x18x8xf32, #tpu.memory_space<vmem>>, vector<1x16x16x8xf32>
    %154 = arith.addf %152, %153 : vector<1x16x16x8xf32>
    %cst_137 = arith.constant 0.000000e+00 : f32
    %155 = vector.broadcast %cst_137 : f32 to vector<1x16x16x8xf32>
    %156 = arith.maximumf %153, %155 : vector<1x16x16x8xf32>
    %157 = vector.shape_cast %156 : vector<1x16x16x8xf32> to vector<256x8xf32>
    %c0_138 = arith.constant 0 : index
    %c0_139 = arith.constant 0 : index
    %158 = vector.load %arg12[%c0_138, %c0_139] : memref<256x72xf32, #tpu.memory_space<vmem>>, vector<256x8xf32>
    tpu.vector_store %arg12[%c0_138, %c0_139], %157 {strides = array<i32>} : memref<256x72xf32, #tpu.memory_space<vmem>>, vector<256x8xf32>,
    %c0_140 = arith.constant 0 : index
    %c0_141 = arith.constant 0 : index
    %c1_142 = arith.constant 1 : index
    %c0_143 = arith.constant 0 : index
    %159 = vector.load %arg14[%c0_140, %c0_141, %c1_142, %c0_143] : memref<1x18x18x8xf32, #tpu.memory_space<vmem>>, vector<1x16x16x8xf32>
    %160 = arith.addf %154, %159 : vector<1x16x16x8xf32>
    %cst_144 = arith.constant 0.000000e+00 : f32
    %161 = vector.broadcast %cst_144 : f32 to vector<1x16x16x8xf32>
    %162 = arith.maximumf %159, %161 : vector<1x16x16x8xf32>
    %163 = vector.shape_cast %162 : vector<1x16x16x8xf32> to vector<256x8xf32>
    %c0_145 = arith.constant 0 : index
    %c8_146 = arith.constant 8 : index
    %164 = vector.load %arg12[%c0_145, %c8_146] : memref<256x72xf32, #tpu.memory_space<vmem>>, vector<256x8xf32>
    tpu.vector_store %arg12[%c0_145, %c8_146], %163 {strides = array<i32>} : memref<256x72xf32, #tpu.memory_space<vmem>>, vector<256x8xf32>,
    %c0_147 = arith.constant 0 : index
    %c0_148 = arith.constant 0 : index
    %c2_149 = arith.constant 2 : index
    %c0_150 = arith.constant 0 : index
    %165 = vector.load %arg14[%c0_147, %c0_148, %c2_149, %c0_150] : memref<1x18x18x8xf32, #tpu.memory_space<vmem>>, vector<1x16x16x8xf32>
    %166 = arith.addf %160, %165 : vector<1x16x16x8xf32>
    %cst_151 = arith.constant 0.000000e+00 : f32
    %167 = vector.broadcast %cst_151 : f32 to vector<1x16x16x8xf32>
    %168 = arith.maximumf %165, %167 : vector<1x16x16x8xf32>
    %169 = vector.shape_cast %168 : vector<1x16x16x8xf32> to vector<256x8xf32>
    %c0_152 = arith.constant 0 : index
    %c16_153 = arith.constant 16 : index
    %170 = vector.load %arg12[%c0_152, %c16_153] : memref<256x72xf32, #tpu.memory_space<vmem>>, vector<256x8xf32>
    tpu.vector_store %arg12[%c0_152, %c16_153], %169 {strides = array<i32>} : memref<256x72xf32, #tpu.memory_space<vmem>>, vector<256x8xf32>,
    %c0_154 = arith.constant 0 : index
    %c1_155 = arith.constant 1 : index
    %c0_156 = arith.constant 0 : index
    %c0_157 = arith.constant 0 : index
    %171 = vector.load %arg14[%c0_154, %c1_155, %c0_156, %c0_157] : memref<1x18x18x8xf32, #tpu.memory_space<vmem>>, vector<1x16x16x8xf32>
    %172 = arith.addf %166, %171 : vector<1x16x16x8xf32>
    %cst_158 = arith.constant 0.000000e+00 : f32
    %173 = vector.broadcast %cst_158 : f32 to vector<1x16x16x8xf32>
    %174 = arith.maximumf %171, %173 : vector<1x16x16x8xf32>
    %175 = vector.shape_cast %174 : vector<1x16x16x8xf32> to vector<256x8xf32>
    %c0_159 = arith.constant 0 : index
    %c24_160 = arith.constant 24 : index
    %176 = vector.load %arg12[%c0_159, %c24_160] : memref<256x72xf32, #tpu.memory_space<vmem>>, vector<256x8xf32>
    tpu.vector_store %arg12[%c0_159, %c24_160], %175 {strides = array<i32>} : memref<256x72xf32, #tpu.memory_space<vmem>>, vector<256x8xf32>,
    %c0_161 = arith.constant 0 : index
    %c1_162 = arith.constant 1 : index
    %c1_163 = arith.constant 1 : index
    %c0_164 = arith.constant 0 : index
    %177 = vector.load %arg14[%c0_161, %c1_162, %c1_163, %c0_164] : memref<1x18x18x8xf32, #tpu.memory_space<vmem>>, vector<1x16x16x8xf32>
    %178 = arith.addf %172, %177 : vector<1x16x16x8xf32>
    %cst_165 = arith.constant 0.000000e+00 : f32
    %179 = vector.broadcast %cst_165 : f32 to vector<1x16x16x8xf32>
    %180 = arith.maximumf %177, %179 : vector<1x16x16x8xf32>
    %181 = vector.shape_cast %180 : vector<1x16x16x8xf32> to vector<256x8xf32>
    %c0_166 = arith.constant 0 : index
    %c32_167 = arith.constant 32 : index
    %182 = vector.load %arg12[%c0_166, %c32_167] : memref<256x72xf32, #tpu.memory_space<vmem>>, vector<256x8xf32>
    tpu.vector_store %arg12[%c0_166, %c32_167], %181 {strides = array<i32>} : memref<256x72xf32, #tpu.memory_space<vmem>>, vector<256x8xf32>,
    %c0_168 = arith.constant 0 : index
    %c1_169 = arith.constant 1 : index
    %c2_170 = arith.constant 2 : index
    %c0_171 = arith.constant 0 : index
    %183 = vector.load %arg14[%c0_168, %c1_169, %c2_170, %c0_171] : memref<1x18x18x8xf32, #tpu.memory_space<vmem>>, vector<1x16x16x8xf32>
    %184 = arith.addf %178, %183 : vector<1x16x16x8xf32>
    %cst_172 = arith.constant 0.000000e+00 : f32
    %185 = vector.broadcast %cst_172 : f32 to vector<1x16x16x8xf32>
    %186 = arith.maximumf %183, %185 : vector<1x16x16x8xf32>
    %187 = vector.shape_cast %186 : vector<1x16x16x8xf32> to vector<256x8xf32>
    %c0_173 = arith.constant 0 : index
    %c40_174 = arith.constant 40 : index
    %188 = vector.load %arg12[%c0_173, %c40_174] : memref<256x72xf32, #tpu.memory_space<vmem>>, vector<256x8xf32>
    tpu.vector_store %arg12[%c0_173, %c40_174], %187 {strides = array<i32>} : memref<256x72xf32, #tpu.memory_space<vmem>>, vector<256x8xf32>,
    %c0_175 = arith.constant 0 : index
    %c2_176 = arith.constant 2 : index
    %c0_177 = arith.constant 0 : index
    %c0_178 = arith.constant 0 : index
    %189 = vector.load %arg14[%c0_175, %c2_176, %c0_177, %c0_178] : memref<1x18x18x8xf32, #tpu.memory_space<vmem>>, vector<1x16x16x8xf32>
    %190 = arith.addf %184, %189 : vector<1x16x16x8xf32>
    %cst_179 = arith.constant 0.000000e+00 : f32
    %191 = vector.broadcast %cst_179 : f32 to vector<1x16x16x8xf32>
    %192 = arith.maximumf %189, %191 : vector<1x16x16x8xf32>
    %193 = vector.shape_cast %192 : vector<1x16x16x8xf32> to vector<256x8xf32>
    %c0_180 = arith.constant 0 : index
    %c48_181 = arith.constant 48 : index
    %194 = vector.load %arg12[%c0_180, %c48_181] : memref<256x72xf32, #tpu.memory_space<vmem>>, vector<256x8xf32>
    tpu.vector_store %arg12[%c0_180, %c48_181], %193 {strides = array<i32>} : memref<256x72xf32, #tpu.memory_space<vmem>>, vector<256x8xf32>,
    %c0_182 = arith.constant 0 : index
    %c2_183 = arith.constant 2 : index
    %c1_184 = arith.constant 1 : index
    %c0_185 = arith.constant 0 : index
    %195 = vector.load %arg14[%c0_182, %c2_183, %c1_184, %c0_185] : memref<1x18x18x8xf32, #tpu.memory_space<vmem>>, vector<1x16x16x8xf32>
    %196 = arith.addf %190, %195 : vector<1x16x16x8xf32>
    %cst_186 = arith.constant 0.000000e+00 : f32
    %197 = vector.broadcast %cst_186 : f32 to vector<1x16x16x8xf32>
    %198 = arith.maximumf %195, %197 : vector<1x16x16x8xf32>
    %199 = vector.shape_cast %198 : vector<1x16x16x8xf32> to vector<256x8xf32>
    %c0_187 = arith.constant 0 : index
    %c56_188 = arith.constant 56 : index
    %200 = vector.load %arg12[%c0_187, %c56_188] : memref<256x72xf32, #tpu.memory_space<vmem>>, vector<256x8xf32>
    tpu.vector_store %arg12[%c0_187, %c56_188], %199 {strides = array<i32>} : memref<256x72xf32, #tpu.memory_space<vmem>>, vector<256x8xf32>,
    %c0_189 = arith.constant 0 : index
    %c2_190 = arith.constant 2 : index
    %c2_191 = arith.constant 2 : index
    %c0_192 = arith.constant 0 : index
    %201 = vector.load %arg14[%c0_189, %c2_190, %c2_191, %c0_192] : memref<1x18x18x8xf32, #tpu.memory_space<vmem>>, vector<1x16x16x8xf32>
    %202 = arith.addf %196, %201 : vector<1x16x16x8xf32>
    %cst_193 = arith.constant 0.000000e+00 : f32
    %203 = vector.broadcast %cst_193 : f32 to vector<1x16x16x8xf32>
    %204 = arith.maximumf %201, %203 : vector<1x16x16x8xf32>
    %205 = vector.shape_cast %204 : vector<1x16x16x8xf32> to vector<256x8xf32>
    %c0_194 = arith.constant 0 : index
    %c64_195 = arith.constant 64 : index
    %206 = vector.load %arg12[%c0_194, %c64_195] : memref<256x72xf32, #tpu.memory_space<vmem>>, vector<256x8xf32>
    tpu.vector_store %arg12[%c0_194, %c64_195], %205 {strides = array<i32>} : memref<256x72xf32, #tpu.memory_space<vmem>>, vector<256x8xf32>,
    %207 = vector.shape_cast %177 : vector<1x16x16x8xf32> to vector<256x8xf32>
    %208 = vector.broadcast %34 : vector<1x16x16x1xf32> to vector<1x16x16x8xf32>
    %209 = arith.mulf %202, %208 : vector<1x16x16x8xf32>
    %210 = vector.shape_cast %209 : vector<1x16x16x8xf32> to vector<256x8xf32>
    %c0_196 = arith.constant 0 : index
    %c0_197 = arith.constant 0 : index
    %211 = vector.load %arg7[%c0_196, %c0_197] : memref<72x16xbf16, #tpu.memory_space<vmem>>, vector<72x16xbf16>
    %c0_198 = arith.constant 0 : index
    %c0_199 = arith.constant 0 : index
    %212 = vector.load %arg8[%c0_198, %c0_199] : memref<1x16xf32, #tpu.memory_space<vmem>>, vector<1x16xf32>
    %c0_200 = arith.constant 0 : index
    %c0_201 = arith.constant 0 : index
    %213 = vector.load %arg12[%c0_200, %c0_201] : memref<256x72xf32, #tpu.memory_space<vmem>>, vector<256x72xf32>
    %214 = arith.truncf %213 : vector<256x72xf32> to vector<256x72xbf16>
    %cst_202 = arith.constant dense<0.000000e+00> : vector<256x16xf32>
    %215 = tpu.matmul %214, %211, %cst_202 {dimension_numbers = #tpu.dot_dimension_numbers<[1], [0], [0], [1], [0, 0, 1, 1], [], []>} : vector<256x72xbf16>, vector<72x16xbf16>, vector<256x16xf32> -> vector<256x16xf32>
    %216 = vector.broadcast %212 : vector<1x16xf32> to vector<256x16xf32>
    %217 = arith.addf %215, %216 : vector<256x16xf32>
    %c2_203 = arith.constant 2 : index
    %c1_204 = arith.constant 1 : index
    %218 = memref.load %arg4[%c2_203, %c1_204] : memref<6x5xf32, #tpu.memory_space<smem>>
    %c2_205 = arith.constant 2 : index
    %c4_206 = arith.constant 4 : index
    %219 = memref.load %arg4[%c2_205, %c4_206] : memref<6x5xf32, #tpu.memory_space<smem>>
    %220 = vector.extract_strided_slice %217 {offsets = [0, 0], sizes = [256, 8], strides = [1, 1]} : vector<256x16xf32> to vector<256x8xf32>
    %221 = vector.broadcast %218 : f32 to vector<256x8xf32>
    %222 = arith.mulf %221, %207 : vector<256x8xf32>
    %223 = arith.addf %220, %222 : vector<256x8xf32>
    %224 = vector.broadcast %219 : f32 to vector<256x8xf32>
    %225 = arith.mulf %224, %210 : vector<256x8xf32>
    %226 = arith.addf %223, %225 : vector<256x8xf32>
    %c0_207 = arith.constant 0 : index
    %c1_208 = arith.constant 1 : index
    %c1_209 = arith.constant 1 : index
    %c0_210 = arith.constant 0 : index
    %227 = vector.load %arg15[%c0_207, %c1_208, %c1_209, %c0_210] : memref<1x18x18x8xf32, #tpu.memory_space<vmem>>, vector<1x16x16x8xf32>
    %228 = vector.shape_cast %226 : vector<256x8xf32> to vector<1x16x16x8xf32>
    %229 = arith.addf %227, %228 : vector<1x16x16x8xf32>
    %c0_211 = arith.constant 0 : index
    %c1_212 = arith.constant 1 : index
    %c1_213 = arith.constant 1 : index
    %c0_214 = arith.constant 0 : index
    %230 = vector.load %arg15[%c0_211, %c1_212, %c1_213, %c0_214] : memref<1x18x18x8xf32, #tpu.memory_space<vmem>>, vector<1x16x16x8xf32>
    tpu.vector_store %arg15[%c0_211, %c1_212, %c1_213, %c0_214], %229 {strides = array<i32>} : memref<1x18x18x8xf32, #tpu.memory_space<vmem>>, vector<1x16x16x8xf32>,
    %c4_215 = arith.constant 4 : index
    %c1_216 = arith.constant 1 : index
    %231 = memref.load %arg4[%c4_215, %c1_216] : memref<6x5xf32, #tpu.memory_space<smem>>
    %c4_217 = arith.constant 4 : index
    %c4_218 = arith.constant 4 : index
    %232 = memref.load %arg4[%c4_217, %c4_218] : memref<6x5xf32, #tpu.memory_space<smem>>
    %233 = vector.extract_strided_slice %217 {offsets = [0, 8], sizes = [256, 8], strides = [1, 1]} : vector<256x16xf32> to vector<256x8xf32>
    %234 = vector.broadcast %231 : f32 to vector<256x8xf32>
    %235 = arith.mulf %234, %207 : vector<256x8xf32>
    %236 = arith.addf %233, %235 : vector<256x8xf32>
    %237 = vector.broadcast %232 : f32 to vector<256x8xf32>
    %238 = arith.mulf %237, %210 : vector<256x8xf32>
    %239 = arith.addf %236, %238 : vector<256x8xf32>
    %c0_219 = arith.constant 0 : index
    %c0_220 = arith.constant 0 : index
    %c0_221 = arith.constant 0 : index
    %c0_222 = arith.constant 0 : index
    %240 = vector.load %arg11[%c0_219, %c0_220, %c0_221, %c0_222] : memref<1x16x16x8xf32, #tpu.memory_space<vmem>>, vector<1x16x16x8xf32>
    %241 = vector.shape_cast %239 : vector<256x8xf32> to vector<1x16x16x8xf32>
    %242 = arith.addf %240, %241 : vector<1x16x16x8xf32>
    %c0_223 = arith.constant 0 : index
    %c0_224 = arith.constant 0 : index
    %c0_225 = arith.constant 0 : index
    %c0_226 = arith.constant 0 : index
    %243 = vector.load %arg11[%c0_223, %c0_224, %c0_225, %c0_226] : memref<1x16x16x8xf32, #tpu.memory_space<vmem>>, vector<1x16x16x8xf32>
    tpu.vector_store %arg11[%c0_223, %c0_224, %c0_225, %c0_226], %242 {strides = array<i32>} : memref<1x16x16x8xf32, #tpu.memory_space<vmem>>, vector<1x16x16x8xf32>,
    %cst_227 = arith.constant 0.000000e+00 : f32
    %244 = vector.broadcast %cst_227 : f32 to vector<1x16x16x8xf32>
    %c0_228 = arith.constant 0 : index
    %c0_229 = arith.constant 0 : index
    %c0_230 = arith.constant 0 : index
    %c0_231 = arith.constant 0 : index
    %245 = vector.load %arg15[%c0_228, %c0_229, %c0_230, %c0_231] : memref<1x18x18x8xf32, #tpu.memory_space<vmem>>, vector<1x16x16x8xf32>
    %246 = arith.addf %244, %245 : vector<1x16x16x8xf32>
    %cst_232 = arith.constant 0.000000e+00 : f32
    %247 = vector.broadcast %cst_232 : f32 to vector<1x16x16x8xf32>
    %248 = arith.maximumf %245, %247 : vector<1x16x16x8xf32>
    %249 = vector.shape_cast %248 : vector<1x16x16x8xf32> to vector<256x8xf32>
    %c0_233 = arith.constant 0 : index
    %c0_234 = arith.constant 0 : index
    %250 = vector.load %arg12[%c0_233, %c0_234] : memref<256x72xf32, #tpu.memory_space<vmem>>, vector<256x8xf32>
    tpu.vector_store %arg12[%c0_233, %c0_234], %249 {strides = array<i32>} : memref<256x72xf32, #tpu.memory_space<vmem>>, vector<256x8xf32>,
    %c0_235 = arith.constant 0 : index
    %c0_236 = arith.constant 0 : index
    %c1_237 = arith.constant 1 : index
    %c0_238 = arith.constant 0 : index
    %251 = vector.load %arg15[%c0_235, %c0_236, %c1_237, %c0_238] : memref<1x18x18x8xf32, #tpu.memory_space<vmem>>, vector<1x16x16x8xf32>
    %252 = arith.addf %246, %251 : vector<1x16x16x8xf32>
    %cst_239 = arith.constant 0.000000e+00 : f32
    %253 = vector.broadcast %cst_239 : f32 to vector<1x16x16x8xf32>
    %254 = arith.maximumf %251, %253 : vector<1x16x16x8xf32>
    %255 = vector.shape_cast %254 : vector<1x16x16x8xf32> to vector<256x8xf32>
    %c0_240 = arith.constant 0 : index
    %c8_241 = arith.constant 8 : index
    %256 = vector.load %arg12[%c0_240, %c8_241] : memref<256x72xf32, #tpu.memory_space<vmem>>, vector<256x8xf32>
    tpu.vector_store %arg12[%c0_240, %c8_241], %255 {strides = array<i32>} : memref<256x72xf32, #tpu.memory_space<vmem>>, vector<256x8xf32>,
    %c0_242 = arith.constant 0 : index
    %c0_243 = arith.constant 0 : index
    %c2_244 = arith.constant 2 : index
    %c0_245 = arith.constant 0 : index
    %257 = vector.load %arg15[%c0_242, %c0_243, %c2_244, %c0_245] : memref<1x18x18x8xf32, #tpu.memory_space<vmem>>, vector<1x16x16x8xf32>
    %258 = arith.addf %252, %257 : vector<1x16x16x8xf32>
    %cst_246 = arith.constant 0.000000e+00 : f32
    %259 = vector.broadcast %cst_246 : f32 to vector<1x16x16x8xf32>
    %260 = arith.maximumf %257, %259 : vector<1x16x16x8xf32>
    %261 = vector.shape_cast %260 : vector<1x16x16x8xf32> to vector<256x8xf32>
    %c0_247 = arith.constant 0 : index
    %c16_248 = arith.constant 16 : index
    %262 = vector.load %arg12[%c0_247, %c16_248] : memref<256x72xf32, #tpu.memory_space<vmem>>, vector<256x8xf32>
    tpu.vector_store %arg12[%c0_247, %c16_248], %261 {strides = array<i32>} : memref<256x72xf32, #tpu.memory_space<vmem>>, vector<256x8xf32>,
    %c0_249 = arith.constant 0 : index
    %c1_250 = arith.constant 1 : index
    %c0_251 = arith.constant 0 : index
    %c0_252 = arith.constant 0 : index
    %263 = vector.load %arg15[%c0_249, %c1_250, %c0_251, %c0_252] : memref<1x18x18x8xf32, #tpu.memory_space<vmem>>, vector<1x16x16x8xf32>
    %264 = arith.addf %258, %263 : vector<1x16x16x8xf32>
    %cst_253 = arith.constant 0.000000e+00 : f32
    %265 = vector.broadcast %cst_253 : f32 to vector<1x16x16x8xf32>
    %266 = arith.maximumf %263, %265 : vector<1x16x16x8xf32>
    %267 = vector.shape_cast %266 : vector<1x16x16x8xf32> to vector<256x8xf32>
    %c0_254 = arith.constant 0 : index
    %c24_255 = arith.constant 24 : index
    %268 = vector.load %arg12[%c0_254, %c24_255] : memref<256x72xf32, #tpu.memory_space<vmem>>, vector<256x8xf32>
    tpu.vector_store %arg12[%c0_254, %c24_255], %267 {strides = array<i32>} : memref<256x72xf32, #tpu.memory_space<vmem>>, vector<256x8xf32>,
    %c0_256 = arith.constant 0 : index
    %c1_257 = arith.constant 1 : index
    %c1_258 = arith.constant 1 : index
    %c0_259 = arith.constant 0 : index
    %269 = vector.load %arg15[%c0_256, %c1_257, %c1_258, %c0_259] : memref<1x18x18x8xf32, #tpu.memory_space<vmem>>, vector<1x16x16x8xf32>
    %270 = arith.addf %264, %269 : vector<1x16x16x8xf32>
    %cst_260 = arith.constant 0.000000e+00 : f32
    %271 = vector.broadcast %cst_260 : f32 to vector<1x16x16x8xf32>
    %272 = arith.maximumf %269, %271 : vector<1x16x16x8xf32>
    %273 = vector.shape_cast %272 : vector<1x16x16x8xf32> to vector<256x8xf32>
    %c0_261 = arith.constant 0 : index
    %c32_262 = arith.constant 32 : index
    %274 = vector.load %arg12[%c0_261, %c32_262] : memref<256x72xf32, #tpu.memory_space<vmem>>, vector<256x8xf32>
    tpu.vector_store %arg12[%c0_261, %c32_262], %273 {strides = array<i32>} : memref<256x72xf32, #tpu.memory_space<vmem>>, vector<256x8xf32>,
    %c0_263 = arith.constant 0 : index
    %c1_264 = arith.constant 1 : index
    %c2_265 = arith.constant 2 : index
    %c0_266 = arith.constant 0 : index
    %275 = vector.load %arg15[%c0_263, %c1_264, %c2_265, %c0_266] : memref<1x18x18x8xf32, #tpu.memory_space<vmem>>, vector<1x16x16x8xf32>
    %276 = arith.addf %270, %275 : vector<1x16x16x8xf32>
    %cst_267 = arith.constant 0.000000e+00 : f32
    %277 = vector.broadcast %cst_267 : f32 to vector<1x16x16x8xf32>
    %278 = arith.maximumf %275, %277 : vector<1x16x16x8xf32>
    %279 = vector.shape_cast %278 : vector<1x16x16x8xf32> to vector<256x8xf32>
    %c0_268 = arith.constant 0 : index
    %c40_269 = arith.constant 40 : index
    %280 = vector.load %arg12[%c0_268, %c40_269] : memref<256x72xf32, #tpu.memory_space<vmem>>, vector<256x8xf32>
    tpu.vector_store %arg12[%c0_268, %c40_269], %279 {strides = array<i32>} : memref<256x72xf32, #tpu.memory_space<vmem>>, vector<256x8xf32>,
    %c0_270 = arith.constant 0 : index
    %c2_271 = arith.constant 2 : index
    %c0_272 = arith.constant 0 : index
    %c0_273 = arith.constant 0 : index
    %281 = vector.load %arg15[%c0_270, %c2_271, %c0_272, %c0_273] : memref<1x18x18x8xf32, #tpu.memory_space<vmem>>, vector<1x16x16x8xf32>
    %282 = arith.addf %276, %281 : vector<1x16x16x8xf32>
    %cst_274 = arith.constant 0.000000e+00 : f32
    %283 = vector.broadcast %cst_274 : f32 to vector<1x16x16x8xf32>
    %284 = arith.maximumf %281, %283 : vector<1x16x16x8xf32>
    %285 = vector.shape_cast %284 : vector<1x16x16x8xf32> to vector<256x8xf32>
    %c0_275 = arith.constant 0 : index
    %c48_276 = arith.constant 48 : index
    %286 = vector.load %arg12[%c0_275, %c48_276] : memref<256x72xf32, #tpu.memory_space<vmem>>, vector<256x8xf32>
    tpu.vector_store %arg12[%c0_275, %c48_276], %285 {strides = array<i32>} : memref<256x72xf32, #tpu.memory_space<vmem>>, vector<256x8xf32>,
    %c0_277 = arith.constant 0 : index
    %c2_278 = arith.constant 2 : index
    %c1_279 = arith.constant 1 : index
    %c0_280 = arith.constant 0 : index
    %287 = vector.load %arg15[%c0_277, %c2_278, %c1_279, %c0_280] : memref<1x18x18x8xf32, #tpu.memory_space<vmem>>, vector<1x16x16x8xf32>
    %288 = arith.addf %282, %287 : vector<1x16x16x8xf32>
    %cst_281 = arith.constant 0.000000e+00 : f32
    %289 = vector.broadcast %cst_281 : f32 to vector<1x16x16x8xf32>
    %290 = arith.maximumf %287, %289 : vector<1x16x16x8xf32>
    %291 = vector.shape_cast %290 : vector<1x16x16x8xf32> to vector<256x8xf32>
    %c0_282 = arith.constant 0 : index
    %c56_283 = arith.constant 56 : index
    %292 = vector.load %arg12[%c0_282, %c56_283] : memref<256x72xf32, #tpu.memory_space<vmem>>, vector<256x8xf32>
    tpu.vector_store %arg12[%c0_282, %c56_283], %291 {strides = array<i32>} : memref<256x72xf32, #tpu.memory_space<vmem>>, vector<256x8xf32>,
    %c0_284 = arith.constant 0 : index
    %c2_285 = arith.constant 2 : index
    %c2_286 = arith.constant 2 : index
    %c0_287 = arith.constant 0 : index
    %293 = vector.load %arg15[%c0_284, %c2_285, %c2_286, %c0_287] : memref<1x18x18x8xf32, #tpu.memory_space<vmem>>, vector<1x16x16x8xf32>
    %294 = arith.addf %288, %293 : vector<1x16x16x8xf32>
    %cst_288 = arith.constant 0.000000e+00 : f32
    %295 = vector.broadcast %cst_288 : f32 to vector<1x16x16x8xf32>
    %296 = arith.maximumf %293, %295 : vector<1x16x16x8xf32>
    %297 = vector.shape_cast %296 : vector<1x16x16x8xf32> to vector<256x8xf32>
    %c0_289 = arith.constant 0 : index
    %c64_290 = arith.constant 64 : index
    %298 = vector.load %arg12[%c0_289, %c64_290] : memref<256x72xf32, #tpu.memory_space<vmem>>, vector<256x8xf32>
    tpu.vector_store %arg12[%c0_289, %c64_290], %297 {strides = array<i32>} : memref<256x72xf32, #tpu.memory_space<vmem>>, vector<256x8xf32>,
    %299 = vector.shape_cast %269 : vector<1x16x16x8xf32> to vector<256x8xf32>
    %300 = vector.broadcast %34 : vector<1x16x16x1xf32> to vector<1x16x16x8xf32>
    %301 = arith.mulf %294, %300 : vector<1x16x16x8xf32>
    %302 = vector.shape_cast %301 : vector<1x16x16x8xf32> to vector<256x8xf32>
    %c0_291 = arith.constant 0 : index
    %c0_292 = arith.constant 0 : index
    %303 = vector.load %arg9[%c0_291, %c0_292] : memref<72x8xbf16, #tpu.memory_space<vmem>>, vector<72x8xbf16>
    %c0_293 = arith.constant 0 : index
    %c0_294 = arith.constant 0 : index
    %304 = vector.load %arg10[%c0_293, %c0_294] : memref<1x8xf32, #tpu.memory_space<vmem>>, vector<1x8xf32>
    %c0_295 = arith.constant 0 : index
    %c0_296 = arith.constant 0 : index
    %305 = vector.load %arg12[%c0_295, %c0_296] : memref<256x72xf32, #tpu.memory_space<vmem>>, vector<256x72xf32>
    %306 = arith.truncf %305 : vector<256x72xf32> to vector<256x72xbf16>
    %cst_297 = arith.constant dense<0.000000e+00> : vector<256x8xf32>
    %307 = tpu.matmul %306, %303, %cst_297 {dimension_numbers = #tpu.dot_dimension_numbers<[1], [0], [0], [1], [0, 0, 1, 1], [], []>} : vector<256x72xbf16>, vector<72x8xbf16>, vector<256x8xf32> -> vector<256x8xf32>
    %308 = vector.broadcast %304 : vector<1x8xf32> to vector<256x8xf32>
    %309 = arith.addf %307, %308 : vector<256x8xf32>
    %c5 = arith.constant 5 : index
    %c1_298 = arith.constant 1 : index
    %310 = memref.load %arg4[%c5, %c1_298] : memref<6x5xf32, #tpu.memory_space<smem>>
    %c5_299 = arith.constant 5 : index
    %c4_300 = arith.constant 4 : index
    %311 = memref.load %arg4[%c5_299, %c4_300] : memref<6x5xf32, #tpu.memory_space<smem>>
    %312 = vector.broadcast %310 : f32 to vector<256x8xf32>
    %313 = arith.mulf %312, %299 : vector<256x8xf32>
    %314 = arith.addf %309, %313 : vector<256x8xf32>
    %315 = vector.broadcast %311 : f32 to vector<256x8xf32>
    %316 = arith.mulf %315, %302 : vector<256x8xf32>
    %317 = arith.addf %314, %316 : vector<256x8xf32>
    %c0_301 = arith.constant 0 : index
    %c0_302 = arith.constant 0 : index
    %c0_303 = arith.constant 0 : index
    %c0_304 = arith.constant 0 : index
    %318 = vector.load %arg11[%c0_301, %c0_302, %c0_303, %c0_304] : memref<1x16x16x8xf32, #tpu.memory_space<vmem>>, vector<1x16x16x8xf32>
    %319 = vector.shape_cast %317 : vector<256x8xf32> to vector<1x16x16x8xf32>
    %320 = arith.addf %318, %319 : vector<1x16x16x8xf32>
    %c0_305 = arith.constant 0 : index
    %c0_306 = arith.constant 0 : index
    %c0_307 = arith.constant 0 : index
    %c0_308 = arith.constant 0 : index
    %321 = vector.load %arg11[%c0_305, %c0_306, %c0_307, %c0_308] : memref<1x16x16x8xf32, #tpu.memory_space<vmem>>, vector<1x16x16x8xf32>
    tpu.vector_store %arg11[%c0_305, %c0_306, %c0_307, %c0_308], %320 {strides = array<i32>} : memref<1x16x16x8xf32, #tpu.memory_space<vmem>>, vector<1x16x16x8xf32>,
    return
  }
  func.func @transform_0(%arg0: i32) -> (i32, i32, i32, i32) {
    %c0_i32 = arith.constant 0 : i32
    %c0_i32_0 = arith.constant 0 : i32
    %c0_i32_1 = arith.constant 0 : i32
    %c0_i32_2 = arith.constant 0 : i32
    return %arg0, %c0_i32, %c0_i32_0, %c0_i32_1 : i32, i32, i32, i32
  }
  func.func @transform_1(%arg0: i32) -> (i32, i32) {
    %c0_i32 = arith.constant 0 : i32
    %c0_i32_0 = arith.constant 0 : i32
    %c0_i32_1 = arith.constant 0 : i32
    return %c0_i32, %c0_i32_0 : i32, i32
  }
  func.func @transform_2(%arg0: i32) -> (i32, i32) {
    %c0_i32 = arith.constant 0 : i32
    %c0_i32_0 = arith.constant 0 : i32
    %c0_i32_1 = arith.constant 0 : i32
    return %c0_i32, %c0_i32_0 : i32, i32
  }
  func.func @transform_3(%arg0: i32) -> (i32, i32) {
    %c0_i32 = arith.constant 0 : i32
    %c0_i32_0 = arith.constant 0 : i32
    %c0_i32_1 = arith.constant 0 : i32
    return %c0_i32, %c0_i32_0 : i32, i32
  }
  func.func @transform_4(%arg0: i32) -> (i32, i32) {
    %c0_i32 = arith.constant 0 : i32
    %c0_i32_0 = arith.constant 0 : i32
    %c0_i32_1 = arith.constant 0 : i32
    return %c0_i32, %c0_i32_0 : i32, i32
  }
  func.func @transform_5(%arg0: i32) -> (i32, i32) {
    %c0_i32 = arith.constant 0 : i32
    %c0_i32_0 = arith.constant 0 : i32
    %c0_i32_1 = arith.constant 0 : i32
    return %c0_i32, %c0_i32_0 : i32, i32
  }
  func.func @transform_6(%arg0: i32) -> (i32, i32) {
    %c0_i32 = arith.constant 0 : i32
    %c0_i32_0 = arith.constant 0 : i32
    %c0_i32_1 = arith.constant 0 : i32
    return %c0_i32, %c0_i32_0 : i32, i32
  }
  func.func @transform_7(%arg0: i32) -> (i32, i32) {
    %c0_i32 = arith.constant 0 : i32
    %c0_i32_0 = arith.constant 0 : i32
    %c0_i32_1 = arith.constant 0 : i32
    return %c0_i32, %c0_i32_0 : i32, i32
  }
  func.func @transform_8(%arg0: i32) -> (i32, i32) {
    %c0_i32 = arith.constant 0 : i32
    %c0_i32_0 = arith.constant 0 : i32
    %c0_i32_1 = arith.constant 0 : i32
    return %c0_i32, %c0_i32_0 : i32, i32
  }
  func.func @transform_9(%arg0: i32) -> (i32, i32) {
    %c0_i32 = arith.constant 0 : i32
    %c0_i32_0 = arith.constant 0 : i32
    %c0_i32_1 = arith.constant 0 : i32
    return %c0_i32, %c0_i32_0 : i32, i32
  }
  func.func @transform_10(%arg0: i32) -> (i32, i32, i32, i32) {
    %c0_i32 = arith.constant 0 : i32
    %c0_i32_0 = arith.constant 0 : i32
    %c0_i32_1 = arith.constant 0 : i32
    %c0_i32_2 = arith.constant 0 : i32
    return %arg0, %c0_i32, %c0_i32_0, %c0_i32_1 : i32, i32, i32, i32
  }
}

</mosaic_0001>

<llo_original>
// kernel: cell_forward.1
$region0: #{cell_forward.1}
  #allocation0 [shape = 'u32[]', space=smem, size = 0x4, offset = 0x4, fixed_abs, tag = 'smem constant byte address 0x4 - core index']
  #allocation1 [shape = 'u32[144,128]{1,0:T(1,128)}', space=vmem, size = 0x12000, scoped, tag = 'internal scratch']
  #allocation2 [shape = 'f32[256,72]{1,0:T(8,128)}', space=vmem, size = 0x20000, scoped, tag = 'scratch operand']
  #allocation3 [shape = 'f32[1,18,18,8]{3,2,1,0:T(8,128)}', space=vmem, size = 0x36000, scoped, tag = 'scratch operand']
  #allocation4 [shape = 'f32[1,18,18,8]{3,2,1,0:T(8,128)}', space=vmem, size = 0x36000, scoped, tag = 'scratch operand']
  #allocation5 [shape = 'f32[1,18,18,8]{3,2,1,0:T(8,128)}', space=vmem, size = 0x36000, scoped, tag = 'scratch operand']
  %s0 = inlined_call_operand.vmem [shape: f32[2,16,16,8], index: 0, kind: input, shape index: {}]
  %s1 = inlined_call_operand.vmem [shape: bf16[8,8], index: 1, kind: input, shape index: {}]
  %s2 = inlined_call_operand.vmem [shape: f32[1,8], index: 2, kind: input, shape index: {}]
  %s3 = inlined_call_operand.vmem [shape: f32[6,5], index: 3, kind: input, shape index: {}]
  %s4 = inlined_call_operand.vmem [shape: bf16[72,24], index: 4, kind: input, shape index: {}]
  %s5 = inlined_call_operand.vmem [shape: f32[1,24], index: 5, kind: input, shape index: {}]
  %s6 = inlined_call_operand.vmem [shape: bf16[72,16], index: 6, kind: input, shape index: {}]
  %s7 = inlined_call_operand.vmem [shape: f32[1,16], index: 7, kind: input, shape index: {}]
  %s8 = inlined_call_operand.vmem [shape: bf16[72,8], index: 8, kind: input, shape index: {}]
  %s9 = inlined_call_operand.vmem [shape: f32[1,8], index: 9, kind: input, shape index: {}]
  %s10 = inlined_call_operand.vmem [shape: f32[2,16,16,8], index: 10, kind: output, shape index: {}]
  %s11 = sld [smem:[#allocation0]]
  $region77: #{cell_forward.1} parent=0
    _
  %s13 = ssub.s32 1, %s11
  %s14 = scalar_select 0, %s13, %s11
  $region1: #{cell_forward.1} parent=0
    #allocation6 [shape = 'u8[4096]{0}', space=smem, size = 0x1000, scoped, tag = 'input window, operand 3, single buffered']
    #allocation7 [shape = 's32[2]{0}', space=sflag, size = 0x8, scoped, tag = 'scoped memory for cell_forward.1']
    %15 = vsyncpa [#allocation7], 0
    loop: start=0, step=1, limit=4
    $region2: #{cell_forward.1} parent=1 // loop_pre_header
      _
    $region3: #{cell_forward.1} parent=1 // loop_header
      %s17 = sphi 0, %s21
      %p18 = scmp.ge.s32.totalorder %s17, 4
      %s27 = sphi 0, %s29
      %s30 = sphi 0, %s27
      %s31 = sphi 0, %s30
      %s47 = sphi 0, %s31
      %s51 = sphi 0, %s51
      %s53 = sphi 0, %s51
      %s54 = sphi 0, %s53
      %s68 = sphi 0, %s54
      %s72 = sphi 0, %s72
      %s74 = sphi 0, %s72
      %s75 = sphi 0, %s74
      %s89 = sphi 0, %s75
      %s93 = sphi 0, %s93
      %s95 = sphi 0, %s93
      %s96 = sphi 0, %s95
      %s110 = sphi 0, %s96
      %s114 = sphi 0, %s114
      %s116 = sphi 0, %s114
      %s117 = sphi 0, %s116
      %s131 = sphi 0, %s117
      %s135 = sphi 0, %s135
      %s137 = sphi 0, %s135
      %s138 = sphi 0, %s137
      %s152 = sphi 0, %s138
      %s156 = sphi 0, %s156
      %s158 = sphi 0, %s156
      %s159 = sphi 0, %s158
      %s173 = sphi 0, %s159
      %s177 = sphi 0, %s177
      %s179 = sphi 0, %s177
      %s180 = sphi 0, %s179
      %s194 = sphi 0, %s180
      %s198 = sphi 0, %s198
      %s200 = sphi 0, %s198
      %s201 = sphi 0, %s200
      %s215 = sphi 0, %s201
      %s219 = sphi 0, %s219
      %s221 = sphi 0, %s219
      %s222 = sphi 0, %s221
      %s236 = sphi 0, %s222
      %s242 = sphi 0, %s244
      %s245 = sphi 0, %s242
      %s246 = sphi 0, %s245
      %s262 = sphi 0, %s246
    $region4: #{cell_forward.1} parent=1 // loop_header_branch
      %20 = sbr.rel (%p18) target = $region8
    $region5: #{cell_forward.1} parent=1 // loop_body
      %s22 = ssub.s32 %s17, 1
      %s23 = ssub.s32 %s17, 2
      %s24 = sadd.s32 %s17, 1
      %s25 = ssub.s32 %s17, %s24
      %p26 = scmp.eq.s32.totalorder %s25, 0
      %s28 = sadd.s32 %s27, 1
      %s29 = scalar_select %p26, %s27, %s28
      %p32 = pneg %p26
      %p33 = scmp.eq.s32.totalorder %s17, 1
      %p34 = por %p32, %p33
      %p35 = scmp.ne.s32.totalorder %s27, %s30
      %p36 = scmp.eq.s32.totalorder %s17, 0
      %p37 = por %p35, %p36
      %p38 = scmp.ne.s32.totalorder %s27, %s30
      %p39 = scmp.eq.s32.totalorder %s22, 1
      %p40 = por %p38, %p39
      %p41 = scmp.ne.s32.totalorder %s30, %s31
      %p42 = scmp.eq.s32.totalorder %s22, 0
      %p43 = por %p41, %p42
      %p44 = scmp.ne.s32.totalorder %s30, %s31
      %p45 = scmp.eq.s32.totalorder %s23, 1
      %p46 = por %p44, %p45
      %p48 = scmp.ne.s32.totalorder %s31, %s47
      %p49 = scmp.eq.s32.totalorder %s23, 0
      %p50 = por %p48, %p49
      %s52 = sadd.s32 %s51, 1
      %p55 = scmp.eq.s32.totalorder %s17, 1
      %p56 = scmp.ne.s32.totalorder %s51, %s53
      %p57 = scmp.eq.s32.totalorder %s17, 0
      %p58 = por %p56, %p57
      %p59 = scmp.ne.s32.totalorder %s51, %s53
      %p60 = scmp.eq.s32.totalorder %s22, 1
      %p61 = por %p59, %p60
      %p62 = scmp.ne.s32.totalorder %s53, %s54
      %p63 = scmp.eq.s32.totalorder %s22, 0
      %p64 = por %p62, %p63
      %p65 = scmp.ne.s32.totalorder %s53, %s54
      %p66 = scmp.eq.s32.totalorder %s23, 1
      %p67 = por %p65, %p66
      %p69 = scmp.ne.s32.totalorder %s54, %s68
      %p70 = scmp.eq.s32.totalorder %s23, 0
      %p71 = por %p69, %p70
      %s73 = sadd.s32 %s72, 1
      %p76 = scmp.eq.s32.totalorder %s17, 1
      %p77 = scmp.ne.s32.totalorder %s72, %s74
      %p78 = scmp.eq.s32.totalorder %s17, 0
      %p79 = por %p77, %p78
      %p80 = scmp.ne.s32.totalorder %s72, %s74
      %p81 = scmp.eq.s32.totalorder %s22, 1
      %p82 = por %p80, %p81
      %p83 = scmp.ne.s32.totalorder %s74, %s75
      %p84 = scmp.eq.s32.totalorder %s22, 0
      %p85 = por %p83, %p84
      %p86 = scmp.ne.s32.totalorder %s74, %s75
      %p87 = scmp.eq.s32.totalorder %s23, 1
      %p88 = por %p86, %p87
      %p90 = scmp.ne.s32.totalorder %s75, %s89
      %p91 = scmp.eq.s32.totalorder %s23, 0
      %p92 = por %p90, %p91
      %s94 = sadd.s32 %s93, 1
      %p97 = scmp.eq.s32.totalorder %s17, 1
      %p98 = scmp.ne.s32.totalorder %s93, %s95
      %p99 = scmp.eq.s32.totalorder %s17, 0
      %p100 = por %p98, %p99
      %p101 = scmp.ne.s32.totalorder %s93, %s95
      %p102 = scmp.eq.s32.totalorder %s22, 1
      %p103 = por %p101, %p102
      %p104 = scmp.ne.s32.totalorder %s95, %s96
      %p105 = scmp.eq.s32.totalorder %s22, 0
      %p106 = por %p104, %p105
      %p107 = scmp.ne.s32.totalorder %s95, %s96
      %p108 = scmp.eq.s32.totalorder %s23, 1
      %p109 = por %p107, %p108
      %p111 = scmp.ne.s32.totalorder %s96, %s110
      %p112 = scmp.eq.s32.totalorder %s23, 0
      %p113 = por %p111, %p112
      %s115 = sadd.s32 %s114, 1
      %p118 = scmp.eq.s32.totalorder %s17, 1
      %p119 = scmp.ne.s32.totalorder %s114, %s116
      %p120 = scmp.eq.s32.totalorder %s17, 0
      %p121 = por %p119, %p120
      %p122 = scmp.ne.s32.totalorder %s114, %s116
      %p123 = scmp.eq.s32.totalorder %s22, 1
      %p124 = por %p122, %p123
      %p125 = scmp.ne.s32.totalorder %s116, %s117
      %p126 = scmp.eq.s32.totalorder %s22, 0
      %p127 = por %p125, %p126
      %p128 = scmp.ne.s32.totalorder %s116, %s117
      %p129 = scmp.eq.s32.totalorder %s23, 1
      %p130 = por %p128, %p129
      %p132 = scmp.ne.s32.totalorder %s117, %s131
      %p133 = scmp.eq.s32.totalorder %s23, 0
      %p134 = por %p132, %p133
      %s136 = sadd.s32 %s135, 1
      %p139 = scmp.eq.s32.totalorder %s17, 1
      %p140 = scmp.ne.s32.totalorder %s135, %s137
      %p141 = scmp.eq.s32.totalorder %s17, 0
      %p142 = por %p140, %p141
      %p143 = scmp.ne.s32.totalorder %s135, %s137
      %p144 = scmp.eq.s32.totalorder %s22, 1
      %p145 = por %p143, %p144
      %p146 = scmp.ne.s32.totalorder %s137, %s138
      %p147 = scmp.eq.s32.totalorder %s22, 0
      %p148 = por %p146, %p147
      %p149 = scmp.ne.s32.totalorder %s137, %s138
      %p150 = scmp.eq.s32.totalorder %s23, 1
      %p151 = por %p149, %p150
      %p153 = scmp.ne.s32.totalorder %s138, %s152
      %p154 = scmp.eq.s32.totalorder %s23, 0
      %p155 = por %p153, %p154
      %s157 = sadd.s32 %s156, 1
      %p160 = scmp.eq.s32.totalorder %s17, 1
      %p161 = scmp.ne.s32.totalorder %s156, %s158
      %p162 = scmp.eq.s32.totalorder %s17, 0
      %p163 = por %p161, %p162
      %p164 = scmp.ne.s32.totalorder %s156, %s158
      %p165 = scmp.eq.s32.totalorder %s22, 1
      %p166 = por %p164, %p165
      %p167 = scmp.ne.s32.totalorder %s158, %s159
      %p168 = scmp.eq.s32.totalorder %s22, 0
      %p169 = por %p167, %p168
      %p170 = scmp.ne.s32.totalorder %s158, %s159
      %p171 = scmp.eq.s32.totalorder %s23, 1
      %p172 = por %p170, %p171
      %p174 = scmp.ne.s32.totalorder %s159, %s173
      %p175 = scmp.eq.s32.totalorder %s23, 0
      %p176 = por %p174, %p175
      %s178 = sadd.s32 %s177, 1
      %p181 = scmp.eq.s32.totalorder %s17, 1
      %p182 = scmp.ne.s32.totalorder %s177, %s179
      %p183 = scmp.eq.s32.totalorder %s17, 0
      %p184 = por %p182, %p183
      %p185 = scmp.ne.s32.totalorder %s177, %s179
      %p186 = scmp.eq.s32.totalorder %s22, 1
      %p187 = por %p185, %p186
      %p188 = scmp.ne.s32.totalorder %s179, %s180
      %p189 = scmp.eq.s32.totalorder %s22, 0
      %p190 = por %p188, %p189
      %p191 = scmp.ne.s32.totalorder %s179, %s180
      %p192 = scmp.eq.s32.totalorder %s23, 1
      %p193 = por %p191, %p192
      %p195 = scmp.ne.s32.totalorder %s180, %s194
      %p196 = scmp.eq.s32.totalorder %s23, 0
      %p197 = por %p195, %p196
      %s199 = sadd.s32 %s198, 1
      %p202 = scmp.eq.s32.totalorder %s17, 1
      %p203 = scmp.ne.s32.totalorder %s198, %s200
      %p204 = scmp.eq.s32.totalorder %s17, 0
      %p205 = por %p203, %p204
      %p206 = scmp.ne.s32.totalorder %s198, %s200
      %p207 = scmp.eq.s32.totalorder %s22, 1
      %p208 = por %p206, %p207
      %p209 = scmp.ne.s32.totalorder %s200, %s201
      %p210 = scmp.eq.s32.totalorder %s22, 0
      %p211 = por %p209, %p210
      %p212 = scmp.ne.s32.totalorder %s200, %s201
      %p213 = scmp.eq.s32.totalorder %s23, 1
      %p214 = por %p212, %p213
      %p216 = scmp.ne.s32.totalorder %s201, %s215
      %p217 = scmp.eq.s32.totalorder %s23, 0
      %p218 = por %p216, %p217
      %s220 = sadd.s32 %s219, 1
      %p223 = scmp.eq.s32.totalorder %s17, 1
      %p224 = scmp.ne.s32.totalorder %s219, %s221
      %p225 = scmp.eq.s32.totalorder %s17, 0
      %p226 = por %p224, %p225
      %p227 = scmp.ne.s32.totalorder %s219, %s221
      %p228 = scmp.eq.s32.totalorder %s22, 1
      %p229 = por %p227, %p228
      %p230 = scmp.ne.s32.totalorder %s221, %s222
      %p231 = scmp.eq.s32.totalorder %s22, 0
      %p232 = por %p230, %p231
      %p233 = scmp.ne.s32.totalorder %s221, %s222
      %p234 = scmp.eq.s32.totalorder %s23, 1
      %p235 = por %p233, %p234
      %p237 = scmp.ne.s32.totalorder %s222, %s236
      %p238 = scmp.eq.s32.totalorder %s23, 0
      %p239 = por %p237, %p238
      %s240 = ssub.s32 %s17, %s24
      %p241 = scmp.eq.s32.totalorder %s240, 0
      %s243 = sadd.s32 %s242, 1
      %s244 = scalar_select %p241, %s242, %s243
      %p247 = pneg %p241
      %p248 = scmp.eq.s32.totalorder %s17, 1
      %p249 = por %p247, %p248
      %p250 = scmp.ne.s32.totalorder %s242, %s245
      %p251 = scmp.eq.s32.totalorder %s17, 0
      %p252 = por %p250, %p251
      %p253 = scmp.ne.s32.totalorder %s242, %s245
      %p254 = scmp.eq.s32.totalorder %s22, 1
      %p255 = por %p253, %p254
      %p256 = scmp.ne.s32.totalorder %s245, %s246
      %p257 = scmp.eq.s32.totalorder %s22, 0
      %p258 = por %p256, %p257
      %p259 = scmp.ne.s32.totalorder %s245, %s246
      %p260 = scmp.eq.s32.totalorder %s23, 1
      %p261 = por %p259, %p260
      %p263 = scmp.ne.s32.totalorder %s246, %s262
      %p264 = scmp.eq.s32.totalorder %s23, 0
      %p265 = por %p263, %p264
      %p266 = scmp.le.s32.totalorder 1, %s17
      %p267 = scmp.lt.s32.totalorder %s17, 3
      %p268 = pnand %p266, %p267
      %p269 = pneg %p268
      // Predicated region
      $region9: #{cell_forward.1} parent=5 // pred_check
        _
      $region10: #{cell_forward.1} parent=5 // pred_check_branch
        %271 = sbr.rel (%p268) target = $region12
      $region11: #{cell_forward.1} parent=5 // pred_region
        %s272 = ssub.s32 %s17, 1
        // Predicated region
        $region13: #{cell_forward.1} parent=11 // pred_check
          %p273 = pneg %p64
        $region14: #{cell_forward.1} parent=11 // pred_check_branch
          %275 = sbr.rel (%p273) target = $region16
        $region15: #{cell_forward.1} parent=11 // pred_region
          _
        $region16: #{cell_forward.1} parent=11 // pred_fallthru
          _
        // Predicated region
        $region17: #{cell_forward.1} parent=11 // pred_check
          %p276 = pneg %p85
        $region18: #{cell_forward.1} parent=11 // pred_check_branch
          %278 = sbr.rel (%p276) target = $region20
        $region19: #{cell_forward.1} parent=11 // pred_region
          _
        $region20: #{cell_forward.1} parent=11 // pred_fallthru
          _
        // Predicated region
        $region21: #{cell_forward.1} parent=11 // pred_check
          %p279 = pneg %p106
        $region22: #{cell_forward.1} parent=11 // pred_check_branch
          %281 = sbr.rel (%p279) target = $region24
        $region23: #{cell_forward.1} parent=11 // pred_region
          %s283 = ssub.s32 128, 128
          %284 = vsyncadd [#allocation7], %s283
          %s286 = sshll.u32 %s3, 4
          %s287 = int_to_ptr.vmem [resolvable:$true] %s286
          %289 = dma.vmem_to_smem %s287, 128, [#allocation6], [#allocation7]
        $region24: #{cell_forward.1} parent=11 // pred_fallthru
          _
        // Predicated region
        $region25: #{cell_forward.1} parent=11 // pred_check
          %p290 = pneg %p127
        $region26: #{cell_forward.1} parent=11 // pred_check_branch
          %292 = sbr.rel (%p290) target = $region28
        $region27: #{cell_forward.1} parent=11 // pred_region
          _
        $region28: #{cell_forward.1} parent=11 // pred_fallthru
          _
        // Predicated region
        $region29: #{cell_forward.1} parent=11 // pred_check
          %p293 = pneg %p148
        $region30: #{cell_forward.1} parent=11 // pred_check_branch
          %295 = sbr.rel (%p293) target = $region32
        $region31: #{cell_forward.1} parent=11 // pred_region
          _
        $region32: #{cell_forward.1} parent=11 // pred_fallthru
          _
        // Predicated region
        $region33: #{cell_forward.1} parent=11 // pred_check
          %p296 = pneg %p169
        $region34: #{cell_forward.1} parent=11 // pred_check_branch
          %298 = sbr.rel (%p296) target = $region36
        $region35: #{cell_forward.1} parent=11 // pred_region
          _
        $region36: #{cell_forward.1} parent=11 // pred_fallthru
          _
        // Predicated region
        $region37: #{cell_forward.1} parent=11 // pred_check
          %p299 = pneg %p190
        $region38: #{cell_forward.1} parent=11 // pred_check_branch
          %301 = sbr.rel (%p299) target = $region40
        $region39: #{cell_forward.1} parent=11 // pred_region
          _
        $region40: #{cell_forward.1} parent=11 // pred_fallthru
          _
        // Predicated region
        $region41: #{cell_forward.1} parent=11 // pred_check
          %p302 = pneg %p211
        $region42: #{cell_forward.1} parent=11 // pred_check_branch
          %304 = sbr.rel (%p302) target = $region44
        $region43: #{cell_forward.1} parent=11 // pred_region
          _
        $region44: #{cell_forward.1} parent=11 // pred_fallthru
          _
        // Predicated region
        $region45: #{cell_forward.1} parent=11 // pred_check
          %p305 = pneg %p232
        $region46: #{cell_forward.1} parent=11 // pred_check_branch
          %307 = sbr.rel (%p305) target = $region48
        $region47: #{cell_forward.1} parent=11 // pred_region
          _
        $region48: #{cell_forward.1} parent=11 // pred_fallthru
          _
      $region12: #{cell_forward.1} parent=5 // pred_fallthru
        _
      %p308 = scmp.lt.s32.totalorder %s17, 2
      // Predicated region
      $region49: #{cell_forward.1} parent=5 // pred_check
        %p309 = pneg %p308
      $region50: #{cell_forward.1} parent=5 // pred_check_branch
        %311 = sbr.rel (%p309) target = $region52
      $region51: #{cell_forward.1} parent=5 // pred_region
        // Predicated region
        $region53: #{cell_forward.1} parent=51 // pred_check
          %p312 = pneg %p37
        $region54: #{cell_forward.1} parent=51 // pred_check_branch
          %314 = sbr.rel (%p312) target = $region56
        $region55: #{cell_forward.1} parent=51 // pred_region
          %p315 = scmp.lt.s32.totalorder %s17, 1
          %s316 = scalar_select %p315, %s17, 1
          %s317 = smul.addr %s316, 32
          %s318 = smul.addr %s317, 8
          %s319 = scalar_lea.vmem %s0, %s318
        $region56: #{cell_forward.1} parent=51 // pred_fallthru
          _
      $region52: #{cell_forward.1} parent=5 // pred_fallthru
        _
      %p320 = scmp.le.s32.totalorder 1, %s17
      %p321 = scmp.lt.s32.totalorder %s17, 3
      %p322 = pnand %p320, %p321
      %p323 = pneg %p322
      // Predicated region
      $region57: #{cell_forward.1} parent=5 // pred_check
        _
      $region58: #{cell_forward.1} parent=5 // pred_check_branch
        %325 = sbr.rel (%p322) target = $region60
      $region59: #{cell_forward.1} parent=5 // pred_region
        %s326 = ssub.s32 %s17, 1
        // Predicated region
        $region61: #{cell_forward.1} parent=59 // pred_check
          %p327 = pneg %p106
        $region62: #{cell_forward.1} parent=59 // pred_check_branch
          %329 = sbr.rel (%p327) target = $region64
        $region63: #{cell_forward.1} parent=59 // pred_region
          %330 = dma.done [#allocation7], 128
        $region64: #{cell_forward.1} parent=59 // pred_fallthru
          _
        %331 = sfence
        %p332 = scmp.lt.s32.totalorder %s22, 1
        %s333 = scalar_select %p332, %s22, 1
        %s334 = smul.addr %s333, 32
        %s335 = smul.addr %s334, 8
        %s336 = scalar_lea.vmem %s0, %s335
        %p337 = pneg %p43
        %p338 = pneg %p40
        %p339 = pneg %p64
        %p340 = pneg %p61
        %p341 = pneg %p85
        %p342 = pneg %p82
        %p343 = pneg %p106
        %p344 = pneg %p103
        %p345 = pneg %p127
        %p346 = pneg %p124
        %p347 = pneg %p148
        %p348 = pneg %p145
        %p349 = pneg %p169
        %p350 = pneg %p166
        %p351 = pneg %p190
        %p352 = pneg %p187
        %p353 = pneg %p211
        %p354 = pneg %p208
        %p355 = pneg %p232
        %p356 = pneg %p229
        %p357 = pneg %p258
        %p358 = pneg %p255
        %p359 = scmp.lt.s32.totalorder %s22, 1
        %s360 = scalar_select %p359, %s22, 1
        %s361 = smul.addr %s360, 32
        %s362 = smul.addr %s361, 8
        %s363 = scalar_lea.vmem %s10, %s362
        %p364 = scmp.lt.s32.totalorder %s22, 1
        %s365 = scalar_select %p364, %s22, 1
        %s366 = smul.addr %s365, 32
        %s367 = smul.addr %s366, 8
        %s368 = scalar_lea.vmem %s0, %s367
        %p369 = scmp.lt.s32.totalorder %s22, 1
        %s370 = scalar_select %p369, %s22, 1
        %s371 = smul.addr %s370, 32
        %s372 = smul.addr %s371, 8
        %s373 = scalar_lea.vmem %s10, %s372
        %vm375 = vcmask 64512
        %376 = vst.msk [vmem:[#allocation3] sm:$0xff] %vm375, 0.0
        %377 = vst.msk [vmem:[#allocation3 + $0x8] sm:$0xff] %vm375, 0.0
        %vm378 = vcmask 58368
        %379 = vst.msk [vmem:[#allocation3 + $0x10] sm:$0x3] %vm378, 0.0
        %380 = vst.msk [vmem:[#allocation3 + $0x18] sm:$0xff] %vm375, 0.0
        %381 = vst.msk [vmem:[#allocation3 + $0x20] sm:$0xff] %vm375, 0.0
        %382 = vst.msk [vmem:[#allocation3 + $0x28] sm:$0x3] %vm378, 0.0
        %383 = vst.msk [vmem:[#allocation3 + $0x30] sm:$0xff] %vm375, 0.0
        %384 = vst.msk [vmem:[#allocation3 + $0x38] sm:$0xff] %vm375, 0.0
        %385 = vst.msk [vmem:[#allocation3 + $0x40] sm:$0x3] %vm378, 0.0
        %386 = vst.msk [vmem:[#allocation3 + $0x48] sm:$0xff] %vm375, 0.0
        %387 = vst.msk [vmem:[#allocation3 + $0x50] sm:$0xff] %vm375, 0.0
        %388 = vst.msk [vmem:[#allocation3 + $0x58] sm:$0x3] %vm378, 0.0
        %389 = vst.msk [vmem:[#allocation3 + $0x60] sm:$0xff] %vm375, 0.0
        %390 = vst.msk [vmem:[#allocation3 + $0x68] sm:$0xff] %vm375, 0.0
        %391 = vst.msk [vmem:[#allocation3 + $0x70] sm:$0x3] %vm378, 0.0
        %392 = vst.msk [vmem:[#allocation3 + $0x78] sm:$0xff] %vm375, 0.0
        %393 = vst.msk [vmem:[#allocation3 + $0x80] sm:$0xff] %vm375, 0.0
        %394 = vst.msk [vmem:[#allocation3 + $0x88] sm:$0x3] %vm378, 0.0
        %395 = vst.msk [vmem:[#allocation3 + $0x90] sm:$0xff] %vm375, 0.0
        %396 = vst.msk [vmem:[#allocation3 + $0x98] sm:$0xff] %vm375, 0.0
        %397 = vst.msk [vmem:[#allocation3 + $0xa0] sm:$0x3] %vm378, 0.0
        %398 = vst.msk [vmem:[#allocation3 + $0xa8] sm:$0xff] %vm375, 0.0
        %399 = vst.msk [vmem:[#allocation3 + $0xb0] sm:$0xff] %vm375, 0.0
        %400 = vst.msk [vmem:[#allocation3 + $0xb8] sm:$0x3] %vm378, 0.0
        %401 = vst.msk [vmem:[#allocation3 + $0xc0] sm:$0xff] %vm375, 0.0
        %402 = vst.msk [vmem:[#allocation3 + $0xc8] sm:$0xff] %vm375, 0.0
        %403 = vst.msk [vmem:[#allocation3 + $0xd0] sm:$0x3] %vm378, 0.0
        %404 = vst.msk [vmem:[#allocation3 + $0xd8] sm:$0xff] %vm375, 0.0
        %405 = vst.msk [vmem:[#allocation3 + $0xe0] sm:$0xff] %vm375, 0.0
        %406 = vst.msk [vmem:[#allocation3 + $0xe8] sm:$0x3] %vm378, 0.0
        %407 = vst.msk [vmem:[#allocation3 + $0xf0] sm:$0xff] %vm375, 0.0
        %408 = vst.msk [vmem:[#allocation3 + $0xf8] sm:$0xff] %vm375, 0.0
        %409 = vst.msk [vmem:[#allocation3 + $0x100] sm:$0x3] %vm378, 0.0
        %410 = vst.msk [vmem:[#allocation3 + $0x108] sm:$0xff] %vm375, 0.0
        %411 = vst.msk [vmem:[#allocation3 + $0x110] sm:$0xff] %vm375, 0.0
        %412 = vst.msk [vmem:[#allocation3 + $0x118] sm:$0x3] %vm378, 0.0
        %413 = vst.msk [vmem:[#allocation3 + $0x120] sm:$0xff] %vm375, 0.0
        %414 = vst.msk [vmem:[#allocation3 + $0x128] sm:$0xff] %vm375, 0.0
        %415 = vst.msk [vmem:[#allocation3 + $0x130] sm:$0x3] %vm378, 0.0
        %416 = vst.msk [vmem:[#allocation3 + $0x138] sm:$0xff] %vm375, 0.0
        %417 = vst.msk [vmem:[#allocation3 + $0x140] sm:$0xff] %vm375, 0.0
        %418 = vst.msk [vmem:[#allocation3 + $0x148] sm:$0x3] %vm378, 0.0
        %419 = vst.msk [vmem:[#allocation3 + $0x150] sm:$0xff] %vm375, 0.0
        %420 = vst.msk [vmem:[#allocation3 + $0x158] sm:$0xff] %vm375, 0.0
        %421 = vst.msk [vmem:[#allocation3 + $0x160] sm:$0x3] %vm378, 0.0
        %422 = vst.msk [vmem:[#allocation3 + $0x168] sm:$0xff] %vm375, 0.0
        %423 = vst.msk [vmem:[#allocation3 + $0x170] sm:$0xff] %vm375, 0.0
        %424 = vst.msk [vmem:[#allocation3 + $0x178] sm:$0x3] %vm378, 0.0
        %425 = vst.msk [vmem:[#allocation3 + $0x180] sm:$0xff] %vm375, 0.0
        %426 = vst.msk [vmem:[#allocation3 + $0x188] sm:$0xff] %vm375, 0.0
        %427 = vst.msk [vmem:[#allocation3 + $0x190] sm:$0x3] %vm378, 0.0
        %428 = vst.msk [vmem:[#allocation3 + $0x198] sm:$0xff] %vm375, 0.0
        %429 = vst.msk [vmem:[#allocation3 + $0x1a0] sm:$0xff] %vm375, 0.0
        %430 = vst.msk [vmem:[#allocation3 + $0x1a8] sm:$0x3] %vm378, 0.0
        %431 = vst.msk [vmem:[#allocation4] sm:$0xff] %vm375, 0.0
        %432 = vst.msk [vmem:[#allocation4 + $0x8] sm:$0xff] %vm375, 0.0
        %433 = vst.msk [vmem:[#allocation4 + $0x10] sm:$0x3] %vm378, 0.0
        %434 = vst.msk [vmem:[#allocation4 + $0x18] sm:$0xff] %vm375, 0.0
        %435 = vst.msk [vmem:[#allocation4 + $0x20] sm:$0xff] %vm375, 0.0
        %436 = vst.msk [vmem:[#allocation4 + $0x28] sm:$0x3] %vm378, 0.0
        %437 = vst.msk [vmem:[#allocation4 + $0x30] sm:$0xff] %vm375, 0.0
        %438 = vst.msk [vmem:[#allocation4 + $0x38] sm:$0xff] %vm375, 0.0
        %439 = vst.msk [vmem:[#allocation4 + $0x40] sm:$0x3] %vm378, 0.0
        %440 = vst.msk [vmem:[#allocation4 + $0x48] sm:$0xff] %vm375, 0.0
        %441 = vst.msk [vmem:[#allocation4 + $0x50] sm:$0xff] %vm375, 0.0
        %442 = vst.msk [vmem:[#allocation4 + $0x58] sm:$0x3] %vm378, 0.0
        %443 = vst.msk [vmem:[#allocation4 + $0x60] sm:$0xff] %vm375, 0.0
        %444 = vst.msk [vmem:[#allocation4 + $0x68] sm:$0xff] %vm375, 0.0
        %445 = vst.msk [vmem:[#allocation4 + $0x70] sm:$0x3] %vm378, 0.0
        %446 = vst.msk [vmem:[#allocation4 + $0x78] sm:$0xff] %vm375, 0.0
        %447 = vst.msk [vmem:[#allocation4 + $0x80] sm:$0xff] %vm375, 0.0
        %448 = vst.msk [vmem:[#allocation4 + $0x88] sm:$0x3] %vm378, 0.0
        %449 = vst.msk [vmem:[#allocation4 + $0x90] sm:$0xff] %vm375, 0.0
        %450 = vst.msk [vmem:[#allocation4 + $0x98] sm:$0xff] %vm375, 0.0
        %451 = vst.msk [vmem:[#allocation4 + $0xa0] sm:$0x3] %vm378, 0.0
        %452 = vst.msk [vmem:[#allocation4 + $0xa8] sm:$0xff] %vm375, 0.0
        %453 = vst.msk [vmem:[#allocation4 + $0xb0] sm:$0xff] %vm375, 0.0
        %454 = vst.msk [vmem:[#allocation4 + $0xb8] sm:$0x3] %vm378, 0.0
        %455 = vst.msk [vmem:[#allocation4 + $0xc0] sm:$0xff] %vm375, 0.0
        %456 = vst.msk [vmem:[#allocation4 + $0xc8] sm:$0xff] %vm375, 0.0
        %457 = vst.msk [vmem:[#allocation4 + $0xd0] sm:$0x3] %vm378, 0.0
        %458 = vst.msk [vmem:[#allocation4 + $0xd8] sm:$0xff] %vm375, 0.0
        %459 = vst.msk [vmem:[#allocation4 + $0xe0] sm:$0xff] %vm375, 0.0
        %460 = vst.msk [vmem:[#allocation4 + $0xe8] sm:$0x3] %vm378, 0.0
        %461 = vst.msk [vmem:[#allocation4 + $0xf0] sm:$0xff] %vm375, 0.0
        %462 = vst.msk [vmem:[#allocation4 + $0xf8] sm:$0xff] %vm375, 0.0
        %463 = vst.msk [vmem:[#allocation4 + $0x100] sm:$0x3] %vm378, 0.0
        %464 = vst.msk [vmem:[#allocation4 + $0x108] sm:$0xff] %vm375, 0.0
        %465 = vst.msk [vmem:[#allocation4 + $0x110] sm:$0xff] %vm375, 0.0
        %466 = vst.msk [vmem:[#allocation4 + $0x118] sm:$0x3] %vm378, 0.0
        %467 = vst.msk [vmem:[#allocation4 + $0x120] sm:$0xff] %vm375, 0.0
        %468 = vst.msk [vmem:[#allocation4 + $0x128] sm:$0xff] %vm375, 0.0
        %469 = vst.msk [vmem:[#allocation4 + $0x130] sm:$0x3] %vm378, 0.0
        %470 = vst.msk [vmem:[#allocation4 + $0x138] sm:$0xff] %vm375, 0.0
        %471 = vst.msk [vmem:[#allocation4 + $0x140] sm:$0xff] %vm375, 0.0
        %472 = vst.msk [vmem:[#allocation4 + $0x148] sm:$0x3] %vm378, 0.0
        %473 = vst.msk [vmem:[#allocation4 + $0x150] sm:$0xff] %vm375, 0.0
        %474 = vst.msk [vmem:[#allocation4 + $0x158] sm:$0xff] %vm375, 0.0
        %475 = vst.msk [vmem:[#allocation4 + $0x160] sm:$0x3] %vm378, 0.0
        %476 = vst.msk [vmem:[#allocation4 + $0x168] sm:$0xff] %vm375, 0.0
        %477 = vst.msk [vmem:[#allocation4 + $0x170] sm:$0xff] %vm375, 0.0
        %478 = vst.msk [vmem:[#allocation4 + $0x178] sm:$0x3] %vm378, 0.0
        %479 = vst.msk [vmem:[#allocation4 + $0x180] sm:$0xff] %vm375, 0.0
        %480 = vst.msk [vmem:[#allocation4 + $0x188] sm:$0xff] %vm375, 0.0
        %481 = vst.msk [vmem:[#allocation4 + $0x190] sm:$0x3] %vm378, 0.0
        %482 = vst.msk [vmem:[#allocation4 + $0x198] sm:$0xff] %vm375, 0.0
        %483 = vst.msk [vmem:[#allocation4 + $0x1a0] sm:$0xff] %vm375, 0.0
        %484 = vst.msk [vmem:[#allocation4 + $0x1a8] sm:$0x3] %vm378, 0.0
        %485 = vst.msk [vmem:[#allocation5] sm:$0xff] %vm375, 0.0
        %486 = vst.msk [vmem:[#allocation5 + $0x8] sm:$0xff] %vm375, 0.0
        %487 = vst.msk [vmem:[#allocation5 + $0x10] sm:$0x3] %vm378, 0.0
        %488 = vst.msk [vmem:[#allocation5 + $0x18] sm:$0xff] %vm375, 0.0
        %489 = vst.msk [vmem:[#allocation5 + $0x20] sm:$0xff] %vm375, 0.0
        %490 = vst.msk [vmem:[#allocation5 + $0x28] sm:$0x3] %vm378, 0.0
        %491 = vst.msk [vmem:[#allocation5 + $0x30] sm:$0xff] %vm375, 0.0
        %492 = vst.msk [vmem:[#allocation5 + $0x38] sm:$0xff] %vm375, 0.0
        %493 = vst.msk [vmem:[#allocation5 + $0x40] sm:$0x3] %vm378, 0.0
        %494 = vst.msk [vmem:[#allocation5 + $0x48] sm:$0xff] %vm375, 0.0
        %495 = vst.msk [vmem:[#allocation5 + $0x50] sm:$0xff] %vm375, 0.0
        %496 = vst.msk [vmem:[#allocation5 + $0x58] sm:$0x3] %vm378, 0.0
        %497 = vst.msk [vmem:[#allocation5 + $0x60] sm:$0xff] %vm375, 0.0
        %498 = vst.msk [vmem:[#allocation5 + $0x68] sm:$0xff] %vm375, 0.0
        %499 = vst.msk [vmem:[#allocation5 + $0x70] sm:$0x3] %vm378, 0.0
        %500 = vst.msk [vmem:[#allocation5 + $0x78] sm:$0xff] %vm375, 0.0
        %501 = vst.msk [vmem:[#allocation5 + $0x80] sm:$0xff] %vm375, 0.0
        %502 = vst.msk [vmem:[#allocation5 + $0x88] sm:$0x3] %vm378, 0.0
        %503 = vst.msk [vmem:[#allocation5 + $0x90] sm:$0xff] %vm375, 0.0
        %504 = vst.msk [vmem:[#allocation5 + $0x98] sm:$0xff] %vm375, 0.0
        %505 = vst.msk [vmem:[#allocation5 + $0xa0] sm:$0x3] %vm378, 0.0
        %506 = vst.msk [vmem:[#allocation5 + $0xa8] sm:$0xff] %vm375, 0.0
        %507 = vst.msk [vmem:[#allocation5 + $0xb0] sm:$0xff] %vm375, 0.0
        %508 = vst.msk [vmem:[#allocation5 + $0xb8] sm:$0x3] %vm378, 0.0
        %509 = vst.msk [vmem:[#allocation5 + $0xc0] sm:$0xff] %vm375, 0.0
        %510 = vst.msk [vmem:[#allocation5 + $0xc8] sm:$0xff] %vm375, 0.0
        %511 = vst.msk [vmem:[#allocation5 + $0xd0] sm:$0x3] %vm378, 0.0
        %512 = vst.msk [vmem:[#allocation5 + $0xd8] sm:$0xff] %vm375, 0.0
        %513 = vst.msk [vmem:[#allocation5 + $0xe0] sm:$0xff] %vm375, 0.0
        %514 = vst.msk [vmem:[#allocation5 + $0xe8] sm:$0x3] %vm378, 0.0
        %515 = vst.msk [vmem:[#allocation5 + $0xf0] sm:$0xff] %vm375, 0.0
        %516 = vst.msk [vmem:[#allocation5 + $0xf8] sm:$0xff] %vm375, 0.0
        %517 = vst.msk [vmem:[#allocation5 + $0x100] sm:$0x3] %vm378, 0.0
        %518 = vst.msk [vmem:[#allocation5 + $0x108] sm:$0xff] %vm375, 0.0
        %519 = vst.msk [vmem:[#allocation5 + $0x110] sm:$0xff] %vm375, 0.0
        %520 = vst.msk [vmem:[#allocation5 + $0x118] sm:$0x3] %vm378, 0.0
        %521 = vst.msk [vmem:[#allocation5 + $0x120] sm:$0xff] %vm375, 0.0
        %522 = vst.msk [vmem:[#allocation5 + $0x128] sm:$0xff] %vm375, 0.0
        %523 = vst.msk [vmem:[#allocation5 + $0x130] sm:$0x3] %vm378, 0.0
        %524 = vst.msk [vmem:[#allocation5 + $0x138] sm:$0xff] %vm375, 0.0
        %525 = vst.msk [vmem:[#allocation5 + $0x140] sm:$0xff] %vm375, 0.0
        %526 = vst.msk [vmem:[#allocation5 + $0x148] sm:$0x3] %vm378, 0.0
        %527 = vst.msk [vmem:[#allocation5 + $0x150] sm:$0xff] %vm375, 0.0
        %528 = vst.msk [vmem:[#allocation5 + $0x158] sm:$0xff] %vm375, 0.0
        %529 = vst.msk [vmem:[#allocation5 + $0x160] sm:$0x3] %vm378, 0.0
        %530 = vst.msk [vmem:[#allocation5 + $0x168] sm:$0xff] %vm375, 0.0
        %531 = vst.msk [vmem:[#allocation5 + $0x170] sm:$0xff] %vm375, 0.0
        %532 = vst.msk [vmem:[#allocation5 + $0x178] sm:$0x3] %vm378, 0.0
        %533 = vst.msk [vmem:[#allocation5 + $0x180] sm:$0xff] %vm375, 0.0
        %534 = vst.msk [vmem:[#allocation5 + $0x188] sm:$0xff] %vm375, 0.0
        %535 = vst.msk [vmem:[#allocation5 + $0x190] sm:$0x3] %vm378, 0.0
        %536 = vst.msk [vmem:[#allocation5 + $0x198] sm:$0xff] %vm375, 0.0
        %537 = vst.msk [vmem:[#allocation5 + $0x1a0] sm:$0xff] %vm375, 0.0
        %538 = vst.msk [vmem:[#allocation5 + $0x1a8] sm:$0x3] %vm378, 0.0
        %539 = vst.msk [vmem:[%s373] sm:$0xff] %vm375, 0.0
        %540 = vst.msk [vmem:[%s373 + $0x8] sm:$0xff] %vm375, 0.0
        %541 = vst.msk [vmem:[%s373 + $0x10] sm:$0xff] %vm375, 0.0
        %542 = vst.msk [vmem:[%s373 + $0x18] sm:$0xff] %vm375, 0.0
        %543 = vst.msk [vmem:[%s373 + $0x20] sm:$0xff] %vm375, 0.0
        %544 = vst.msk [vmem:[%s373 + $0x28] sm:$0xff] %vm375, 0.0
        %545 = vst.msk [vmem:[%s373 + $0x30] sm:$0xff] %vm375, 0.0
        %546 = vst.msk [vmem:[%s373 + $0x38] sm:$0xff] %vm375, 0.0
        %547 = vst.msk [vmem:[%s373 + $0x40] sm:$0xff] %vm375, 0.0
        %548 = vst.msk [vmem:[%s373 + $0x48] sm:$0xff] %vm375, 0.0
        %549 = vst.msk [vmem:[%s373 + $0x50] sm:$0xff] %vm375, 0.0
        %550 = vst.msk [vmem:[%s373 + $0x58] sm:$0xff] %vm375, 0.0
        %551 = vst.msk [vmem:[%s373 + $0x60] sm:$0xff] %vm375, 0.0
        %552 = vst.msk [vmem:[%s373 + $0x68] sm:$0xff] %vm375, 0.0
        %553 = vst.msk [vmem:[%s373 + $0x70] sm:$0xff] %vm375, 0.0
        %554 = vst.msk [vmem:[%s373 + $0x78] sm:$0xff] %vm375, 0.0
        %555 = vst.msk [vmem:[%s373 + $0x80] sm:$0xff] %vm375, 0.0
        %556 = vst.msk [vmem:[%s373 + $0x88] sm:$0xff] %vm375, 0.0
        %557 = vst.msk [vmem:[%s373 + $0x90] sm:$0xff] %vm375, 0.0
        %558 = vst.msk [vmem:[%s373 + $0x98] sm:$0xff] %vm375, 0.0
        %559 = vst.msk [vmem:[%s373 + $0xa0] sm:$0xff] %vm375, 0.0
        %560 = vst.msk [vmem:[%s373 + $0xa8] sm:$0xff] %vm375, 0.0
        %561 = vst.msk [vmem:[%s373 + $0xb0] sm:$0xff] %vm375, 0.0
        %562 = vst.msk [vmem:[%s373 + $0xb8] sm:$0xff] %vm375, 0.0
        %563 = vst.msk [vmem:[%s373 + $0xc0] sm:$0xff] %vm375, 0.0
        %564 = vst.msk [vmem:[%s373 + $0xc8] sm:$0xff] %vm375, 0.0
        %565 = vst.msk [vmem:[%s373 + $0xd0] sm:$0xff] %vm375, 0.0
        %566 = vst.msk [vmem:[%s373 + $0xd8] sm:$0xff] %vm375, 0.0
        %567 = vst.msk [vmem:[%s373 + $0xe0] sm:$0xff] %vm375, 0.0
        %568 = vst.msk [vmem:[%s373 + $0xe8] sm:$0xff] %vm375, 0.0
        %569 = vst.msk [vmem:[%s373 + $0xf0] sm:$0xff] %vm375, 0.0
        %570 = vst.msk [vmem:[%s373 + $0xf8] sm:$0xff] %vm375, 0.0
        %v571 = vlaneseq
        %v572 = vshrl.u32 %v571, 7
        %v573 = vadd.s32 %v572, 8
        %v574 = vcvt.s32.f32 1
        %v575 = vcvt.s32.f32 0
        %v576 = vsub.f32 3.0, %v574
        %v577 = vsub.f32 3.0, %v575
        %v578 = vsub.f32 %v576, %v575
        %v579 = vsub.f32 %v577, %v575
        %v580 = vsub.f32 %v577, %v574
        %vm581 = vcmp.eq.s32.totalorder %v572, 0
        %vm582 = vcmp.eq.s32.totalorder %v573, 0
        %v583 = vsel %vm581, 1, 0
        %v584 = vsel %vm582, 1, 0
        %v585 = vcvt.s32.f32 %v583
        %v586 = vcvt.s32.f32 %v584
        %v587 = vsub.f32 3.0, %v585
        %v588 = vsub.f32 3.0, %v586
        %vm589 = vcmp.eq.s32.totalorder %v572, 15
        %vm590 = vcmp.eq.s32.totalorder %v573, 15
        %v591 = vsel %vm589, 1, 0
        %v592 = vsel %vm590, 1, 0
        %v593 = vcvt.s32.f32 %v591
        %v594 = vcvt.s32.f32 %v592
        %v595 = vsub.f32 %v587, %v593
        %v596 = vsub.f32 %v588, %v594
        %v597 = vmul.f32 %v578, %v595
        %v598 = vmul.f32 %v578, %v596
        %v599 = vmul.f32 %v579, %v595
        %v600 = vmul.f32 %v579, %v596
        %v601 = vmul.f32 %v580, %v595
        %v602 = vmul.f32 %v580, %v596
        %v603 = vrcp.pop %v597
        %v604 = vmul.f32 1.0, %v603
        %v605 = vrcp.pop %v598
        %v606 = vmul.f32 1.0, %v605
        %v607 = vrcp.pop %v599
        %v608 = vmul.f32 1.0, %v607
        %v609 = vrcp.pop %v600
        %v610 = vmul.f32 1.0, %v609
        %v611 = vrcp.pop %v601
        %v612 = vmul.f32 1.0, %v611
        %v613 = vrcp.pop %v602
        %v614 = vmul.f32 1.0, %v613
        %v615 = vld [vmem:[%s368] sm:$0xff]
        %v616 = vld [vmem:[%s368 + $0x8] sm:$0xff]
        %v617 = vld [vmem:[%s368 + $0x10] sm:$0xff]
        %v618 = vld [vmem:[%s368 + $0x18] sm:$0xff]
        %v619 = vld [vmem:[%s368 + $0x20] sm:$0xff]
        %v620 = vld [vmem:[%s368 + $0x28] sm:$0xff]
        %v621 = vld [vmem:[%s368 + $0x30] sm:$0xff]
        %v622 = vld [vmem:[%s368 + $0x38] sm:$0xff]
        %v623 = vld [vmem:[%s368 + $0x40] sm:$0xff]
        %v624 = vld [vmem:[%s368 + $0x48] sm:$0xff]
        %v625 = vld [vmem:[%s368 + $0x50] sm:$0xff]
        %v626 = vld [vmem:[%s368 + $0x58] sm:$0xff]
        %v627 = vld [vmem:[%s368 + $0x60] sm:$0xff]
        %v628 = vld [vmem:[%s368 + $0x68] sm:$0xff]
        %v629 = vld [vmem:[%s368 + $0x70] sm:$0xff]
        %v630 = vld [vmem:[%s368 + $0x78] sm:$0xff]
        %v631 = vld [vmem:[%s368 + $0x80] sm:$0xff]
        %v632 = vld [vmem:[%s368 + $0x88] sm:$0xff]
        %v633 = vld [vmem:[%s368 + $0x90] sm:$0xff]
        %v634 = vld [vmem:[%s368 + $0x98] sm:$0xff]
        %v635 = vld [vmem:[%s368 + $0xa0] sm:$0xff]
        %v636 = vld [vmem:[%s368 + $0xa8] sm:$0xff]
        %v637 = vld [vmem:[%s368 + $0xb0] sm:$0xff]
        %v638 = vld [vmem:[%s368 + $0xb8] sm:$0xff]
        %v639 = vld [vmem:[%s368 + $0xc0] sm:$0xff]
        %v640 = vld [vmem:[%s368 + $0xc8] sm:$0xff]
        %v641 = vld [vmem:[%s368 + $0xd0] sm:$0xff]
        %v642 = vld [vmem:[%s368 + $0xd8] sm:$0xff]
        %v643 = vld [vmem:[%s368 + $0xe0] sm:$0xff]
        %v644 = vld [vmem:[%s368 + $0xe8] sm:$0xff]
        %v645 = vld [vmem:[%s368 + $0xf0] sm:$0xff]
        %v646 = vld [vmem:[%s368 + $0xf8] sm:$0xff]
        %v647 = vmax.f32 %v615, 0.0
        %v648 = vmax.f32 %v616, 0.0
        %v649 = vmax.f32 %v617, 0.0
        %v650 = vmax.f32 %v618, 0.0
        %v651 = vmax.f32 %v619, 0.0
        %v652 = vmax.f32 %v620, 0.0
        %v653 = vmax.f32 %v621, 0.0
        %v654 = vmax.f32 %v622, 0.0
        %v655 = vmax.f32 %v623, 0.0
        %v656 = vmax.f32 %v624, 0.0
        %v657 = vmax.f32 %v625, 0.0
        %v658 = vmax.f32 %v626, 0.0
        %v659 = vmax.f32 %v627, 0.0
        %v660 = vmax.f32 %v628, 0.0
        %v661 = vmax.f32 %v629, 0.0
        %v662 = vmax.f32 %v630, 0.0
        %v663 = vmax.f32 %v631, 0.0
        %v664 = vmax.f32 %v632, 0.0
        %v665 = vmax.f32 %v633, 0.0
        %v666 = vmax.f32 %v634, 0.0
        %v667 = vmax.f32 %v635, 0.0
        %v668 = vmax.f32 %v636, 0.0
        %v669 = vmax.f32 %v637, 0.0
        %v670 = vmax.f32 %v638, 0.0
        %v671 = vmax.f32 %v639, 0.0
        %v672 = vmax.f32 %v640, 0.0
        %v673 = vmax.f32 %v641, 0.0
        %v674 = vmax.f32 %v642, 0.0
        %v675 = vmax.f32 %v643, 0.0
        %v676 = vmax.f32 %v644, 0.0
        %v677 = vmax.f32 %v645, 0.0
        %v678 = vmax.f32 %v646, 0.0
        %v679 = vpack.c.bf16 %v648, %v647
        %v680 = vpack.c.bf16 %v650, %v649
        %v681 = vpack.c.bf16 %v652, %v651
        %v682 = vpack.c.bf16 %v654, %v653
        %v683 = vpack.c.bf16 %v656, %v655
        %v684 = vpack.c.bf16 %v658, %v657
        %v685 = vpack.c.bf16 %v660, %v659
        %v686 = vpack.c.bf16 %v662, %v661
        %v687 = vpack.c.bf16 %v664, %v663
        %v688 = vpack.c.bf16 %v666, %v665
        %v689 = vpack.c.bf16 %v668, %v667
        %v690 = vpack.c.bf16 %v670, %v669
        %v691 = vpack.c.bf16 %v672, %v671
        %v692 = vpack.c.bf16 %v674, %v673
        %v693 = vpack.c.bf16 %v676, %v675
        %v694 = vpack.c.bf16 %v678, %v677
        %v695 = vld [vmem:[%s1] sm:$0xf]
        %v696 = vld [vmem:[%s2] sm:$0x1]
        %v698 = vlaneseq
        %v699 = vshrl.u32 %v698, 7
        %v700 = vsub.s32 0, %v699
        %v701 = vrot.slane %v696, %v700
        %v704 = vsel %vm375, %v679, 0
        %v707 = vsel %vm375, %v680, 0
        %v710 = vsel %vm375, %v681, 0
        %v713 = vsel %vm375, %v682, 0
        %v716 = vsel %vm375, %v683, 0
        %v719 = vsel %vm375, %v684, 0
        %v722 = vsel %vm375, %v685, 0
        %v725 = vsel %vm375, %v686, 0
        %v728 = vsel %vm375, %v687, 0
        %v731 = vsel %vm375, %v688, 0
        %v734 = vsel %vm375, %v689, 0
        %v737 = vsel %vm375, %v690, 0
        %v740 = vsel %vm375, %v691, 0
        %v743 = vsel %vm375, %v692, 0
        %v746 = vsel %vm375, %v693, 0
        %v749 = vsel %vm375, %v694, 0
        %vm751 = vcmask 1043456
        %v753 = vsel %vm751, %v695, 0
        %755 = vmatprep.subr.bf16.mxu0 0
        %756 = vmatpush1.bf16.msra.mxu0 %v753
        %757 = vmatprep.subr.bf16.mxu0 0
        %758 = vmatpush1.bf16.msra.mxu0 0
        %759 = vmatprep.subr.bf16.mxu0 0
        %760 = vmatpush1.bf16.msra.mxu0 0
        %761 = vmatprep.subr.bf16.mxu0 0
        %762 = vmatpush1.bf16.msra.mxu0 0
        %763 = vmatprep.subr.bf16.mxu0 0
        %764 = vmatpush1.bf16.msra.mxu0 0
        %765 = vmatprep.subr.bf16.mxu0 0
        %766 = vmatpush1.bf16.msra.mxu0 0
        %767 = vmatprep.subr.bf16.mxu0 0
        %768 = vmatpush1.bf16.msra.mxu0 0
        %769 = vmatprep.subr.bf16.mxu0 0
        %770 = vmatpush1.bf16.msra.mxu0 0
        %771 = vmatprep.subr.bf16.mxu0 0
        %772 = vmatpush1.bf16.msra.mxu0 0
        %773 = vmatprep.subr.bf16.mxu0 0
        %774 = vmatpush1.bf16.msra.mxu0 0
        %775 = vmatprep.subr.bf16.mxu0 0
        %776 = vmatpush1.bf16.msra.mxu0 0
        %777 = vmatprep.subr.bf16.mxu0 0
        %778 = vmatpush1.bf16.msra.mxu0 0
        %779 = vmatprep.subr.bf16.mxu0 0
        %780 = vmatpush1.bf16.msra.mxu0 0
        %781 = vmatprep.subr.bf16.mxu0 0
        %782 = vmatpush1.bf16.msra.mxu0 0
        %783 = vmatprep.subr.bf16.mxu0 0
        %784 = vmatpush1.bf16.msra.mxu0 0
        %785 = vmatprep.subr.bf16.mxu0 0
        %786 = vmatpush1.bf16.msra.mxu0 0
        %787 = vmatprep.mubr.bf16.mxu0 0
        %788 = vmatmul.mubr.bf16.gmra.mrb[0].mxu0 %v704
        %v789 = vpop.f32.mrb[0].mxu0
        %v790 = vadd.f32 %v701, %v789
        %v791 = vpop.f32.mrb[0].mxu0
        %v792 = vpop.f32.mrb[0].mxu0
        %v793 = vadd.f32 %v701, %v792
        %v794 = vpop.f32.mrb[0].mxu0
        %795 = vmatprep.mubr.bf16.mxu0 0
        %796 = vmatmul.mubr.bf16.gmra.mrb[0].mxu0 %v707
        %v797 = vpop.f32.mrb[0].mxu0
        %v798 = vadd.f32 %v701, %v797
        %v799 = vpop.f32.mrb[0].mxu0
        %v800 = vpop.f32.mrb[0].mxu0
        %v801 = vadd.f32 %v701, %v800
        %v802 = vpop.f32.mrb[0].mxu0
        %803 = vmatprep.mubr.bf16.mxu0 0
        %804 = vmatmul.mubr.bf16.gmra.mrb[0].mxu0 %v710
        %v805 = vpop.f32.mrb[0].mxu0
        %v806 = vadd.f32 %v701, %v805
        %v807 = vpop.f32.mrb[0].mxu0
        %v808 = vpop.f32.mrb[0].mxu0
        %v809 = vadd.f32 %v701, %v808
        %v810 = vpop.f32.mrb[0].mxu0
        %811 = vmatprep.mubr.bf16.mxu0 0
        %812 = vmatmul.mubr.bf16.gmra.mrb[0].mxu0 %v713
        %v813 = vpop.f32.mrb[0].mxu0
        %v814 = vadd.f32 %v701, %v813
        %v815 = vpop.f32.mrb[0].mxu0
        %v816 = vpop.f32.mrb[0].mxu0
        %v817 = vadd.f32 %v701, %v816
        %v818 = vpop.f32.mrb[0].mxu0
        %819 = vmatprep.mubr.bf16.mxu0 0
        %820 = vmatmul.mubr.bf16.gmra.mrb[0].mxu0 %v716
        %v821 = vpop.f32.mrb[0].mxu0
        %v822 = vadd.f32 %v701, %v821
        %v823 = vpop.f32.mrb[0].mxu0
        %v824 = vpop.f32.mrb[0].mxu0
        %v825 = vadd.f32 %v701, %v824
        %v826 = vpop.f32.mrb[0].mxu0
        %827 = vmatprep.mubr.bf16.mxu0 0
        %828 = vmatmul.mubr.bf16.gmra.mrb[0].mxu0 %v719
        %v829 = vpop.f32.mrb[0].mxu0
        %v830 = vadd.f32 %v701, %v829
        %v831 = vpop.f32.mrb[0].mxu0
        %v832 = vpop.f32.mrb[0].mxu0
        %v833 = vadd.f32 %v701, %v832
        %v834 = vpop.f32.mrb[0].mxu0
        %835 = vmatprep.mubr.bf16.mxu0 0
        %836 = vmatmul.mubr.bf16.gmra.mrb[0].mxu0 %v722
        %v837 = vpop.f32.mrb[0].mxu0
        %v838 = vadd.f32 %v701, %v837
        %v839 = vpop.f32.mrb[0].mxu0
        %v840 = vpop.f32.mrb[0].mxu0
        %v841 = vadd.f32 %v701, %v840
        %v842 = vpop.f32.mrb[0].mxu0
        %843 = vmatprep.mubr.bf16.mxu0 0
        %844 = vmatmul.mubr.bf16.gmra.mrb[0].mxu0 %v725
        %v845 = vpop.f32.mrb[0].mxu0
        %v846 = vadd.f32 %v701, %v845
        %v847 = vpop.f32.mrb[0].mxu0
        %v848 = vpop.f32.mrb[0].mxu0
        %v849 = vadd.f32 %v701, %v848
        %v850 = vpop.f32.mrb[0].mxu0
        %851 = vmatprep.mubr.bf16.mxu0 0
        %852 = vmatmul.mubr.bf16.gmra.mrb[0].mxu0 %v728
        %v853 = vpop.f32.mrb[0].mxu0
        %v854 = vadd.f32 %v701, %v853
        %v855 = vpop.f32.mrb[0].mxu0
        %v856 = vpop.f32.mrb[0].mxu0
        %v857 = vadd.f32 %v701, %v856
        %v858 = vpop.f32.mrb[0].mxu0
        %859 = vmatprep.mubr.bf16.mxu0 0
        %860 = vmatmul.mubr.bf16.gmra.mrb[0].mxu0 %v731
        %v861 = vpop.f32.mrb[0].mxu0
        %v862 = vadd.f32 %v701, %v861
        %v863 = vpop.f32.mrb[0].mxu0
        %v864 = vpop.f32.mrb[0].mxu0
        %v865 = vadd.f32 %v701, %v864
        %v866 = vpop.f32.mrb[0].mxu0
        %867 = vmatprep.mubr.bf16.mxu0 0
        %868 = vmatmul.mubr.bf16.gmra.mrb[0].mxu0 %v734
        %v869 = vpop.f32.mrb[0].mxu0
        %v870 = vadd.f32 %v701, %v869
        %v871 = vpop.f32.mrb[0].mxu0
        %v872 = vpop.f32.mrb[0].mxu0
        %v873 = vadd.f32 %v701, %v872
        %v874 = vpop.f32.mrb[0].mxu0
        %875 = vmatprep.mubr.bf16.mxu0 0
        %876 = vmatmul.mubr.bf16.gmra.mrb[0].mxu0 %v737
        %v877 = vpop.f32.mrb[0].mxu0
        %v878 = vadd.f32 %v701, %v877
        %v879 = vpop.f32.mrb[0].mxu0
        %v880 = vpop.f32.mrb[0].mxu0
        %v881 = vadd.f32 %v701, %v880
        %v882 = vpop.f32.mrb[0].mxu0
        %883 = vmatprep.mubr.bf16.mxu0 0
        %884 = vmatmul.mubr.bf16.gmra.mrb[0].mxu0 %v740
        %v885 = vpop.f32.mrb[0].mxu0
        %v886 = vadd.f32 %v701, %v885
        %v887 = vpop.f32.mrb[0].mxu0
        %v888 = vpop.f32.mrb[0].mxu0
        %v889 = vadd.f32 %v701, %v888
        %v890 = vpop.f32.mrb[0].mxu0
        %891 = vmatprep.mubr.bf16.mxu0 0
        %892 = vmatmul.mubr.bf16.gmra.mrb[0].mxu0 %v743
        %v893 = vpop.f32.mrb[0].mxu0
        %v894 = vadd.f32 %v701, %v893
        %v895 = vpop.f32.mrb[0].mxu0
        %v896 = vpop.f32.mrb[0].mxu0
        %v897 = vadd.f32 %v701, %v896
        %v898 = vpop.f32.mrb[0].mxu0
        %899 = vmatprep.mubr.bf16.mxu0 0
        %900 = vmatmul.mubr.bf16.gmra.mrb[0].mxu0 %v746
        %v901 = vpop.f32.mrb[0].mxu0
        %v902 = vadd.f32 %v701, %v901
        %v903 = vpop.f32.mrb[0].mxu0
        %v904 = vpop.f32.mrb[0].mxu0
        %v905 = vadd.f32 %v701, %v904
        %v906 = vpop.f32.mrb[0].mxu0
        %907 = vmatprep.mubr.bf16.mxu0 0
        %908 = vmatmul.mubr.bf16.gmra.mrb[0].mxu0 %v749
        %v909 = vpop.f32.mrb[0].mxu0
        %v910 = vadd.f32 %v701, %v909
        %v911 = vpop.f32.mrb[0].mxu0
        %v912 = vpop.f32.mrb[0].mxu0
        %v913 = vadd.f32 %v701, %v912
        %v914 = vpop.f32.mrb[0].mxu0
        %915 = vdwg.mxu0
        %s916 = scalar_lea.vmem [#allocation3], 24
        %917 = vst.msk [vmem:[%s916 + $0x1] sm:$0xff] %vm375, %v790
        %918 = vst.msk [vmem:[%s916 + $0x9] sm:$0xff] %vm375, %v793
        %919 = vst.msk [vmem:[%s916 + $0x19] sm:$0xff] %vm375, %v798
        %920 = vst.msk [vmem:[%s916 + $0x21] sm:$0xff] %vm375, %v801
        %921 = vst.msk [vmem:[%s916 + $0x31] sm:$0xff] %vm375, %v806
        %922 = vst.msk [vmem:[%s916 + $0x39] sm:$0xff] %vm375, %v809
        %923 = vst.msk [vmem:[%s916 + $0x49] sm:$0xff] %vm375, %v814
        %924 = vst.msk [vmem:[%s916 + $0x51] sm:$0xff] %vm375, %v817
        %925 = vst.msk [vmem:[%s916 + $0x61] sm:$0xff] %vm375, %v822
        %926 = vst.msk [vmem:[%s916 + $0x69] sm:$0xff] %vm375, %v825
        %927 = vst.msk [vmem:[%s916 + $0x79] sm:$0xff] %vm375, %v830
        %928 = vst.msk [vmem:[%s916 + $0x81] sm:$0xff] %vm375, %v833
        %929 = vst.msk [vmem:[%s916 + $0x91] sm:$0xff] %vm375, %v838
        %930 = vst.msk [vmem:[%s916 + $0x99] sm:$0xff] %vm375, %v841
        %931 = vst.msk [vmem:[%s916 + $0xa9] sm:$0xff] %vm375, %v846
        %932 = vst.msk [vmem:[%s916 + $0xb1] sm:$0xff] %vm375, %v849
        %933 = vst.msk [vmem:[%s916 + $0xc1] sm:$0xff] %vm375, %v854
        %934 = vst.msk [vmem:[%s916 + $0xc9] sm:$0xff] %vm375, %v857
        %935 = vst.msk [vmem:[%s916 + $0xd9] sm:$0xff] %vm375, %v862
        %936 = vst.msk [vmem:[%s916 + $0xe1] sm:$0xff] %vm375, %v865
        %937 = vst.msk [vmem:[%s916 + $0xf1] sm:$0xff] %vm375, %v870
        %938 = vst.msk [vmem:[%s916 + $0xf9] sm:$0xff] %vm375, %v873
        %939 = vst.msk [vmem:[%s916 + $0x109] sm:$0xff] %vm375, %v878
        %940 = vst.msk [vmem:[%s916 + $0x111] sm:$0xff] %vm375, %v881
        %941 = vst.msk [vmem:[%s916 + $0x121] sm:$0xff] %vm375, %v886
        %942 = vst.msk [vmem:[%s916 + $0x129] sm:$0xff] %vm375, %v889
        %943 = vst.msk [vmem:[%s916 + $0x139] sm:$0xff] %vm375, %v894
        %944 = vst.msk [vmem:[%s916 + $0x141] sm:$0xff] %vm375, %v897
        %945 = vst.msk [vmem:[%s916 + $0x151] sm:$0xff] %vm375, %v902
        %946 = vst.msk [vmem:[%s916 + $0x159] sm:$0xff] %vm375, %v905
        %947 = vst.msk [vmem:[%s916 + $0x169] sm:$0xff] %vm375, %v910
        %948 = vst.msk [vmem:[%s916 + $0x171] sm:$0xff] %vm375, %v913
        %v949 = vld [vmem:[#allocation3] sm:$0xff]
        %v950 = vld [vmem:[#allocation3 + $0x8] sm:$0xff]
        %v951 = vld [vmem:[#allocation3 + $0x18] sm:$0xff]
        %v952 = vld [vmem:[#allocation3 + $0x20] sm:$0xff]
        %v953 = vld [vmem:[#allocation3 + $0x30] sm:$0xff]
        %v954 = vld [vmem:[#allocation3 + $0x38] sm:$0xff]
        %v955 = vld [vmem:[#allocation3 + $0x48] sm:$0xff]
        %v956 = vld [vmem:[#allocation3 + $0x50] sm:$0xff]
        %v957 = vld [vmem:[#allocation3 + $0x60] sm:$0xff]
        %v958 = vld [vmem:[#allocation3 + $0x68] sm:$0xff]
        %v959 = vld [vmem:[#allocation3 + $0x78] sm:$0xff]
        %v960 = vld [vmem:[#allocation3 + $0x80] sm:$0xff]
        %v961 = vld [vmem:[#allocation3 + $0x90] sm:$0xff]
        %v962 = vld [vmem:[#allocation3 + $0x98] sm:$0xff]
        %v963 = vld [vmem:[#allocation3 + $0xa8] sm:$0xff]
        %v964 = vld [vmem:[#allocation3 + $0xb0] sm:$0xff]
        %v965 = vld [vmem:[#allocation3 + $0xc0] sm:$0xff]
        %v966 = vld [vmem:[#allocation3 + $0xc8] sm:$0xff]
        %v967 = vld [vmem:[#allocation3 + $0xd8] sm:$0xff]
        %v968 = vld [vmem:[#allocation3 + $0xe0] sm:$0xff]
        %v969 = vld [vmem:[#allocation3 + $0xf0] sm:$0xff]
        %v970 = vld [vmem:[#allocation3 + $0xf8] sm:$0xff]
        %v971 = vld [vmem:[#allocation3 + $0x108] sm:$0xff]
        %v972 = vld [vmem:[#allocation3 + $0x110] sm:$0xff]
        %v973 = vld [vmem:[#allocation3 + $0x120] sm:$0xff]
        %v974 = vld [vmem:[#allocation3 + $0x128] sm:$0xff]
        %v975 = vld [vmem:[#allocation3 + $0x138] sm:$0xff]
        %v976 = vld [vmem:[#allocation3 + $0x140] sm:$0xff]
        %v977 = vld [vmem:[#allocation3 + $0x150] sm:$0xff]
        %v978 = vld [vmem:[#allocation3 + $0x158] sm:$0xff]
        %v979 = vld [vmem:[#allocation3 + $0x168] sm:$0xff]
        %v980 = vld [vmem:[#allocation3 + $0x170] sm:$0xff]
        %v981 = vadd.f32 %v949, 0.0
        %v982 = vadd.f32 %v950, 0.0
        %v983 = vadd.f32 %v951, 0.0
        %v984 = vadd.f32 %v952, 0.0
        %v985 = vadd.f32 %v953, 0.0
        %v986 = vadd.f32 %v954, 0.0
        %v987 = vadd.f32 %v955, 0.0
        %v988 = vadd.f32 %v956, 0.0
        %v989 = vadd.f32 %v957, 0.0
        %v990 = vadd.f32 %v958, 0.0
        %v991 = vadd.f32 %v959, 0.0
        %v992 = vadd.f32 %v960, 0.0
        %v993 = vadd.f32 %v961, 0.0
        %v994 = vadd.f32 %v962, 0.0
        %v995 = vadd.f32 %v963, 0.0
        %v996 = vadd.f32 %v964, 0.0
        %v997 = vadd.f32 %v965, 0.0
        %v998 = vadd.f32 %v966, 0.0
        %v999 = vadd.f32 %v967, 0.0
        %v1000 = vadd.f32 %v968, 0.0
        %v1001 = vadd.f32 %v969, 0.0
        %v1002 = vadd.f32 %v970, 0.0
        %v1003 = vadd.f32 %v971, 0.0
        %v1004 = vadd.f32 %v972, 0.0
        %v1005 = vadd.f32 %v973, 0.0
        %v1006 = vadd.f32 %v974, 0.0
        %v1007 = vadd.f32 %v975, 0.0
        %v1008 = vadd.f32 %v976, 0.0
        %v1009 = vadd.f32 %v977, 0.0
        %v1010 = vadd.f32 %v978, 0.0
        %v1011 = vadd.f32 %v979, 0.0
        %v1012 = vadd.f32 %v980, 0.0
        %v1013 = vmax.f32 %v949, 0.0
        %v1014 = vmax.f32 %v950, 0.0
        %v1015 = vmax.f32 %v951, 0.0
        %v1016 = vmax.f32 %v952, 0.0
        %v1017 = vmax.f32 %v953, 0.0
        %v1018 = vmax.f32 %v954, 0.0
        %v1019 = vmax.f32 %v955, 0.0
        %v1020 = vmax.f32 %v956, 0.0
        %v1021 = vmax.f32 %v957, 0.0
        %v1022 = vmax.f32 %v958, 0.0
        %v1023 = vmax.f32 %v959, 0.0
        %v1024 = vmax.f32 %v960, 0.0
        %v1025 = vmax.f32 %v961, 0.0
        %v1026 = vmax.f32 %v962, 0.0
        %v1027 = vmax.f32 %v963, 0.0
        %v1028 = vmax.f32 %v964, 0.0
        %v1029 = vmax.f32 %v965, 0.0
        %v1030 = vmax.f32 %v966, 0.0
        %v1031 = vmax.f32 %v967, 0.0
        %v1032 = vmax.f32 %v968, 0.0
        %v1033 = vmax.f32 %v969, 0.0
        %v1034 = vmax.f32 %v970, 0.0
        %v1035 = vmax.f32 %v971, 0.0
        %v1036 = vmax.f32 %v972, 0.0
        %v1037 = vmax.f32 %v973, 0.0
        %v1038 = vmax.f32 %v974, 0.0
        %v1039 = vmax.f32 %v975, 0.0
        %v1040 = vmax.f32 %v976, 0.0
        %v1041 = vmax.f32 %v977, 0.0
        %v1042 = vmax.f32 %v978, 0.0
        %v1043 = vmax.f32 %v979, 0.0
        %v1044 = vmax.f32 %v980, 0.0
        %1045 = vst.msk [vmem:[#allocation2] sm:$0xff] %vm375, %v1013
        %1046 = vst.msk [vmem:[#allocation2 + $0x8] sm:$0xff] %vm375, %v1014
        %1047 = vst.msk [vmem:[#allocation2 + $0x10] sm:$0xff] %vm375, %v1015
        %1048 = vst.msk [vmem:[#allocation2 + $0x18] sm:$0xff] %vm375, %v1016
        %1049 = vst.msk [vmem:[#allocation2 + $0x20] sm:$0xff] %vm375, %v1017
        %1050 = vst.msk [vmem:[#allocation2 + $0x28] sm:$0xff] %vm375, %v1018
        %1051 = vst.msk [vmem:[#allocation2 + $0x30] sm:$0xff] %vm375, %v1019
        %1052 = vst.msk [vmem:[#allocation2 + $0x38] sm:$0xff] %vm375, %v1020
        %1053 = vst.msk [vmem:[#allocation2 + $0x40] sm:$0xff] %vm375, %v1021
        %1054 = vst.msk [vmem:[#allocation2 + $0x48] sm:$0xff] %vm375, %v1022
        %1055 = vst.msk [vmem:[#allocation2 + $0x50] sm:$0xff] %vm375, %v1023
        %1056 = vst.msk [vmem:[#allocation2 + $0x58] sm:$0xff] %vm375, %v1024
        %1057 = vst.msk [vmem:[#allocation2 + $0x60] sm:$0xff] %vm375, %v1025
        %1058 = vst.msk [vmem:[#allocation2 + $0x68] sm:$0xff] %vm375, %v1026
        %1059 = vst.msk [vmem:[#allocation2 + $0x70] sm:$0xff] %vm375, %v1027
        %1060 = vst.msk [vmem:[#allocation2 + $0x78] sm:$0xff] %vm375, %v1028
        %1061 = vst.msk [vmem:[#allocation2 + $0x80] sm:$0xff] %vm375, %v1029
        %1062 = vst.msk [vmem:[#allocation2 + $0x88] sm:$0xff] %vm375, %v1030
        %1063 = vst.msk [vmem:[#allocation2 + $0x90] sm:$0xff] %vm375, %v1031
        %1064 = vst.msk [vmem:[#allocation2 + $0x98] sm:$0xff] %vm375, %v1032
        %1065 = vst.msk [vmem:[#allocation2 + $0xa0] sm:$0xff] %vm375, %v1033
        %1066 = vst.msk [vmem:[#allocation2 + $0xa8] sm:$0xff] %vm375, %v1034
        %1067 = vst.msk [vmem:[#allocation2 + $0xb0] sm:$0xff] %vm375, %v1035
        %1068 = vst.msk [vmem:[#allocation2 + $0xb8] sm:$0xff] %vm375, %v1036
        %1069 = vst.msk [vmem:[#allocation2 + $0xc0] sm:$0xff] %vm375, %v1037
        %1070 = vst.msk [vmem:[#allocation2 + $0xc8] sm:$0xff] %vm375, %v1038
        %1071 = vst.msk [vmem:[#allocation2 + $0xd0] sm:$0xff] %vm375, %v1039
        %1072 = vst.msk [vmem:[#allocation2 + $0xd8] sm:$0xff] %vm375, %v1040
        %1073 = vst.msk [vmem:[#allocation2 + $0xe0] sm:$0xff] %vm375, %v1041
        %1074 = vst.msk [vmem:[#allocation2 + $0xe8] sm:$0xff] %vm375, %v1042
        %1075 = vst.msk [vmem:[#allocation2 + $0xf0] sm:$0xff] %vm375, %v1043
        %1076 = vst.msk [vmem:[#allocation2 + $0xf8] sm:$0xff] %vm375, %v1044
        %v1077 = vld [vmem:[#allocation3 + $0x1] sm:$0xff]
        %v1078 = vld [vmem:[#allocation3 + $0x9] sm:$0xff]
        %v1079 = vld [vmem:[#allocation3 + $0x19] sm:$0xff]
        %v1080 = vld [vmem:[#allocation3 + $0x21] sm:$0xff]
        %v1081 = vld [vmem:[#allocation3 + $0x31] sm:$0xff]
        %v1082 = vld [vmem:[#allocation3 + $0x39] sm:$0xff]
        %v1083 = vld [vmem:[#allocation3 + $0x49] sm:$0xff]
        %v1084 = vld [vmem:[#allocation3 + $0x51] sm:$0xff]
        %v1085 = vld [vmem:[#allocation3 + $0x61] sm:$0xff]
        %v1086 = vld [vmem:[#allocation3 + $0x69] sm:$0xff]
        %v1087 = vld [vmem:[#allocation3 + $0x79] sm:$0xff]
        %v1088 = vld [vmem:[#allocation3 + $0x81] sm:$0xff]
        %v1089 = vld [vmem:[#allocation3 + $0x91] sm:$0xff]
        %v1090 = vld [vmem:[#allocation3 + $0x99] sm:$0xff]
        %v1091 = vld [vmem:[#allocation3 + $0xa9] sm:$0xff]
        %v1092 = vld [vmem:[#allocation3 + $0xb1] sm:$0xff]
        %v1093 = vld [vmem:[#allocation3 + $0xc1] sm:$0xff]
        %v1094 = vld [vmem:[#allocation3 + $0xc9] sm:$0xff]
        %v1095 = vld [vmem:[#allocation3 + $0xd9] sm:$0xff]
        %v1096 = vld [vmem:[#allocation3 + $0xe1] sm:$0xff]
        %v1097 = vld [vmem:[#allocation3 + $0xf1] sm:$0xff]
        %v1098 = vld [vmem:[#allocation3 + $0xf9] sm:$0xff]
        %v1099 = vld [vmem:[#allocation3 + $0x109] sm:$0xff]
        %v1100 = vld [vmem:[#allocation3 + $0x111] sm:$0xff]
        %v1101 = vld [vmem:[#allocation3 + $0x121] sm:$0xff]
        %v1102 = vld [vmem:[#allocation3 + $0x129] sm:$0xff]
        %v1103 = vld [vmem:[#allocation3 + $0x139] sm:$0xff]
        %v1104 = vld [vmem:[#allocation3 + $0x141] sm:$0xff]
        %v1105 = vld [vmem:[#allocation3 + $0x151] sm:$0xff]
        %v1106 = vld [vmem:[#allocation3 + $0x159] sm:$0xff]
        %v1107 = vld [vmem:[#allocation3 + $0x169] sm:$0xff]
        %v1108 = vld [vmem:[#allocation3 + $0x171] sm:$0xff]
        %v1109 = vadd.f32 %v981, %v1077
        %v1110 = vadd.f32 %v982, %v1078
        %v1111 = vadd.f32 %v983, %v1079
        %v1112 = vadd.f32 %v984, %v1080
        %v1113 = vadd.f32 %v985, %v1081
        %v1114 = vadd.f32 %v986, %v1082
        %v1115 = vadd.f32 %v987, %v1083
        %v1116 = vadd.f32 %v988, %v1084
        %v1117 = vadd.f32 %v989, %v1085
        %v1118 = vadd.f32 %v990, %v1086
        %v1119 = vadd.f32 %v991, %v1087
        %v1120 = vadd.f32 %v992, %v1088
        %v1121 = vadd.f32 %v993, %v1089
        %v1122 = vadd.f32 %v994, %v1090
        %v1123 = vadd.f32 %v995, %v1091
        %v1124 = vadd.f32 %v996, %v1092
        %v1125 = vadd.f32 %v997, %v1093
        %v1126 = vadd.f32 %v998, %v1094
        %v1127 = vadd.f32 %v999, %v1095
        %v1128 = vadd.f32 %v1000, %v1096
        %v1129 = vadd.f32 %v1001, %v1097
        %v1130 = vadd.f32 %v1002, %v1098
        %v1131 = vadd.f32 %v1003, %v1099
        %v1132 = vadd.f32 %v1004, %v1100
        %v1133 = vadd.f32 %v1005, %v1101
        %v1134 = vadd.f32 %v1006, %v1102
        %v1135 = vadd.f32 %v1007, %v1103
        %v1136 = vadd.f32 %v1008, %v1104
        %v1137 = vadd.f32 %v1009, %v1105
        %v1138 = vadd.f32 %v1010, %v1106
        %v1139 = vadd.f32 %v1011, %v1107
        %v1140 = vadd.f32 %v1012, %v1108
        %v1141 = vmax.f32 %v1077, 0.0
        %v1142 = vmax.f32 %v1078, 0.0
        %v1143 = vmax.f32 %v1079, 0.0
        %v1144 = vmax.f32 %v1080, 0.0
        %v1145 = vmax.f32 %v1081, 0.0
        %v1146 = vmax.f32 %v1082, 0.0
        %v1147 = vmax.f32 %v1083, 0.0
        %v1148 = vmax.f32 %v1084, 0.0
        %v1149 = vmax.f32 %v1085, 0.0
        %v1150 = vmax.f32 %v1086, 0.0
        %v1151 = vmax.f32 %v1087, 0.0
        %v1152 = vmax.f32 %v1088, 0.0
        %v1153 = vmax.f32 %v1089, 0.0
        %v1154 = vmax.f32 %v1090, 0.0
        %v1155 = vmax.f32 %v1091, 0.0
        %v1156 = vmax.f32 %v1092, 0.0
        %v1157 = vmax.f32 %v1093, 0.0
        %v1158 = vmax.f32 %v1094, 0.0
        %v1159 = vmax.f32 %v1095, 0.0
        %v1160 = vmax.f32 %v1096, 0.0
        %v1161 = vmax.f32 %v1097, 0.0
        %v1162 = vmax.f32 %v1098, 0.0
        %v1163 = vmax.f32 %v1099, 0.0
        %v1164 = vmax.f32 %v1100, 0.0
        %v1165 = vmax.f32 %v1101, 0.0
        %v1166 = vmax.f32 %v1102, 0.0
        %v1167 = vmax.f32 %v1103, 0.0
        %v1168 = vmax.f32 %v1104, 0.0
        %v1169 = vmax.f32 %v1105, 0.0
        %v1170 = vmax.f32 %v1106, 0.0
        %v1171 = vmax.f32 %v1107, 0.0
        %v1172 = vmax.f32 %v1108, 0.0
        %1205 = vrot.lane.b32.xlu0 %v1141, 8
        %v1206 = vpop.permute.xlu0 %1205
        %1207 = vrot.lane.b32.xlu0 %v1142, 8
        %v1208 = vpop.permute.xlu0 %1207
        %1209 = vrot.lane.b32.xlu0 %v1143, 8
        %v1210 = vpop.permute.xlu0 %1209
        %1211 = vrot.lane.b32.xlu0 %v1144, 8
        %v1212 = vpop.permute.xlu0 %1211
        %1213 = vrot.lane.b32.xlu0 %v1145, 8
        %v1214 = vpop.permute.xlu0 %1213
        %1215 = vrot.lane.b32.xlu0 %v1146, 8
        %v1216 = vpop.permute.xlu0 %1215
        %1217 = vrot.lane.b32.xlu0 %v1147, 8
        %v1218 = vpop.permute.xlu0 %1217
        %1219 = vrot.lane.b32.xlu0 %v1148, 8
        %v1220 = vpop.permute.xlu0 %1219
        %1221 = vrot.lane.b32.xlu0 %v1149, 8
        %v1222 = vpop.permute.xlu0 %1221
        %1223 = vrot.lane.b32.xlu0 %v1150, 8
        %v1224 = vpop.permute.xlu0 %1223
        %1225 = vrot.lane.b32.xlu0 %v1151, 8
        %v1226 = vpop.permute.xlu0 %1225
        %1227 = vrot.lane.b32.xlu0 %v1152, 8
        %v1228 = vpop.permute.xlu0 %1227
        %1229 = vrot.lane.b32.xlu0 %v1153, 8
        %v1230 = vpop.permute.xlu0 %1229
        %1231 = vrot.lane.b32.xlu0 %v1154, 8
        %v1232 = vpop.permute.xlu0 %1231
        %1233 = vrot.lane.b32.xlu0 %v1155, 8
        %v1234 = vpop.permute.xlu0 %1233
        %1235 = vrot.lane.b32.xlu0 %v1156, 8
        %v1236 = vpop.permute.xlu0 %1235
        %1237 = vrot.lane.b32.xlu0 %v1157, 8
        %v1238 = vpop.permute.xlu0 %1237
        %1239 = vrot.lane.b32.xlu0 %v1158, 8
        %v1240 = vpop.permute.xlu0 %1239
        %1241 = vrot.lane.b32.xlu0 %v1159, 8
        %v1242 = vpop.permute.xlu0 %1241
        %1243 = vrot.lane.b32.xlu0 %v1160, 8
        %v1244 = vpop.permute.xlu0 %1243
        %1245 = vrot.lane.b32.xlu0 %v1161, 8
        %v1246 = vpop.permute.xlu0 %1245
        %1247 = vrot.lane.b32.xlu0 %v1162, 8
        %v1248 = vpop.permute.xlu0 %1247
        %1249 = vrot.lane.b32.xlu0 %v1163, 8
        %v1250 = vpop.permute.xlu0 %1249
        %1251 = vrot.lane.b32.xlu0 %v1164, 8
        %v1252 = vpop.permute.xlu0 %1251
        %1253 = vrot.lane.b32.xlu0 %v1165, 8
        %v1254 = vpop.permute.xlu0 %1253
        %1255 = vrot.lane.b32.xlu0 %v1166, 8
        %v1256 = vpop.permute.xlu0 %1255
        %1257 = vrot.lane.b32.xlu0 %v1167, 8
        %v1258 = vpop.permute.xlu0 %1257
        %1259 = vrot.lane.b32.xlu0 %v1168, 8
        %v1260 = vpop.permute.xlu0 %1259
        %1261 = vrot.lane.b32.xlu0 %v1169, 8
        %v1262 = vpop.permute.xlu0 %1261
        %1263 = vrot.lane.b32.xlu0 %v1170, 8
        %v1264 = vpop.permute.xlu0 %1263
        %1265 = vrot.lane.b32.xlu0 %v1171, 8
        %v1266 = vpop.permute.xlu0 %1265
        %1267 = vrot.lane.b32.xlu0 %v1172, 8
        %v1268 = vpop.permute.xlu0 %1267
        %vm1301 = vcmask 130112
        %1302 = vst.msk [vmem:[#allocation2] sm:$0xff] %vm1301, %v1206
        %1303 = vst.msk [vmem:[#allocation2 + $0x8] sm:$0xff] %vm1301, %v1208
        %1304 = vst.msk [vmem:[#allocation2 + $0x10] sm:$0xff] %vm1301, %v1210
        %1305 = vst.msk [vmem:[#allocation2 + $0x18] sm:$0xff] %vm1301, %v1212
        %1306 = vst.msk [vmem:[#allocation2 + $0x20] sm:$0xff] %vm1301, %v1214
        %1307 = vst.msk [vmem:[#allocation2 + $0x28] sm:$0xff] %vm1301, %v1216
        %1308 = vst.msk [vmem:[#allocation2 + $0x30] sm:$0xff] %vm1301, %v1218
        %1309 = vst.msk [vmem:[#allocation2 + $0x38] sm:$0xff] %vm1301, %v1220
        %1310 = vst.msk [vmem:[#allocation2 + $0x40] sm:$0xff] %vm1301, %v1222
        %1311 = vst.msk [vmem:[#allocation2 + $0x48] sm:$0xff] %vm1301, %v1224
        %1312 = vst.msk [vmem:[#allocation2 + $0x50] sm:$0xff] %vm1301, %v1226
        %1313 = vst.msk [vmem:[#allocation2 + $0x58] sm:$0xff] %vm1301, %v1228
        %1314 = vst.msk [vmem:[#allocation2 + $0x60] sm:$0xff] %vm1301, %v1230
        %1315 = vst.msk [vmem:[#allocation2 + $0x68] sm:$0xff] %vm1301, %v1232
        %1316 = vst.msk [vmem:[#allocation2 + $0x70] sm:$0xff] %vm1301, %v1234
        %1317 = vst.msk [vmem:[#allocation2 + $0x78] sm:$0xff] %vm1301, %v1236
        %1318 = vst.msk [vmem:[#allocation2 + $0x80] sm:$0xff] %vm1301, %v1238
        %1319 = vst.msk [vmem:[#allocation2 + $0x88] sm:$0xff] %vm1301, %v1240
        %1320 = vst.msk [vmem:[#allocation2 + $0x90] sm:$0xff] %vm1301, %v1242
        %1321 = vst.msk [vmem:[#allocation2 + $0x98] sm:$0xff] %vm1301, %v1244
        %1322 = vst.msk [vmem:[#allocation2 + $0xa0] sm:$0xff] %vm1301, %v1246
        %1323 = vst.msk [vmem:[#allocation2 + $0xa8] sm:$0xff] %vm1301, %v1248
        %1324 = vst.msk [vmem:[#allocation2 + $0xb0] sm:$0xff] %vm1301, %v1250
        %1325 = vst.msk [vmem:[#allocation2 + $0xb8] sm:$0xff] %vm1301, %v1252
        %1326 = vst.msk [vmem:[#allocation2 + $0xc0] sm:$0xff] %vm1301, %v1254
        %1327 = vst.msk [vmem:[#allocation2 + $0xc8] sm:$0xff] %vm1301, %v1256
        %1328 = vst.msk [vmem:[#allocation2 + $0xd0] sm:$0xff] %vm1301, %v1258
        %1329 = vst.msk [vmem:[#allocation2 + $0xd8] sm:$0xff] %vm1301, %v1260
        %1330 = vst.msk [vmem:[#allocation2 + $0xe0] sm:$0xff] %vm1301, %v1262
        %1331 = vst.msk [vmem:[#allocation2 + $0xe8] sm:$0xff] %vm1301, %v1264
        %1332 = vst.msk [vmem:[#allocation2 + $0xf0] sm:$0xff] %vm1301, %v1266
        %1333 = vst.msk [vmem:[#allocation2 + $0xf8] sm:$0xff] %vm1301, %v1268
        %v1334 = vld [vmem:[#allocation3 + $0x2] sm:$0xff]
        %v1335 = vld [vmem:[#allocation3 + $0xa] sm:$0xff]
        %v1336 = vld [vmem:[#allocation3 + $0x1a] sm:$0xff]
        %v1337 = vld [vmem:[#allocation3 + $0x22] sm:$0xff]
        %v1338 = vld [vmem:[#allocation3 + $0x32] sm:$0xff]
        %v1339 = vld [vmem:[#allocation3 + $0x3a] sm:$0xff]
        %v1340 = vld [vmem:[#allocation3 + $0x4a] sm:$0xff]
        %v1341 = vld [vmem:[#allocation3 + $0x52] sm:$0xff]
        %v1342 = vld [vmem:[#allocation3 + $0x62] sm:$0xff]
        %v1343 = vld [vmem:[#allocation3 + $0x6a] sm:$0xff]
        %v1344 = vld [vmem:[#allocation3 + $0x7a] sm:$0xff]
        %v1345 = vld [vmem:[#allocation3 + $0x82] sm:$0xff]
        %v1346 = vld [vmem:[#allocation3 + $0x92] sm:$0xff]
        %v1347 = vld [vmem:[#allocation3 + $0x9a] sm:$0xff]
        %v1348 = vld [vmem:[#allocation3 + $0xaa] sm:$0xff]
        %v1349 = vld [vmem:[#allocation3 + $0xb2] sm:$0xff]
        %v1350 = vld [vmem:[#allocation3 + $0xc2] sm:$0xff]
        %v1351 = vld [vmem:[#allocation3 + $0xca] sm:$0xff]
        %v1352 = vld [vmem:[#allocation3 + $0xda] sm:$0xff]
        %v1353 = vld [vmem:[#allocation3 + $0xe2] sm:$0xff]
        %v1354 = vld [vmem:[#allocation3 + $0xf2] sm:$0xff]
        %v1355 = vld [vmem:[#allocation3 + $0xfa] sm:$0xff]
        %v1356 = vld [vmem:[#allocation3 + $0x10a] sm:$0xff]
        %v1357 = vld [vmem:[#allocation3 + $0x112] sm:$0xff]
        %v1358 = vld [vmem:[#allocation3 + $0x122] sm:$0xff]
        %v1359 = vld [vmem:[#allocation3 + $0x12a] sm:$0xff]
        %v1360 = vld [vmem:[#allocation3 + $0x13a] sm:$0xff]
        %v1361 = vld [vmem:[#allocation3 + $0x142] sm:$0xff]
        %v1362 = vld [vmem:[#allocation3 + $0x152] sm:$0xff]
        %v1363 = vld [vmem:[#allocation3 + $0x15a] sm:$0xff]
        %v1364 = vld [vmem:[#allocation3 + $0x16a] sm:$0xff]
        %v1365 = vld [vmem:[#allocation3 + $0x172] sm:$0xff]
        %v1366 = vadd.f32 %v1109, %v1334
        %v1367 = vadd.f32 %v1110, %v1335
        %v1368 = vadd.f32 %v1111, %v1336
        %v1369 = vadd.f32 %v1112, %v1337
        %v1370 = vadd.f32 %v1113, %v1338
        %v1371 = vadd.f32 %v1114, %v1339
        %v1372 = vadd.f32 %v1115, %v1340
        %v1373 = vadd.f32 %v1116, %v1341
        %v1374 = vadd.f32 %v1117, %v1342
        %v1375 = vadd.f32 %v1118, %v1343
        %v1376 = vadd.f32 %v1119, %v1344
        %v1377 = vadd.f32 %v1120, %v1345
        %v1378 = vadd.f32 %v1121, %v1346
        %v1379 = vadd.f32 %v1122, %v1347
        %v1380 = vadd.f32 %v1123, %v1348
        %v1381 = vadd.f32 %v1124, %v1349
        %v1382 = vadd.f32 %v1125, %v1350
        %v1383 = vadd.f32 %v1126, %v1351
        %v1384 = vadd.f32 %v1127, %v1352
        %v1385 = vadd.f32 %v1128, %v1353
        %v1386 = vadd.f32 %v1129, %v1354
        %v1387 = vadd.f32 %v1130, %v1355
        %v1388 = vadd.f32 %v1131, %v1356
        %v1389 = vadd.f32 %v1132, %v1357
        %v1390 = vadd.f32 %v1133, %v1358
        %v1391 = vadd.f32 %v1134, %v1359
        %v1392 = vadd.f32 %v1135, %v1360
        %v1393 = vadd.f32 %v1136, %v1361
        %v1394 = vadd.f32 %v1137, %v1362
        %v1395 = vadd.f32 %v1138, %v1363
        %v1396 = vadd.f32 %v1139, %v1364
        %v1397 = vadd.f32 %v1140, %v1365
        %v1398 = vmax.f32 %v1334, 0.0
        %v1399 = vmax.f32 %v1335, 0.0
        %v1400 = vmax.f32 %v1336, 0.0
        %v1401 = vmax.f32 %v1337, 0.0
        %v1402 = vmax.f32 %v1338, 0.0
        %v1403 = vmax.f32 %v1339, 0.0
        %v1404 = vmax.f32 %v1340, 0.0
        %v1405 = vmax.f32 %v1341, 0.0
        %v1406 = vmax.f32 %v1342, 0.0
        %v1407 = vmax.f32 %v1343, 0.0
        %v1408 = vmax.f32 %v1344, 0.0
        %v1409 = vmax.f32 %v1345, 0.0
        %v1410 = vmax.f32 %v1346, 0.0
        %v1411 = vmax.f32 %v1347, 0.0
        %v1412 = vmax.f32 %v1348, 0.0
        %v1413 = vmax.f32 %v1349, 0.0
        %v1414 = vmax.f32 %v1350, 0.0
        %v1415 = vmax.f32 %v1351, 0.0
        %v1416 = vmax.f32 %v1352, 0.0
        %v1417 = vmax.f32 %v1353, 0.0
        %v1418 = vmax.f32 %v1354, 0.0
        %v1419 = vmax.f32 %v1355, 0.0
        %v1420 = vmax.f32 %v1356, 0.0
        %v1421 = vmax.f32 %v1357, 0.0
        %v1422 = vmax.f32 %v1358, 0.0
        %v1423 = vmax.f32 %v1359, 0.0
        %v1424 = vmax.f32 %v1360, 0.0
        %v1425 = vmax.f32 %v1361, 0.0
        %v1426 = vmax.f32 %v1362, 0.0
        %v1427 = vmax.f32 %v1363, 0.0
        %v1428 = vmax.f32 %v1364, 0.0
        %v1429 = vmax.f32 %v1365, 0.0
        %1462 = vrot.lane.b32.xlu0 %v1398, 16
        %v1463 = vpop.permute.xlu0 %1462
        %1464 = vrot.lane.b32.xlu0 %v1399, 16
        %v1465 = vpop.permute.xlu0 %1464
        %1466 = vrot.lane.b32.xlu0 %v1400, 16
        %v1467 = vpop.permute.xlu0 %1466
        %1468 = vrot.lane.b32.xlu0 %v1401, 16
        %v1469 = vpop.permute.xlu0 %1468
        %1470 = vrot.lane.b32.xlu0 %v1402, 16
        %v1471 = vpop.permute.xlu0 %1470
        %1472 = vrot.lane.b32.xlu0 %v1403, 16
        %v1473 = vpop.permute.xlu0 %1472
        %1474 = vrot.lane.b32.xlu0 %v1404, 16
        %v1475 = vpop.permute.xlu0 %1474
        %1476 = vrot.lane.b32.xlu0 %v1405, 16
        %v1477 = vpop.permute.xlu0 %1476
        %1478 = vrot.lane.b32.xlu0 %v1406, 16
        %v1479 = vpop.permute.xlu0 %1478
        %1480 = vrot.lane.b32.xlu0 %v1407, 16
        %v1481 = vpop.permute.xlu0 %1480
        %1482 = vrot.lane.b32.xlu0 %v1408, 16
        %v1483 = vpop.permute.xlu0 %1482
        %1484 = vrot.lane.b32.xlu0 %v1409, 16
        %v1485 = vpop.permute.xlu0 %1484
        %1486 = vrot.lane.b32.xlu0 %v1410, 16
        %v1487 = vpop.permute.xlu0 %1486
        %1488 = vrot.lane.b32.xlu0 %v1411, 16
        %v1489 = vpop.permute.xlu0 %1488
        %1490 = vrot.lane.b32.xlu0 %v1412, 16
        %v1491 = vpop.permute.xlu0 %1490
        %1492 = vrot.lane.b32.xlu0 %v1413, 16
        %v1493 = vpop.permute.xlu0 %1492
        %1494 = vrot.lane.b32.xlu0 %v1414, 16
        %v1495 = vpop.permute.xlu0 %1494
        %1496 = vrot.lane.b32.xlu0 %v1415, 16
        %v1497 = vpop.permute.xlu0 %1496
        %1498 = vrot.lane.b32.xlu0 %v1416, 16
        %v1499 = vpop.permute.xlu0 %1498
        %1500 = vrot.lane.b32.xlu0 %v1417, 16
        %v1501 = vpop.permute.xlu0 %1500
        %1502 = vrot.lane.b32.xlu0 %v1418, 16
        %v1503 = vpop.permute.xlu0 %1502
        %1504 = vrot.lane.b32.xlu0 %v1419, 16
        %v1505 = vpop.permute.xlu0 %1504
        %1506 = vrot.lane.b32.xlu0 %v1420, 16
        %v1507 = vpop.permute.xlu0 %1506
        %1508 = vrot.lane.b32.xlu0 %v1421, 16
        %v1509 = vpop.permute.xlu0 %1508
        %1510 = vrot.lane.b32.xlu0 %v1422, 16
        %v1511 = vpop.permute.xlu0 %1510
        %1512 = vrot.lane.b32.xlu0 %v1423, 16
        %v1513 = vpop.permute.xlu0 %1512
        %1514 = vrot.lane.b32.xlu0 %v1424, 16
        %v1515 = vpop.permute.xlu0 %1514
        %1516 = vrot.lane.b32.xlu0 %v1425, 16
        %v1517 = vpop.permute.xlu0 %1516
        %1518 = vrot.lane.b32.xlu0 %v1426, 16
        %v1519 = vpop.permute.xlu0 %1518
        %1520 = vrot.lane.b32.xlu0 %v1427, 16
        %v1521 = vpop.permute.xlu0 %1520
        %1522 = vrot.lane.b32.xlu0 %v1428, 16
        %v1523 = vpop.permute.xlu0 %1522
        %1524 = vrot.lane.b32.xlu0 %v1429, 16
        %v1525 = vpop.permute.xlu0 %1524
        %vm1558 = vcmask 195712
        %1559 = vst.msk [vmem:[#allocation2] sm:$0xff] %vm1558, %v1463
        %1560 = vst.msk [vmem:[#allocation2 + $0x8] sm:$0xff] %vm1558, %v1465
        %1561 = vst.msk [vmem:[#allocation2 + $0x10] sm:$0xff] %vm1558, %v1467
        %1562 = vst.msk [vmem:[#allocation2 + $0x18] sm:$0xff] %vm1558, %v1469
        %1563 = vst.msk [vmem:[#allocation2 + $0x20] sm:$0xff] %vm1558, %v1471
        %1564 = vst.msk [vmem:[#allocation2 + $0x28] sm:$0xff] %vm1558, %v1473
        %1565 = vst.msk [vmem:[#allocation2 + $0x30] sm:$0xff] %vm1558, %v1475
        %1566 = vst.msk [vmem:[#allocation2 + $0x38] sm:$0xff] %vm1558, %v1477
        %1567 = vst.msk [vmem:[#allocation2 + $0x40] sm:$0xff] %vm1558, %v1479
        %1568 = vst.msk [vmem:[#allocation2 + $0x48] sm:$0xff] %vm1558, %v1481
        %1569 = vst.msk [vmem:[#allocation2 + $0x50] sm:$0xff] %vm1558, %v1483
        %1570 = vst.msk [vmem:[#allocation2 + $0x58] sm:$0xff] %vm1558, %v1485
        %1571 = vst.msk [vmem:[#allocation2 + $0x60] sm:$0xff] %vm1558, %v1487
        %1572 = vst.msk [vmem:[#allocation2 + $0x68] sm:$0xff] %vm1558, %v1489
        %1573 = vst.msk [vmem:[#allocation2 + $0x70] sm:$0xff] %vm1558, %v1491
        %1574 = vst.msk [vmem:[#allocation2 + $0x78] sm:$0xff] %vm1558, %v1493
        %1575 = vst.msk [vmem:[#allocation2 + $0x80] sm:$0xff] %vm1558, %v1495
        %1576 = vst.msk [vmem:[#allocation2 + $0x88] sm:$0xff] %vm1558, %v1497
        %1577 = vst.msk [vmem:[#allocation2 + $0x90] sm:$0xff] %vm1558, %v1499
        %1578 = vst.msk [vmem:[#allocation2 + $0x98] sm:$0xff] %vm1558, %v1501
        %1579 = vst.msk [vmem:[#allocation2 + $0xa0] sm:$0xff] %vm1558, %v1503
        %1580 = vst.msk [vmem:[#allocation2 + $0xa8] sm:$0xff] %vm1558, %v1505
        %1581 = vst.msk [vmem:[#allocation2 + $0xb0] sm:$0xff] %vm1558, %v1507
        %1582 = vst.msk [vmem:[#allocation2 + $0xb8] sm:$0xff] %vm1558, %v1509
        %1583 = vst.msk [vmem:[#allocation2 + $0xc0] sm:$0xff] %vm1558, %v1511
        %1584 = vst.msk [vmem:[#allocation2 + $0xc8] sm:$0xff] %vm1558, %v1513
        %1585 = vst.msk [vmem:[#allocation2 + $0xd0] sm:$0xff] %vm1558, %v1515
        %1586 = vst.msk [vmem:[#allocation2 + $0xd8] sm:$0xff] %vm1558, %v1517
        %1587 = vst.msk [vmem:[#allocation2 + $0xe0] sm:$0xff] %vm1558, %v1519
        %1588 = vst.msk [vmem:[#allocation2 + $0xe8] sm:$0xff] %vm1558, %v1521
        %1589 = vst.msk [vmem:[#allocation2 + $0xf0] sm:$0xff] %vm1558, %v1523
        %1590 = vst.msk [vmem:[#allocation2 + $0xf8] sm:$0xff] %vm1558, %v1525
        %v1591 = vld [vmem:[%s916] sm:$0xff]
        %v1592 = vld [vmem:[%s916 + $0x8] sm:$0xff]
        %v1593 = vld [vmem:[%s916 + $0x18] sm:$0xff]
        %v1594 = vld [vmem:[%s916 + $0x20] sm:$0xff]
        %v1595 = vld [vmem:[%s916 + $0x30] sm:$0xff]
        %v1596 = vld [vmem:[%s916 + $0x38] sm:$0xff]
        %v1597 = vld [vmem:[%s916 + $0x48] sm:$0xff]
        %v1598 = vld [vmem:[%s916 + $0x50] sm:$0xff]
        %v1599 = vld [vmem:[%s916 + $0x60] sm:$0xff]
        %v1600 = vld [vmem:[%s916 + $0x68] sm:$0xff]
        %v1601 = vld [vmem:[%s916 + $0x78] sm:$0xff]
        %v1602 = vld [vmem:[%s916 + $0x80] sm:$0xff]
        %v1603 = vld [vmem:[%s916 + $0x90] sm:$0xff]
        %v1604 = vld [vmem:[%s916 + $0x98] sm:$0xff]
        %v1605 = vld [vmem:[%s916 + $0xa8] sm:$0xff]
        %v1606 = vld [vmem:[%s916 + $0xb0] sm:$0xff]
        %v1607 = vld [vmem:[%s916 + $0xc0] sm:$0xff]
        %v1608 = vld [vmem:[%s916 + $0xc8] sm:$0xff]
        %v1609 = vld [vmem:[%s916 + $0xd8] sm:$0xff]
        %v1610 = vld [vmem:[%s916 + $0xe0] sm:$0xff]
        %v1611 = vld [vmem:[%s916 + $0xf0] sm:$0xff]
        %v1612 = vld [vmem:[%s916 + $0xf8] sm:$0xff]
        %v1613 = vld [vmem:[%s916 + $0x108] sm:$0xff]
        %v1614 = vld [vmem:[%s916 + $0x110] sm:$0xff]
        %v1615 = vld [vmem:[%s916 + $0x120] sm:$0xff]
        %v1616 = vld [vmem:[%s916 + $0x128] sm:$0xff]
        %v1617 = vld [vmem:[%s916 + $0x138] sm:$0xff]
        %v1618 = vld [vmem:[%s916 + $0x140] sm:$0xff]
        %v1619 = vld [vmem:[%s916 + $0x150] sm:$0xff]
        %v1620 = vld [vmem:[%s916 + $0x158] sm:$0xff]
        %v1621 = vld [vmem:[%s916 + $0x168] sm:$0xff]
        %v1622 = vld [vmem:[%s916 + $0x170] sm:$0xff]
        %v1623 = vadd.f32 %v1366, %v1591
        %v1624 = vadd.f32 %v1367, %v1592
        %v1625 = vadd.f32 %v1368, %v1593
        %v1626 = vadd.f32 %v1369, %v1594
        %v1627 = vadd.f32 %v1370, %v1595
        %v1628 = vadd.f32 %v1371, %v1596
        %v1629 = vadd.f32 %v1372, %v1597
        %v1630 = vadd.f32 %v1373, %v1598
        %v1631 = vadd.f32 %v1374, %v1599
        %v1632 = vadd.f32 %v1375, %v1600
        %v1633 = vadd.f32 %v1376, %v1601
        %v1634 = vadd.f32 %v1377, %v1602
        %v1635 = vadd.f32 %v1378, %v1603
        %v1636 = vadd.f32 %v1379, %v1604
        %v1637 = vadd.f32 %v1380, %v1605
        %v1638 = vadd.f32 %v1381, %v1606
        %v1639 = vadd.f32 %v1382, %v1607
        %v1640 = vadd.f32 %v1383, %v1608
        %v1641 = vadd.f32 %v1384, %v1609
        %v1642 = vadd.f32 %v1385, %v1610
        %v1643 = vadd.f32 %v1386, %v1611
        %v1644 = vadd.f32 %v1387, %v1612
        %v1645 = vadd.f32 %v1388, %v1613
        %v1646 = vadd.f32 %v1389, %v1614
        %v1647 = vadd.f32 %v1390, %v1615
        %v1648 = vadd.f32 %v1391, %v1616
        %v1649 = vadd.f32 %v1392, %v1617
        %v1650 = vadd.f32 %v1393, %v1618
        %v1651 = vadd.f32 %v1394, %v1619
        %v1652 = vadd.f32 %v1395, %v1620
        %v1653 = vadd.f32 %v1396, %v1621
        %v1654 = vadd.f32 %v1397, %v1622
        %v1655 = vmax.f32 %v1591, 0.0
        %v1656 = vmax.f32 %v1592, 0.0
        %v1657 = vmax.f32 %v1593, 0.0
        %v1658 = vmax.f32 %v1594, 0.0
        %v1659 = vmax.f32 %v1595, 0.0
        %v1660 = vmax.f32 %v1596, 0.0
        %v1661 = vmax.f32 %v1597, 0.0
        %v1662 = vmax.f32 %v1598, 0.0
        %v1663 = vmax.f32 %v1599, 0.0
        %v1664 = vmax.f32 %v1600, 0.0
        %v1665 = vmax.f32 %v1601, 0.0
        %v1666 = vmax.f32 %v1602, 0.0
        %v1667 = vmax.f32 %v1603, 0.0
        %v1668 = vmax.f32 %v1604, 0.0
        %v1669 = vmax.f32 %v1605, 0.0
        %v1670 = vmax.f32 %v1606, 0.0
        %v1671 = vmax.f32 %v1607, 0.0
        %v1672 = vmax.f32 %v1608, 0.0
        %v1673 = vmax.f32 %v1609, 0.0
        %v1674 = vmax.f32 %v1610, 0.0
        %v1675 = vmax.f32 %v1611, 0.0
        %v1676 = vmax.f32 %v1612, 0.0
        %v1677 = vmax.f32 %v1613, 0.0
        %v1678 = vmax.f32 %v1614, 0.0
        %v1679 = vmax.f32 %v1615, 0.0
        %v1680 = vmax.f32 %v1616, 0.0
        %v1681 = vmax.f32 %v1617, 0.0
        %v1682 = vmax.f32 %v1618, 0.0
        %v1683 = vmax.f32 %v1619, 0.0
        %v1684 = vmax.f32 %v1620, 0.0
        %v1685 = vmax.f32 %v1621, 0.0
        %v1686 = vmax.f32 %v1622, 0.0
        %1719 = vrot.lane.b32.xlu0 %v1655, 24
        %v1720 = vpop.permute.xlu0 %1719
        %1721 = vrot.lane.b32.xlu0 %v1656, 24
        %v1722 = vpop.permute.xlu0 %1721
        %1723 = vrot.lane.b32.xlu0 %v1657, 24
        %v1724 = vpop.permute.xlu0 %1723
        %1725 = vrot.lane.b32.xlu0 %v1658, 24
        %v1726 = vpop.permute.xlu0 %1725
        %1727 = vrot.lane.b32.xlu0 %v1659, 24
        %v1728 = vpop.permute.xlu0 %1727
        %1729 = vrot.lane.b32.xlu0 %v1660, 24
        %v1730 = vpop.permute.xlu0 %1729
        %1731 = vrot.lane.b32.xlu0 %v1661, 24
        %v1732 = vpop.permute.xlu0 %1731
        %1733 = vrot.lane.b32.xlu0 %v1662, 24
        %v1734 = vpop.permute.xlu0 %1733
        %1735 = vrot.lane.b32.xlu0 %v1663, 24
        %v1736 = vpop.permute.xlu0 %1735
        %1737 = vrot.lane.b32.xlu0 %v1664, 24
        %v1738 = vpop.permute.xlu0 %1737
        %1739 = vrot.lane.b32.xlu0 %v1665, 24
        %v1740 = vpop.permute.xlu0 %1739
        %1741 = vrot.lane.b32.xlu0 %v1666, 24
        %v1742 = vpop.permute.xlu0 %1741
        %1743 = vrot.lane.b32.xlu0 %v1667, 24
        %v1744 = vpop.permute.xlu0 %1743
        %1745 = vrot.lane.b32.xlu0 %v1668, 24
        %v1746 = vpop.permute.xlu0 %1745
        %1747 = vrot.lane.b32.xlu0 %v1669, 24
        %v1748 = vpop.permute.xlu0 %1747
        %1749 = vrot.lane.b32.xlu0 %v1670, 24
        %v1750 = vpop.permute.xlu0 %1749
        %1751 = vrot.lane.b32.xlu0 %v1671, 24
        %v1752 = vpop.permute.xlu0 %1751
        %1753 = vrot.lane.b32.xlu0 %v1672, 24
        %v1754 = vpop.permute.xlu0 %1753
        %1755 = vrot.lane.b32.xlu0 %v1673, 24
        %v1756 = vpop.permute.xlu0 %1755
        %1757 = vrot.lane.b32.xlu0 %v1674, 24
        %v1758 = vpop.permute.xlu0 %1757
        %1759 = vrot.lane.b32.xlu0 %v1675, 24
        %v1760 = vpop.permute.xlu0 %1759
        %1761 = vrot.lane.b32.xlu0 %v1676, 24
        %v1762 = vpop.permute.xlu0 %1761
        %1763 = vrot.lane.b32.xlu0 %v1677, 24
        %v1764 = vpop.permute.xlu0 %1763
        %1765 = vrot.lane.b32.xlu0 %v1678, 24
        %v1766 = vpop.permute.xlu0 %1765
        %1767 = vrot.lane.b32.xlu0 %v1679, 24
        %v1768 = vpop.permute.xlu0 %1767
        %1769 = vrot.lane.b32.xlu0 %v1680, 24
        %v1770 = vpop.permute.xlu0 %1769
        %1771 = vrot.lane.b32.xlu0 %v1681, 24
        %v1772 = vpop.permute.xlu0 %1771
        %1773 = vrot.lane.b32.xlu0 %v1682, 24
        %v1774 = vpop.permute.xlu0 %1773
        %1775 = vrot.lane.b32.xlu0 %v1683, 24
        %v1776 = vpop.permute.xlu0 %1775
        %1777 = vrot.lane.b32.xlu0 %v1684, 24
        %v1778 = vpop.permute.xlu0 %1777
        %1779 = vrot.lane.b32.xlu0 %v1685, 24
        %v1780 = vpop.permute.xlu0 %1779
        %1781 = vrot.lane.b32.xlu0 %v1686, 24
        %v1782 = vpop.permute.xlu0 %1781
        %vm1815 = vcmask 261312
        %1816 = vst.msk [vmem:[#allocation2] sm:$0xff] %vm1815, %v1720
        %1817 = vst.msk [vmem:[#allocation2 + $0x8] sm:$0xff] %vm1815, %v1722
        %1818 = vst.msk [vmem:[#allocation2 + $0x10] sm:$0xff] %vm1815, %v1724
        %1819 = vst.msk [vmem:[#allocation2 + $0x18] sm:$0xff] %vm1815, %v1726
        %1820 = vst.msk [vmem:[#allocation2 + $0x20] sm:$0xff] %vm1815, %v1728
        %1821 = vst.msk [vmem:[#allocation2 + $0x28] sm:$0xff] %vm1815, %v1730
        %1822 = vst.msk [vmem:[#allocation2 + $0x30] sm:$0xff] %vm1815, %v1732
        %1823 = vst.msk [vmem:[#allocation2 + $0x38] sm:$0xff] %vm1815, %v1734
        %1824 = vst.msk [vmem:[#allocation2 + $0x40] sm:$0xff] %vm1815, %v1736
        %1825 = vst.msk [vmem:[#allocation2 + $0x48] sm:$0xff] %vm1815, %v1738
        %1826 = vst.msk [vmem:[#allocation2 + $0x50] sm:$0xff] %vm1815, %v1740
        %1827 = vst.msk [vmem:[#allocation2 + $0x58] sm:$0xff] %vm1815, %v1742
        %1828 = vst.msk [vmem:[#allocation2 + $0x60] sm:$0xff] %vm1815, %v1744
        %1829 = vst.msk [vmem:[#allocation2 + $0x68] sm:$0xff] %vm1815, %v1746
        %1830 = vst.msk [vmem:[#allocation2 + $0x70] sm:$0xff] %vm1815, %v1748
        %1831 = vst.msk [vmem:[#allocation2 + $0x78] sm:$0xff] %vm1815, %v1750
        %1832 = vst.msk [vmem:[#allocation2 + $0x80] sm:$0xff] %vm1815, %v1752
        %1833 = vst.msk [vmem:[#allocation2 + $0x88] sm:$0xff] %vm1815, %v1754
        %1834 = vst.msk [vmem:[#allocation2 + $0x90] sm:$0xff] %vm1815, %v1756
        %1835 = vst.msk [vmem:[#allocation2 + $0x98] sm:$0xff] %vm1815, %v1758
        %1836 = vst.msk [vmem:[#allocation2 + $0xa0] sm:$0xff] %vm1815, %v1760
        %1837 = vst.msk [vmem:[#allocation2 + $0xa8] sm:$0xff] %vm1815, %v1762
        %1838 = vst.msk [vmem:[#allocation2 + $0xb0] sm:$0xff] %vm1815, %v1764
        %1839 = vst.msk [vmem:[#allocation2 + $0xb8] sm:$0xff] %vm1815, %v1766
        %1840 = vst.msk [vmem:[#allocation2 + $0xc0] sm:$0xff] %vm1815, %v1768
        %1841 = vst.msk [vmem:[#allocation2 + $0xc8] sm:$0xff] %vm1815, %v1770
        %1842 = vst.msk [vmem:[#allocation2 + $0xd0] sm:$0xff] %vm1815, %v1772
        %1843 = vst.msk [vmem:[#allocation2 + $0xd8] sm:$0xff] %vm1815, %v1774
        %1844 = vst.msk [vmem:[#allocation2 + $0xe0] sm:$0xff] %vm1815, %v1776
        %1845 = vst.msk [vmem:[#allocation2 + $0xe8] sm:$0xff] %vm1815, %v1778
        %1846 = vst.msk [vmem:[#allocation2 + $0xf0] sm:$0xff] %vm1815, %v1780
        %1847 = vst.msk [vmem:[#allocation2 + $0xf8] sm:$0xff] %vm1815, %v1782
        %v1848 = vld [vmem:[%s916 + $0x1] sm:$0xff]
        %v1849 = vld [vmem:[%s916 + $0x9] sm:$0xff]
        %v1850 = vld [vmem:[%s916 + $0x19] sm:$0xff]
        %v1851 = vld [vmem:[%s916 + $0x21] sm:$0xff]
        %v1852 = vld [vmem:[%s916 + $0x31] sm:$0xff]
        %v1853 = vld [vmem:[%s916 + $0x39] sm:$0xff]
        %v1854 = vld [vmem:[%s916 + $0x49] sm:$0xff]
        %v1855 = vld [vmem:[%s916 + $0x51] sm:$0xff]
        %v1856 = vld [vmem:[%s916 + $0x61] sm:$0xff]
        %v1857 = vld [vmem:[%s916 + $0x69] sm:$0xff]
        %v1858 = vld [vmem:[%s916 + $0x79] sm:$0xff]
        %v1859 = vld [vmem:[%s916 + $0x81] sm:$0xff]
        %v1860 = vld [vmem:[%s916 + $0x91] sm:$0xff]
        %v1861 = vld [vmem:[%s916 + $0x99] sm:$0xff]
        %v1862 = vld [vmem:[%s916 + $0xa9] sm:$0xff]
        %v1863 = vld [vmem:[%s916 + $0xb1] sm:$0xff]
        %v1864 = vld [vmem:[%s916 + $0xc1] sm:$0xff]
        %v1865 = vld [vmem:[%s916 + $0xc9] sm:$0xff]
        %v1866 = vld [vmem:[%s916 + $0xd9] sm:$0xff]
        %v1867 = vld [vmem:[%s916 + $0xe1] sm:$0xff]
        %v1868 = vld [vmem:[%s916 + $0xf1] sm:$0xff]
        %v1869 = vld [vmem:[%s916 + $0xf9] sm:$0xff]
        %v1870 = vld [vmem:[%s916 + $0x109] sm:$0xff]
        %v1871 = vld [vmem:[%s916 + $0x111] sm:$0xff]
        %v1872 = vld [vmem:[%s916 + $0x121] sm:$0xff]
        %v1873 = vld [vmem:[%s916 + $0x129] sm:$0xff]
        %v1874 = vld [vmem:[%s916 + $0x139] sm:$0xff]
        %v1875 = vld [vmem:[%s916 + $0x141] sm:$0xff]
        %v1876 = vld [vmem:[%s916 + $0x151] sm:$0xff]
        %v1877 = vld [vmem:[%s916 + $0x159] sm:$0xff]
        %v1878 = vld [vmem:[%s916 + $0x169] sm:$0xff]
        %v1879 = vld [vmem:[%s916 + $0x171] sm:$0xff]
        %v1880 = vadd.f32 %v1623, %v1848
        %v1881 = vadd.f32 %v1624, %v1849
        %v1882 = vadd.f32 %v1625, %v1850
        %v1883 = vadd.f32 %v1626, %v1851
        %v1884 = vadd.f32 %v1627, %v1852
        %v1885 = vadd.f32 %v1628, %v1853
        %v1886 = vadd.f32 %v1629, %v1854
        %v1887 = vadd.f32 %v1630, %v1855
        %v1888 = vadd.f32 %v1631, %v1856
        %v1889 = vadd.f32 %v1632, %v1857
        %v1890 = vadd.f32 %v1633, %v1858
        %v1891 = vadd.f32 %v1634, %v1859
        %v1892 = vadd.f32 %v1635, %v1860
        %v1893 = vadd.f32 %v1636, %v1861
        %v1894 = vadd.f32 %v1637, %v1862
        %v1895 = vadd.f32 %v1638, %v1863
        %v1896 = vadd.f32 %v1639, %v1864
        %v1897 = vadd.f32 %v1640, %v1865
        %v1898 = vadd.f32 %v1641, %v1866
        %v1899 = vadd.f32 %v1642, %v1867
        %v1900 = vadd.f32 %v1643, %v1868
        %v1901 = vadd.f32 %v1644, %v1869
        %v1902 = vadd.f32 %v1645, %v1870
        %v1903 = vadd.f32 %v1646, %v1871
        %v1904 = vadd.f32 %v1647, %v1872
        %v1905 = vadd.f32 %v1648, %v1873
        %v1906 = vadd.f32 %v1649, %v1874
        %v1907 = vadd.f32 %v1650, %v1875
        %v1908 = vadd.f32 %v1651, %v1876
        %v1909 = vadd.f32 %v1652, %v1877
        %v1910 = vadd.f32 %v1653, %v1878
        %v1911 = vadd.f32 %v1654, %v1879
        %v1912 = vmax.f32 %v1848, 0.0
        %v1913 = vmax.f32 %v1849, 0.0
        %v1914 = vmax.f32 %v1850, 0.0
        %v1915 = vmax.f32 %v1851, 0.0
        %v1916 = vmax.f32 %v1852, 0.0
        %v1917 = vmax.f32 %v1853, 0.0
        %v1918 = vmax.f32 %v1854, 0.0
        %v1919 = vmax.f32 %v1855, 0.0
        %v1920 = vmax.f32 %v1856, 0.0
        %v1921 = vmax.f32 %v1857, 0.0
        %v1922 = vmax.f32 %v1858, 0.0
        %v1923 = vmax.f32 %v1859, 0.0
        %v1924 = vmax.f32 %v1860, 0.0
        %v1925 = vmax.f32 %v1861, 0.0
        %v1926 = vmax.f32 %v1862, 0.0
        %v1927 = vmax.f32 %v1863, 0.0
        %v1928 = vmax.f32 %v1864, 0.0
        %v1929 = vmax.f32 %v1865, 0.0
        %v1930 = vmax.f32 %v1866, 0.0
        %v1931 = vmax.f32 %v1867, 0.0
        %v1932 = vmax.f32 %v1868, 0.0
        %v1933 = vmax.f32 %v1869, 0.0
        %v1934 = vmax.f32 %v1870, 0.0
        %v1935 = vmax.f32 %v1871, 0.0
        %v1936 = vmax.f32 %v1872, 0.0
        %v1937 = vmax.f32 %v1873, 0.0
        %v1938 = vmax.f32 %v1874, 0.0
        %v1939 = vmax.f32 %v1875, 0.0
        %v1940 = vmax.f32 %v1876, 0.0
        %v1941 = vmax.f32 %v1877, 0.0
        %v1942 = vmax.f32 %v1878, 0.0
        %v1943 = vmax.f32 %v1879, 0.0
        %1976 = vrot.lane.b32.xlu0 %v1912, 32
        %v1977 = vpop.permute.xlu0 %1976
        %1978 = vrot.lane.b32.xlu0 %v1913, 32
        %v1979 = vpop.permute.xlu0 %1978
        %1980 = vrot.lane.b32.xlu0 %v1914, 32
        %v1981 = vpop.permute.xlu0 %1980
        %1982 = vrot.lane.b32.xlu0 %v1915, 32
        %v1983 = vpop.permute.xlu0 %1982
        %1984 = vrot.lane.b32.xlu0 %v1916, 32
        %v1985 = vpop.permute.xlu0 %1984
        %1986 = vrot.lane.b32.xlu0 %v1917, 32
        %v1987 = vpop.permute.xlu0 %1986
        %1988 = vrot.lane.b32.xlu0 %v1918, 32
        %v1989 = vpop.permute.xlu0 %1988
        %1990 = vrot.lane.b32.xlu0 %v1919, 32
        %v1991 = vpop.permute.xlu0 %1990
        %1992 = vrot.lane.b32.xlu0 %v1920, 32
        %v1993 = vpop.permute.xlu0 %1992
        %1994 = vrot.lane.b32.xlu0 %v1921, 32
        %v1995 = vpop.permute.xlu0 %1994
        %1996 = vrot.lane.b32.xlu0 %v1922, 32
        %v1997 = vpop.permute.xlu0 %1996
        %1998 = vrot.lane.b32.xlu0 %v1923, 32
        %v1999 = vpop.permute.xlu0 %1998
        %2000 = vrot.lane.b32.xlu0 %v1924, 32
        %v2001 = vpop.permute.xlu0 %2000
        %2002 = vrot.lane.b32.xlu0 %v1925, 32
        %v2003 = vpop.permute.xlu0 %2002
        %2004 = vrot.lane.b32.xlu0 %v1926, 32
        %v2005 = vpop.permute.xlu0 %2004
        %2006 = vrot.lane.b32.xlu0 %v1927, 32
        %v2007 = vpop.permute.xlu0 %2006
        %2008 = vrot.lane.b32.xlu0 %v1928, 32
        %v2009 = vpop.permute.xlu0 %2008
        %2010 = vrot.lane.b32.xlu0 %v1929, 32
        %v2011 = vpop.permute.xlu0 %2010
        %2012 = vrot.lane.b32.xlu0 %v1930, 32
        %v2013 = vpop.permute.xlu0 %2012
        %2014 = vrot.lane.b32.xlu0 %v1931, 32
        %v2015 = vpop.permute.xlu0 %2014
        %2016 = vrot.lane.b32.xlu0 %v1932, 32
        %v2017 = vpop.permute.xlu0 %2016
        %2018 = vrot.lane.b32.xlu0 %v1933, 32
        %v2019 = vpop.permute.xlu0 %2018
        %2020 = vrot.lane.b32.xlu0 %v1934, 32
        %v2021 = vpop.permute.xlu0 %2020
        %2022 = vrot.lane.b32.xlu0 %v1935, 32
        %v2023 = vpop.permute.xlu0 %2022
        %2024 = vrot.lane.b32.xlu0 %v1936, 32
        %v2025 = vpop.permute.xlu0 %2024
        %2026 = vrot.lane.b32.xlu0 %v1937, 32
        %v2027 = vpop.permute.xlu0 %2026
        %2028 = vrot.lane.b32.xlu0 %v1938, 32
        %v2029 = vpop.permute.xlu0 %2028
        %2030 = vrot.lane.b32.xlu0 %v1939, 32
        %v2031 = vpop.permute.xlu0 %2030
        %2032 = vrot.lane.b32.xlu0 %v1940, 32
        %v2033 = vpop.permute.xlu0 %2032
        %2034 = vrot.lane.b32.xlu0 %v1941, 32
        %v2035 = vpop.permute.xlu0 %2034
        %2036 = vrot.lane.b32.xlu0 %v1942, 32
        %v2037 = vpop.permute.xlu0 %2036
        %2038 = vrot.lane.b32.xlu0 %v1943, 32
        %v2039 = vpop.permute.xlu0 %2038
        %vm2072 = vcmask 326912
        %2073 = vst.msk [vmem:[#allocation2] sm:$0xff] %vm2072, %v1977
        %2074 = vst.msk [vmem:[#allocation2 + $0x8] sm:$0xff] %vm2072, %v1979
        %2075 = vst.msk [vmem:[#allocation2 + $0x10] sm:$0xff] %vm2072, %v1981
        %2076 = vst.msk [vmem:[#allocation2 + $0x18] sm:$0xff] %vm2072, %v1983
        %2077 = vst.msk [vmem:[#allocation2 + $0x20] sm:$0xff] %vm2072, %v1985
        %2078 = vst.msk [vmem:[#allocation2 + $0x28] sm:$0xff] %vm2072, %v1987
        %2079 = vst.msk [vmem:[#allocation2 + $0x30] sm:$0xff] %vm2072, %v1989
        %2080 = vst.msk [vmem:[#allocation2 + $0x38] sm:$0xff] %vm2072, %v1991
        %2081 = vst.msk [vmem:[#allocation2 + $0x40] sm:$0xff] %vm2072, %v1993
        %2082 = vst.msk [vmem:[#allocation2 + $0x48] sm:$0xff] %vm2072, %v1995
        %2083 = vst.msk [vmem:[#allocation2 + $0x50] sm:$0xff] %vm2072, %v1997
        %2084 = vst.msk [vmem:[#allocation2 + $0x58] sm:$0xff] %vm2072, %v1999
        %2085 = vst.msk [vmem:[#allocation2 + $0x60] sm:$0xff] %vm2072, %v2001
        %2086 = vst.msk [vmem:[#allocation2 + $0x68] sm:$0xff] %vm2072, %v2003
        %2087 = vst.msk [vmem:[#allocation2 + $0x70] sm:$0xff] %vm2072, %v2005
        %2088 = vst.msk [vmem:[#allocation2 + $0x78] sm:$0xff] %vm2072, %v2007
        %2089 = vst.msk [vmem:[#allocation2 + $0x80] sm:$0xff] %vm2072, %v2009
        %2090 = vst.msk [vmem:[#allocation2 + $0x88] sm:$0xff] %vm2072, %v2011
        %2091 = vst.msk [vmem:[#allocation2 + $0x90] sm:$0xff] %vm2072, %v2013
        %2092 = vst.msk [vmem:[#allocation2 + $0x98] sm:$0xff] %vm2072, %v2015
        %2093 = vst.msk [vmem:[#allocation2 + $0xa0] sm:$0xff] %vm2072, %v2017
        %2094 = vst.msk [vmem:[#allocation2 + $0xa8] sm:$0xff] %vm2072, %v2019
        %2095 = vst.msk [vmem:[#allocation2 + $0xb0] sm:$0xff] %vm2072, %v2021
        %2096 = vst.msk [vmem:[#allocation2 + $0xb8] sm:$0xff] %vm2072, %v2023
        %2097 = vst.msk [vmem:[#allocation2 + $0xc0] sm:$0xff] %vm2072, %v2025
        %2098 = vst.msk [vmem:[#allocation2 + $0xc8] sm:$0xff] %vm2072, %v2027
        %2099 = vst.msk [vmem:[#allocation2 + $0xd0] sm:$0xff] %vm2072, %v2029
        %2100 = vst.msk [vmem:[#allocation2 + $0xd8] sm:$0xff] %vm2072, %v2031
        %2101 = vst.msk [vmem:[#allocation2 + $0xe0] sm:$0xff] %vm2072, %v2033
        %2102 = vst.msk [vmem:[#allocation2 + $0xe8] sm:$0xff] %vm2072, %v2035
        %2103 = vst.msk [vmem:[#allocation2 + $0xf0] sm:$0xff] %vm2072, %v2037
        %2104 = vst.msk [vmem:[#allocation2 + $0xf8] sm:$0xff] %vm2072, %v2039
        %v2105 = vld [vmem:[%s916 + $0x2] sm:$0xff]
        %v2106 = vld [vmem:[%s916 + $0xa] sm:$0xff]
        %v2107 = vld [vmem:[%s916 + $0x1a] sm:$0xff]
        %v2108 = vld [vmem:[%s916 + $0x22] sm:$0xff]
        %v2109 = vld [vmem:[%s916 + $0x32] sm:$0xff]
        %v2110 = vld [vmem:[%s916 + $0x3a] sm:$0xff]
        %v2111 = vld [vmem:[%s916 + $0x4a] sm:$0xff]
        %v2112 = vld [vmem:[%s916 + $0x52] sm:$0xff]
        %v2113 = vld [vmem:[%s916 + $0x62] sm:$0xff]
        %v2114 = vld [vmem:[%s916 + $0x6a] sm:$0xff]
        %v2115 = vld [vmem:[%s916 + $0x7a] sm:$0xff]
        %v2116 = vld [vmem:[%s916 + $0x82] sm:$0xff]
        %v2117 = vld [vmem:[%s916 + $0x92] sm:$0xff]
        %v2118 = vld [vmem:[%s916 + $0x9a] sm:$0xff]
        %v2119 = vld [vmem:[%s916 + $0xaa] sm:$0xff]
        %v2120 = vld [vmem:[%s916 + $0xb2] sm:$0xff]
        %v2121 = vld [vmem:[%s916 + $0xc2] sm:$0xff]
        %v2122 = vld [vmem:[%s916 + $0xca] sm:$0xff]
        %v2123 = vld [vmem:[%s916 + $0xda] sm:$0xff]
        %v2124 = vld [vmem:[%s916 + $0xe2] sm:$0xff]
        %v2125 = vld [vmem:[%s916 + $0xf2] sm:$0xff]
        %v2126 = vld [vmem:[%s916 + $0xfa] sm:$0xff]
        %v2127 = vld [vmem:[%s916 + $0x10a] sm:$0xff]
        %v2128 = vld [vmem:[%s916 + $0x112] sm:$0xff]
        %v2129 = vld [vmem:[%s916 + $0x122] sm:$0xff]
        %v2130 = vld [vmem:[%s916 + $0x12a] sm:$0xff]
        %v2131 = vld [vmem:[%s916 + $0x13a] sm:$0xff]
        %v2132 = vld [vmem:[%s916 + $0x142] sm:$0xff]
        %v2133 = vld [vmem:[%s916 + $0x152] sm:$0xff]
        %v2134 = vld [vmem:[%s916 + $0x15a] sm:$0xff]
        %v2135 = vld [vmem:[%s916 + $0x16a] sm:$0xff]
        %v2136 = vld [vmem:[%s916 + $0x172] sm:$0xff]
        %v2137 = vadd.f32 %v1880, %v2105
        %v2138 = vadd.f32 %v1881, %v2106
        %v2139 = vadd.f32 %v1882, %v2107
        %v2140 = vadd.f32 %v1883, %v2108
        %v2141 = vadd.f32 %v1884, %v2109
        %v2142 = vadd.f32 %v1885, %v2110
        %v2143 = vadd.f32 %v1886, %v2111
        %v2144 = vadd.f32 %v1887, %v2112
        %v2145 = vadd.f32 %v1888, %v2113
        %v2146 = vadd.f32 %v1889, %v2114
        %v2147 = vadd.f32 %v1890, %v2115
        %v2148 = vadd.f32 %v1891, %v2116
        %v2149 = vadd.f32 %v1892, %v2117
        %v2150 = vadd.f32 %v1893, %v2118
        %v2151 = vadd.f32 %v1894, %v2119
        %v2152 = vadd.f32 %v1895, %v2120
        %v2153 = vadd.f32 %v1896, %v2121
        %v2154 = vadd.f32 %v1897, %v2122
        %v2155 = vadd.f32 %v1898, %v2123
        %v2156 = vadd.f32 %v1899, %v2124
        %v2157 = vadd.f32 %v1900, %v2125
        %v2158 = vadd.f32 %v1901, %v2126
        %v2159 = vadd.f32 %v1902, %v2127
        %v2160 = vadd.f32 %v1903, %v2128
        %v2161 = vadd.f32 %v1904, %v2129
        %v2162 = vadd.f32 %v1905, %v2130
        %v2163 = vadd.f32 %v1906, %v2131
        %v2164 = vadd.f32 %v1907, %v2132
        %v2165 = vadd.f32 %v1908, %v2133
        %v2166 = vadd.f32 %v1909, %v2134
        %v2167 = vadd.f32 %v1910, %v2135
        %v2168 = vadd.f32 %v1911, %v2136
        %v2169 = vmax.f32 %v2105, 0.0
        %v2170 = vmax.f32 %v2106, 0.0
        %v2171 = vmax.f32 %v2107, 0.0
        %v2172 = vmax.f32 %v2108, 0.0
        %v2173 = vmax.f32 %v2109, 0.0
        %v2174 = vmax.f32 %v2110, 0.0
        %v2175 = vmax.f32 %v2111, 0.0
        %v2176 = vmax.f32 %v2112, 0.0
        %v2177 = vmax.f32 %v2113, 0.0
        %v2178 = vmax.f32 %v2114, 0.0
        %v2179 = vmax.f32 %v2115, 0.0
        %v2180 = vmax.f32 %v2116, 0.0
        %v2181 = vmax.f32 %v2117, 0.0
        %v2182 = vmax.f32 %v2118, 0.0
        %v2183 = vmax.f32 %v2119, 0.0
        %v2184 = vmax.f32 %v2120, 0.0
        %v2185 = vmax.f32 %v2121, 0.0
        %v2186 = vmax.f32 %v2122, 0.0
        %v2187 = vmax.f32 %v2123, 0.0
        %v2188 = vmax.f32 %v2124, 0.0
        %v2189 = vmax.f32 %v2125, 0.0
        %v2190 = vmax.f32 %v2126, 0.0
        %v2191 = vmax.f32 %v2127, 0.0
        %v2192 = vmax.f32 %v2128, 0.0
        %v2193 = vmax.f32 %v2129, 0.0
        %v2194 = vmax.f32 %v2130, 0.0
        %v2195 = vmax.f32 %v2131, 0.0
        %v2196 = vmax.f32 %v2132, 0.0
        %v2197 = vmax.f32 %v2133, 0.0
        %v2198 = vmax.f32 %v2134, 0.0
        %v2199 = vmax.f32 %v2135, 0.0
        %v2200 = vmax.f32 %v2136, 0.0
        %2233 = vrot.lane.b32.xlu0 %v2169, 40
        %v2234 = vpop.permute.xlu0 %2233
        %2235 = vrot.lane.b32.xlu0 %v2170, 40
        %v2236 = vpop.permute.xlu0 %2235
        %2237 = vrot.lane.b32.xlu0 %v2171, 40
        %v2238 = vpop.permute.xlu0 %2237
        %2239 = vrot.lane.b32.xlu0 %v2172, 40
        %v2240 = vpop.permute.xlu0 %2239
        %2241 = vrot.lane.b32.xlu0 %v2173, 40
        %v2242 = vpop.permute.xlu0 %2241
        %2243 = vrot.lane.b32.xlu0 %v2174, 40
        %v2244 = vpop.permute.xlu0 %2243
        %2245 = vrot.lane.b32.xlu0 %v2175, 40
        %v2246 = vpop.permute.xlu0 %2245
        %2247 = vrot.lane.b32.xlu0 %v2176, 40
        %v2248 = vpop.permute.xlu0 %2247
        %2249 = vrot.lane.b32.xlu0 %v2177, 40
        %v2250 = vpop.permute.xlu0 %2249
        %2251 = vrot.lane.b32.xlu0 %v2178, 40
        %v2252 = vpop.permute.xlu0 %2251
        %2253 = vrot.lane.b32.xlu0 %v2179, 40
        %v2254 = vpop.permute.xlu0 %2253
        %2255 = vrot.lane.b32.xlu0 %v2180, 40
        %v2256 = vpop.permute.xlu0 %2255
        %2257 = vrot.lane.b32.xlu0 %v2181, 40
        %v2258 = vpop.permute.xlu0 %2257
        %2259 = vrot.lane.b32.xlu0 %v2182, 40
        %v2260 = vpop.permute.xlu0 %2259
        %2261 = vrot.lane.b32.xlu0 %v2183, 40
        %v2262 = vpop.permute.xlu0 %2261
        %2263 = vrot.lane.b32.xlu0 %v2184, 40
        %v2264 = vpop.permute.xlu0 %2263
        %2265 = vrot.lane.b32.xlu0 %v2185, 40
        %v2266 = vpop.permute.xlu0 %2265
        %2267 = vrot.lane.b32.xlu0 %v2186, 40
        %v2268 = vpop.permute.xlu0 %2267
        %2269 = vrot.lane.b32.xlu0 %v2187, 40
        %v2270 = vpop.permute.xlu0 %2269
        %2271 = vrot.lane.b32.xlu0 %v2188, 40
        %v2272 = vpop.permute.xlu0 %2271
        %2273 = vrot.lane.b32.xlu0 %v2189, 40
        %v2274 = vpop.permute.xlu0 %2273
        %2275 = vrot.lane.b32.xlu0 %v2190, 40
        %v2276 = vpop.permute.xlu0 %2275
        %2277 = vrot.lane.b32.xlu0 %v2191, 40
        %v2278 = vpop.permute.xlu0 %2277
        %2279 = vrot.lane.b32.xlu0 %v2192, 40
        %v2280 = vpop.permute.xlu0 %2279
        %2281 = vrot.lane.b32.xlu0 %v2193, 40
        %v2282 = vpop.permute.xlu0 %2281
        %2283 = vrot.lane.b32.xlu0 %v2194, 40
        %v2284 = vpop.permute.xlu0 %2283
        %2285 = vrot.lane.b32.xlu0 %v2195, 40
        %v2286 = vpop.permute.xlu0 %2285
        %2287 = vrot.lane.b32.xlu0 %v2196, 40
        %v2288 = vpop.permute.xlu0 %2287
        %2289 = vrot.lane.b32.xlu0 %v2197, 40
        %v2290 = vpop.permute.xlu0 %2289
        %2291 = vrot.lane.b32.xlu0 %v2198, 40
        %v2292 = vpop.permute.xlu0 %2291
        %2293 = vrot.lane.b32.xlu0 %v2199, 40
        %v2294 = vpop.permute.xlu0 %2293
        %2295 = vrot.lane.b32.xlu0 %v2200, 40
        %v2296 = vpop.permute.xlu0 %2295
        %vm2329 = vcmask 392512
        %2330 = vst.msk [vmem:[#allocation2] sm:$0xff] %vm2329, %v2234
        %2331 = vst.msk [vmem:[#allocation2 + $0x8] sm:$0xff] %vm2329, %v2236
        %2332 = vst.msk [vmem:[#allocation2 + $0x10] sm:$0xff] %vm2329, %v2238
        %2333 = vst.msk [vmem:[#allocation2 + $0x18] sm:$0xff] %vm2329, %v2240
        %2334 = vst.msk [vmem:[#allocation2 + $0x20] sm:$0xff] %vm2329, %v2242
        %2335 = vst.msk [vmem:[#allocation2 + $0x28] sm:$0xff] %vm2329, %v2244
        %2336 = vst.msk [vmem:[#allocation2 + $0x30] sm:$0xff] %vm2329, %v2246
        %2337 = vst.msk [vmem:[#allocation2 + $0x38] sm:$0xff] %vm2329, %v2248
        %2338 = vst.msk [vmem:[#allocation2 + $0x40] sm:$0xff] %vm2329, %v2250
        %2339 = vst.msk [vmem:[#allocation2 + $0x48] sm:$0xff] %vm2329, %v2252
        %2340 = vst.msk [vmem:[#allocation2 + $0x50] sm:$0xff] %vm2329, %v2254
        %2341 = vst.msk [vmem:[#allocation2 + $0x58] sm:$0xff] %vm2329, %v2256
        %2342 = vst.msk [vmem:[#allocation2 + $0x60] sm:$0xff] %vm2329, %v2258
        %2343 = vst.msk [vmem:[#allocation2 + $0x68] sm:$0xff] %vm2329, %v2260
        %2344 = vst.msk [vmem:[#allocation2 + $0x70] sm:$0xff] %vm2329, %v2262
        %2345 = vst.msk [vmem:[#allocation2 + $0x78] sm:$0xff] %vm2329, %v2264
        %2346 = vst.msk [vmem:[#allocation2 + $0x80] sm:$0xff] %vm2329, %v2266
        %2347 = vst.msk [vmem:[#allocation2 + $0x88] sm:$0xff] %vm2329, %v2268
        %2348 = vst.msk [vmem:[#allocation2 + $0x90] sm:$0xff] %vm2329, %v2270
        %2349 = vst.msk [vmem:[#allocation2 + $0x98] sm:$0xff] %vm2329, %v2272
        %2350 = vst.msk [vmem:[#allocation2 + $0xa0] sm:$0xff] %vm2329, %v2274
        %2351 = vst.msk [vmem:[#allocation2 + $0xa8] sm:$0xff] %vm2329, %v2276
        %2352 = vst.msk [vmem:[#allocation2 + $0xb0] sm:$0xff] %vm2329, %v2278
        %2353 = vst.msk [vmem:[#allocation2 + $0xb8] sm:$0xff] %vm2329, %v2280
        %2354 = vst.msk [vmem:[#allocation2 + $0xc0] sm:$0xff] %vm2329, %v2282
        %2355 = vst.msk [vmem:[#allocation2 + $0xc8] sm:$0xff] %vm2329, %v2284
        %2356 = vst.msk [vmem:[#allocation2 + $0xd0] sm:$0xff] %vm2329, %v2286
        %2357 = vst.msk [vmem:[#allocation2 + $0xd8] sm:$0xff] %vm2329, %v2288
        %2358 = vst.msk [vmem:[#allocation2 + $0xe0] sm:$0xff] %vm2329, %v2290
        %2359 = vst.msk [vmem:[#allocation2 + $0xe8] sm:$0xff] %vm2329, %v2292
        %2360 = vst.msk [vmem:[#allocation2 + $0xf0] sm:$0xff] %vm2329, %v2294
        %2361 = vst.msk [vmem:[#allocation2 + $0xf8] sm:$0xff] %vm2329, %v2296
        %s2362 = scalar_lea.vmem [#allocation3], 48
        %v2363 = vld [vmem:[%s2362] sm:$0xff]
        %v2364 = vld [vmem:[%s2362 + $0x8] sm:$0xff]
        %v2365 = vld [vmem:[%s2362 + $0x18] sm:$0xff]
        %v2366 = vld [vmem:[%s2362 + $0x20] sm:$0xff]
        %v2367 = vld [vmem:[%s2362 + $0x30] sm:$0xff]
        %v2368 = vld [vmem:[%s2362 + $0x38] sm:$0xff]
        %v2369 = vld [vmem:[%s2362 + $0x48] sm:$0xff]
        %v2370 = vld [vmem:[%s2362 + $0x50] sm:$0xff]
        %v2371 = vld [vmem:[%s2362 + $0x60] sm:$0xff]
        %v2372 = vld [vmem:[%s2362 + $0x68] sm:$0xff]
        %v2373 = vld [vmem:[%s2362 + $0x78] sm:$0xff]
        %v2374 = vld [vmem:[%s2362 + $0x80] sm:$0xff]
        %v2375 = vld [vmem:[%s2362 + $0x90] sm:$0xff]
        %v2376 = vld [vmem:[%s2362 + $0x98] sm:$0xff]
        %v2377 = vld [vmem:[%s2362 + $0xa8] sm:$0xff]
        %v2378 = vld [vmem:[%s2362 + $0xb0] sm:$0xff]
        %v2379 = vld [vmem:[%s2362 + $0xc0] sm:$0xff]
        %v2380 = vld [vmem:[%s2362 + $0xc8] sm:$0xff]
        %v2381 = vld [vmem:[%s2362 + $0xd8] sm:$0xff]
        %v2382 = vld [vmem:[%s2362 + $0xe0] sm:$0xff]
        %v2383 = vld [vmem:[%s2362 + $0xf0] sm:$0xff]
        %v2384 = vld [vmem:[%s2362 + $0xf8] sm:$0xff]
        %v2385 = vld [vmem:[%s2362 + $0x108] sm:$0xff]
        %v2386 = vld [vmem:[%s2362 + $0x110] sm:$0xff]
        %v2387 = vld [vmem:[%s2362 + $0x120] sm:$0xff]
        %v2388 = vld [vmem:[%s2362 + $0x128] sm:$0xff]
        %v2389 = vld [vmem:[%s2362 + $0x138] sm:$0xff]
        %v2390 = vld [vmem:[%s2362 + $0x140] sm:$0xff]
        %v2391 = vld [vmem:[%s2362 + $0x150] sm:$0xff]
        %v2392 = vld [vmem:[%s2362 + $0x158] sm:$0xff]
        %v2393 = vld [vmem:[%s2362 + $0x168] sm:$0xff]
        %v2394 = vld [vmem:[%s2362 + $0x170] sm:$0xff]
        %v2395 = vadd.f32 %v2137, %v2363
        %v2396 = vadd.f32 %v2138, %v2364
        %v2397 = vadd.f32 %v2139, %v2365
        %v2398 = vadd.f32 %v2140, %v2366
        %v2399 = vadd.f32 %v2141, %v2367
        %v2400 = vadd.f32 %v2142, %v2368
        %v2401 = vadd.f32 %v2143, %v2369
        %v2402 = vadd.f32 %v2144, %v2370
        %v2403 = vadd.f32 %v2145, %v2371
        %v2404 = vadd.f32 %v2146, %v2372
        %v2405 = vadd.f32 %v2147, %v2373
        %v2406 = vadd.f32 %v2148, %v2374
        %v2407 = vadd.f32 %v2149, %v2375
        %v2408 = vadd.f32 %v2150, %v2376
        %v2409 = vadd.f32 %v2151, %v2377
        %v2410 = vadd.f32 %v2152, %v2378
        %v2411 = vadd.f32 %v2153, %v2379
        %v2412 = vadd.f32 %v2154, %v2380
        %v2413 = vadd.f32 %v2155, %v2381
        %v2414 = vadd.f32 %v2156, %v2382
        %v2415 = vadd.f32 %v2157, %v2383
        %v2416 = vadd.f32 %v2158, %v2384
        %v2417 = vadd.f32 %v2159, %v2385
        %v2418 = vadd.f32 %v2160, %v2386
        %v2419 = vadd.f32 %v2161, %v2387
        %v2420 = vadd.f32 %v2162, %v2388
        %v2421 = vadd.f32 %v2163, %v2389
        %v2422 = vadd.f32 %v2164, %v2390
        %v2423 = vadd.f32 %v2165, %v2391
        %v2424 = vadd.f32 %v2166, %v2392
        %v2425 = vadd.f32 %v2167, %v2393
        %v2426 = vadd.f32 %v2168, %v2394
        %v2427 = vmax.f32 %v2363, 0.0
        %v2428 = vmax.f32 %v2364, 0.0
        %v2429 = vmax.f32 %v2365, 0.0
        %v2430 = vmax.f32 %v2366, 0.0
        %v2431 = vmax.f32 %v2367, 0.0
        %v2432 = vmax.f32 %v2368, 0.0
        %v2433 = vmax.f32 %v2369, 0.0
        %v2434 = vmax.f32 %v2370, 0.0
        %v2435 = vmax.f32 %v2371, 0.0
        %v2436 = vmax.f32 %v2372, 0.0
        %v2437 = vmax.f32 %v2373, 0.0
        %v2438 = vmax.f32 %v2374, 0.0
        %v2439 = vmax.f32 %v2375, 0.0
        %v2440 = vmax.f32 %v2376, 0.0
        %v2441 = vmax.f32 %v2377, 0.0
        %v2442 = vmax.f32 %v2378, 0.0
        %v2443 = vmax.f32 %v2379, 0.0
        %v2444 = vmax.f32 %v2380, 0.0
        %v2445 = vmax.f32 %v2381, 0.0
        %v2446 = vmax.f32 %v2382, 0.0
        %v2447 = vmax.f32 %v2383, 0.0
        %v2448 = vmax.f32 %v2384, 0.0
        %v2449 = vmax.f32 %v2385, 0.0
        %v2450 = vmax.f32 %v2386, 0.0
        %v2451 = vmax.f32 %v2387, 0.0
        %v2452 = vmax.f32 %v2388, 0.0
        %v2453 = vmax.f32 %v2389, 0.0
        %v2454 = vmax.f32 %v2390, 0.0
        %v2455 = vmax.f32 %v2391, 0.0
        %v2456 = vmax.f32 %v2392, 0.0
        %v2457 = vmax.f32 %v2393, 0.0
        %v2458 = vmax.f32 %v2394, 0.0
        %2491 = vrot.lane.b32.xlu0 %v2427, 48
        %v2492 = vpop.permute.xlu0 %2491
        %2493 = vrot.lane.b32.xlu0 %v2428, 48
        %v2494 = vpop.permute.xlu0 %2493
        %2495 = vrot.lane.b32.xlu0 %v2429, 48
        %v2496 = vpop.permute.xlu0 %2495
        %2497 = vrot.lane.b32.xlu0 %v2430, 48
        %v2498 = vpop.permute.xlu0 %2497
        %2499 = vrot.lane.b32.xlu0 %v2431, 48
        %v2500 = vpop.permute.xlu0 %2499
        %2501 = vrot.lane.b32.xlu0 %v2432, 48
        %v2502 = vpop.permute.xlu0 %2501
        %2503 = vrot.lane.b32.xlu0 %v2433, 48
        %v2504 = vpop.permute.xlu0 %2503
        %2505 = vrot.lane.b32.xlu0 %v2434, 48
        %v2506 = vpop.permute.xlu0 %2505
        %2507 = vrot.lane.b32.xlu0 %v2435, 48
        %v2508 = vpop.permute.xlu0 %2507
        %2509 = vrot.lane.b32.xlu0 %v2436, 48
        %v2510 = vpop.permute.xlu0 %2509
        %2511 = vrot.lane.b32.xlu0 %v2437, 48
        %v2512 = vpop.permute.xlu0 %2511
        %2513 = vrot.lane.b32.xlu0 %v2438, 48
        %v2514 = vpop.permute.xlu0 %2513
        %2515 = vrot.lane.b32.xlu0 %v2439, 48
        %v2516 = vpop.permute.xlu0 %2515
        %2517 = vrot.lane.b32.xlu0 %v2440, 48
        %v2518 = vpop.permute.xlu0 %2517
        %2519 = vrot.lane.b32.xlu0 %v2441, 48
        %v2520 = vpop.permute.xlu0 %2519
        %2521 = vrot.lane.b32.xlu0 %v2442, 48
        %v2522 = vpop.permute.xlu0 %2521
        %2523 = vrot.lane.b32.xlu0 %v2443, 48
        %v2524 = vpop.permute.xlu0 %2523
        %2525 = vrot.lane.b32.xlu0 %v2444, 48
        %v2526 = vpop.permute.xlu0 %2525
        %2527 = vrot.lane.b32.xlu0 %v2445, 48
        %v2528 = vpop.permute.xlu0 %2527
        %2529 = vrot.lane.b32.xlu0 %v2446, 48
        %v2530 = vpop.permute.xlu0 %2529
        %2531 = vrot.lane.b32.xlu0 %v2447, 48
        %v2532 = vpop.permute.xlu0 %2531
        %2533 = vrot.lane.b32.xlu0 %v2448, 48
        %v2534 = vpop.permute.xlu0 %2533
        %2535 = vrot.lane.b32.xlu0 %v2449, 48
        %v2536 = vpop.permute.xlu0 %2535
        %2537 = vrot.lane.b32.xlu0 %v2450, 48
        %v2538 = vpop.permute.xlu0 %2537
        %2539 = vrot.lane.b32.xlu0 %v2451, 48
        %v2540 = vpop.permute.xlu0 %2539
        %2541 = vrot.lane.b32.xlu0 %v2452, 48
        %v2542 = vpop.permute.xlu0 %2541
        %2543 = vrot.lane.b32.xlu0 %v2453, 48
        %v2544 = vpop.permute.xlu0 %2543
        %2545 = vrot.lane.b32.xlu0 %v2454, 48
        %v2546 = vpop.permute.xlu0 %2545
        %2547 = vrot.lane.b32.xlu0 %v2455, 48
        %v2548 = vpop.permute.xlu0 %2547
        %2549 = vrot.lane.b32.xlu0 %v2456, 48
        %v2550 = vpop.permute.xlu0 %2549
        %2551 = vrot.lane.b32.xlu0 %v2457, 48
        %v2552 = vpop.permute.xlu0 %2551
        %2553 = vrot.lane.b32.xlu0 %v2458, 48
        %v2554 = vpop.permute.xlu0 %2553
        %vm2587 = vcmask 458112
        %2588 = vst.msk [vmem:[#allocation2] sm:$0xff] %vm2587, %v2492
        %2589 = vst.msk [vmem:[#allocation2 + $0x8] sm:$0xff] %vm2587, %v2494
        %2590 = vst.msk [vmem:[#allocation2 + $0x10] sm:$0xff] %vm2587, %v2496
        %2591 = vst.msk [vmem:[#allocation2 + $0x18] sm:$0xff] %vm2587, %v2498
        %2592 = vst.msk [vmem:[#allocation2 + $0x20] sm:$0xff] %vm2587, %v2500
        %2593 = vst.msk [vmem:[#allocation2 + $0x28] sm:$0xff] %vm2587, %v2502
        %2594 = vst.msk [vmem:[#allocation2 + $0x30] sm:$0xff] %vm2587, %v2504
        %2595 = vst.msk [vmem:[#allocation2 + $0x38] sm:$0xff] %vm2587, %v2506
        %2596 = vst.msk [vmem:[#allocation2 + $0x40] sm:$0xff] %vm2587, %v2508
        %2597 = vst.msk [vmem:[#allocation2 + $0x48] sm:$0xff] %vm2587, %v2510
        %2598 = vst.msk [vmem:[#allocation2 + $0x50] sm:$0xff] %vm2587, %v2512
        %2599 = vst.msk [vmem:[#allocation2 + $0x58] sm:$0xff] %vm2587, %v2514
        %2600 = vst.msk [vmem:[#allocation2 + $0x60] sm:$0xff] %vm2587, %v2516
        %2601 = vst.msk [vmem:[#allocation2 + $0x68] sm:$0xff] %vm2587, %v2518
        %2602 = vst.msk [vmem:[#allocation2 + $0x70] sm:$0xff] %vm2587, %v2520
        %2603 = vst.msk [vmem:[#allocation2 + $0x78] sm:$0xff] %vm2587, %v2522
        %2604 = vst.msk [vmem:[#allocation2 + $0x80] sm:$0xff] %vm2587, %v2524
        %2605 = vst.msk [vmem:[#allocation2 + $0x88] sm:$0xff] %vm2587, %v2526
        %2606 = vst.msk [vmem:[#allocation2 + $0x90] sm:$0xff] %vm2587, %v2528
        %2607 = vst.msk [vmem:[#allocation2 + $0x98] sm:$0xff] %vm2587, %v2530
        %2608 = vst.msk [vmem:[#allocation2 + $0xa0] sm:$0xff] %vm2587, %v2532
        %2609 = vst.msk [vmem:[#allocation2 + $0xa8] sm:$0xff] %vm2587, %v2534
        %2610 = vst.msk [vmem:[#allocation2 + $0xb0] sm:$0xff] %vm2587, %v2536
        %2611 = vst.msk [vmem:[#allocation2 + $0xb8] sm:$0xff] %vm2587, %v2538
        %2612 = vst.msk [vmem:[#allocation2 + $0xc0] sm:$0xff] %vm2587, %v2540
        %2613 = vst.msk [vmem:[#allocation2 + $0xc8] sm:$0xff] %vm2587, %v2542
        %2614 = vst.msk [vmem:[#allocation2 + $0xd0] sm:$0xff] %vm2587, %v2544
        %2615 = vst.msk [vmem:[#allocation2 + $0xd8] sm:$0xff] %vm2587, %v2546
        %2616 = vst.msk [vmem:[#allocation2 + $0xe0] sm:$0xff] %vm2587, %v2548
        %2617 = vst.msk [vmem:[#allocation2 + $0xe8] sm:$0xff] %vm2587, %v2550
        %2618 = vst.msk [vmem:[#allocation2 + $0xf0] sm:$0xff] %vm2587, %v2552
        %2619 = vst.msk [vmem:[#allocation2 + $0xf8] sm:$0xff] %vm2587, %v2554
        %v2620 = vld [vmem:[%s2362 + $0x1] sm:$0xff]
        %v2621 = vld [vmem:[%s2362 + $0x9] sm:$0xff]
        %v2622 = vld [vmem:[%s2362 + $0x19] sm:$0xff]
        %v2623 = vld [vmem:[%s2362 + $0x21] sm:$0xff]
        %v2624 = vld [vmem:[%s2362 + $0x31] sm:$0xff]
        %v2625 = vld [vmem:[%s2362 + $0x39] sm:$0xff]
        %v2626 = vld [vmem:[%s2362 + $0x49] sm:$0xff]
        %v2627 = vld [vmem:[%s2362 + $0x51] sm:$0xff]
        %v2628 = vld [vmem:[%s2362 + $0x61] sm:$0xff]
        %v2629 = vld [vmem:[%s2362 + $0x69] sm:$0xff]
        %v2630 = vld [vmem:[%s2362 + $0x79] sm:$0xff]
        %v2631 = vld [vmem:[%s2362 + $0x81] sm:$0xff]
        %v2632 = vld [vmem:[%s2362 + $0x91] sm:$0xff]
        %v2633 = vld [vmem:[%s2362 + $0x99] sm:$0xff]
        %v2634 = vld [vmem:[%s2362 + $0xa9] sm:$0xff]
        %v2635 = vld [vmem:[%s2362 + $0xb1] sm:$0xff]
        %v2636 = vld [vmem:[%s2362 + $0xc1] sm:$0xff]
        %v2637 = vld [vmem:[%s2362 + $0xc9] sm:$0xff]
        %v2638 = vld [vmem:[%s2362 + $0xd9] sm:$0xff]
        %v2639 = vld [vmem:[%s2362 + $0xe1] sm:$0xff]
        %v2640 = vld [vmem:[%s2362 + $0xf1] sm:$0xff]
        %v2641 = vld [vmem:[%s2362 + $0xf9] sm:$0xff]
        %v2642 = vld [vmem:[%s2362 + $0x109] sm:$0xff]
        %v2643 = vld [vmem:[%s2362 + $0x111] sm:$0xff]
        %v2644 = vld [vmem:[%s2362 + $0x121] sm:$0xff]
        %v2645 = vld [vmem:[%s2362 + $0x129] sm:$0xff]
        %v2646 = vld [vmem:[%s2362 + $0x139] sm:$0xff]
        %v2647 = vld [vmem:[%s2362 + $0x141] sm:$0xff]
        %v2648 = vld [vmem:[%s2362 + $0x151] sm:$0xff]
        %v2649 = vld [vmem:[%s2362 + $0x159] sm:$0xff]
        %v2650 = vld [vmem:[%s2362 + $0x169] sm:$0xff]
        %v2651 = vld [vmem:[%s2362 + $0x171] sm:$0xff]
        %v2652 = vadd.f32 %v2395, %v2620
        %v2653 = vadd.f32 %v2396, %v2621
        %v2654 = vadd.f32 %v2397, %v2622
        %v2655 = vadd.f32 %v2398, %v2623
        %v2656 = vadd.f32 %v2399, %v2624
        %v2657 = vadd.f32 %v2400, %v2625
        %v2658 = vadd.f32 %v2401, %v2626
        %v2659 = vadd.f32 %v2402, %v2627
        %v2660 = vadd.f32 %v2403, %v2628
        %v2661 = vadd.f32 %v2404, %v2629
        %v2662 = vadd.f32 %v2405, %v2630
        %v2663 = vadd.f32 %v2406, %v2631
        %v2664 = vadd.f32 %v2407, %v2632
        %v2665 = vadd.f32 %v2408, %v2633
        %v2666 = vadd.f32 %v2409, %v2634
        %v2667 = vadd.f32 %v2410, %v2635
        %v2668 = vadd.f32 %v2411, %v2636
        %v2669 = vadd.f32 %v2412, %v2637
        %v2670 = vadd.f32 %v2413, %v2638
        %v2671 = vadd.f32 %v2414, %v2639
        %v2672 = vadd.f32 %v2415, %v2640
        %v2673 = vadd.f32 %v2416, %v2641
        %v2674 = vadd.f32 %v2417, %v2642
        %v2675 = vadd.f32 %v2418, %v2643
        %v2676 = vadd.f32 %v2419, %v2644
        %v2677 = vadd.f32 %v2420, %v2645
        %v2678 = vadd.f32 %v2421, %v2646
        %v2679 = vadd.f32 %v2422, %v2647
        %v2680 = vadd.f32 %v2423, %v2648
        %v2681 = vadd.f32 %v2424, %v2649
        %v2682 = vadd.f32 %v2425, %v2650
        %v2683 = vadd.f32 %v2426, %v2651
        %v2684 = vmax.f32 %v2620, 0.0
        %v2685 = vmax.f32 %v2621, 0.0
        %v2686 = vmax.f32 %v2622, 0.0
        %v2687 = vmax.f32 %v2623, 0.0
        %v2688 = vmax.f32 %v2624, 0.0
        %v2689 = vmax.f32 %v2625, 0.0
        %v2690 = vmax.f32 %v2626, 0.0
        %v2691 = vmax.f32 %v2627, 0.0
        %v2692 = vmax.f32 %v2628, 0.0
        %v2693 = vmax.f32 %v2629, 0.0
        %v2694 = vmax.f32 %v2630, 0.0
        %v2695 = vmax.f32 %v2631, 0.0
        %v2696 = vmax.f32 %v2632, 0.0
        %v2697 = vmax.f32 %v2633, 0.0
        %v2698 = vmax.f32 %v2634, 0.0
        %v2699 = vmax.f32 %v2635, 0.0
        %v2700 = vmax.f32 %v2636, 0.0
        %v2701 = vmax.f32 %v2637, 0.0
        %v2702 = vmax.f32 %v2638, 0.0
        %v2703 = vmax.f32 %v2639, 0.0
        %v2704 = vmax.f32 %v2640, 0.0
        %v2705 = vmax.f32 %v2641, 0.0
        %v2706 = vmax.f32 %v2642, 0.0
        %v2707 = vmax.f32 %v2643, 0.0
        %v2708 = vmax.f32 %v2644, 0.0
        %v2709 = vmax.f32 %v2645, 0.0
        %v2710 = vmax.f32 %v2646, 0.0
        %v2711 = vmax.f32 %v2647, 0.0
        %v2712 = vmax.f32 %v2648, 0.0
        %v2713 = vmax.f32 %v2649, 0.0
        %v2714 = vmax.f32 %v2650, 0.0
        %v2715 = vmax.f32 %v2651, 0.0
        %2748 = vrot.lane.b32.xlu0 %v2684, 56
        %v2749 = vpop.permute.xlu0 %2748
        %2750 = vrot.lane.b32.xlu0 %v2685, 56
        %v2751 = vpop.permute.xlu0 %2750
        %2752 = vrot.lane.b32.xlu0 %v2686, 56
        %v2753 = vpop.permute.xlu0 %2752
        %2754 = vrot.lane.b32.xlu0 %v2687, 56
        %v2755 = vpop.permute.xlu0 %2754
        %2756 = vrot.lane.b32.xlu0 %v2688, 56
        %v2757 = vpop.permute.xlu0 %2756
        %2758 = vrot.lane.b32.xlu0 %v2689, 56
        %v2759 = vpop.permute.xlu0 %2758
        %2760 = vrot.lane.b32.xlu0 %v2690, 56
        %v2761 = vpop.permute.xlu0 %2760
        %2762 = vrot.lane.b32.xlu0 %v2691, 56
        %v2763 = vpop.permute.xlu0 %2762
        %2764 = vrot.lane.b32.xlu0 %v2692, 56
        %v2765 = vpop.permute.xlu0 %2764
        %2766 = vrot.lane.b32.xlu0 %v2693, 56
        %v2767 = vpop.permute.xlu0 %2766
        %2768 = vrot.lane.b32.xlu0 %v2694, 56
        %v2769 = vpop.permute.xlu0 %2768
        %2770 = vrot.lane.b32.xlu0 %v2695, 56
        %v2771 = vpop.permute.xlu0 %2770
        %2772 = vrot.lane.b32.xlu0 %v2696, 56
        %v2773 = vpop.permute.xlu0 %2772
        %2774 = vrot.lane.b32.xlu0 %v2697, 56
        %v2775 = vpop.permute.xlu0 %2774
        %2776 = vrot.lane.b32.xlu0 %v2698, 56
        %v2777 = vpop.permute.xlu0 %2776
        %2778 = vrot.lane.b32.xlu0 %v2699, 56
        %v2779 = vpop.permute.xlu0 %2778
        %2780 = vrot.lane.b32.xlu0 %v2700, 56
        %v2781 = vpop.permute.xlu0 %2780
        %2782 = vrot.lane.b32.xlu0 %v2701, 56
        %v2783 = vpop.permute.xlu0 %2782
        %2784 = vrot.lane.b32.xlu0 %v2702, 56
        %v2785 = vpop.permute.xlu0 %2784
        %2786 = vrot.lane.b32.xlu0 %v2703, 56
        %v2787 = vpop.permute.xlu0 %2786
        %2788 = vrot.lane.b32.xlu0 %v2704, 56
        %v2789 = vpop.permute.xlu0 %2788
        %2790 = vrot.lane.b32.xlu0 %v2705, 56
        %v2791 = vpop.permute.xlu0 %2790
        %2792 = vrot.lane.b32.xlu0 %v2706, 56
        %v2793 = vpop.permute.xlu0 %2792
        %2794 = vrot.lane.b32.xlu0 %v2707, 56
        %v2795 = vpop.permute.xlu0 %2794
        %2796 = vrot.lane.b32.xlu0 %v2708, 56
        %v2797 = vpop.permute.xlu0 %2796
        %2798 = vrot.lane.b32.xlu0 %v2709, 56
        %v2799 = vpop.permute.xlu0 %2798
        %2800 = vrot.lane.b32.xlu0 %v2710, 56
        %v2801 = vpop.permute.xlu0 %2800
        %2802 = vrot.lane.b32.xlu0 %v2711, 56
        %v2803 = vpop.permute.xlu0 %2802
        %2804 = vrot.lane.b32.xlu0 %v2712, 56
        %v2805 = vpop.permute.xlu0 %2804
        %2806 = vrot.lane.b32.xlu0 %v2713, 56
        %v2807 = vpop.permute.xlu0 %2806
        %2808 = vrot.lane.b32.xlu0 %v2714, 56
        %v2809 = vpop.permute.xlu0 %2808
        %2810 = vrot.lane.b32.xlu0 %v2715, 56
        %v2811 = vpop.permute.xlu0 %2810
        %vm2844 = vcmask 523712
        %2845 = vst.msk [vmem:[#allocation2] sm:$0xff] %vm2844, %v2749
        %2846 = vst.msk [vmem:[#allocation2 + $0x8] sm:$0xff] %vm2844, %v2751
        %2847 = vst.msk [vmem:[#allocation2 + $0x10] sm:$0xff] %vm2844, %v2753
        %2848 = vst.msk [vmem:[#allocation2 + $0x18] sm:$0xff] %vm2844, %v2755
        %2849 = vst.msk [vmem:[#allocation2 + $0x20] sm:$0xff] %vm2844, %v2757
        %2850 = vst.msk [vmem:[#allocation2 + $0x28] sm:$0xff] %vm2844, %v2759
        %2851 = vst.msk [vmem:[#allocation2 + $0x30] sm:$0xff] %vm2844, %v2761
        %2852 = vst.msk [vmem:[#allocation2 + $0x38] sm:$0xff] %vm2844, %v2763
        %2853 = vst.msk [vmem:[#allocation2 + $0x40] sm:$0xff] %vm2844, %v2765
        %2854 = vst.msk [vmem:[#allocation2 + $0x48] sm:$0xff] %vm2844, %v2767
        %2855 = vst.msk [vmem:[#allocation2 + $0x50] sm:$0xff] %vm2844, %v2769
        %2856 = vst.msk [vmem:[#allocation2 + $0x58] sm:$0xff] %vm2844, %v2771
        %2857 = vst.msk [vmem:[#allocation2 + $0x60] sm:$0xff] %vm2844, %v2773
        %2858 = vst.msk [vmem:[#allocation2 + $0x68] sm:$0xff] %vm2844, %v2775
        %2859 = vst.msk [vmem:[#allocation2 + $0x70] sm:$0xff] %vm2844, %v2777
        %2860 = vst.msk [vmem:[#allocation2 + $0x78] sm:$0xff] %vm2844, %v2779
        %2861 = vst.msk [vmem:[#allocation2 + $0x80] sm:$0xff] %vm2844, %v2781
        %2862 = vst.msk [vmem:[#allocation2 + $0x88] sm:$0xff] %vm2844, %v2783
        %2863 = vst.msk [vmem:[#allocation2 + $0x90] sm:$0xff] %vm2844, %v2785
        %2864 = vst.msk [vmem:[#allocation2 + $0x98] sm:$0xff] %vm2844, %v2787
        %2865 = vst.msk [vmem:[#allocation2 + $0xa0] sm:$0xff] %vm2844, %v2789
        %2866 = vst.msk [vmem:[#allocation2 + $0xa8] sm:$0xff] %vm2844, %v2791
        %2867 = vst.msk [vmem:[#allocation2 + $0xb0] sm:$0xff] %vm2844, %v2793
        %2868 = vst.msk [vmem:[#allocation2 + $0xb8] sm:$0xff] %vm2844, %v2795
        %2869 = vst.msk [vmem:[#allocation2 + $0xc0] sm:$0xff] %vm2844, %v2797
        %2870 = vst.msk [vmem:[#allocation2 + $0xc8] sm:$0xff] %vm2844, %v2799
        %2871 = vst.msk [vmem:[#allocation2 + $0xd0] sm:$0xff] %vm2844, %v2801
        %2872 = vst.msk [vmem:[#allocation2 + $0xd8] sm:$0xff] %vm2844, %v2803
        %2873 = vst.msk [vmem:[#allocation2 + $0xe0] sm:$0xff] %vm2844, %v2805
        %2874 = vst.msk [vmem:[#allocation2 + $0xe8] sm:$0xff] %vm2844, %v2807
        %2875 = vst.msk [vmem:[#allocation2 + $0xf0] sm:$0xff] %vm2844, %v2809
        %2876 = vst.msk [vmem:[#allocation2 + $0xf8] sm:$0xff] %vm2844, %v2811
        %v2877 = vld [vmem:[%s2362 + $0x2] sm:$0xff]
        %v2878 = vld [vmem:[%s2362 + $0xa] sm:$0xff]
        %v2879 = vld [vmem:[%s2362 + $0x1a] sm:$0xff]
        %v2880 = vld [vmem:[%s2362 + $0x22] sm:$0xff]
        %v2881 = vld [vmem:[%s2362 + $0x32] sm:$0xff]
        %v2882 = vld [vmem:[%s2362 + $0x3a] sm:$0xff]
        %v2883 = vld [vmem:[%s2362 + $0x4a] sm:$0xff]
        %v2884 = vld [vmem:[%s2362 + $0x52] sm:$0xff]
        %v2885 = vld [vmem:[%s2362 + $0x62] sm:$0xff]
        %v2886 = vld [vmem:[%s2362 + $0x6a] sm:$0xff]
        %v2887 = vld [vmem:[%s2362 + $0x7a] sm:$0xff]
        %v2888 = vld [vmem:[%s2362 + $0x82] sm:$0xff]
        %v2889 = vld [vmem:[%s2362 + $0x92] sm:$0xff]
        %v2890 = vld [vmem:[%s2362 + $0x9a] sm:$0xff]
        %v2891 = vld [vmem:[%s2362 + $0xaa] sm:$0xff]
        %v2892 = vld [vmem:[%s2362 + $0xb2] sm:$0xff]
        %v2893 = vld [vmem:[%s2362 + $0xc2] sm:$0xff]
        %v2894 = vld [vmem:[%s2362 + $0xca] sm:$0xff]
        %v2895 = vld [vmem:[%s2362 + $0xda] sm:$0xff]
        %v2896 = vld [vmem:[%s2362 + $0xe2] sm:$0xff]
        %v2897 = vld [vmem:[%s2362 + $0xf2] sm:$0xff]
        %v2898 = vld [vmem:[%s2362 + $0xfa] sm:$0xff]
        %v2899 = vld [vmem:[%s2362 + $0x10a] sm:$0xff]
        %v2900 = vld [vmem:[%s2362 + $0x112] sm:$0xff]
        %v2901 = vld [vmem:[%s2362 + $0x122] sm:$0xff]
        %v2902 = vld [vmem:[%s2362 + $0x12a] sm:$0xff]
        %v2903 = vld [vmem:[%s2362 + $0x13a] sm:$0xff]
        %v2904 = vld [vmem:[%s2362 + $0x142] sm:$0xff]
        %v2905 = vld [vmem:[%s2362 + $0x152] sm:$0xff]
        %v2906 = vld [vmem:[%s2362 + $0x15a] sm:$0xff]
        %v2907 = vld [vmem:[%s2362 + $0x16a] sm:$0xff]
        %v2908 = vld [vmem:[%s2362 + $0x172] sm:$0xff]
        %v2909 = vadd.f32 %v2652, %v2877
        %v2910 = vadd.f32 %v2653, %v2878
        %v2911 = vadd.f32 %v2654, %v2879
        %v2912 = vadd.f32 %v2655, %v2880
        %v2913 = vadd.f32 %v2656, %v2881
        %v2914 = vadd.f32 %v2657, %v2882
        %v2915 = vadd.f32 %v2658, %v2883
        %v2916 = vadd.f32 %v2659, %v2884
        %v2917 = vadd.f32 %v2660, %v2885
        %v2918 = vadd.f32 %v2661, %v2886
        %v2919 = vadd.f32 %v2662, %v2887
        %v2920 = vadd.f32 %v2663, %v2888
        %v2921 = vadd.f32 %v2664, %v2889
        %v2922 = vadd.f32 %v2665, %v2890
        %v2923 = vadd.f32 %v2666, %v2891
        %v2924 = vadd.f32 %v2667, %v2892
        %v2925 = vadd.f32 %v2668, %v2893
        %v2926 = vadd.f32 %v2669, %v2894
        %v2927 = vadd.f32 %v2670, %v2895
        %v2928 = vadd.f32 %v2671, %v2896
        %v2929 = vadd.f32 %v2672, %v2897
        %v2930 = vadd.f32 %v2673, %v2898
        %v2931 = vadd.f32 %v2674, %v2899
        %v2932 = vadd.f32 %v2675, %v2900
        %v2933 = vadd.f32 %v2676, %v2901
        %v2934 = vadd.f32 %v2677, %v2902
        %v2935 = vadd.f32 %v2678, %v2903
        %v2936 = vadd.f32 %v2679, %v2904
        %v2937 = vadd.f32 %v2680, %v2905
        %v2938 = vadd.f32 %v2681, %v2906
        %v2939 = vadd.f32 %v2682, %v2907
        %v2940 = vadd.f32 %v2683, %v2908
        %v2941 = vmax.f32 %v2877, 0.0
        %v2942 = vmax.f32 %v2878, 0.0
        %v2943 = vmax.f32 %v2879, 0.0
        %v2944 = vmax.f32 %v2880, 0.0
        %v2945 = vmax.f32 %v2881, 0.0
        %v2946 = vmax.f32 %v2882, 0.0
        %v2947 = vmax.f32 %v2883, 0.0
        %v2948 = vmax.f32 %v2884, 0.0
        %v2949 = vmax.f32 %v2885, 0.0
        %v2950 = vmax.f32 %v2886, 0.0
        %v2951 = vmax.f32 %v2887, 0.0
        %v2952 = vmax.f32 %v2888, 0.0
        %v2953 = vmax.f32 %v2889, 0.0
        %v2954 = vmax.f32 %v2890, 0.0
        %v2955 = vmax.f32 %v2891, 0.0
        %v2956 = vmax.f32 %v2892, 0.0
        %v2957 = vmax.f32 %v2893, 0.0
        %v2958 = vmax.f32 %v2894, 0.0
        %v2959 = vmax.f32 %v2895, 0.0
        %v2960 = vmax.f32 %v2896, 0.0
        %v2961 = vmax.f32 %v2897, 0.0
        %v2962 = vmax.f32 %v2898, 0.0
        %v2963 = vmax.f32 %v2899, 0.0
        %v2964 = vmax.f32 %v2900, 0.0
        %v2965 = vmax.f32 %v2901, 0.0
        %v2966 = vmax.f32 %v2902, 0.0
        %v2967 = vmax.f32 %v2903, 0.0
        %v2968 = vmax.f32 %v2904, 0.0
        %v2969 = vmax.f32 %v2905, 0.0
        %v2970 = vmax.f32 %v2906, 0.0
        %v2971 = vmax.f32 %v2907, 0.0
        %v2972 = vmax.f32 %v2908, 0.0
        %3005 = vrot.lane.b32.xlu0 %v2941, 64
        %v3006 = vpop.permute.xlu0 %3005
        %3007 = vrot.lane.b32.xlu0 %v2942, 64
        %v3008 = vpop.permute.xlu0 %3007
        %3009 = vrot.lane.b32.xlu0 %v2943, 64
        %v3010 = vpop.permute.xlu0 %3009
        %3011 = vrot.lane.b32.xlu0 %v2944, 64
        %v3012 = vpop.permute.xlu0 %3011
        %3013 = vrot.lane.b32.xlu0 %v2945, 64
        %v3014 = vpop.permute.xlu0 %3013
        %3015 = vrot.lane.b32.xlu0 %v2946, 64
        %v3016 = vpop.permute.xlu0 %3015
        %3017 = vrot.lane.b32.xlu0 %v2947, 64
        %v3018 = vpop.permute.xlu0 %3017
        %3019 = vrot.lane.b32.xlu0 %v2948, 64
        %v3020 = vpop.permute.xlu0 %3019
        %3021 = vrot.lane.b32.xlu0 %v2949, 64
        %v3022 = vpop.permute.xlu0 %3021
        %3023 = vrot.lane.b32.xlu0 %v2950, 64
        %v3024 = vpop.permute.xlu0 %3023
        %3025 = vrot.lane.b32.xlu0 %v2951, 64
        %v3026 = vpop.permute.xlu0 %3025
        %3027 = vrot.lane.b32.xlu0 %v2952, 64
        %v3028 = vpop.permute.xlu0 %3027
        %3029 = vrot.lane.b32.xlu0 %v2953, 64
        %v3030 = vpop.permute.xlu0 %3029
        %3031 = vrot.lane.b32.xlu0 %v2954, 64
        %v3032 = vpop.permute.xlu0 %3031
        %3033 = vrot.lane.b32.xlu0 %v2955, 64
        %v3034 = vpop.permute.xlu0 %3033
        %3035 = vrot.lane.b32.xlu0 %v2956, 64
        %v3036 = vpop.permute.xlu0 %3035
        %3037 = vrot.lane.b32.xlu0 %v2957, 64
        %v3038 = vpop.permute.xlu0 %3037
        %3039 = vrot.lane.b32.xlu0 %v2958, 64
        %v3040 = vpop.permute.xlu0 %3039
        %3041 = vrot.lane.b32.xlu0 %v2959, 64
        %v3042 = vpop.permute.xlu0 %3041
        %3043 = vrot.lane.b32.xlu0 %v2960, 64
        %v3044 = vpop.permute.xlu0 %3043
        %3045 = vrot.lane.b32.xlu0 %v2961, 64
        %v3046 = vpop.permute.xlu0 %3045
        %3047 = vrot.lane.b32.xlu0 %v2962, 64
        %v3048 = vpop.permute.xlu0 %3047
        %3049 = vrot.lane.b32.xlu0 %v2963, 64
        %v3050 = vpop.permute.xlu0 %3049
        %3051 = vrot.lane.b32.xlu0 %v2964, 64
        %v3052 = vpop.permute.xlu0 %3051
        %3053 = vrot.lane.b32.xlu0 %v2965, 64
        %v3054 = vpop.permute.xlu0 %3053
        %3055 = vrot.lane.b32.xlu0 %v2966, 64
        %v3056 = vpop.permute.xlu0 %3055
        %3057 = vrot.lane.b32.xlu0 %v2967, 64
        %v3058 = vpop.permute.xlu0 %3057
        %3059 = vrot.lane.b32.xlu0 %v2968, 64
        %v3060 = vpop.permute.xlu0 %3059
        %3061 = vrot.lane.b32.xlu0 %v2969, 64
        %v3062 = vpop.permute.xlu0 %3061
        %3063 = vrot.lane.b32.xlu0 %v2970, 64
        %v3064 = vpop.permute.xlu0 %3063
        %3065 = vrot.lane.b32.xlu0 %v2971, 64
        %v3066 = vpop.permute.xlu0 %3065
        %3067 = vrot.lane.b32.xlu0 %v2972, 64
        %v3068 = vpop.permute.xlu0 %3067
        %vm3101 = vcmask 589312
        %3102 = vst.msk [vmem:[#allocation2] sm:$0xff] %vm3101, %v3006
        %3103 = vst.msk [vmem:[#allocation2 + $0x8] sm:$0xff] %vm3101, %v3008
        %3104 = vst.msk [vmem:[#allocation2 + $0x10] sm:$0xff] %vm3101, %v3010
        %3105 = vst.msk [vmem:[#allocation2 + $0x18] sm:$0xff] %vm3101, %v3012
        %3106 = vst.msk [vmem:[#allocation2 + $0x20] sm:$0xff] %vm3101, %v3014
        %3107 = vst.msk [vmem:[#allocation2 + $0x28] sm:$0xff] %vm3101, %v3016
        %3108 = vst.msk [vmem:[#allocation2 + $0x30] sm:$0xff] %vm3101, %v3018
        %3109 = vst.msk [vmem:[#allocation2 + $0x38] sm:$0xff] %vm3101, %v3020
        %3110 = vst.msk [vmem:[#allocation2 + $0x40] sm:$0xff] %vm3101, %v3022
        %3111 = vst.msk [vmem:[#allocation2 + $0x48] sm:$0xff] %vm3101, %v3024
        %3112 = vst.msk [vmem:[#allocation2 + $0x50] sm:$0xff] %vm3101, %v3026
        %3113 = vst.msk [vmem:[#allocation2 + $0x58] sm:$0xff] %vm3101, %v3028
        %3114 = vst.msk [vmem:[#allocation2 + $0x60] sm:$0xff] %vm3101, %v3030
        %3115 = vst.msk [vmem:[#allocation2 + $0x68] sm:$0xff] %vm3101, %v3032
        %3116 = vst.msk [vmem:[#allocation2 + $0x70] sm:$0xff] %vm3101, %v3034
        %3117 = vst.msk [vmem:[#allocation2 + $0x78] sm:$0xff] %vm3101, %v3036
        %3118 = vst.msk [vmem:[#allocation2 + $0x80] sm:$0xff] %vm3101, %v3038
        %3119 = vst.msk [vmem:[#allocation2 + $0x88] sm:$0xff] %vm3101, %v3040
        %3120 = vst.msk [vmem:[#allocation2 + $0x90] sm:$0xff] %vm3101, %v3042
        %3121 = vst.msk [vmem:[#allocation2 + $0x98] sm:$0xff] %vm3101, %v3044
        %3122 = vst.msk [vmem:[#allocation2 + $0xa0] sm:$0xff] %vm3101, %v3046
        %3123 = vst.msk [vmem:[#allocation2 + $0xa8] sm:$0xff] %vm3101, %v3048
        %3124 = vst.msk [vmem:[#allocation2 + $0xb0] sm:$0xff] %vm3101, %v3050
        %3125 = vst.msk [vmem:[#allocation2 + $0xb8] sm:$0xff] %vm3101, %v3052
        %3126 = vst.msk [vmem:[#allocation2 + $0xc0] sm:$0xff] %vm3101, %v3054
        %3127 = vst.msk [vmem:[#allocation2 + $0xc8] sm:$0xff] %vm3101, %v3056
        %3128 = vst.msk [vmem:[#allocation2 + $0xd0] sm:$0xff] %vm3101, %v3058
        %3129 = vst.msk [vmem:[#allocation2 + $0xd8] sm:$0xff] %vm3101, %v3060
        %3130 = vst.msk [vmem:[#allocation2 + $0xe0] sm:$0xff] %vm3101, %v3062
        %3131 = vst.msk [vmem:[#allocation2 + $0xe8] sm:$0xff] %vm3101, %v3064
        %3132 = vst.msk [vmem:[#allocation2 + $0xf0] sm:$0xff] %vm3101, %v3066
        %3133 = vst.msk [vmem:[#allocation2 + $0xf8] sm:$0xff] %vm3101, %v3068
        %v3134 = vmul.f32 %v2909, %v604
        %v3135 = vmul.f32 %v2910, %v606
        %v3136 = vmul.f32 %v2911, %v608
        %v3137 = vmul.f32 %v2912, %v610
        %v3138 = vmul.f32 %v2913, %v608
        %v3139 = vmul.f32 %v2914, %v610
        %v3140 = vmul.f32 %v2915, %v608
        %v3141 = vmul.f32 %v2916, %v610
        %v3142 = vmul.f32 %v2917, %v608
        %v3143 = vmul.f32 %v2918, %v610
        %v3144 = vmul.f32 %v2919, %v608
        %v3145 = vmul.f32 %v2920, %v610
        %v3146 = vmul.f32 %v2921, %v608
        %v3147 = vmul.f32 %v2922, %v610
        %v3148 = vmul.f32 %v2923, %v608
        %v3149 = vmul.f32 %v2924, %v610
        %v3150 = vmul.f32 %v2925, %v608
        %v3151 = vmul.f32 %v2926, %v610
        %v3152 = vmul.f32 %v2927, %v608
        %v3153 = vmul.f32 %v2928, %v610
        %v3154 = vmul.f32 %v2929, %v608
        %v3155 = vmul.f32 %v2930, %v610
        %v3156 = vmul.f32 %v2931, %v608
        %v3157 = vmul.f32 %v2932, %v610
        %v3158 = vmul.f32 %v2933, %v608
        %v3159 = vmul.f32 %v2934, %v610
        %v3160 = vmul.f32 %v2935, %v608
        %v3161 = vmul.f32 %v2936, %v610
        %v3162 = vmul.f32 %v2937, %v608
        %v3163 = vmul.f32 %v2938, %v610
        %v3164 = vmul.f32 %v2939, %v612
        %v3165 = vmul.f32 %v2940, %v614
        %v3166 = vld [vmem:[%s4] sm:$0xf]
        %v3167 = vld [vmem:[%s4 + $0x4] sm:$0xf]
        %v3168 = vld [vmem:[%s4 + $0x8] sm:$0xf]
        %v3169 = vld [vmem:[%s4 + $0xc] sm:$0xf]
        %v3170 = vld [vmem:[%s4 + $0x10] sm:$0xf]
        %v3171 = vld [vmem:[%s4 + $0x14] sm:$0xf]
        %v3172 = vld [vmem:[%s4 + $0x18] sm:$0xf]
        %v3173 = vld [vmem:[%s4 + $0x1c] sm:$0xf]
        %v3174 = vld [vmem:[%s4 + $0x20] sm:$0xf]
        %v3175 = vld [vmem:[%s5] sm:$0x1]
        %v3176 = vld [vmem:[#allocation2] sm:$0xff]
        %v3177 = vld [vmem:[#allocation2 + $0x8] sm:$0xff]
        %v3178 = vld [vmem:[#allocation2 + $0x10] sm:$0xff]
        %v3179 = vld [vmem:[#allocation2 + $0x18] sm:$0xff]
        %v3180 = vld [vmem:[#allocation2 + $0x20] sm:$0xff]
        %v3181 = vld [vmem:[#allocation2 + $0x28] sm:$0xff]
        %v3182 = vld [vmem:[#allocation2 + $0x30] sm:$0xff]
        %v3183 = vld [vmem:[#allocation2 + $0x38] sm:$0xff]
        %v3184 = vld [vmem:[#allocation2 + $0x40] sm:$0xff]
        %v3185 = vld [vmem:[#allocation2 + $0x48] sm:$0xff]
        %v3186 = vld [vmem:[#allocation2 + $0x50] sm:$0xff]
        %v3187 = vld [vmem:[#allocation2 + $0x58] sm:$0xff]
        %v3188 = vld [vmem:[#allocation2 + $0x60] sm:$0xff]
        %v3189 = vld [vmem:[#allocation2 + $0x68] sm:$0xff]
        %v3190 = vld [vmem:[#allocation2 + $0x70] sm:$0xff]
        %v3191 = vld [vmem:[#allocation2 + $0x78] sm:$0xff]
        %v3192 = vld [vmem:[#allocation2 + $0x80] sm:$0xff]
        %v3193 = vld [vmem:[#allocation2 + $0x88] sm:$0xff]
        %v3194 = vld [vmem:[#allocation2 + $0x90] sm:$0xff]
        %v3195 = vld [vmem:[#allocation2 + $0x98] sm:$0xff]
        %v3196 = vld [vmem:[#allocation2 + $0xa0] sm:$0xff]
        %v3197 = vld [vmem:[#allocation2 + $0xa8] sm:$0xff]
        %v3198 = vld [vmem:[#allocation2 + $0xb0] sm:$0xff]
        %v3199 = vld [vmem:[#allocation2 + $0xb8] sm:$0xff]
        %v3200 = vld [vmem:[#allocation2 + $0xc0] sm:$0xff]
        %v3201 = vld [vmem:[#allocation2 + $0xc8] sm:$0xff]
        %v3202 = vld [vmem:[#allocation2 + $0xd0] sm:$0xff]
        %v3203 = vld [vmem:[#allocation2 + $0xd8] sm:$0xff]
        %v3204 = vld [vmem:[#allocation2 + $0xe0] sm:$0xff]
        %v3205 = vld [vmem:[#allocation2 + $0xe8] sm:$0xff]
        %v3206 = vld [vmem:[#allocation2 + $0xf0] sm:$0xff]
        %v3207 = vld [vmem:[#allocation2 + $0xf8] sm:$0xff]
        %v3208 = vpack.c.bf16 %v3177, %v3176
        %v3209 = vpack.c.bf16 %v3179, %v3178
        %v3210 = vpack.c.bf16 %v3181, %v3180
        %v3211 = vpack.c.bf16 %v3183, %v3182
        %v3212 = vpack.c.bf16 %v3185, %v3184
        %v3213 = vpack.c.bf16 %v3187, %v3186
        %v3214 = vpack.c.bf16 %v3189, %v3188
        %v3215 = vpack.c.bf16 %v3191, %v3190
        %v3216 = vpack.c.bf16 %v3193, %v3192
        %v3217 = vpack.c.bf16 %v3195, %v3194
        %v3218 = vpack.c.bf16 %v3197, %v3196
        %v3219 = vpack.c.bf16 %v3199, %v3198
        %v3220 = vpack.c.bf16 %v3201, %v3200
        %v3221 = vpack.c.bf16 %v3203, %v3202
        %v3222 = vpack.c.bf16 %v3205, %v3204
        %v3223 = vpack.c.bf16 %v3207, %v3206
        %v3225 = vlaneseq
        %v3226 = vshrl.u32 %v3225, 7
        %v3227 = vsub.s32 0, %v3226
        %v3228 = vrot.slane %v3175, %v3227
        %v3239 = vunpack.c.l.b16 %v3166
        %v3240 = vunpack.c.l.b16 %v3167
        %v3241 = vunpack.c.l.b16 %v3168
        %v3242 = vunpack.c.l.b16 %v3169
        %v3243 = vunpack.c.l.b16 %v3170
        %v3244 = vunpack.c.l.b16 %v3171
        %v3245 = vunpack.c.l.b16 %v3172
        %v3246 = vunpack.c.l.b16 %v3173
        %v3247 = vunpack.c.l.b16 %v3174
        %v3248 = vpack.c.b16 %v3240, %v3239
        %v3249 = vpack.c.b16 %v3242, %v3241
        %v3250 = vpack.c.b16 %v3244, %v3243
        %v3251 = vpack.c.b16 %v3246, %v3245
        %v3252 = vpack.c.b16 %v3247, %v3247
        %vm3257 = vcmask 588800
        %v3259 = vsel %vm3257, %v3208, 0
        %v3262 = vsel %vm3257, %v3209, 0
        %v3265 = vsel %vm3257, %v3210, 0
        %v3268 = vsel %vm3257, %v3211, 0
        %v3271 = vsel %vm3257, %v3212, 0
        %v3274 = vsel %vm3257, %v3213, 0
        %v3277 = vsel %vm3257, %v3214, 0
        %v3280 = vsel %vm3257, %v3215, 0
        %v3283 = vsel %vm3257, %v3216, 0
        %v3286 = vsel %vm3257, %v3217, 0
        %v3289 = vsel %vm3257, %v3218, 0
        %v3292 = vsel %vm3257, %v3219, 0
        %v3295 = vsel %vm3257, %v3220, 0
        %v3298 = vsel %vm3257, %v3221, 0
        %v3301 = vsel %vm3257, %v3222, 0
        %v3304 = vsel %vm3257, %v3223, 0
        %v3307 = vsel %vm751, %v3252, 0
        %3309 = vmatprep.subr.bf16.mxu0 0
        %3310 = vmatpush1.bf16.msra.mxu0 %v3248
        %3311 = vmatprep.subr.bf16.mxu0 0
        %3312 = vmatpush1.bf16.msra.mxu0 %v3249
        %3313 = vmatprep.subr.bf16.mxu0 0
        %3314 = vmatpush1.bf16.msra.mxu0 %v3250
        %3315 = vmatprep.subr.bf16.mxu0 0
        %3316 = vmatpush1.bf16.msra.mxu0 %v3251
        %3317 = vmatprep.subr.bf16.mxu0 0
        %3318 = vmatpush1.bf16.msra.mxu0 %v3307
        %3319 = vmatprep.subr.bf16.mxu0 0
        %3320 = vmatpush1.bf16.msra.mxu0 0
        %3321 = vmatprep.subr.bf16.mxu0 0
        %3322 = vmatpush1.bf16.msra.mxu0 0
        %3323 = vmatprep.subr.bf16.mxu0 0
        %3324 = vmatpush1.bf16.msra.mxu0 0
        %3325 = vmatprep.subr.bf16.mxu0 0
        %3326 = vmatpush1.bf16.msra.mxu0 0
        %3327 = vmatprep.subr.bf16.mxu0 0
        %3328 = vmatpush1.bf16.msra.mxu0 0
        %3329 = vmatprep.subr.bf16.mxu0 0
        %3330 = vmatpush1.bf16.msra.mxu0 0
        %3331 = vmatprep.subr.bf16.mxu0 0
        %3332 = vmatpush1.bf16.msra.mxu0 0
        %3333 = vmatprep.subr.bf16.mxu0 0
        %3334 = vmatpush1.bf16.msra.mxu0 0
        %3335 = vmatprep.subr.bf16.mxu0 0
        %3336 = vmatpush1.bf16.msra.mxu0 0
        %3337 = vmatprep.subr.bf16.mxu0 0
        %3338 = vmatpush1.bf16.msra.mxu0 0
        %3339 = vmatprep.subr.bf16.mxu0 0
        %3340 = vmatpush1.bf16.msra.mxu0 0
        %3341 = vmatprep.mubr.bf16.mxu0 0
        %3342 = vmatmul.mubr.bf16.gmra.mrb[0].mxu0 %v3259
        %v3343 = vpop.f32.mrb[0].mxu0
        %v3344 = vadd.f32 %v3228, %v3343
        %v3345 = vpop.f32.mrb[0].mxu0
        %v3346 = vpop.f32.mrb[0].mxu0
        %v3347 = vadd.f32 %v3228, %v3346
        %v3348 = vpop.f32.mrb[0].mxu0
        %3349 = vmatprep.mubr.bf16.mxu0 0
        %3350 = vmatmul.mubr.bf16.gmra.mrb[0].mxu0 %v3262
        %v3351 = vpop.f32.mrb[0].mxu0
        %v3352 = vadd.f32 %v3228, %v3351
        %v3353 = vpop.f32.mrb[0].mxu0
        %v3354 = vpop.f32.mrb[0].mxu0
        %v3355 = vadd.f32 %v3228, %v3354
        %v3356 = vpop.f32.mrb[0].mxu0
        %3357 = vmatprep.mubr.bf16.mxu0 0
        %3358 = vmatmul.mubr.bf16.gmra.mrb[0].mxu0 %v3265
        %v3359 = vpop.f32.mrb[0].mxu0
        %v3360 = vadd.f32 %v3228, %v3359
        %v3361 = vpop.f32.mrb[0].mxu0
        %v3362 = vpop.f32.mrb[0].mxu0
        %v3363 = vadd.f32 %v3228, %v3362
        %v3364 = vpop.f32.mrb[0].mxu0
        %3365 = vmatprep.mubr.bf16.mxu0 0
        %3366 = vmatmul.mubr.bf16.gmra.mrb[0].mxu0 %v3268
        %v3367 = vpop.f32.mrb[0].mxu0
        %v3368 = vadd.f32 %v3228, %v3367
        %v3369 = vpop.f32.mrb[0].mxu0
        %v3370 = vpop.f32.mrb[0].mxu0
        %v3371 = vadd.f32 %v3228, %v3370
        %v3372 = vpop.f32.mrb[0].mxu0
        %3373 = vmatprep.mubr.bf16.mxu0 0
        %3374 = vmatmul.mubr.bf16.gmra.mrb[0].mxu0 %v3271
        %v3375 = vpop.f32.mrb[0].mxu0
        %v3376 = vadd.f32 %v3228, %v3375
        %v3377 = vpop.f32.mrb[0].mxu0
        %v3378 = vpop.f32.mrb[0].mxu0
        %v3379 = vadd.f32 %v3228, %v3378
        %v3380 = vpop.f32.mrb[0].mxu0
        %3381 = vmatprep.mubr.bf16.mxu0 0
        %3382 = vmatmul.mubr.bf16.gmra.mrb[0].mxu0 %v3274
        %v3383 = vpop.f32.mrb[0].mxu0
        %v3384 = vadd.f32 %v3228, %v3383
        %v3385 = vpop.f32.mrb[0].mxu0
        %v3386 = vpop.f32.mrb[0].mxu0
        %v3387 = vadd.f32 %v3228, %v3386
        %v3388 = vpop.f32.mrb[0].mxu0
        %3389 = vmatprep.mubr.bf16.mxu0 0
        %3390 = vmatmul.mubr.bf16.gmra.mrb[0].mxu0 %v3277
        %v3391 = vpop.f32.mrb[0].mxu0
        %v3392 = vadd.f32 %v3228, %v3391
        %v3393 = vpop.f32.mrb[0].mxu0
        %v3394 = vpop.f32.mrb[0].mxu0
        %v3395 = vadd.f32 %v3228, %v3394
        %v3396 = vpop.f32.mrb[0].mxu0
        %3397 = vmatprep.mubr.bf16.mxu0 0
        %3398 = vmatmul.mubr.bf16.gmra.mrb[0].mxu0 %v3280
        %v3399 = vpop.f32.mrb[0].mxu0
        %v3400 = vadd.f32 %v3228, %v3399
        %v3401 = vpop.f32.mrb[0].mxu0
        %v3402 = vpop.f32.mrb[0].mxu0
        %v3403 = vadd.f32 %v3228, %v3402
        %v3404 = vpop.f32.mrb[0].mxu0
        %3405 = vmatprep.mubr.bf16.mxu0 0
        %3406 = vmatmul.mubr.bf16.gmra.mrb[0].mxu0 %v3283
        %v3407 = vpop.f32.mrb[0].mxu0
        %v3408 = vadd.f32 %v3228, %v3407
        %v3409 = vpop.f32.mrb[0].mxu0
        %v3410 = vpop.f32.mrb[0].mxu0
        %v3411 = vadd.f32 %v3228, %v3410
        %v3412 = vpop.f32.mrb[0].mxu0
        %3413 = vmatprep.mubr.bf16.mxu0 0
        %3414 = vmatmul.mubr.bf16.gmra.mrb[0].mxu0 %v3286
        %v3415 = vpop.f32.mrb[0].mxu0
        %v3416 = vadd.f32 %v3228, %v3415
        %v3417 = vpop.f32.mrb[0].mxu0
        %v3418 = vpop.f32.mrb[0].mxu0
        %v3419 = vadd.f32 %v3228, %v3418
        %v3420 = vpop.f32.mrb[0].mxu0
        %3421 = vmatprep.mubr.bf16.mxu0 0
        %3422 = vmatmul.mubr.bf16.gmra.mrb[0].mxu0 %v3289
        %v3423 = vpop.f32.mrb[0].mxu0
        %v3424 = vadd.f32 %v3228, %v3423
        %v3425 = vpop.f32.mrb[0].mxu0
        %v3426 = vpop.f32.mrb[0].mxu0
        %v3427 = vadd.f32 %v3228, %v3426
        %v3428 = vpop.f32.mrb[0].mxu0
        %3429 = vmatprep.mubr.bf16.mxu0 0
        %3430 = vmatmul.mubr.bf16.gmra.mrb[0].mxu0 %v3292
        %v3431 = vpop.f32.mrb[0].mxu0
        %v3432 = vadd.f32 %v3228, %v3431
        %v3433 = vpop.f32.mrb[0].mxu0
        %v3434 = vpop.f32.mrb[0].mxu0
        %v3435 = vadd.f32 %v3228, %v3434
        %v3436 = vpop.f32.mrb[0].mxu0
        %3437 = vmatprep.mubr.bf16.mxu0 0
        %3438 = vmatmul.mubr.bf16.gmra.mrb[0].mxu0 %v3295
        %v3439 = vpop.f32.mrb[0].mxu0
        %v3440 = vadd.f32 %v3228, %v3439
        %v3441 = vpop.f32.mrb[0].mxu0
        %v3442 = vpop.f32.mrb[0].mxu0
        %v3443 = vadd.f32 %v3228, %v3442
        %v3444 = vpop.f32.mrb[0].mxu0
        %3445 = vmatprep.mubr.bf16.mxu0 0
        %3446 = vmatmul.mubr.bf16.gmra.mrb[0].mxu0 %v3298
        %v3447 = vpop.f32.mrb[0].mxu0
        %v3448 = vadd.f32 %v3228, %v3447
        %v3449 = vpop.f32.mrb[0].mxu0
        %v3450 = vpop.f32.mrb[0].mxu0
        %v3451 = vadd.f32 %v3228, %v3450
        %v3452 = vpop.f32.mrb[0].mxu0
        %3453 = vmatprep.mubr.bf16.mxu0 0
        %3454 = vmatmul.mubr.bf16.gmra.mrb[0].mxu0 %v3301
        %v3455 = vpop.f32.mrb[0].mxu0
        %v3456 = vadd.f32 %v3228, %v3455
        %v3457 = vpop.f32.mrb[0].mxu0
        %v3458 = vpop.f32.mrb[0].mxu0
        %v3459 = vadd.f32 %v3228, %v3458
        %v3460 = vpop.f32.mrb[0].mxu0
        %3461 = vmatprep.mubr.bf16.mxu0 0
        %3462 = vmatmul.mubr.bf16.gmra.mrb[0].mxu0 %v3304
        %v3463 = vpop.f32.mrb[0].mxu0
        %v3464 = vadd.f32 %v3228, %v3463
        %v3465 = vpop.f32.mrb[0].mxu0
        %v3466 = vpop.f32.mrb[0].mxu0
        %v3467 = vadd.f32 %v3228, %v3466
        %v3468 = vpop.f32.mrb[0].mxu0
        %3469 = vdwg.mxu0
        %s3470 = sld [smem:[#allocation6 + $0x1]]
        %s3471 = sld [smem:[#allocation6 + $0x4]]
        %v3472 = vstv %s3470
        %v3473 = vmul.f32 %v3472, %v1848
        %v3474 = vmul.f32 %v3472, %v1849
        %v3475 = vmul.f32 %v3472, %v1850
        %v3476 = vmul.f32 %v3472, %v1851
        %v3477 = vmul.f32 %v3472, %v1852
        %v3478 = vmul.f32 %v3472, %v1853
        %v3479 = vmul.f32 %v3472, %v1854
        %v3480 = vmul.f32 %v3472, %v1855
        %v3481 = vmul.f32 %v3472, %v1856
        %v3482 = vmul.f32 %v3472, %v1857
        %v3483 = vmul.f32 %v3472, %v1858
        %v3484 = vmul.f32 %v3472, %v1859
        %v3485 = vmul.f32 %v3472, %v1860
        %v3486 = vmul.f32 %v3472, %v1861
        %v3487 = vmul.f32 %v3472, %v1862
        %v3488 = vmul.f32 %v3472, %v1863
        %v3489 = vmul.f32 %v3472, %v1864
        %v3490 = vmul.f32 %v3472, %v1865
        %v3491 = vmul.f32 %v3472, %v1866
        %v3492 = vmul.f32 %v3472, %v1867
        %v3493 = vmul.f32 %v3472, %v1868
        %v3494 = vmul.f32 %v3472, %v1869
        %v3495 = vmul.f32 %v3472, %v1870
        %v3496 = vmul.f32 %v3472, %v1871
        %v3497 = vmul.f32 %v3472, %v1872
        %v3498 = vmul.f32 %v3472, %v1873
        %v3499 = vmul.f32 %v3472, %v1874
        %v3500 = vmul.f32 %v3472, %v1875
        %v3501 = vmul.f32 %v3472, %v1876
        %v3502 = vmul.f32 %v3472, %v1877
        %v3503 = vmul.f32 %v3472, %v1878
        %v3504 = vmul.f32 %v3472, %v1879
        %v3505 = vadd.f32 %v3344, %v3473
        %v3506 = vadd.f32 %v3347, %v3474
        %v3507 = vadd.f32 %v3352, %v3475
        %v3508 = vadd.f32 %v3355, %v3476
        %v3509 = vadd.f32 %v3360, %v3477
        %v3510 = vadd.f32 %v3363, %v3478
        %v3511 = vadd.f32 %v3368, %v3479
        %v3512 = vadd.f32 %v3371, %v3480
        %v3513 = vadd.f32 %v3376, %v3481
        %v3514 = vadd.f32 %v3379, %v3482
        %v3515 = vadd.f32 %v3384, %v3483
        %v3516 = vadd.f32 %v3387, %v3484
        %v3517 = vadd.f32 %v3392, %v3485
        %v3518 = vadd.f32 %v3395, %v3486
        %v3519 = vadd.f32 %v3400, %v3487
        %v3520 = vadd.f32 %v3403, %v3488
        %v3521 = vadd.f32 %v3408, %v3489
        %v3522 = vadd.f32 %v3411, %v3490
        %v3523 = vadd.f32 %v3416, %v3491
        %v3524 = vadd.f32 %v3419, %v3492
        %v3525 = vadd.f32 %v3424, %v3493
        %v3526 = vadd.f32 %v3427, %v3494
        %v3527 = vadd.f32 %v3432, %v3495
        %v3528 = vadd.f32 %v3435, %v3496
        %v3529 = vadd.f32 %v3440, %v3497
        %v3530 = vadd.f32 %v3443, %v3498
        %v3531 = vadd.f32 %v3448, %v3499
        %v3532 = vadd.f32 %v3451, %v3500
        %v3533 = vadd.f32 %v3456, %v3501
        %v3534 = vadd.f32 %v3459, %v3502
        %v3535 = vadd.f32 %v3464, %v3503
        %v3536 = vadd.f32 %v3467, %v3504
        %v3537 = vstv %s3471
        %v3538 = vmul.f32 %v3537, %v3134
        %v3539 = vmul.f32 %v3537, %v3135
        %v3540 = vmul.f32 %v3537, %v3136
        %v3541 = vmul.f32 %v3537, %v3137
        %v3542 = vmul.f32 %v3537, %v3138
        %v3543 = vmul.f32 %v3537, %v3139
        %v3544 = vmul.f32 %v3537, %v3140
        %v3545 = vmul.f32 %v3537, %v3141
        %v3546 = vmul.f32 %v3537, %v3142
        %v3547 = vmul.f32 %v3537, %v3143
        %v3548 = vmul.f32 %v3537, %v3144
        %v3549 = vmul.f32 %v3537, %v3145
        %v3550 = vmul.f32 %v3537, %v3146
        %v3551 = vmul.f32 %v3537, %v3147
        %v3552 = vmul.f32 %v3537, %v3148
        %v3553 = vmul.f32 %v3537, %v3149
        %v3554 = vmul.f32 %v3537, %v3150
        %v3555 = vmul.f32 %v3537, %v3151
        %v3556 = vmul.f32 %v3537, %v3152
        %v3557 = vmul.f32 %v3537, %v3153
        %v3558 = vmul.f32 %v3537, %v3154
        %v3559 = vmul.f32 %v3537, %v3155
        %v3560 = vmul.f32 %v3537, %v3156
        %v3561 = vmul.f32 %v3537, %v3157
        %v3562 = vmul.f32 %v3537, %v3158
        %v3563 = vmul.f32 %v3537, %v3159
        %v3564 = vmul.f32 %v3537, %v3160
        %v3565 = vmul.f32 %v3537, %v3161
        %v3566 = vmul.f32 %v3537, %v3162
        %v3567 = vmul.f32 %v3537, %v3163
        %v3568 = vmul.f32 %v3537, %v3164
        %v3569 = vmul.f32 %v3537, %v3165
        %v3570 = vadd.f32 %v3505, %v3538
        %v3571 = vadd.f32 %v3506, %v3539
        %v3572 = vadd.f32 %v3507, %v3540
        %v3573 = vadd.f32 %v3508, %v3541
        %v3574 = vadd.f32 %v3509, %v3542
        %v3575 = vadd.f32 %v3510, %v3543
        %v3576 = vadd.f32 %v3511, %v3544
        %v3577 = vadd.f32 %v3512, %v3545
        %v3578 = vadd.f32 %v3513, %v3546
        %v3579 = vadd.f32 %v3514, %v3547
        %v3580 = vadd.f32 %v3515, %v3548
        %v3581 = vadd.f32 %v3516, %v3549
        %v3582 = vadd.f32 %v3517, %v3550
        %v3583 = vadd.f32 %v3518, %v3551
        %v3584 = vadd.f32 %v3519, %v3552
        %v3585 = vadd.f32 %v3520, %v3553
        %v3586 = vadd.f32 %v3521, %v3554
        %v3587 = vadd.f32 %v3522, %v3555
        %v3588 = vadd.f32 %v3523, %v3556
        %v3589 = vadd.f32 %v3524, %v3557
        %v3590 = vadd.f32 %v3525, %v3558
        %v3591 = vadd.f32 %v3526, %v3559
        %v3592 = vadd.f32 %v3527, %v3560
        %v3593 = vadd.f32 %v3528, %v3561
        %v3594 = vadd.f32 %v3529, %v3562
        %v3595 = vadd.f32 %v3530, %v3563
        %v3596 = vadd.f32 %v3531, %v3564
        %v3597 = vadd.f32 %v3532, %v3565
        %v3598 = vadd.f32 %v3533, %v3566
        %v3599 = vadd.f32 %v3534, %v3567
        %v3600 = vadd.f32 %v3535, %v3568
        %v3601 = vadd.f32 %v3536, %v3569
        %s3602 = scalar_lea.vmem [#allocation4], 24
        %v3603 = vld [vmem:[%s3602 + $0x1] sm:$0xff]
        %v3604 = vld [vmem:[%s3602 + $0x9] sm:$0xff]
        %v3605 = vld [vmem:[%s3602 + $0x19] sm:$0xff]
        %v3606 = vld [vmem:[%s3602 + $0x21] sm:$0xff]
        %v3607 = vld [vmem:[%s3602 + $0x31] sm:$0xff]
        %v3608 = vld [vmem:[%s3602 + $0x39] sm:$0xff]
        %v3609 = vld [vmem:[%s3602 + $0x49] sm:$0xff]
        %v3610 = vld [vmem:[%s3602 + $0x51] sm:$0xff]
        %v3611 = vld [vmem:[%s3602 + $0x61] sm:$0xff]
        %v3612 = vld [vmem:[%s3602 + $0x69] sm:$0xff]
        %v3613 = vld [vmem:[%s3602 + $0x79] sm:$0xff]
        %v3614 = vld [vmem:[%s3602 + $0x81] sm:$0xff]
        %v3615 = vld [vmem:[%s3602 + $0x91] sm:$0xff]
        %v3616 = vld [vmem:[%s3602 + $0x99] sm:$0xff]
        %v3617 = vld [vmem:[%s3602 + $0xa9] sm:$0xff]
        %v3618 = vld [vmem:[%s3602 + $0xb1] sm:$0xff]
        %v3619 = vld [vmem:[%s3602 + $0xc1] sm:$0xff]
        %v3620 = vld [vmem:[%s3602 + $0xc9] sm:$0xff]
        %v3621 = vld [vmem:[%s3602 + $0xd9] sm:$0xff]
        %v3622 = vld [vmem:[%s3602 + $0xe1] sm:$0xff]
        %v3623 = vld [vmem:[%s3602 + $0xf1] sm:$0xff]
        %v3624 = vld [vmem:[%s3602 + $0xf9] sm:$0xff]
        %v3625 = vld [vmem:[%s3602 + $0x109] sm:$0xff]
        %v3626 = vld [vmem:[%s3602 + $0x111] sm:$0xff]
        %v3627 = vld [vmem:[%s3602 + $0x121] sm:$0xff]
        %v3628 = vld [vmem:[%s3602 + $0x129] sm:$0xff]
        %v3629 = vld [vmem:[%s3602 + $0x139] sm:$0xff]
        %v3630 = vld [vmem:[%s3602 + $0x141] sm:$0xff]
        %v3631 = vld [vmem:[%s3602 + $0x151] sm:$0xff]
        %v3632 = vld [vmem:[%s3602 + $0x159] sm:$0xff]
        %v3633 = vld [vmem:[%s3602 + $0x169] sm:$0xff]
        %v3634 = vld [vmem:[%s3602 + $0x171] sm:$0xff]
        %v3635 = vadd.f32 %v3603, %v3570
        %v3636 = vadd.f32 %v3604, %v3571
        %v3637 = vadd.f32 %v3605, %v3572
        %v3638 = vadd.f32 %v3606, %v3573
        %v3639 = vadd.f32 %v3607, %v3574
        %v3640 = vadd.f32 %v3608, %v3575
        %v3641 = vadd.f32 %v3609, %v3576
        %v3642 = vadd.f32 %v3610, %v3577
        %v3643 = vadd.f32 %v3611, %v3578
        %v3644 = vadd.f32 %v3612, %v3579
        %v3645 = vadd.f32 %v3613, %v3580
        %v3646 = vadd.f32 %v3614, %v3581
        %v3647 = vadd.f32 %v3615, %v3582
        %v3648 = vadd.f32 %v3616, %v3583
        %v3649 = vadd.f32 %v3617, %v3584
        %v3650 = vadd.f32 %v3618, %v3585
        %v3651 = vadd.f32 %v3619, %v3586
        %v3652 = vadd.f32 %v3620, %v3587
        %v3653 = vadd.f32 %v3621, %v3588
        %v3654 = vadd.f32 %v3622, %v3589
        %v3655 = vadd.f32 %v3623, %v3590
        %v3656 = vadd.f32 %v3624, %v3591
        %v3657 = vadd.f32 %v3625, %v3592
        %v3658 = vadd.f32 %v3626, %v3593
        %v3659 = vadd.f32 %v3627, %v3594
        %v3660 = vadd.f32 %v3628, %v3595
        %v3661 = vadd.f32 %v3629, %v3596
        %v3662 = vadd.f32 %v3630, %v3597
        %v3663 = vadd.f32 %v3631, %v3598
        %v3664 = vadd.f32 %v3632, %v3599
        %v3665 = vadd.f32 %v3633, %v3600
        %v3666 = vadd.f32 %v3634, %v3601
        %3667 = vst.msk [vmem:[%s3602 + $0x1] sm:$0xff] %vm375, %v3635
        %3668 = vst.msk [vmem:[%s3602 + $0x9] sm:$0xff] %vm375, %v3636
        %3669 = vst.msk [vmem:[%s3602 + $0x19] sm:$0xff] %vm375, %v3637
        %3670 = vst.msk [vmem:[%s3602 + $0x21] sm:$0xff] %vm375, %v3638
        %3671 = vst.msk [vmem:[%s3602 + $0x31] sm:$0xff] %vm375, %v3639
        %3672 = vst.msk [vmem:[%s3602 + $0x39] sm:$0xff] %vm375, %v3640
        %3673 = vst.msk [vmem:[%s3602 + $0x49] sm:$0xff] %vm375, %v3641
        %3674 = vst.msk [vmem:[%s3602 + $0x51] sm:$0xff] %vm375, %v3642
        %3675 = vst.msk [vmem:[%s3602 + $0x61] sm:$0xff] %vm375, %v3643
        %3676 = vst.msk [vmem:[%s3602 + $0x69] sm:$0xff] %vm375, %v3644
        %3677 = vst.msk [vmem:[%s3602 + $0x79] sm:$0xff] %vm375, %v3645
        %3678 = vst.msk [vmem:[%s3602 + $0x81] sm:$0xff] %vm375, %v3646
        %3679 = vst.msk [vmem:[%s3602 + $0x91] sm:$0xff] %vm375, %v3647
        %3680 = vst.msk [vmem:[%s3602 + $0x99] sm:$0xff] %vm375, %v3648
        %3681 = vst.msk [vmem:[%s3602 + $0xa9] sm:$0xff] %vm375, %v3649
        %3682 = vst.msk [vmem:[%s3602 + $0xb1] sm:$0xff] %vm375, %v3650
        %3683 = vst.msk [vmem:[%s3602 + $0xc1] sm:$0xff] %vm375, %v3651
        %3684 = vst.msk [vmem:[%s3602 + $0xc9] sm:$0xff] %vm375, %v3652
        %3685 = vst.msk [vmem:[%s3602 + $0xd9] sm:$0xff] %vm375, %v3653
        %3686 = vst.msk [vmem:[%s3602 + $0xe1] sm:$0xff] %vm375, %v3654
        %3687 = vst.msk [vmem:[%s3602 + $0xf1] sm:$0xff] %vm375, %v3655
        %3688 = vst.msk [vmem:[%s3602 + $0xf9] sm:$0xff] %vm375, %v3656
        %3689 = vst.msk [vmem:[%s3602 + $0x109] sm:$0xff] %vm375, %v3657
        %3690 = vst.msk [vmem:[%s3602 + $0x111] sm:$0xff] %vm375, %v3658
        %3691 = vst.msk [vmem:[%s3602 + $0x121] sm:$0xff] %vm375, %v3659
        %3692 = vst.msk [vmem:[%s3602 + $0x129] sm:$0xff] %vm375, %v3660
        %3693 = vst.msk [vmem:[%s3602 + $0x139] sm:$0xff] %vm375, %v3661
        %3694 = vst.msk [vmem:[%s3602 + $0x141] sm:$0xff] %vm375, %v3662
        %3695 = vst.msk [vmem:[%s3602 + $0x151] sm:$0xff] %vm375, %v3663
        %3696 = vst.msk [vmem:[%s3602 + $0x159] sm:$0xff] %vm375, %v3664
        %3697 = vst.msk [vmem:[%s3602 + $0x169] sm:$0xff] %vm375, %v3665
        %3698 = vst.msk [vmem:[%s3602 + $0x171] sm:$0xff] %vm375, %v3666
        %s3699 = sld [smem:[#allocation6 + $0x81]]
        %s3700 = sld [smem:[#allocation6 + $0x84]]
        %v3701 = vstv %s3699
        %v3702 = vmul.f32 %v3701, %v1848
        %v3703 = vmul.f32 %v3701, %v1849
        %v3704 = vmul.f32 %v3701, %v1850
        %v3705 = vmul.f32 %v3701, %v1851
        %v3706 = vmul.f32 %v3701, %v1852
        %v3707 = vmul.f32 %v3701, %v1853
        %v3708 = vmul.f32 %v3701, %v1854
        %v3709 = vmul.f32 %v3701, %v1855
        %v3710 = vmul.f32 %v3701, %v1856
        %v3711 = vmul.f32 %v3701, %v1857
        %v3712 = vmul.f32 %v3701, %v1858
        %v3713 = vmul.f32 %v3701, %v1859
        %v3714 = vmul.f32 %v3701, %v1860
        %v3715 = vmul.f32 %v3701, %v1861
        %v3716 = vmul.f32 %v3701, %v1862
        %v3717 = vmul.f32 %v3701, %v1863
        %v3718 = vmul.f32 %v3701, %v1864
        %v3719 = vmul.f32 %v3701, %v1865
        %v3720 = vmul.f32 %v3701, %v1866
        %v3721 = vmul.f32 %v3701, %v1867
        %v3722 = vmul.f32 %v3701, %v1868
        %v3723 = vmul.f32 %v3701, %v1869
        %v3724 = vmul.f32 %v3701, %v1870
        %v3725 = vmul.f32 %v3701, %v1871
        %v3726 = vmul.f32 %v3701, %v1872
        %v3727 = vmul.f32 %v3701, %v1873
        %v3728 = vmul.f32 %v3701, %v1874
        %v3729 = vmul.f32 %v3701, %v1875
        %v3730 = vmul.f32 %v3701, %v1876
        %v3731 = vmul.f32 %v3701, %v1877
        %v3732 = vmul.f32 %v3701, %v1878
        %v3733 = vmul.f32 %v3701, %v1879
        %3766 = vrot.lane.b32.xlu0 %v3702, 8
        %v3767 = vpop.permute.xlu0 %3766
        %3768 = vrot.lane.b32.xlu0 %v3703, 8
        %v3769 = vpop.permute.xlu0 %3768
        %3770 = vrot.lane.b32.xlu0 %v3704, 8
        %v3771 = vpop.permute.xlu0 %3770
        %3772 = vrot.lane.b32.xlu0 %v3705, 8
        %v3773 = vpop.permute.xlu0 %3772
        %3774 = vrot.lane.b32.xlu0 %v3706, 8
        %v3775 = vpop.permute.xlu0 %3774
        %3776 = vrot.lane.b32.xlu0 %v3707, 8
        %v3777 = vpop.permute.xlu0 %3776
        %3778 = vrot.lane.b32.xlu0 %v3708, 8
        %v3779 = vpop.permute.xlu0 %3778
        %3780 = vrot.lane.b32.xlu0 %v3709, 8
        %v3781 = vpop.permute.xlu0 %3780
        %3782 = vrot.lane.b32.xlu0 %v3710, 8
        %v3783 = vpop.permute.xlu0 %3782
        %3784 = vrot.lane.b32.xlu0 %v3711, 8
        %v3785 = vpop.permute.xlu0 %3784
        %3786 = vrot.lane.b32.xlu0 %v3712, 8
        %v3787 = vpop.permute.xlu0 %3786
        %3788 = vrot.lane.b32.xlu0 %v3713, 8
        %v3789 = vpop.permute.xlu0 %3788
        %3790 = vrot.lane.b32.xlu0 %v3714, 8
        %v3791 = vpop.permute.xlu0 %3790
        %3792 = vrot.lane.b32.xlu0 %v3715, 8
        %v3793 = vpop.permute.xlu0 %3792
        %3794 = vrot.lane.b32.xlu0 %v3716, 8
        %v3795 = vpop.permute.xlu0 %3794
        %3796 = vrot.lane.b32.xlu0 %v3717, 8
        %v3797 = vpop.permute.xlu0 %3796
        %3798 = vrot.lane.b32.xlu0 %v3718, 8
        %v3799 = vpop.permute.xlu0 %3798
        %3800 = vrot.lane.b32.xlu0 %v3719, 8
        %v3801 = vpop.permute.xlu0 %3800
        %3802 = vrot.lane.b32.xlu0 %v3720, 8
        %v3803 = vpop.permute.xlu0 %3802
        %3804 = vrot.lane.b32.xlu0 %v3721, 8
        %v3805 = vpop.permute.xlu0 %3804
        %3806 = vrot.lane.b32.xlu0 %v3722, 8
        %v3807 = vpop.permute.xlu0 %3806
        %3808 = vrot.lane.b32.xlu0 %v3723, 8
        %v3809 = vpop.permute.xlu0 %3808
        %3810 = vrot.lane.b32.xlu0 %v3724, 8
        %v3811 = vpop.permute.xlu0 %3810
        %3812 = vrot.lane.b32.xlu0 %v3725, 8
        %v3813 = vpop.permute.xlu0 %3812
        %3814 = vrot.lane.b32.xlu0 %v3726, 8
        %v3815 = vpop.permute.xlu0 %3814
        %3816 = vrot.lane.b32.xlu0 %v3727, 8
        %v3817 = vpop.permute.xlu0 %3816
        %3818 = vrot.lane.b32.xlu0 %v3728, 8
        %v3819 = vpop.permute.xlu0 %3818
        %3820 = vrot.lane.b32.xlu0 %v3729, 8
        %v3821 = vpop.permute.xlu0 %3820
        %3822 = vrot.lane.b32.xlu0 %v3730, 8
        %v3823 = vpop.permute.xlu0 %3822
        %3824 = vrot.lane.b32.xlu0 %v3731, 8
        %v3825 = vpop.permute.xlu0 %3824
        %3826 = vrot.lane.b32.xlu0 %v3732, 8
        %v3827 = vpop.permute.xlu0 %3826
        %3828 = vrot.lane.b32.xlu0 %v3733, 8
        %v3829 = vpop.permute.xlu0 %3828
        %v3862 = vadd.f32 %v3344, %v3767
        %v3863 = vadd.f32 %v3347, %v3769
        %v3864 = vadd.f32 %v3352, %v3771
        %v3865 = vadd.f32 %v3355, %v3773
        %v3866 = vadd.f32 %v3360, %v3775
        %v3867 = vadd.f32 %v3363, %v3777
        %v3868 = vadd.f32 %v3368, %v3779
        %v3869 = vadd.f32 %v3371, %v3781
        %v3870 = vadd.f32 %v3376, %v3783
        %v3871 = vadd.f32 %v3379, %v3785
        %v3872 = vadd.f32 %v3384, %v3787
        %v3873 = vadd.f32 %v3387, %v3789
        %v3874 = vadd.f32 %v3392, %v3791
        %v3875 = vadd.f32 %v3395, %v3793
        %v3876 = vadd.f32 %v3400, %v3795
        %v3877 = vadd.f32 %v3403, %v3797
        %v3878 = vadd.f32 %v3408, %v3799
        %v3879 = vadd.f32 %v3411, %v3801
        %v3880 = vadd.f32 %v3416, %v3803
        %v3881 = vadd.f32 %v3419, %v3805
        %v3882 = vadd.f32 %v3424, %v3807
        %v3883 = vadd.f32 %v3427, %v3809
        %v3884 = vadd.f32 %v3432, %v3811
        %v3885 = vadd.f32 %v3435, %v3813
        %v3886 = vadd.f32 %v3440, %v3815
        %v3887 = vadd.f32 %v3443, %v3817
        %v3888 = vadd.f32 %v3448, %v3819
        %v3889 = vadd.f32 %v3451, %v3821
        %v3890 = vadd.f32 %v3456, %v3823
        %v3891 = vadd.f32 %v3459, %v3825
        %v3892 = vadd.f32 %v3464, %v3827
        %v3893 = vadd.f32 %v3467, %v3829
        %v3894 = vstv %s3700
        %v3895 = vmul.f32 %v3894, %v3134
        %v3896 = vmul.f32 %v3894, %v3135
        %v3897 = vmul.f32 %v3894, %v3136
        %v3898 = vmul.f32 %v3894, %v3137
        %v3899 = vmul.f32 %v3894, %v3138
        %v3900 = vmul.f32 %v3894, %v3139
        %v3901 = vmul.f32 %v3894, %v3140
        %v3902 = vmul.f32 %v3894, %v3141
        %v3903 = vmul.f32 %v3894, %v3142
        %v3904 = vmul.f32 %v3894, %v3143
        %v3905 = vmul.f32 %v3894, %v3144
        %v3906 = vmul.f32 %v3894, %v3145
        %v3907 = vmul.f32 %v3894, %v3146
        %v3908 = vmul.f32 %v3894, %v3147
        %v3909 = vmul.f32 %v3894, %v3148
        %v3910 = vmul.f32 %v3894, %v3149
        %v3911 = vmul.f32 %v3894, %v3150
        %v3912 = vmul.f32 %v3894, %v3151
        %v3913 = vmul.f32 %v3894, %v3152
        %v3914 = vmul.f32 %v3894, %v3153
        %v3915 = vmul.f32 %v3894, %v3154
        %v3916 = vmul.f32 %v3894, %v3155
        %v3917 = vmul.f32 %v3894, %v3156
        %v3918 = vmul.f32 %v3894, %v3157
        %v3919 = vmul.f32 %v3894, %v3158
        %v3920 = vmul.f32 %v3894, %v3159
        %v3921 = vmul.f32 %v3894, %v3160
        %v3922 = vmul.f32 %v3894, %v3161
        %v3923 = vmul.f32 %v3894, %v3162
        %v3924 = vmul.f32 %v3894, %v3163
        %v3925 = vmul.f32 %v3894, %v3164
        %v3926 = vmul.f32 %v3894, %v3165
        %3959 = vrot.lane.b32.xlu0 %v3895, 8
        %v3960 = vpop.permute.xlu0 %3959
        %3961 = vrot.lane.b32.xlu0 %v3896, 8
        %v3962 = vpop.permute.xlu0 %3961
        %3963 = vrot.lane.b32.xlu0 %v3897, 8
        %v3964 = vpop.permute.xlu0 %3963
        %3965 = vrot.lane.b32.xlu0 %v3898, 8
        %v3966 = vpop.permute.xlu0 %3965
        %3967 = vrot.lane.b32.xlu0 %v3899, 8
        %v3968 = vpop.permute.xlu0 %3967
        %3969 = vrot.lane.b32.xlu0 %v3900, 8
        %v3970 = vpop.permute.xlu0 %3969
        %3971 = vrot.lane.b32.xlu0 %v3901, 8
        %v3972 = vpop.permute.xlu0 %3971
        %3973 = vrot.lane.b32.xlu0 %v3902, 8
        %v3974 = vpop.permute.xlu0 %3973
        %3975 = vrot.lane.b32.xlu0 %v3903, 8
        %v3976 = vpop.permute.xlu0 %3975
        %3977 = vrot.lane.b32.xlu0 %v3904, 8
        %v3978 = vpop.permute.xlu0 %3977
        %3979 = vrot.lane.b32.xlu0 %v3905, 8
        %v3980 = vpop.permute.xlu0 %3979
        %3981 = vrot.lane.b32.xlu0 %v3906, 8
        %v3982 = vpop.permute.xlu0 %3981
        %3983 = vrot.lane.b32.xlu0 %v3907, 8
        %v3984 = vpop.permute.xlu0 %3983
        %3985 = vrot.lane.b32.xlu0 %v3908, 8
        %v3986 = vpop.permute.xlu0 %3985
        %3987 = vrot.lane.b32.xlu0 %v3909, 8
        %v3988 = vpop.permute.xlu0 %3987
        %3989 = vrot.lane.b32.xlu0 %v3910, 8
        %v3990 = vpop.permute.xlu0 %3989
        %3991 = vrot.lane.b32.xlu0 %v3911, 8
        %v3992 = vpop.permute.xlu0 %3991
        %3993 = vrot.lane.b32.xlu0 %v3912, 8
        %v3994 = vpop.permute.xlu0 %3993
        %3995 = vrot.lane.b32.xlu0 %v3913, 8
        %v3996 = vpop.permute.xlu0 %3995
        %3997 = vrot.lane.b32.xlu0 %v3914, 8
        %v3998 = vpop.permute.xlu0 %3997
        %3999 = vrot.lane.b32.xlu0 %v3915, 8
        %v4000 = vpop.permute.xlu0 %3999
        %4001 = vrot.lane.b32.xlu0 %v3916, 8
        %v4002 = vpop.permute.xlu0 %4001
        %4003 = vrot.lane.b32.xlu0 %v3917, 8
        %v4004 = vpop.permute.xlu0 %4003
        %4005 = vrot.lane.b32.xlu0 %v3918, 8
        %v4006 = vpop.permute.xlu0 %4005
        %4007 = vrot.lane.b32.xlu0 %v3919, 8
        %v4008 = vpop.permute.xlu0 %4007
        %4009 = vrot.lane.b32.xlu0 %v3920, 8
        %v4010 = vpop.permute.xlu0 %4009
        %4011 = vrot.lane.b32.xlu0 %v3921, 8
        %v4012 = vpop.permute.xlu0 %4011
        %4013 = vrot.lane.b32.xlu0 %v3922, 8
        %v4014 = vpop.permute.xlu0 %4013
        %4015 = vrot.lane.b32.xlu0 %v3923, 8
        %v4016 = vpop.permute.xlu0 %4015
        %4017 = vrot.lane.b32.xlu0 %v3924, 8
        %v4018 = vpop.permute.xlu0 %4017
        %4019 = vrot.lane.b32.xlu0 %v3925, 8
        %v4020 = vpop.permute.xlu0 %4019
        %4021 = vrot.lane.b32.xlu0 %v3926, 8
        %v4022 = vpop.permute.xlu0 %4021
        %v4055 = vadd.f32 %v3862, %v3960
        %v4056 = vadd.f32 %v3863, %v3962
        %v4057 = vadd.f32 %v3864, %v3964
        %v4058 = vadd.f32 %v3865, %v3966
        %v4059 = vadd.f32 %v3866, %v3968
        %v4060 = vadd.f32 %v3867, %v3970
        %v4061 = vadd.f32 %v3868, %v3972
        %v4062 = vadd.f32 %v3869, %v3974
        %v4063 = vadd.f32 %v3870, %v3976
        %v4064 = vadd.f32 %v3871, %v3978
        %v4065 = vadd.f32 %v3872, %v3980
        %v4066 = vadd.f32 %v3873, %v3982
        %v4067 = vadd.f32 %v3874, %v3984
        %v4068 = vadd.f32 %v3875, %v3986
        %v4069 = vadd.f32 %v3876, %v3988
        %v4070 = vadd.f32 %v3877, %v3990
        %v4071 = vadd.f32 %v3878, %v3992
        %v4072 = vadd.f32 %v3879, %v3994
        %v4073 = vadd.f32 %v3880, %v3996
        %v4074 = vadd.f32 %v3881, %v3998
        %v4075 = vadd.f32 %v3882, %v4000
        %v4076 = vadd.f32 %v3883, %v4002
        %v4077 = vadd.f32 %v3884, %v4004
        %v4078 = vadd.f32 %v3885, %v4006
        %v4079 = vadd.f32 %v3886, %v4008
        %v4080 = vadd.f32 %v3887, %v4010
        %v4081 = vadd.f32 %v3888, %v4012
        %v4082 = vadd.f32 %v3889, %v4014
        %v4083 = vadd.f32 %v3890, %v4016
        %v4084 = vadd.f32 %v3891, %v4018
        %v4085 = vadd.f32 %v3892, %v4020
        %v4086 = vadd.f32 %v3893, %v4022
        %s4087 = scalar_lea.vmem [#allocation5], 24
        %v4088 = vld [vmem:[%s4087 + $0x1] sm:$0xff]
        %v4089 = vld [vmem:[%s4087 + $0x9] sm:$0xff]
        %v4090 = vld [vmem:[%s4087 + $0x19] sm:$0xff]
        %v4091 = vld [vmem:[%s4087 + $0x21] sm:$0xff]
        %v4092 = vld [vmem:[%s4087 + $0x31] sm:$0xff]
        %v4093 = vld [vmem:[%s4087 + $0x39] sm:$0xff]
        %v4094 = vld [vmem:[%s4087 + $0x49] sm:$0xff]
        %v4095 = vld [vmem:[%s4087 + $0x51] sm:$0xff]
        %v4096 = vld [vmem:[%s4087 + $0x61] sm:$0xff]
        %v4097 = vld [vmem:[%s4087 + $0x69] sm:$0xff]
        %v4098 = vld [vmem:[%s4087 + $0x79] sm:$0xff]
        %v4099 = vld [vmem:[%s4087 + $0x81] sm:$0xff]
        %v4100 = vld [vmem:[%s4087 + $0x91] sm:$0xff]
        %v4101 = vld [vmem:[%s4087 + $0x99] sm:$0xff]
        %v4102 = vld [vmem:[%s4087 + $0xa9] sm:$0xff]
        %v4103 = vld [vmem:[%s4087 + $0xb1] sm:$0xff]
        %v4104 = vld [vmem:[%s4087 + $0xc1] sm:$0xff]
        %v4105 = vld [vmem:[%s4087 + $0xc9] sm:$0xff]
        %v4106 = vld [vmem:[%s4087 + $0xd9] sm:$0xff]
        %v4107 = vld [vmem:[%s4087 + $0xe1] sm:$0xff]
        %v4108 = vld [vmem:[%s4087 + $0xf1] sm:$0xff]
        %v4109 = vld [vmem:[%s4087 + $0xf9] sm:$0xff]
        %v4110 = vld [vmem:[%s4087 + $0x109] sm:$0xff]
        %v4111 = vld [vmem:[%s4087 + $0x111] sm:$0xff]
        %v4112 = vld [vmem:[%s4087 + $0x121] sm:$0xff]
        %v4113 = vld [vmem:[%s4087 + $0x129] sm:$0xff]
        %v4114 = vld [vmem:[%s4087 + $0x139] sm:$0xff]
        %v4115 = vld [vmem:[%s4087 + $0x141] sm:$0xff]
        %v4116 = vld [vmem:[%s4087 + $0x151] sm:$0xff]
        %v4117 = vld [vmem:[%s4087 + $0x159] sm:$0xff]
        %v4118 = vld [vmem:[%s4087 + $0x169] sm:$0xff]
        %v4119 = vld [vmem:[%s4087 + $0x171] sm:$0xff]
        %4152 = vrot.lane.b32.xlu0 %v4055, 120
        %v4153 = vpop.permute.xlu0 %4152
        %4154 = vrot.lane.b32.xlu0 %v4056, 120
        %v4155 = vpop.permute.xlu0 %4154
        %4156 = vrot.lane.b32.xlu0 %v4057, 120
        %v4157 = vpop.permute.xlu0 %4156
        %4158 = vrot.lane.b32.xlu0 %v4058, 120
        %v4159 = vpop.permute.xlu0 %4158
        %4160 = vrot.lane.b32.xlu0 %v4059, 120
        %v4161 = vpop.permute.xlu0 %4160
        %4162 = vrot.lane.b32.xlu0 %v4060, 120
        %v4163 = vpop.permute.xlu0 %4162
        %4164 = vrot.lane.b32.xlu0 %v4061, 120
        %v4165 = vpop.permute.xlu0 %4164
        %4166 = vrot.lane.b32.xlu0 %v4062, 120
        %v4167 = vpop.permute.xlu0 %4166
        %4168 = vrot.lane.b32.xlu0 %v4063, 120
        %v4169 = vpop.permute.xlu0 %4168
        %4170 = vrot.lane.b32.xlu0 %v4064, 120
        %v4171 = vpop.permute.xlu0 %4170
        %4172 = vrot.lane.b32.xlu0 %v4065, 120
        %v4173 = vpop.permute.xlu0 %4172
        %4174 = vrot.lane.b32.xlu0 %v4066, 120
        %v4175 = vpop.permute.xlu0 %4174
        %4176 = vrot.lane.b32.xlu0 %v4067, 120
        %v4177 = vpop.permute.xlu0 %4176
        %4178 = vrot.lane.b32.xlu0 %v4068, 120
        %v4179 = vpop.permute.xlu0 %4178
        %4180 = vrot.lane.b32.xlu0 %v4069, 120
        %v4181 = vpop.permute.xlu0 %4180
        %4182 = vrot.lane.b32.xlu0 %v4070, 120
        %v4183 = vpop.permute.xlu0 %4182
        %4184 = vrot.lane.b32.xlu0 %v4071, 120
        %v4185 = vpop.permute.xlu0 %4184
        %4186 = vrot.lane.b32.xlu0 %v4072, 120
        %v4187 = vpop.permute.xlu0 %4186
        %4188 = vrot.lane.b32.xlu0 %v4073, 120
        %v4189 = vpop.permute.xlu0 %4188
        %4190 = vrot.lane.b32.xlu0 %v4074, 120
        %v4191 = vpop.permute.xlu0 %4190
        %4192 = vrot.lane.b32.xlu0 %v4075, 120
        %v4193 = vpop.permute.xlu0 %4192
        %4194 = vrot.lane.b32.xlu0 %v4076, 120
        %v4195 = vpop.permute.xlu0 %4194
        %4196 = vrot.lane.b32.xlu0 %v4077, 120
        %v4197 = vpop.permute.xlu0 %4196
        %4198 = vrot.lane.b32.xlu0 %v4078, 120
        %v4199 = vpop.permute.xlu0 %4198
        %4200 = vrot.lane.b32.xlu0 %v4079, 120
        %v4201 = vpop.permute.xlu0 %4200
        %4202 = vrot.lane.b32.xlu0 %v4080, 120
        %v4203 = vpop.permute.xlu0 %4202
        %4204 = vrot.lane.b32.xlu0 %v4081, 120
        %v4205 = vpop.permute.xlu0 %4204
        %4206 = vrot.lane.b32.xlu0 %v4082, 120
        %v4207 = vpop.permute.xlu0 %4206
        %4208 = vrot.lane.b32.xlu0 %v4083, 120
        %v4209 = vpop.permute.xlu0 %4208
        %4210 = vrot.lane.b32.xlu0 %v4084, 120
        %v4211 = vpop.permute.xlu0 %4210
        %4212 = vrot.lane.b32.xlu0 %v4085, 120
        %v4213 = vpop.permute.xlu0 %4212
        %4214 = vrot.lane.b32.xlu0 %v4086, 120
        %v4215 = vpop.permute.xlu0 %4214
        %v4248 = vadd.f32 %v4088, %v4153
        %v4249 = vadd.f32 %v4089, %v4155
        %v4250 = vadd.f32 %v4090, %v4157
        %v4251 = vadd.f32 %v4091, %v4159
        %v4252 = vadd.f32 %v4092, %v4161
        %v4253 = vadd.f32 %v4093, %v4163
        %v4254 = vadd.f32 %v4094, %v4165
        %v4255 = vadd.f32 %v4095, %v4167
        %v4256 = vadd.f32 %v4096, %v4169
        %v4257 = vadd.f32 %v4097, %v4171
        %v4258 = vadd.f32 %v4098, %v4173
        %v4259 = vadd.f32 %v4099, %v4175
        %v4260 = vadd.f32 %v4100, %v4177
        %v4261 = vadd.f32 %v4101, %v4179
        %v4262 = vadd.f32 %v4102, %v4181
        %v4263 = vadd.f32 %v4103, %v4183
        %v4264 = vadd.f32 %v4104, %v4185
        %v4265 = vadd.f32 %v4105, %v4187
        %v4266 = vadd.f32 %v4106, %v4189
        %v4267 = vadd.f32 %v4107, %v4191
        %v4268 = vadd.f32 %v4108, %v4193
        %v4269 = vadd.f32 %v4109, %v4195
        %v4270 = vadd.f32 %v4110, %v4197
        %v4271 = vadd.f32 %v4111, %v4199
        %v4272 = vadd.f32 %v4112, %v4201
        %v4273 = vadd.f32 %v4113, %v4203
        %v4274 = vadd.f32 %v4114, %v4205
        %v4275 = vadd.f32 %v4115, %v4207
        %v4276 = vadd.f32 %v4116, %v4209
        %v4277 = vadd.f32 %v4117, %v4211
        %v4278 = vadd.f32 %v4118, %v4213
        %v4279 = vadd.f32 %v4119, %v4215
        %4280 = vst.msk [vmem:[%s4087 + $0x1] sm:$0xff] %vm375, %v4248
        %4281 = vst.msk [vmem:[%s4087 + $0x9] sm:$0xff] %vm375, %v4249
        %4282 = vst.msk [vmem:[%s4087 + $0x19] sm:$0xff] %vm375, %v4250
        %4283 = vst.msk [vmem:[%s4087 + $0x21] sm:$0xff] %vm375, %v4251
        %4284 = vst.msk [vmem:[%s4087 + $0x31] sm:$0xff] %vm375, %v4252
        %4285 = vst.msk [vmem:[%s4087 + $0x39] sm:$0xff] %vm375, %v4253
        %4286 = vst.msk [vmem:[%s4087 + $0x49] sm:$0xff] %vm375, %v4254
        %4287 = vst.msk [vmem:[%s4087 + $0x51] sm:$0xff] %vm375, %v4255
        %4288 = vst.msk [vmem:[%s4087 + $0x61] sm:$0xff] %vm375, %v4256
        %4289 = vst.msk [vmem:[%s4087 + $0x69] sm:$0xff] %vm375, %v4257
        %4290 = vst.msk [vmem:[%s4087 + $0x79] sm:$0xff] %vm375, %v4258
        %4291 = vst.msk [vmem:[%s4087 + $0x81] sm:$0xff] %vm375, %v4259
        %4292 = vst.msk [vmem:[%s4087 + $0x91] sm:$0xff] %vm375, %v4260
        %4293 = vst.msk [vmem:[%s4087 + $0x99] sm:$0xff] %vm375, %v4261
        %4294 = vst.msk [vmem:[%s4087 + $0xa9] sm:$0xff] %vm375, %v4262
        %4295 = vst.msk [vmem:[%s4087 + $0xb1] sm:$0xff] %vm375, %v4263
        %4296 = vst.msk [vmem:[%s4087 + $0xc1] sm:$0xff] %vm375, %v4264
        %4297 = vst.msk [vmem:[%s4087 + $0xc9] sm:$0xff] %vm375, %v4265
        %4298 = vst.msk [vmem:[%s4087 + $0xd9] sm:$0xff] %vm375, %v4266
        %4299 = vst.msk [vmem:[%s4087 + $0xe1] sm:$0xff] %vm375, %v4267
        %4300 = vst.msk [vmem:[%s4087 + $0xf1] sm:$0xff] %vm375, %v4268
        %4301 = vst.msk [vmem:[%s4087 + $0xf9] sm:$0xff] %vm375, %v4269
        %4302 = vst.msk [vmem:[%s4087 + $0x109] sm:$0xff] %vm375, %v4270
        %4303 = vst.msk [vmem:[%s4087 + $0x111] sm:$0xff] %vm375, %v4271
        %4304 = vst.msk [vmem:[%s4087 + $0x121] sm:$0xff] %vm375, %v4272
        %4305 = vst.msk [vmem:[%s4087 + $0x129] sm:$0xff] %vm375, %v4273
        %4306 = vst.msk [vmem:[%s4087 + $0x139] sm:$0xff] %vm375, %v4274
        %4307 = vst.msk [vmem:[%s4087 + $0x141] sm:$0xff] %vm375, %v4275
        %4308 = vst.msk [vmem:[%s4087 + $0x151] sm:$0xff] %vm375, %v4276
        %4309 = vst.msk [vmem:[%s4087 + $0x159] sm:$0xff] %vm375, %v4277
        %4310 = vst.msk [vmem:[%s4087 + $0x169] sm:$0xff] %vm375, %v4278
        %4311 = vst.msk [vmem:[%s4087 + $0x171] sm:$0xff] %vm375, %v4279
        %s4312 = sld [smem:[#allocation6 + $0x181]]
        %s4313 = sld [smem:[#allocation6 + $0x184]]
        %v4314 = vstv %s4312
        %v4315 = vmul.f32 %v4314, %v1848
        %v4316 = vmul.f32 %v4314, %v1849
        %v4317 = vmul.f32 %v4314, %v1850
        %v4318 = vmul.f32 %v4314, %v1851
        %v4319 = vmul.f32 %v4314, %v1852
        %v4320 = vmul.f32 %v4314, %v1853
        %v4321 = vmul.f32 %v4314, %v1854
        %v4322 = vmul.f32 %v4314, %v1855
        %v4323 = vmul.f32 %v4314, %v1856
        %v4324 = vmul.f32 %v4314, %v1857
        %v4325 = vmul.f32 %v4314, %v1858
        %v4326 = vmul.f32 %v4314, %v1859
        %v4327 = vmul.f32 %v4314, %v1860
        %v4328 = vmul.f32 %v4314, %v1861
        %v4329 = vmul.f32 %v4314, %v1862
        %v4330 = vmul.f32 %v4314, %v1863
        %v4331 = vmul.f32 %v4314, %v1864
        %v4332 = vmul.f32 %v4314, %v1865
        %v4333 = vmul.f32 %v4314, %v1866
        %v4334 = vmul.f32 %v4314, %v1867
        %v4335 = vmul.f32 %v4314, %v1868
        %v4336 = vmul.f32 %v4314, %v1869
        %v4337 = vmul.f32 %v4314, %v1870
        %v4338 = vmul.f32 %v4314, %v1871
        %v4339 = vmul.f32 %v4314, %v1872
        %v4340 = vmul.f32 %v4314, %v1873
        %v4341 = vmul.f32 %v4314, %v1874
        %v4342 = vmul.f32 %v4314, %v1875
        %v4343 = vmul.f32 %v4314, %v1876
        %v4344 = vmul.f32 %v4314, %v1877
        %v4345 = vmul.f32 %v4314, %v1878
        %v4346 = vmul.f32 %v4314, %v1879
        %4379 = vrot.lane.b32.xlu0 %v4315, 16
        %v4380 = vpop.permute.xlu0 %4379
        %4381 = vrot.lane.b32.xlu0 %v4316, 16
        %v4382 = vpop.permute.xlu0 %4381
        %4383 = vrot.lane.b32.xlu0 %v4317, 16
        %v4384 = vpop.permute.xlu0 %4383
        %4385 = vrot.lane.b32.xlu0 %v4318, 16
        %v4386 = vpop.permute.xlu0 %4385
        %4387 = vrot.lane.b32.xlu0 %v4319, 16
        %v4388 = vpop.permute.xlu0 %4387
        %4389 = vrot.lane.b32.xlu0 %v4320, 16
        %v4390 = vpop.permute.xlu0 %4389
        %4391 = vrot.lane.b32.xlu0 %v4321, 16
        %v4392 = vpop.permute.xlu0 %4391
        %4393 = vrot.lane.b32.xlu0 %v4322, 16
        %v4394 = vpop.permute.xlu0 %4393
        %4395 = vrot.lane.b32.xlu0 %v4323, 16
        %v4396 = vpop.permute.xlu0 %4395
        %4397 = vrot.lane.b32.xlu0 %v4324, 16
        %v4398 = vpop.permute.xlu0 %4397
        %4399 = vrot.lane.b32.xlu0 %v4325, 16
        %v4400 = vpop.permute.xlu0 %4399
        %4401 = vrot.lane.b32.xlu0 %v4326, 16
        %v4402 = vpop.permute.xlu0 %4401
        %4403 = vrot.lane.b32.xlu0 %v4327, 16
        %v4404 = vpop.permute.xlu0 %4403
        %4405 = vrot.lane.b32.xlu0 %v4328, 16
        %v4406 = vpop.permute.xlu0 %4405
        %4407 = vrot.lane.b32.xlu0 %v4329, 16
        %v4408 = vpop.permute.xlu0 %4407
        %4409 = vrot.lane.b32.xlu0 %v4330, 16
        %v4410 = vpop.permute.xlu0 %4409
        %4411 = vrot.lane.b32.xlu0 %v4331, 16
        %v4412 = vpop.permute.xlu0 %4411
        %4413 = vrot.lane.b32.xlu0 %v4332, 16
        %v4414 = vpop.permute.xlu0 %4413
        %4415 = vrot.lane.b32.xlu0 %v4333, 16
        %v4416 = vpop.permute.xlu0 %4415
        %4417 = vrot.lane.b32.xlu0 %v4334, 16
        %v4418 = vpop.permute.xlu0 %4417
        %4419 = vrot.lane.b32.xlu0 %v4335, 16
        %v4420 = vpop.permute.xlu0 %4419
        %4421 = vrot.lane.b32.xlu0 %v4336, 16
        %v4422 = vpop.permute.xlu0 %4421
        %4423 = vrot.lane.b32.xlu0 %v4337, 16
        %v4424 = vpop.permute.xlu0 %4423
        %4425 = vrot.lane.b32.xlu0 %v4338, 16
        %v4426 = vpop.permute.xlu0 %4425
        %4427 = vrot.lane.b32.xlu0 %v4339, 16
        %v4428 = vpop.permute.xlu0 %4427
        %4429 = vrot.lane.b32.xlu0 %v4340, 16
        %v4430 = vpop.permute.xlu0 %4429
        %4431 = vrot.lane.b32.xlu0 %v4341, 16
        %v4432 = vpop.permute.xlu0 %4431
        %4433 = vrot.lane.b32.xlu0 %v4342, 16
        %v4434 = vpop.permute.xlu0 %4433
        %4435 = vrot.lane.b32.xlu0 %v4343, 16
        %v4436 = vpop.permute.xlu0 %4435
        %4437 = vrot.lane.b32.xlu0 %v4344, 16
        %v4438 = vpop.permute.xlu0 %4437
        %4439 = vrot.lane.b32.xlu0 %v4345, 16
        %v4440 = vpop.permute.xlu0 %4439
        %4441 = vrot.lane.b32.xlu0 %v4346, 16
        %v4442 = vpop.permute.xlu0 %4441
        %v4475 = vadd.f32 %v3344, %v4380
        %v4476 = vadd.f32 %v3347, %v4382
        %v4477 = vadd.f32 %v3352, %v4384
        %v4478 = vadd.f32 %v3355, %v4386
        %v4479 = vadd.f32 %v3360, %v4388
        %v4480 = vadd.f32 %v3363, %v4390
        %v4481 = vadd.f32 %v3368, %v4392
        %v4482 = vadd.f32 %v3371, %v4394
        %v4483 = vadd.f32 %v3376, %v4396
        %v4484 = vadd.f32 %v3379, %v4398
        %v4485 = vadd.f32 %v3384, %v4400
        %v4486 = vadd.f32 %v3387, %v4402
        %v4487 = vadd.f32 %v3392, %v4404
        %v4488 = vadd.f32 %v3395, %v4406
        %v4489 = vadd.f32 %v3400, %v4408
        %v4490 = vadd.f32 %v3403, %v4410
        %v4491 = vadd.f32 %v3408, %v4412
        %v4492 = vadd.f32 %v3411, %v4414
        %v4493 = vadd.f32 %v3416, %v4416
        %v4494 = vadd.f32 %v3419, %v4418
        %v4495 = vadd.f32 %v3424, %v4420
        %v4496 = vadd.f32 %v3427, %v4422
        %v4497 = vadd.f32 %v3432, %v4424
        %v4498 = vadd.f32 %v3435, %v4426
        %v4499 = vadd.f32 %v3440, %v4428
        %v4500 = vadd.f32 %v3443, %v4430
        %v4501 = vadd.f32 %v3448, %v4432
        %v4502 = vadd.f32 %v3451, %v4434
        %v4503 = vadd.f32 %v3456, %v4436
        %v4504 = vadd.f32 %v3459, %v4438
        %v4505 = vadd.f32 %v3464, %v4440
        %v4506 = vadd.f32 %v3467, %v4442
        %v4507 = vstv %s4313
        %v4508 = vmul.f32 %v4507, %v3134
        %v4509 = vmul.f32 %v4507, %v3135
        %v4510 = vmul.f32 %v4507, %v3136
        %v4511 = vmul.f32 %v4507, %v3137
        %v4512 = vmul.f32 %v4507, %v3138
        %v4513 = vmul.f32 %v4507, %v3139
        %v4514 = vmul.f32 %v4507, %v3140
        %v4515 = vmul.f32 %v4507, %v3141
        %v4516 = vmul.f32 %v4507, %v3142
        %v4517 = vmul.f32 %v4507, %v3143
        %v4518 = vmul.f32 %v4507, %v3144
        %v4519 = vmul.f32 %v4507, %v3145
        %v4520 = vmul.f32 %v4507, %v3146
        %v4521 = vmul.f32 %v4507, %v3147
        %v4522 = vmul.f32 %v4507, %v3148
        %v4523 = vmul.f32 %v4507, %v3149
        %v4524 = vmul.f32 %v4507, %v3150
        %v4525 = vmul.f32 %v4507, %v3151
        %v4526 = vmul.f32 %v4507, %v3152
        %v4527 = vmul.f32 %v4507, %v3153
        %v4528 = vmul.f32 %v4507, %v3154
        %v4529 = vmul.f32 %v4507, %v3155
        %v4530 = vmul.f32 %v4507, %v3156
        %v4531 = vmul.f32 %v4507, %v3157
        %v4532 = vmul.f32 %v4507, %v3158
        %v4533 = vmul.f32 %v4507, %v3159
        %v4534 = vmul.f32 %v4507, %v3160
        %v4535 = vmul.f32 %v4507, %v3161
        %v4536 = vmul.f32 %v4507, %v3162
        %v4537 = vmul.f32 %v4507, %v3163
        %v4538 = vmul.f32 %v4507, %v3164
        %v4539 = vmul.f32 %v4507, %v3165
        %4572 = vrot.lane.b32.xlu0 %v4508, 16
        %v4573 = vpop.permute.xlu0 %4572
        %4574 = vrot.lane.b32.xlu0 %v4509, 16
        %v4575 = vpop.permute.xlu0 %4574
        %4576 = vrot.lane.b32.xlu0 %v4510, 16
        %v4577 = vpop.permute.xlu0 %4576
        %4578 = vrot.lane.b32.xlu0 %v4511, 16
        %v4579 = vpop.permute.xlu0 %4578
        %4580 = vrot.lane.b32.xlu0 %v4512, 16
        %v4581 = vpop.permute.xlu0 %4580
        %4582 = vrot.lane.b32.xlu0 %v4513, 16
        %v4583 = vpop.permute.xlu0 %4582
        %4584 = vrot.lane.b32.xlu0 %v4514, 16
        %v4585 = vpop.permute.xlu0 %4584
        %4586 = vrot.lane.b32.xlu0 %v4515, 16
        %v4587 = vpop.permute.xlu0 %4586
        %4588 = vrot.lane.b32.xlu0 %v4516, 16
        %v4589 = vpop.permute.xlu0 %4588
        %4590 = vrot.lane.b32.xlu0 %v4517, 16
        %v4591 = vpop.permute.xlu0 %4590
        %4592 = vrot.lane.b32.xlu0 %v4518, 16
        %v4593 = vpop.permute.xlu0 %4592
        %4594 = vrot.lane.b32.xlu0 %v4519, 16
        %v4595 = vpop.permute.xlu0 %4594
        %4596 = vrot.lane.b32.xlu0 %v4520, 16
        %v4597 = vpop.permute.xlu0 %4596
        %4598 = vrot.lane.b32.xlu0 %v4521, 16
        %v4599 = vpop.permute.xlu0 %4598
        %4600 = vrot.lane.b32.xlu0 %v4522, 16
        %v4601 = vpop.permute.xlu0 %4600
        %4602 = vrot.lane.b32.xlu0 %v4523, 16
        %v4603 = vpop.permute.xlu0 %4602
        %4604 = vrot.lane.b32.xlu0 %v4524, 16
        %v4605 = vpop.permute.xlu0 %4604
        %4606 = vrot.lane.b32.xlu0 %v4525, 16
        %v4607 = vpop.permute.xlu0 %4606
        %4608 = vrot.lane.b32.xlu0 %v4526, 16
        %v4609 = vpop.permute.xlu0 %4608
        %4610 = vrot.lane.b32.xlu0 %v4527, 16
        %v4611 = vpop.permute.xlu0 %4610
        %4612 = vrot.lane.b32.xlu0 %v4528, 16
        %v4613 = vpop.permute.xlu0 %4612
        %4614 = vrot.lane.b32.xlu0 %v4529, 16
        %v4615 = vpop.permute.xlu0 %4614
        %4616 = vrot.lane.b32.xlu0 %v4530, 16
        %v4617 = vpop.permute.xlu0 %4616
        %4618 = vrot.lane.b32.xlu0 %v4531, 16
        %v4619 = vpop.permute.xlu0 %4618
        %4620 = vrot.lane.b32.xlu0 %v4532, 16
        %v4621 = vpop.permute.xlu0 %4620
        %4622 = vrot.lane.b32.xlu0 %v4533, 16
        %v4623 = vpop.permute.xlu0 %4622
        %4624 = vrot.lane.b32.xlu0 %v4534, 16
        %v4625 = vpop.permute.xlu0 %4624
        %4626 = vrot.lane.b32.xlu0 %v4535, 16
        %v4627 = vpop.permute.xlu0 %4626
        %4628 = vrot.lane.b32.xlu0 %v4536, 16
        %v4629 = vpop.permute.xlu0 %4628
        %4630 = vrot.lane.b32.xlu0 %v4537, 16
        %v4631 = vpop.permute.xlu0 %4630
        %4632 = vrot.lane.b32.xlu0 %v4538, 16
        %v4633 = vpop.permute.xlu0 %4632
        %4634 = vrot.lane.b32.xlu0 %v4539, 16
        %v4635 = vpop.permute.xlu0 %4634
        %v4668 = vadd.f32 %v4475, %v4573
        %v4669 = vadd.f32 %v4476, %v4575
        %v4670 = vadd.f32 %v4477, %v4577
        %v4671 = vadd.f32 %v4478, %v4579
        %v4672 = vadd.f32 %v4479, %v4581
        %v4673 = vadd.f32 %v4480, %v4583
        %v4674 = vadd.f32 %v4481, %v4585
        %v4675 = vadd.f32 %v4482, %v4587
        %v4676 = vadd.f32 %v4483, %v4589
        %v4677 = vadd.f32 %v4484, %v4591
        %v4678 = vadd.f32 %v4485, %v4593
        %v4679 = vadd.f32 %v4486, %v4595
        %v4680 = vadd.f32 %v4487, %v4597
        %v4681 = vadd.f32 %v4488, %v4599
        %v4682 = vadd.f32 %v4489, %v4601
        %v4683 = vadd.f32 %v4490, %v4603
        %v4684 = vadd.f32 %v4491, %v4605
        %v4685 = vadd.f32 %v4492, %v4607
        %v4686 = vadd.f32 %v4493, %v4609
        %v4687 = vadd.f32 %v4494, %v4611
        %v4688 = vadd.f32 %v4495, %v4613
        %v4689 = vadd.f32 %v4496, %v4615
        %v4690 = vadd.f32 %v4497, %v4617
        %v4691 = vadd.f32 %v4498, %v4619
        %v4692 = vadd.f32 %v4499, %v4621
        %v4693 = vadd.f32 %v4500, %v4623
        %v4694 = vadd.f32 %v4501, %v4625
        %v4695 = vadd.f32 %v4502, %v4627
        %v4696 = vadd.f32 %v4503, %v4629
        %v4697 = vadd.f32 %v4504, %v4631
        %v4698 = vadd.f32 %v4505, %v4633
        %v4699 = vadd.f32 %v4506, %v4635
        %v4700 = vld [vmem:[%s373] sm:$0xff]
        %v4701 = vld [vmem:[%s373 + $0x8] sm:$0xff]
        %v4702 = vld [vmem:[%s373 + $0x10] sm:$0xff]
        %v4703 = vld [vmem:[%s373 + $0x18] sm:$0xff]
        %v4704 = vld [vmem:[%s373 + $0x20] sm:$0xff]
        %v4705 = vld [vmem:[%s373 + $0x28] sm:$0xff]
        %v4706 = vld [vmem:[%s373 + $0x30] sm:$0xff]
        %v4707 = vld [vmem:[%s373 + $0x38] sm:$0xff]
        %v4708 = vld [vmem:[%s373 + $0x40] sm:$0xff]
        %v4709 = vld [vmem:[%s373 + $0x48] sm:$0xff]
        %v4710 = vld [vmem:[%s373 + $0x50] sm:$0xff]
        %v4711 = vld [vmem:[%s373 + $0x58] sm:$0xff]
        %v4712 = vld [vmem:[%s373 + $0x60] sm:$0xff]
        %v4713 = vld [vmem:[%s373 + $0x68] sm:$0xff]
        %v4714 = vld [vmem:[%s373 + $0x70] sm:$0xff]
        %v4715 = vld [vmem:[%s373 + $0x78] sm:$0xff]
        %v4716 = vld [vmem:[%s373 + $0x80] sm:$0xff]
        %v4717 = vld [vmem:[%s373 + $0x88] sm:$0xff]
        %v4718 = vld [vmem:[%s373 + $0x90] sm:$0xff]
        %v4719 = vld [vmem:[%s373 + $0x98] sm:$0xff]
        %v4720 = vld [vmem:[%s373 + $0xa0] sm:$0xff]
        %v4721 = vld [vmem:[%s373 + $0xa8] sm:$0xff]
        %v4722 = vld [vmem:[%s373 + $0xb0] sm:$0xff]
        %v4723 = vld [vmem:[%s373 + $0xb8] sm:$0xff]
        %v4724 = vld [vmem:[%s373 + $0xc0] sm:$0xff]
        %v4725 = vld [vmem:[%s373 + $0xc8] sm:$0xff]
        %v4726 = vld [vmem:[%s373 + $0xd0] sm:$0xff]
        %v4727 = vld [vmem:[%s373 + $0xd8] sm:$0xff]
        %v4728 = vld [vmem:[%s373 + $0xe0] sm:$0xff]
        %v4729 = vld [vmem:[%s373 + $0xe8] sm:$0xff]
        %v4730 = vld [vmem:[%s373 + $0xf0] sm:$0xff]
        %v4731 = vld [vmem:[%s373 + $0xf8] sm:$0xff]
        %4764 = vrot.lane.b32.xlu0 %v4668, 112
        %v4765 = vpop.permute.xlu0 %4764
        %4766 = vrot.lane.b32.xlu0 %v4669, 112
        %v4767 = vpop.permute.xlu0 %4766
        %4768 = vrot.lane.b32.xlu0 %v4670, 112
        %v4769 = vpop.permute.xlu0 %4768
        %4770 = vrot.lane.b32.xlu0 %v4671, 112
        %v4771 = vpop.permute.xlu0 %4770
        %4772 = vrot.lane.b32.xlu0 %v4672, 112
        %v4773 = vpop.permute.xlu0 %4772
        %4774 = vrot.lane.b32.xlu0 %v4673, 112
        %v4775 = vpop.permute.xlu0 %4774
        %4776 = vrot.lane.b32.xlu0 %v4674, 112
        %v4777 = vpop.permute.xlu0 %4776
        %4778 = vrot.lane.b32.xlu0 %v4675, 112
        %v4779 = vpop.permute.xlu0 %4778
        %4780 = vrot.lane.b32.xlu0 %v4676, 112
        %v4781 = vpop.permute.xlu0 %4780
        %4782 = vrot.lane.b32.xlu0 %v4677, 112
        %v4783 = vpop.permute.xlu0 %4782
        %4784 = vrot.lane.b32.xlu0 %v4678, 112
        %v4785 = vpop.permute.xlu0 %4784
        %4786 = vrot.lane.b32.xlu0 %v4679, 112
        %v4787 = vpop.permute.xlu0 %4786
        %4788 = vrot.lane.b32.xlu0 %v4680, 112
        %v4789 = vpop.permute.xlu0 %4788
        %4790 = vrot.lane.b32.xlu0 %v4681, 112
        %v4791 = vpop.permute.xlu0 %4790
        %4792 = vrot.lane.b32.xlu0 %v4682, 112
        %v4793 = vpop.permute.xlu0 %4792
        %4794 = vrot.lane.b32.xlu0 %v4683, 112
        %v4795 = vpop.permute.xlu0 %4794
        %4796 = vrot.lane.b32.xlu0 %v4684, 112
        %v4797 = vpop.permute.xlu0 %4796
        %4798 = vrot.lane.b32.xlu0 %v4685, 112
        %v4799 = vpop.permute.xlu0 %4798
        %4800 = vrot.lane.b32.xlu0 %v4686, 112
        %v4801 = vpop.permute.xlu0 %4800
        %4802 = vrot.lane.b32.xlu0 %v4687, 112
        %v4803 = vpop.permute.xlu0 %4802
        %4804 = vrot.lane.b32.xlu0 %v4688, 112
        %v4805 = vpop.permute.xlu0 %4804
        %4806 = vrot.lane.b32.xlu0 %v4689, 112
        %v4807 = vpop.permute.xlu0 %4806
        %4808 = vrot.lane.b32.xlu0 %v4690, 112
        %v4809 = vpop.permute.xlu0 %4808
        %4810 = vrot.lane.b32.xlu0 %v4691, 112
        %v4811 = vpop.permute.xlu0 %4810
        %4812 = vrot.lane.b32.xlu0 %v4692, 112
        %v4813 = vpop.permute.xlu0 %4812
        %4814 = vrot.lane.b32.xlu0 %v4693, 112
        %v4815 = vpop.permute.xlu0 %4814
        %4816 = vrot.lane.b32.xlu0 %v4694, 112
        %v4817 = vpop.permute.xlu0 %4816
        %4818 = vrot.lane.b32.xlu0 %v4695, 112
        %v4819 = vpop.permute.xlu0 %4818
        %4820 = vrot.lane.b32.xlu0 %v4696, 112
        %v4821 = vpop.permute.xlu0 %4820
        %4822 = vrot.lane.b32.xlu0 %v4697, 112
        %v4823 = vpop.permute.xlu0 %4822
        %4824 = vrot.lane.b32.xlu0 %v4698, 112
        %v4825 = vpop.permute.xlu0 %4824
        %4826 = vrot.lane.b32.xlu0 %v4699, 112
        %v4827 = vpop.permute.xlu0 %4826
        %v4860 = vadd.f32 %v4700, %v4765
        %v4861 = vadd.f32 %v4701, %v4767
        %v4862 = vadd.f32 %v4702, %v4769
        %v4863 = vadd.f32 %v4703, %v4771
        %v4864 = vadd.f32 %v4704, %v4773
        %v4865 = vadd.f32 %v4705, %v4775
        %v4866 = vadd.f32 %v4706, %v4777
        %v4867 = vadd.f32 %v4707, %v4779
        %v4868 = vadd.f32 %v4708, %v4781
        %v4869 = vadd.f32 %v4709, %v4783
        %v4870 = vadd.f32 %v4710, %v4785
        %v4871 = vadd.f32 %v4711, %v4787
        %v4872 = vadd.f32 %v4712, %v4789
        %v4873 = vadd.f32 %v4713, %v4791
        %v4874 = vadd.f32 %v4714, %v4793
        %v4875 = vadd.f32 %v4715, %v4795
        %v4876 = vadd.f32 %v4716, %v4797
        %v4877 = vadd.f32 %v4717, %v4799
        %v4878 = vadd.f32 %v4718, %v4801
        %v4879 = vadd.f32 %v4719, %v4803
        %v4880 = vadd.f32 %v4720, %v4805
        %v4881 = vadd.f32 %v4721, %v4807
        %v4882 = vadd.f32 %v4722, %v4809
        %v4883 = vadd.f32 %v4723, %v4811
        %v4884 = vadd.f32 %v4724, %v4813
        %v4885 = vadd.f32 %v4725, %v4815
        %v4886 = vadd.f32 %v4726, %v4817
        %v4887 = vadd.f32 %v4727, %v4819
        %v4888 = vadd.f32 %v4728, %v4821
        %v4889 = vadd.f32 %v4729, %v4823
        %v4890 = vadd.f32 %v4730, %v4825
        %v4891 = vadd.f32 %v4731, %v4827
        %4892 = vst.msk [vmem:[%s373] sm:$0xff] %vm375, %v4860
        %4893 = vst.msk [vmem:[%s373 + $0x8] sm:$0xff] %vm375, %v4861
        %4894 = vst.msk [vmem:[%s373 + $0x10] sm:$0xff] %vm375, %v4862
        %4895 = vst.msk [vmem:[%s373 + $0x18] sm:$0xff] %vm375, %v4863
        %4896 = vst.msk [vmem:[%s373 + $0x20] sm:$0xff] %vm375, %v4864
        %4897 = vst.msk [vmem:[%s373 + $0x28] sm:$0xff] %vm375, %v4865
        %4898 = vst.msk [vmem:[%s373 + $0x30] sm:$0xff] %vm375, %v4866
        %4899 = vst.msk [vmem:[%s373 + $0x38] sm:$0xff] %vm375, %v4867
        %4900 = vst.msk [vmem:[%s373 + $0x40] sm:$0xff] %vm375, %v4868
        %4901 = vst.msk [vmem:[%s373 + $0x48] sm:$0xff] %vm375, %v4869
        %4902 = vst.msk [vmem:[%s373 + $0x50] sm:$0xff] %vm375, %v4870
        %4903 = vst.msk [vmem:[%s373 + $0x58] sm:$0xff] %vm375, %v4871
        %4904 = vst.msk [vmem:[%s373 + $0x60] sm:$0xff] %vm375, %v4872
        %4905 = vst.msk [vmem:[%s373 + $0x68] sm:$0xff] %vm375, %v4873
        %4906 = vst.msk [vmem:[%s373 + $0x70] sm:$0xff] %vm375, %v4874
        %4907 = vst.msk [vmem:[%s373 + $0x78] sm:$0xff] %vm375, %v4875
        %4908 = vst.msk [vmem:[%s373 + $0x80] sm:$0xff] %vm375, %v4876
        %4909 = vst.msk [vmem:[%s373 + $0x88] sm:$0xff] %vm375, %v4877
        %4910 = vst.msk [vmem:[%s373 + $0x90] sm:$0xff] %vm375, %v4878
        %4911 = vst.msk [vmem:[%s373 + $0x98] sm:$0xff] %vm375, %v4879
        %4912 = vst.msk [vmem:[%s373 + $0xa0] sm:$0xff] %vm375, %v4880
        %4913 = vst.msk [vmem:[%s373 + $0xa8] sm:$0xff] %vm375, %v4881
        %4914 = vst.msk [vmem:[%s373 + $0xb0] sm:$0xff] %vm375, %v4882
        %4915 = vst.msk [vmem:[%s373 + $0xb8] sm:$0xff] %vm375, %v4883
        %4916 = vst.msk [vmem:[%s373 + $0xc0] sm:$0xff] %vm375, %v4884
        %4917 = vst.msk [vmem:[%s373 + $0xc8] sm:$0xff] %vm375, %v4885
        %4918 = vst.msk [vmem:[%s373 + $0xd0] sm:$0xff] %vm375, %v4886
        %4919 = vst.msk [vmem:[%s373 + $0xd8] sm:$0xff] %vm375, %v4887
        %4920 = vst.msk [vmem:[%s373 + $0xe0] sm:$0xff] %vm375, %v4888
        %4921 = vst.msk [vmem:[%s373 + $0xe8] sm:$0xff] %vm375, %v4889
        %4922 = vst.msk [vmem:[%s373 + $0xf0] sm:$0xff] %vm375, %v4890
        %4923 = vst.msk [vmem:[%s373 + $0xf8] sm:$0xff] %vm375, %v4891
        %v4924 = vld [vmem:[#allocation4] sm:$0xff]
        %v4925 = vld [vmem:[#allocation4 + $0x8] sm:$0xff]
        %v4926 = vld [vmem:[#allocation4 + $0x18] sm:$0xff]
        %v4927 = vld [vmem:[#allocation4 + $0x20] sm:$0xff]
        %v4928 = vld [vmem:[#allocation4 + $0x30] sm:$0xff]
        %v4929 = vld [vmem:[#allocation4 + $0x38] sm:$0xff]
        %v4930 = vld [vmem:[#allocation4 + $0x48] sm:$0xff]
        %v4931 = vld [vmem:[#allocation4 + $0x50] sm:$0xff]
        %v4932 = vld [vmem:[#allocation4 + $0x60] sm:$0xff]
        %v4933 = vld [vmem:[#allocation4 + $0x68] sm:$0xff]
        %v4934 = vld [vmem:[#allocation4 + $0x78] sm:$0xff]
        %v4935 = vld [vmem:[#allocation4 + $0x80] sm:$0xff]
        %v4936 = vld [vmem:[#allocation4 + $0x90] sm:$0xff]
        %v4937 = vld [vmem:[#allocation4 + $0x98] sm:$0xff]
        %v4938 = vld [vmem:[#allocation4 + $0xa8] sm:$0xff]
        %v4939 = vld [vmem:[#allocation4 + $0xb0] sm:$0xff]
        %v4940 = vld [vmem:[#allocation4 + $0xc0] sm:$0xff]
        %v4941 = vld [vmem:[#allocation4 + $0xc8] sm:$0xff]
        %v4942 = vld [vmem:[#allocation4 + $0xd8] sm:$0xff]
        %v4943 = vld [vmem:[#allocation4 + $0xe0] sm:$0xff]
        %v4944 = vld [vmem:[#allocation4 + $0xf0] sm:$0xff]
        %v4945 = vld [vmem:[#allocation4 + $0xf8] sm:$0xff]
        %v4946 = vld [vmem:[#allocation4 + $0x108] sm:$0xff]
        %v4947 = vld [vmem:[#allocation4 + $0x110] sm:$0xff]
        %v4948 = vld [vmem:[#allocation4 + $0x120] sm:$0xff]
        %v4949 = vld [vmem:[#allocation4 + $0x128] sm:$0xff]
        %v4950 = vld [vmem:[#allocation4 + $0x138] sm:$0xff]
        %v4951 = vld [vmem:[#allocation4 + $0x140] sm:$0xff]
        %v4952 = vld [vmem:[#allocation4 + $0x150] sm:$0xff]
        %v4953 = vld [vmem:[#allocation4 + $0x158] sm:$0xff]
        %v4954 = vld [vmem:[#allocation4 + $0x168] sm:$0xff]
        %v4955 = vld [vmem:[#allocation4 + $0x170] sm:$0xff]
        %v4956 = vadd.f32 %v4924, 0.0
        %v4957 = vadd.f32 %v4925, 0.0
        %v4958 = vadd.f32 %v4926, 0.0
        %v4959 = vadd.f32 %v4927, 0.0
        %v4960 = vadd.f32 %v4928, 0.0
        %v4961 = vadd.f32 %v4929, 0.0
        %v4962 = vadd.f32 %v4930, 0.0
        %v4963 = vadd.f32 %v4931, 0.0
        %v4964 = vadd.f32 %v4932, 0.0
        %v4965 = vadd.f32 %v4933, 0.0
        %v4966 = vadd.f32 %v4934, 0.0
        %v4967 = vadd.f32 %v4935, 0.0
        %v4968 = vadd.f32 %v4936, 0.0
        %v4969 = vadd.f32 %v4937, 0.0
        %v4970 = vadd.f32 %v4938, 0.0
        %v4971 = vadd.f32 %v4939, 0.0
        %v4972 = vadd.f32 %v4940, 0.0
        %v4973 = vadd.f32 %v4941, 0.0
        %v4974 = vadd.f32 %v4942, 0.0
        %v4975 = vadd.f32 %v4943, 0.0
        %v4976 = vadd.f32 %v4944, 0.0
        %v4977 = vadd.f32 %v4945, 0.0
        %v4978 = vadd.f32 %v4946, 0.0
        %v4979 = vadd.f32 %v4947, 0.0
        %v4980 = vadd.f32 %v4948, 0.0
        %v4981 = vadd.f32 %v4949, 0.0
        %v4982 = vadd.f32 %v4950, 0.0
        %v4983 = vadd.f32 %v4951, 0.0
        %v4984 = vadd.f32 %v4952, 0.0
        %v4985 = vadd.f32 %v4953, 0.0
        %v4986 = vadd.f32 %v4954, 0.0
        %v4987 = vadd.f32 %v4955, 0.0
        %v4988 = vmax.f32 %v4924, 0.0
        %v4989 = vmax.f32 %v4925, 0.0
        %v4990 = vmax.f32 %v4926, 0.0
        %v4991 = vmax.f32 %v4927, 0.0
        %v4992 = vmax.f32 %v4928, 0.0
        %v4993 = vmax.f32 %v4929, 0.0
        %v4994 = vmax.f32 %v4930, 0.0
        %v4995 = vmax.f32 %v4931, 0.0
        %v4996 = vmax.f32 %v4932, 0.0
        %v4997 = vmax.f32 %v4933, 0.0
        %v4998 = vmax.f32 %v4934, 0.0
        %v4999 = vmax.f32 %v4935, 0.0
        %v5000 = vmax.f32 %v4936, 0.0
        %v5001 = vmax.f32 %v4937, 0.0
        %v5002 = vmax.f32 %v4938, 0.0
        %v5003 = vmax.f32 %v4939, 0.0
        %v5004 = vmax.f32 %v4940, 0.0
        %v5005 = vmax.f32 %v4941, 0.0
        %v5006 = vmax.f32 %v4942, 0.0
        %v5007 = vmax.f32 %v4943, 0.0
        %v5008 = vmax.f32 %v4944, 0.0
        %v5009 = vmax.f32 %v4945, 0.0
        %v5010 = vmax.f32 %v4946, 0.0
        %v5011 = vmax.f32 %v4947, 0.0
        %v5012 = vmax.f32 %v4948, 0.0
        %v5013 = vmax.f32 %v4949, 0.0
        %v5014 = vmax.f32 %v4950, 0.0
        %v5015 = vmax.f32 %v4951, 0.0
        %v5016 = vmax.f32 %v4952, 0.0
        %v5017 = vmax.f32 %v4953, 0.0
        %v5018 = vmax.f32 %v4954, 0.0
        %v5019 = vmax.f32 %v4955, 0.0
        %5020 = vst.msk [vmem:[#allocation2] sm:$0xff] %vm375, %v4988
        %5021 = vst.msk [vmem:[#allocation2 + $0x8] sm:$0xff] %vm375, %v4989
        %5022 = vst.msk [vmem:[#allocation2 + $0x10] sm:$0xff] %vm375, %v4990
        %5023 = vst.msk [vmem:[#allocation2 + $0x18] sm:$0xff] %vm375, %v4991
        %5024 = vst.msk [vmem:[#allocation2 + $0x20] sm:$0xff] %vm375, %v4992
        %5025 = vst.msk [vmem:[#allocation2 + $0x28] sm:$0xff] %vm375, %v4993
        %5026 = vst.msk [vmem:[#allocation2 + $0x30] sm:$0xff] %vm375, %v4994
        %5027 = vst.msk [vmem:[#allocation2 + $0x38] sm:$0xff] %vm375, %v4995
        %5028 = vst.msk [vmem:[#allocation2 + $0x40] sm:$0xff] %vm375, %v4996
        %5029 = vst.msk [vmem:[#allocation2 + $0x48] sm:$0xff] %vm375, %v4997
        %5030 = vst.msk [vmem:[#allocation2 + $0x50] sm:$0xff] %vm375, %v4998
        %5031 = vst.msk [vmem:[#allocation2 + $0x58] sm:$0xff] %vm375, %v4999
        %5032 = vst.msk [vmem:[#allocation2 + $0x60] sm:$0xff] %vm375, %v5000
        %5033 = vst.msk [vmem:[#allocation2 + $0x68] sm:$0xff] %vm375, %v5001
        %5034 = vst.msk [vmem:[#allocation2 + $0x70] sm:$0xff] %vm375, %v5002
        %5035 = vst.msk [vmem:[#allocation2 + $0x78] sm:$0xff] %vm375, %v5003
        %5036 = vst.msk [vmem:[#allocation2 + $0x80] sm:$0xff] %vm375, %v5004
        %5037 = vst.msk [vmem:[#allocation2 + $0x88] sm:$0xff] %vm375, %v5005
        %5038 = vst.msk [vmem:[#allocation2 + $0x90] sm:$0xff] %vm375, %v5006
        %5039 = vst.msk [vmem:[#allocation2 + $0x98] sm:$0xff] %vm375, %v5007
        %5040 = vst.msk [vmem:[#allocation2 + $0xa0] sm:$0xff] %vm375, %v5008
        %5041 = vst.msk [vmem:[#allocation2 + $0xa8] sm:$0xff] %vm375, %v5009
        %5042 = vst.msk [vmem:[#allocation2 + $0xb0] sm:$0xff] %vm375, %v5010
        %5043 = vst.msk [vmem:[#allocation2 + $0xb8] sm:$0xff] %vm375, %v5011
        %5044 = vst.msk [vmem:[#allocation2 + $0xc0] sm:$0xff] %vm375, %v5012
        %5045 = vst.msk [vmem:[#allocation2 + $0xc8] sm:$0xff] %vm375, %v5013
        %5046 = vst.msk [vmem:[#allocation2 + $0xd0] sm:$0xff] %vm375, %v5014
        %5047 = vst.msk [vmem:[#allocation2 + $0xd8] sm:$0xff] %vm375, %v5015
        %5048 = vst.msk [vmem:[#allocation2 + $0xe0] sm:$0xff] %vm375, %v5016
        %5049 = vst.msk [vmem:[#allocation2 + $0xe8] sm:$0xff] %vm375, %v5017
        %5050 = vst.msk [vmem:[#allocation2 + $0xf0] sm:$0xff] %vm375, %v5018
        %5051 = vst.msk [vmem:[#allocation2 + $0xf8] sm:$0xff] %vm375, %v5019
        %v5052 = vld [vmem:[#allocation4 + $0x1] sm:$0xff]
        %v5053 = vld [vmem:[#allocation4 + $0x9] sm:$0xff]
        %v5054 = vld [vmem:[#allocation4 + $0x19] sm:$0xff]
        %v5055 = vld [vmem:[#allocation4 + $0x21] sm:$0xff]
        %v5056 = vld [vmem:[#allocation4 + $0x31] sm:$0xff]
        %v5057 = vld [vmem:[#allocation4 + $0x39] sm:$0xff]
        %v5058 = vld [vmem:[#allocation4 + $0x49] sm:$0xff]
        %v5059 = vld [vmem:[#allocation4 + $0x51] sm:$0xff]
        %v5060 = vld [vmem:[#allocation4 + $0x61] sm:$0xff]
        %v5061 = vld [vmem:[#allocation4 + $0x69] sm:$0xff]
        %v5062 = vld [vmem:[#allocation4 + $0x79] sm:$0xff]
        %v5063 = vld [vmem:[#allocation4 + $0x81] sm:$0xff]
        %v5064 = vld [vmem:[#allocation4 + $0x91] sm:$0xff]
        %v5065 = vld [vmem:[#allocation4 + $0x99] sm:$0xff]
        %v5066 = vld [vmem:[#allocation4 + $0xa9] sm:$0xff]
        %v5067 = vld [vmem:[#allocation4 + $0xb1] sm:$0xff]
        %v5068 = vld [vmem:[#allocation4 + $0xc1] sm:$0xff]
        %v5069 = vld [vmem:[#allocation4 + $0xc9] sm:$0xff]
        %v5070 = vld [vmem:[#allocation4 + $0xd9] sm:$0xff]
        %v5071 = vld [vmem:[#allocation4 + $0xe1] sm:$0xff]
        %v5072 = vld [vmem:[#allocation4 + $0xf1] sm:$0xff]
        %v5073 = vld [vmem:[#allocation4 + $0xf9] sm:$0xff]
        %v5074 = vld [vmem:[#allocation4 + $0x109] sm:$0xff]
        %v5075 = vld [vmem:[#allocation4 + $0x111] sm:$0xff]
        %v5076 = vld [vmem:[#allocation4 + $0x121] sm:$0xff]
        %v5077 = vld [vmem:[#allocation4 + $0x129] sm:$0xff]
        %v5078 = vld [vmem:[#allocation4 + $0x139] sm:$0xff]
        %v5079 = vld [vmem:[#allocation4 + $0x141] sm:$0xff]
        %v5080 = vld [vmem:[#allocation4 + $0x151] sm:$0xff]
        %v5081 = vld [vmem:[#allocation4 + $0x159] sm:$0xff]
        %v5082 = vld [vmem:[#allocation4 + $0x169] sm:$0xff]
        %v5083 = vld [vmem:[#allocation4 + $0x171] sm:$0xff]
        %v5084 = vadd.f32 %v4956, %v5052
        %v5085 = vadd.f32 %v4957, %v5053
        %v5086 = vadd.f32 %v4958, %v5054
        %v5087 = vadd.f32 %v4959, %v5055
        %v5088 = vadd.f32 %v4960, %v5056
        %v5089 = vadd.f32 %v4961, %v5057
        %v5090 = vadd.f32 %v4962, %v5058
        %v5091 = vadd.f32 %v4963, %v5059
        %v5092 = vadd.f32 %v4964, %v5060
        %v5093 = vadd.f32 %v4965, %v5061
        %v5094 = vadd.f32 %v4966, %v5062
        %v5095 = vadd.f32 %v4967, %v5063
        %v5096 = vadd.f32 %v4968, %v5064
        %v5097 = vadd.f32 %v4969, %v5065
        %v5098 = vadd.f32 %v4970, %v5066
        %v5099 = vadd.f32 %v4971, %v5067
        %v5100 = vadd.f32 %v4972, %v5068
        %v5101 = vadd.f32 %v4973, %v5069
        %v5102 = vadd.f32 %v4974, %v5070
        %v5103 = vadd.f32 %v4975, %v5071
        %v5104 = vadd.f32 %v4976, %v5072
        %v5105 = vadd.f32 %v4977, %v5073
        %v5106 = vadd.f32 %v4978, %v5074
        %v5107 = vadd.f32 %v4979, %v5075
        %v5108 = vadd.f32 %v4980, %v5076
        %v5109 = vadd.f32 %v4981, %v5077
        %v5110 = vadd.f32 %v4982, %v5078
        %v5111 = vadd.f32 %v4983, %v5079
        %v5112 = vadd.f32 %v4984, %v5080
        %v5113 = vadd.f32 %v4985, %v5081
        %v5114 = vadd.f32 %v4986, %v5082
        %v5115 = vadd.f32 %v4987, %v5083
        %v5116 = vmax.f32 %v5052, 0.0
        %v5117 = vmax.f32 %v5053, 0.0
        %v5118 = vmax.f32 %v5054, 0.0
        %v5119 = vmax.f32 %v5055, 0.0
        %v5120 = vmax.f32 %v5056, 0.0
        %v5121 = vmax.f32 %v5057, 0.0
        %v5122 = vmax.f32 %v5058, 0.0
        %v5123 = vmax.f32 %v5059, 0.0
        %v5124 = vmax.f32 %v5060, 0.0
        %v5125 = vmax.f32 %v5061, 0.0
        %v5126 = vmax.f32 %v5062, 0.0
        %v5127 = vmax.f32 %v5063, 0.0
        %v5128 = vmax.f32 %v5064, 0.0
        %v5129 = vmax.f32 %v5065, 0.0
        %v5130 = vmax.f32 %v5066, 0.0
        %v5131 = vmax.f32 %v5067, 0.0
        %v5132 = vmax.f32 %v5068, 0.0
        %v5133 = vmax.f32 %v5069, 0.0
        %v5134 = vmax.f32 %v5070, 0.0
        %v5135 = vmax.f32 %v5071, 0.0
        %v5136 = vmax.f32 %v5072, 0.0
        %v5137 = vmax.f32 %v5073, 0.0
        %v5138 = vmax.f32 %v5074, 0.0
        %v5139 = vmax.f32 %v5075, 0.0
        %v5140 = vmax.f32 %v5076, 0.0
        %v5141 = vmax.f32 %v5077, 0.0
        %v5142 = vmax.f32 %v5078, 0.0
        %v5143 = vmax.f32 %v5079, 0.0
        %v5144 = vmax.f32 %v5080, 0.0
        %v5145 = vmax.f32 %v5081, 0.0
        %v5146 = vmax.f32 %v5082, 0.0
        %v5147 = vmax.f32 %v5083, 0.0
        %5180 = vrot.lane.b32.xlu0 %v5116, 8
        %v5181 = vpop.permute.xlu0 %5180
        %5182 = vrot.lane.b32.xlu0 %v5117, 8
        %v5183 = vpop.permute.xlu0 %5182
        %5184 = vrot.lane.b32.xlu0 %v5118, 8
        %v5185 = vpop.permute.xlu0 %5184
        %5186 = vrot.lane.b32.xlu0 %v5119, 8
        %v5187 = vpop.permute.xlu0 %5186
        %5188 = vrot.lane.b32.xlu0 %v5120, 8
        %v5189 = vpop.permute.xlu0 %5188
        %5190 = vrot.lane.b32.xlu0 %v5121, 8
        %v5191 = vpop.permute.xlu0 %5190
        %5192 = vrot.lane.b32.xlu0 %v5122, 8
        %v5193 = vpop.permute.xlu0 %5192
        %5194 = vrot.lane.b32.xlu0 %v5123, 8
        %v5195 = vpop.permute.xlu0 %5194
        %5196 = vrot.lane.b32.xlu0 %v5124, 8
        %v5197 = vpop.permute.xlu0 %5196
        %5198 = vrot.lane.b32.xlu0 %v5125, 8
        %v5199 = vpop.permute.xlu0 %5198
        %5200 = vrot.lane.b32.xlu0 %v5126, 8
        %v5201 = vpop.permute.xlu0 %5200
        %5202 = vrot.lane.b32.xlu0 %v5127, 8
        %v5203 = vpop.permute.xlu0 %5202
        %5204 = vrot.lane.b32.xlu0 %v5128, 8
        %v5205 = vpop.permute.xlu0 %5204
        %5206 = vrot.lane.b32.xlu0 %v5129, 8
        %v5207 = vpop.permute.xlu0 %5206
        %5208 = vrot.lane.b32.xlu0 %v5130, 8
        %v5209 = vpop.permute.xlu0 %5208
        %5210 = vrot.lane.b32.xlu0 %v5131, 8
        %v5211 = vpop.permute.xlu0 %5210
        %5212 = vrot.lane.b32.xlu0 %v5132, 8
        %v5213 = vpop.permute.xlu0 %5212
        %5214 = vrot.lane.b32.xlu0 %v5133, 8
        %v5215 = vpop.permute.xlu0 %5214
        %5216 = vrot.lane.b32.xlu0 %v5134, 8
        %v5217 = vpop.permute.xlu0 %5216
        %5218 = vrot.lane.b32.xlu0 %v5135, 8
        %v5219 = vpop.permute.xlu0 %5218
        %5220 = vrot.lane.b32.xlu0 %v5136, 8
        %v5221 = vpop.permute.xlu0 %5220
        %5222 = vrot.lane.b32.xlu0 %v5137, 8
        %v5223 = vpop.permute.xlu0 %5222
        %5224 = vrot.lane.b32.xlu0 %v5138, 8
        %v5225 = vpop.permute.xlu0 %5224
        %5226 = vrot.lane.b32.xlu0 %v5139, 8
        %v5227 = vpop.permute.xlu0 %5226
        %5228 = vrot.lane.b32.xlu0 %v5140, 8
        %v5229 = vpop.permute.xlu0 %5228
        %5230 = vrot.lane.b32.xlu0 %v5141, 8
        %v5231 = vpop.permute.xlu0 %5230
        %5232 = vrot.lane.b32.xlu0 %v5142, 8
        %v5233 = vpop.permute.xlu0 %5232
        %5234 = vrot.lane.b32.xlu0 %v5143, 8
        %v5235 = vpop.permute.xlu0 %5234
        %5236 = vrot.lane.b32.xlu0 %v5144, 8
        %v5237 = vpop.permute.xlu0 %5236
        %5238 = vrot.lane.b32.xlu0 %v5145, 8
        %v5239 = vpop.permute.xlu0 %5238
        %5240 = vrot.lane.b32.xlu0 %v5146, 8
        %v5241 = vpop.permute.xlu0 %5240
        %5242 = vrot.lane.b32.xlu0 %v5147, 8
        %v5243 = vpop.permute.xlu0 %5242
        %5276 = vst.msk [vmem:[#allocation2] sm:$0xff] %vm1301, %v5181
        %5277 = vst.msk [vmem:[#allocation2 + $0x8] sm:$0xff] %vm1301, %v5183
        %5278 = vst.msk [vmem:[#allocation2 + $0x10] sm:$0xff] %vm1301, %v5185
        %5279 = vst.msk [vmem:[#allocation2 + $0x18] sm:$0xff] %vm1301, %v5187
        %5280 = vst.msk [vmem:[#allocation2 + $0x20] sm:$0xff] %vm1301, %v5189
        %5281 = vst.msk [vmem:[#allocation2 + $0x28] sm:$0xff] %vm1301, %v5191
        %5282 = vst.msk [vmem:[#allocation2 + $0x30] sm:$0xff] %vm1301, %v5193
        %5283 = vst.msk [vmem:[#allocation2 + $0x38] sm:$0xff] %vm1301, %v5195
        %5284 = vst.msk [vmem:[#allocation2 + $0x40] sm:$0xff] %vm1301, %v5197
        %5285 = vst.msk [vmem:[#allocation2 + $0x48] sm:$0xff] %vm1301, %v5199
        %5286 = vst.msk [vmem:[#allocation2 + $0x50] sm:$0xff] %vm1301, %v5201
        %5287 = vst.msk [vmem:[#allocation2 + $0x58] sm:$0xff] %vm1301, %v5203
        %5288 = vst.msk [vmem:[#allocation2 + $0x60] sm:$0xff] %vm1301, %v5205
        %5289 = vst.msk [vmem:[#allocation2 + $0x68] sm:$0xff] %vm1301, %v5207
        %5290 = vst.msk [vmem:[#allocation2 + $0x70] sm:$0xff] %vm1301, %v5209
        %5291 = vst.msk [vmem:[#allocation2 + $0x78] sm:$0xff] %vm1301, %v5211
        %5292 = vst.msk [vmem:[#allocation2 + $0x80] sm:$0xff] %vm1301, %v5213
        %5293 = vst.msk [vmem:[#allocation2 + $0x88] sm:$0xff] %vm1301, %v5215
        %5294 = vst.msk [vmem:[#allocation2 + $0x90] sm:$0xff] %vm1301, %v5217
        %5295 = vst.msk [vmem:[#allocation2 + $0x98] sm:$0xff] %vm1301, %v5219
        %5296 = vst.msk [vmem:[#allocation2 + $0xa0] sm:$0xff] %vm1301, %v5221
        %5297 = vst.msk [vmem:[#allocation2 + $0xa8] sm:$0xff] %vm1301, %v5223
        %5298 = vst.msk [vmem:[#allocation2 + $0xb0] sm:$0xff] %vm1301, %v5225
        %5299 = vst.msk [vmem:[#allocation2 + $0xb8] sm:$0xff] %vm1301, %v5227
        %5300 = vst.msk [vmem:[#allocation2 + $0xc0] sm:$0xff] %vm1301, %v5229
        %5301 = vst.msk [vmem:[#allocation2 + $0xc8] sm:$0xff] %vm1301, %v5231
        %5302 = vst.msk [vmem:[#allocation2 + $0xd0] sm:$0xff] %vm1301, %v5233
        %5303 = vst.msk [vmem:[#allocation2 + $0xd8] sm:$0xff] %vm1301, %v5235
        %5304 = vst.msk [vmem:[#allocation2 + $0xe0] sm:$0xff] %vm1301, %v5237
        %5305 = vst.msk [vmem:[#allocation2 + $0xe8] sm:$0xff] %vm1301, %v5239
        %5306 = vst.msk [vmem:[#allocation2 + $0xf0] sm:$0xff] %vm1301, %v5241
        %5307 = vst.msk [vmem:[#allocation2 + $0xf8] sm:$0xff] %vm1301, %v5243
        %v5308 = vld [vmem:[#allocation4 + $0x2] sm:$0xff]
        %v5309 = vld [vmem:[#allocation4 + $0xa] sm:$0xff]
        %v5310 = vld [vmem:[#allocation4 + $0x1a] sm:$0xff]
        %v5311 = vld [vmem:[#allocation4 + $0x22] sm:$0xff]
        %v5312 = vld [vmem:[#allocation4 + $0x32] sm:$0xff]
        %v5313 = vld [vmem:[#allocation4 + $0x3a] sm:$0xff]
        %v5314 = vld [vmem:[#allocation4 + $0x4a] sm:$0xff]
        %v5315 = vld [vmem:[#allocation4 + $0x52] sm:$0xff]
        %v5316 = vld [vmem:[#allocation4 + $0x62] sm:$0xff]
        %v5317 = vld [vmem:[#allocation4 + $0x6a] sm:$0xff]
        %v5318 = vld [vmem:[#allocation4 + $0x7a] sm:$0xff]
        %v5319 = vld [vmem:[#allocation4 + $0x82] sm:$0xff]
        %v5320 = vld [vmem:[#allocation4 + $0x92] sm:$0xff]
        %v5321 = vld [vmem:[#allocation4 + $0x9a] sm:$0xff]
        %v5322 = vld [vmem:[#allocation4 + $0xaa] sm:$0xff]
        %v5323 = vld [vmem:[#allocation4 + $0xb2] sm:$0xff]
        %v5324 = vld [vmem:[#allocation4 + $0xc2] sm:$0xff]
        %v5325 = vld [vmem:[#allocation4 + $0xca] sm:$0xff]
        %v5326 = vld [vmem:[#allocation4 + $0xda] sm:$0xff]
        %v5327 = vld [vmem:[#allocation4 + $0xe2] sm:$0xff]
        %v5328 = vld [vmem:[#allocation4 + $0xf2] sm:$0xff]
        %v5329 = vld [vmem:[#allocation4 + $0xfa] sm:$0xff]
        %v5330 = vld [vmem:[#allocation4 + $0x10a] sm:$0xff]
        %v5331 = vld [vmem:[#allocation4 + $0x112] sm:$0xff]
        %v5332 = vld [vmem:[#allocation4 + $0x122] sm:$0xff]
        %v5333 = vld [vmem:[#allocation4 + $0x12a] sm:$0xff]
        %v5334 = vld [vmem:[#allocation4 + $0x13a] sm:$0xff]
        %v5335 = vld [vmem:[#allocation4 + $0x142] sm:$0xff]
        %v5336 = vld [vmem:[#allocation4 + $0x152] sm:$0xff]
        %v5337 = vld [vmem:[#allocation4 + $0x15a] sm:$0xff]
        %v5338 = vld [vmem:[#allocation4 + $0x16a] sm:$0xff]
        %v5339 = vld [vmem:[#allocation4 + $0x172] sm:$0xff]
        %v5340 = vadd.f32 %v5084, %v5308
        %v5341 = vadd.f32 %v5085, %v5309
        %v5342 = vadd.f32 %v5086, %v5310
        %v5343 = vadd.f32 %v5087, %v5311
        %v5344 = vadd.f32 %v5088, %v5312
        %v5345 = vadd.f32 %v5089, %v5313
        %v5346 = vadd.f32 %v5090, %v5314
        %v5347 = vadd.f32 %v5091, %v5315
        %v5348 = vadd.f32 %v5092, %v5316
        %v5349 = vadd.f32 %v5093, %v5317
        %v5350 = vadd.f32 %v5094, %v5318
        %v5351 = vadd.f32 %v5095, %v5319
        %v5352 = vadd.f32 %v5096, %v5320
        %v5353 = vadd.f32 %v5097, %v5321
        %v5354 = vadd.f32 %v5098, %v5322
        %v5355 = vadd.f32 %v5099, %v5323
        %v5356 = vadd.f32 %v5100, %v5324
        %v5357 = vadd.f32 %v5101, %v5325
        %v5358 = vadd.f32 %v5102, %v5326
        %v5359 = vadd.f32 %v5103, %v5327
        %v5360 = vadd.f32 %v5104, %v5328
        %v5361 = vadd.f32 %v5105, %v5329
        %v5362 = vadd.f32 %v5106, %v5330
        %v5363 = vadd.f32 %v5107, %v5331
        %v5364 = vadd.f32 %v5108, %v5332
        %v5365 = vadd.f32 %v5109, %v5333
        %v5366 = vadd.f32 %v5110, %v5334
        %v5367 = vadd.f32 %v5111, %v5335
        %v5368 = vadd.f32 %v5112, %v5336
        %v5369 = vadd.f32 %v5113, %v5337
        %v5370 = vadd.f32 %v5114, %v5338
        %v5371 = vadd.f32 %v5115, %v5339
        %v5372 = vmax.f32 %v5308, 0.0
        %v5373 = vmax.f32 %v5309, 0.0
        %v5374 = vmax.f32 %v5310, 0.0
        %v5375 = vmax.f32 %v5311, 0.0
        %v5376 = vmax.f32 %v5312, 0.0
        %v5377 = vmax.f32 %v5313, 0.0
        %v5378 = vmax.f32 %v5314, 0.0
        %v5379 = vmax.f32 %v5315, 0.0
        %v5380 = vmax.f32 %v5316, 0.0
        %v5381 = vmax.f32 %v5317, 0.0
        %v5382 = vmax.f32 %v5318, 0.0
        %v5383 = vmax.f32 %v5319, 0.0
        %v5384 = vmax.f32 %v5320, 0.0
        %v5385 = vmax.f32 %v5321, 0.0
        %v5386 = vmax.f32 %v5322, 0.0
        %v5387 = vmax.f32 %v5323, 0.0
        %v5388 = vmax.f32 %v5324, 0.0
        %v5389 = vmax.f32 %v5325, 0.0
        %v5390 = vmax.f32 %v5326, 0.0
        %v5391 = vmax.f32 %v5327, 0.0
        %v5392 = vmax.f32 %v5328, 0.0
        %v5393 = vmax.f32 %v5329, 0.0
        %v5394 = vmax.f32 %v5330, 0.0
        %v5395 = vmax.f32 %v5331, 0.0
        %v5396 = vmax.f32 %v5332, 0.0
        %v5397 = vmax.f32 %v5333, 0.0
        %v5398 = vmax.f32 %v5334, 0.0
        %v5399 = vmax.f32 %v5335, 0.0
        %v5400 = vmax.f32 %v5336, 0.0
        %v5401 = vmax.f32 %v5337, 0.0
        %v5402 = vmax.f32 %v5338, 0.0
        %v5403 = vmax.f32 %v5339, 0.0
        %5436 = vrot.lane.b32.xlu0 %v5372, 16
        %v5437 = vpop.permute.xlu0 %5436
        %5438 = vrot.lane.b32.xlu0 %v5373, 16
        %v5439 = vpop.permute.xlu0 %5438
        %5440 = vrot.lane.b32.xlu0 %v5374, 16
        %v5441 = vpop.permute.xlu0 %5440
        %5442 = vrot.lane.b32.xlu0 %v5375, 16
        %v5443 = vpop.permute.xlu0 %5442
        %5444 = vrot.lane.b32.xlu0 %v5376, 16
        %v5445 = vpop.permute.xlu0 %5444
        %5446 = vrot.lane.b32.xlu0 %v5377, 16
        %v5447 = vpop.permute.xlu0 %5446
        %5448 = vrot.lane.b32.xlu0 %v5378, 16
        %v5449 = vpop.permute.xlu0 %5448
        %5450 = vrot.lane.b32.xlu0 %v5379, 16
        %v5451 = vpop.permute.xlu0 %5450
        %5452 = vrot.lane.b32.xlu0 %v5380, 16
        %v5453 = vpop.permute.xlu0 %5452
        %5454 = vrot.lane.b32.xlu0 %v5381, 16
        %v5455 = vpop.permute.xlu0 %5454
        %5456 = vrot.lane.b32.xlu0 %v5382, 16
        %v5457 = vpop.permute.xlu0 %5456
        %5458 = vrot.lane.b32.xlu0 %v5383, 16
        %v5459 = vpop.permute.xlu0 %5458
        %5460 = vrot.lane.b32.xlu0 %v5384, 16
        %v5461 = vpop.permute.xlu0 %5460
        %5462 = vrot.lane.b32.xlu0 %v5385, 16
        %v5463 = vpop.permute.xlu0 %5462
        %5464 = vrot.lane.b32.xlu0 %v5386, 16
        %v5465 = vpop.permute.xlu0 %5464
        %5466 = vrot.lane.b32.xlu0 %v5387, 16
        %v5467 = vpop.permute.xlu0 %5466
        %5468 = vrot.lane.b32.xlu0 %v5388, 16
        %v5469 = vpop.permute.xlu0 %5468
        %5470 = vrot.lane.b32.xlu0 %v5389, 16
        %v5471 = vpop.permute.xlu0 %5470
        %5472 = vrot.lane.b32.xlu0 %v5390, 16
        %v5473 = vpop.permute.xlu0 %5472
        %5474 = vrot.lane.b32.xlu0 %v5391, 16
        %v5475 = vpop.permute.xlu0 %5474
        %5476 = vrot.lane.b32.xlu0 %v5392, 16
        %v5477 = vpop.permute.xlu0 %5476
        %5478 = vrot.lane.b32.xlu0 %v5393, 16
        %v5479 = vpop.permute.xlu0 %5478
        %5480 = vrot.lane.b32.xlu0 %v5394, 16
        %v5481 = vpop.permute.xlu0 %5480
        %5482 = vrot.lane.b32.xlu0 %v5395, 16
        %v5483 = vpop.permute.xlu0 %5482
        %5484 = vrot.lane.b32.xlu0 %v5396, 16
        %v5485 = vpop.permute.xlu0 %5484
        %5486 = vrot.lane.b32.xlu0 %v5397, 16
        %v5487 = vpop.permute.xlu0 %5486
        %5488 = vrot.lane.b32.xlu0 %v5398, 16
        %v5489 = vpop.permute.xlu0 %5488
        %5490 = vrot.lane.b32.xlu0 %v5399, 16
        %v5491 = vpop.permute.xlu0 %5490
        %5492 = vrot.lane.b32.xlu0 %v5400, 16
        %v5493 = vpop.permute.xlu0 %5492
        %5494 = vrot.lane.b32.xlu0 %v5401, 16
        %v5495 = vpop.permute.xlu0 %5494
        %5496 = vrot.lane.b32.xlu0 %v5402, 16
        %v5497 = vpop.permute.xlu0 %5496
        %5498 = vrot.lane.b32.xlu0 %v5403, 16
        %v5499 = vpop.permute.xlu0 %5498
        %5532 = vst.msk [vmem:[#allocation2] sm:$0xff] %vm1558, %v5437
        %5533 = vst.msk [vmem:[#allocation2 + $0x8] sm:$0xff] %vm1558, %v5439
        %5534 = vst.msk [vmem:[#allocation2 + $0x10] sm:$0xff] %vm1558, %v5441
        %5535 = vst.msk [vmem:[#allocation2 + $0x18] sm:$0xff] %vm1558, %v5443
        %5536 = vst.msk [vmem:[#allocation2 + $0x20] sm:$0xff] %vm1558, %v5445
        %5537 = vst.msk [vmem:[#allocation2 + $0x28] sm:$0xff] %vm1558, %v5447
        %5538 = vst.msk [vmem:[#allocation2 + $0x30] sm:$0xff] %vm1558, %v5449
        %5539 = vst.msk [vmem:[#allocation2 + $0x38] sm:$0xff] %vm1558, %v5451
        %5540 = vst.msk [vmem:[#allocation2 + $0x40] sm:$0xff] %vm1558, %v5453
        %5541 = vst.msk [vmem:[#allocation2 + $0x48] sm:$0xff] %vm1558, %v5455
        %5542 = vst.msk [vmem:[#allocation2 + $0x50] sm:$0xff] %vm1558, %v5457
        %5543 = vst.msk [vmem:[#allocation2 + $0x58] sm:$0xff] %vm1558, %v5459
        %5544 = vst.msk [vmem:[#allocation2 + $0x60] sm:$0xff] %vm1558, %v5461
        %5545 = vst.msk [vmem:[#allocation2 + $0x68] sm:$0xff] %vm1558, %v5463
        %5546 = vst.msk [vmem:[#allocation2 + $0x70] sm:$0xff] %vm1558, %v5465
        %5547 = vst.msk [vmem:[#allocation2 + $0x78] sm:$0xff] %vm1558, %v5467
        %5548 = vst.msk [vmem:[#allocation2 + $0x80] sm:$0xff] %vm1558, %v5469
        %5549 = vst.msk [vmem:[#allocation2 + $0x88] sm:$0xff] %vm1558, %v5471
        %5550 = vst.msk [vmem:[#allocation2 + $0x90] sm:$0xff] %vm1558, %v5473
        %5551 = vst.msk [vmem:[#allocation2 + $0x98] sm:$0xff] %vm1558, %v5475
        %5552 = vst.msk [vmem:[#allocation2 + $0xa0] sm:$0xff] %vm1558, %v5477
        %5553 = vst.msk [vmem:[#allocation2 + $0xa8] sm:$0xff] %vm1558, %v5479
        %5554 = vst.msk [vmem:[#allocation2 + $0xb0] sm:$0xff] %vm1558, %v5481
        %5555 = vst.msk [vmem:[#allocation2 + $0xb8] sm:$0xff] %vm1558, %v5483
        %5556 = vst.msk [vmem:[#allocation2 + $0xc0] sm:$0xff] %vm1558, %v5485
        %5557 = vst.msk [vmem:[#allocation2 + $0xc8] sm:$0xff] %vm1558, %v5487
        %5558 = vst.msk [vmem:[#allocation2 + $0xd0] sm:$0xff] %vm1558, %v5489
        %5559 = vst.msk [vmem:[#allocation2 + $0xd8] sm:$0xff] %vm1558, %v5491
        %5560 = vst.msk [vmem:[#allocation2 + $0xe0] sm:$0xff] %vm1558, %v5493
        %5561 = vst.msk [vmem:[#allocation2 + $0xe8] sm:$0xff] %vm1558, %v5495
        %5562 = vst.msk [vmem:[#allocation2 + $0xf0] sm:$0xff] %vm1558, %v5497
        %5563 = vst.msk [vmem:[#allocation2 + $0xf8] sm:$0xff] %vm1558, %v5499
        %v5564 = vld [vmem:[%s3602] sm:$0xff]
        %v5565 = vld [vmem:[%s3602 + $0x8] sm:$0xff]
        %v5566 = vld [vmem:[%s3602 + $0x18] sm:$0xff]
        %v5567 = vld [vmem:[%s3602 + $0x20] sm:$0xff]
        %v5568 = vld [vmem:[%s3602 + $0x30] sm:$0xff]
        %v5569 = vld [vmem:[%s3602 + $0x38] sm:$0xff]
        %v5570 = vld [vmem:[%s3602 + $0x48] sm:$0xff]
        %v5571 = vld [vmem:[%s3602 + $0x50] sm:$0xff]
        %v5572 = vld [vmem:[%s3602 + $0x60] sm:$0xff]
        %v5573 = vld [vmem:[%s3602 + $0x68] sm:$0xff]
        %v5574 = vld [vmem:[%s3602 + $0x78] sm:$0xff]
        %v5575 = vld [vmem:[%s3602 + $0x80] sm:$0xff]
        %v5576 = vld [vmem:[%s3602 + $0x90] sm:$0xff]
        %v5577 = vld [vmem:[%s3602 + $0x98] sm:$0xff]
        %v5578 = vld [vmem:[%s3602 + $0xa8] sm:$0xff]
        %v5579 = vld [vmem:[%s3602 + $0xb0] sm:$0xff]
        %v5580 = vld [vmem:[%s3602 + $0xc0] sm:$0xff]
        %v5581 = vld [vmem:[%s3602 + $0xc8] sm:$0xff]
        %v5582 = vld [vmem:[%s3602 + $0xd8] sm:$0xff]
        %v5583 = vld [vmem:[%s3602 + $0xe0] sm:$0xff]
        %v5584 = vld [vmem:[%s3602 + $0xf0] sm:$0xff]
        %v5585 = vld [vmem:[%s3602 + $0xf8] sm:$0xff]
        %v5586 = vld [vmem:[%s3602 + $0x108] sm:$0xff]
        %v5587 = vld [vmem:[%s3602 + $0x110] sm:$0xff]
        %v5588 = vld [vmem:[%s3602 + $0x120] sm:$0xff]
        %v5589 = vld [vmem:[%s3602 + $0x128] sm:$0xff]
        %v5590 = vld [vmem:[%s3602 + $0x138] sm:$0xff]
        %v5591 = vld [vmem:[%s3602 + $0x140] sm:$0xff]
        %v5592 = vld [vmem:[%s3602 + $0x150] sm:$0xff]
        %v5593 = vld [vmem:[%s3602 + $0x158] sm:$0xff]
        %v5594 = vld [vmem:[%s3602 + $0x168] sm:$0xff]
        %v5595 = vld [vmem:[%s3602 + $0x170] sm:$0xff]
        %v5596 = vadd.f32 %v5340, %v5564
        %v5597 = vadd.f32 %v5341, %v5565
        %v5598 = vadd.f32 %v5342, %v5566
        %v5599 = vadd.f32 %v5343, %v5567
        %v5600 = vadd.f32 %v5344, %v5568
        %v5601 = vadd.f32 %v5345, %v5569
        %v5602 = vadd.f32 %v5346, %v5570
        %v5603 = vadd.f32 %v5347, %v5571
        %v5604 = vadd.f32 %v5348, %v5572
        %v5605 = vadd.f32 %v5349, %v5573
        %v5606 = vadd.f32 %v5350, %v5574
        %v5607 = vadd.f32 %v5351, %v5575
        %v5608 = vadd.f32 %v5352, %v5576
        %v5609 = vadd.f32 %v5353, %v5577
        %v5610 = vadd.f32 %v5354, %v5578
        %v5611 = vadd.f32 %v5355, %v5579
        %v5612 = vadd.f32 %v5356, %v5580
        %v5613 = vadd.f32 %v5357, %v5581
        %v5614 = vadd.f32 %v5358, %v5582
        %v5615 = vadd.f32 %v5359, %v5583
        %v5616 = vadd.f32 %v5360, %v5584
        %v5617 = vadd.f32 %v5361, %v5585
        %v5618 = vadd.f32 %v5362, %v5586
        %v5619 = vadd.f32 %v5363, %v5587
        %v5620 = vadd.f32 %v5364, %v5588
        %v5621 = vadd.f32 %v5365, %v5589
        %v5622 = vadd.f32 %v5366, %v5590
        %v5623 = vadd.f32 %v5367, %v5591
        %v5624 = vadd.f32 %v5368, %v5592
        %v5625 = vadd.f32 %v5369, %v5593
        %v5626 = vadd.f32 %v5370, %v5594
        %v5627 = vadd.f32 %v5371, %v5595
        %v5628 = vmax.f32 %v5564, 0.0
        %v5629 = vmax.f32 %v5565, 0.0
        %v5630 = vmax.f32 %v5566, 0.0
        %v5631 = vmax.f32 %v5567, 0.0
        %v5632 = vmax.f32 %v5568, 0.0
        %v5633 = vmax.f32 %v5569, 0.0
        %v5634 = vmax.f32 %v5570, 0.0
        %v5635 = vmax.f32 %v5571, 0.0
        %v5636 = vmax.f32 %v5572, 0.0
        %v5637 = vmax.f32 %v5573, 0.0
        %v5638 = vmax.f32 %v5574, 0.0
        %v5639 = vmax.f32 %v5575, 0.0
        %v5640 = vmax.f32 %v5576, 0.0
        %v5641 = vmax.f32 %v5577, 0.0
        %v5642 = vmax.f32 %v5578, 0.0
        %v5643 = vmax.f32 %v5579, 0.0
        %v5644 = vmax.f32 %v5580, 0.0
        %v5645 = vmax.f32 %v5581, 0.0
        %v5646 = vmax.f32 %v5582, 0.0
        %v5647 = vmax.f32 %v5583, 0.0
        %v5648 = vmax.f32 %v5584, 0.0
        %v5649 = vmax.f32 %v5585, 0.0
        %v5650 = vmax.f32 %v5586, 0.0
        %v5651 = vmax.f32 %v5587, 0.0
        %v5652 = vmax.f32 %v5588, 0.0
        %v5653 = vmax.f32 %v5589, 0.0
        %v5654 = vmax.f32 %v5590, 0.0
        %v5655 = vmax.f32 %v5591, 0.0
        %v5656 = vmax.f32 %v5592, 0.0
        %v5657 = vmax.f32 %v5593, 0.0
        %v5658 = vmax.f32 %v5594, 0.0
        %v5659 = vmax.f32 %v5595, 0.0
        %5692 = vrot.lane.b32.xlu0 %v5628, 24
        %v5693 = vpop.permute.xlu0 %5692
        %5694 = vrot.lane.b32.xlu0 %v5629, 24
        %v5695 = vpop.permute.xlu0 %5694
        %5696 = vrot.lane.b32.xlu0 %v5630, 24
        %v5697 = vpop.permute.xlu0 %5696
        %5698 = vrot.lane.b32.xlu0 %v5631, 24
        %v5699 = vpop.permute.xlu0 %5698
        %5700 = vrot.lane.b32.xlu0 %v5632, 24
        %v5701 = vpop.permute.xlu0 %5700
        %5702 = vrot.lane.b32.xlu0 %v5633, 24
        %v5703 = vpop.permute.xlu0 %5702
        %5704 = vrot.lane.b32.xlu0 %v5634, 24
        %v5705 = vpop.permute.xlu0 %5704
        %5706 = vrot.lane.b32.xlu0 %v5635, 24
        %v5707 = vpop.permute.xlu0 %5706
        %5708 = vrot.lane.b32.xlu0 %v5636, 24
        %v5709 = vpop.permute.xlu0 %5708
        %5710 = vrot.lane.b32.xlu0 %v5637, 24
        %v5711 = vpop.permute.xlu0 %5710
        %5712 = vrot.lane.b32.xlu0 %v5638, 24
        %v5713 = vpop.permute.xlu0 %5712
        %5714 = vrot.lane.b32.xlu0 %v5639, 24
        %v5715 = vpop.permute.xlu0 %5714
        %5716 = vrot.lane.b32.xlu0 %v5640, 24
        %v5717 = vpop.permute.xlu0 %5716
        %5718 = vrot.lane.b32.xlu0 %v5641, 24
        %v5719 = vpop.permute.xlu0 %5718
        %5720 = vrot.lane.b32.xlu0 %v5642, 24
        %v5721 = vpop.permute.xlu0 %5720
        %5722 = vrot.lane.b32.xlu0 %v5643, 24
        %v5723 = vpop.permute.xlu0 %5722
        %5724 = vrot.lane.b32.xlu0 %v5644, 24
        %v5725 = vpop.permute.xlu0 %5724
        %5726 = vrot.lane.b32.xlu0 %v5645, 24
        %v5727 = vpop.permute.xlu0 %5726
        %5728 = vrot.lane.b32.xlu0 %v5646, 24
        %v5729 = vpop.permute.xlu0 %5728
        %5730 = vrot.lane.b32.xlu0 %v5647, 24
        %v5731 = vpop.permute.xlu0 %5730
        %5732 = vrot.lane.b32.xlu0 %v5648, 24
        %v5733 = vpop.permute.xlu0 %5732
        %5734 = vrot.lane.b32.xlu0 %v5649, 24
        %v5735 = vpop.permute.xlu0 %5734
        %5736 = vrot.lane.b32.xlu0 %v5650, 24
        %v5737 = vpop.permute.xlu0 %5736
        %5738 = vrot.lane.b32.xlu0 %v5651, 24
        %v5739 = vpop.permute.xlu0 %5738
        %5740 = vrot.lane.b32.xlu0 %v5652, 24
        %v5741 = vpop.permute.xlu0 %5740
        %5742 = vrot.lane.b32.xlu0 %v5653, 24
        %v5743 = vpop.permute.xlu0 %5742
        %5744 = vrot.lane.b32.xlu0 %v5654, 24
        %v5745 = vpop.permute.xlu0 %5744
        %5746 = vrot.lane.b32.xlu0 %v5655, 24
        %v5747 = vpop.permute.xlu0 %5746
        %5748 = vrot.lane.b32.xlu0 %v5656, 24
        %v5749 = vpop.permute.xlu0 %5748
        %5750 = vrot.lane.b32.xlu0 %v5657, 24
        %v5751 = vpop.permute.xlu0 %5750
        %5752 = vrot.lane.b32.xlu0 %v5658, 24
        %v5753 = vpop.permute.xlu0 %5752
        %5754 = vrot.lane.b32.xlu0 %v5659, 24
        %v5755 = vpop.permute.xlu0 %5754
        %5788 = vst.msk [vmem:[#allocation2] sm:$0xff] %vm1815, %v5693
        %5789 = vst.msk [vmem:[#allocation2 + $0x8] sm:$0xff] %vm1815, %v5695
        %5790 = vst.msk [vmem:[#allocation2 + $0x10] sm:$0xff] %vm1815, %v5697
        %5791 = vst.msk [vmem:[#allocation2 + $0x18] sm:$0xff] %vm1815, %v5699
        %5792 = vst.msk [vmem:[#allocation2 + $0x20] sm:$0xff] %vm1815, %v5701
        %5793 = vst.msk [vmem:[#allocation2 + $0x28] sm:$0xff] %vm1815, %v5703
        %5794 = vst.msk [vmem:[#allocation2 + $0x30] sm:$0xff] %vm1815, %v5705
        %5795 = vst.msk [vmem:[#allocation2 + $0x38] sm:$0xff] %vm1815, %v5707
        %5796 = vst.msk [vmem:[#allocation2 + $0x40] sm:$0xff] %vm1815, %v5709
        %5797 = vst.msk [vmem:[#allocation2 + $0x48] sm:$0xff] %vm1815, %v5711
        %5798 = vst.msk [vmem:[#allocation2 + $0x50] sm:$0xff] %vm1815, %v5713
        %5799 = vst.msk [vmem:[#allocation2 + $0x58] sm:$0xff] %vm1815, %v5715
        %5800 = vst.msk [vmem:[#allocation2 + $0x60] sm:$0xff] %vm1815, %v5717
        %5801 = vst.msk [vmem:[#allocation2 + $0x68] sm:$0xff] %vm1815, %v5719
        %5802 = vst.msk [vmem:[#allocation2 + $0x70] sm:$0xff] %vm1815, %v5721
        %5803 = vst.msk [vmem:[#allocation2 + $0x78] sm:$0xff] %vm1815, %v5723
        %5804 = vst.msk [vmem:[#allocation2 + $0x80] sm:$0xff] %vm1815, %v5725
        %5805 = vst.msk [vmem:[#allocation2 + $0x88] sm:$0xff] %vm1815, %v5727
        %5806 = vst.msk [vmem:[#allocation2 + $0x90] sm:$0xff] %vm1815, %v5729
        %5807 = vst.msk [vmem:[#allocation2 + $0x98] sm:$0xff] %vm1815, %v5731
        %5808 = vst.msk [vmem:[#allocation2 + $0xa0] sm:$0xff] %vm1815, %v5733
        %5809 = vst.msk [vmem:[#allocation2 + $0xa8] sm:$0xff] %vm1815, %v5735
        %5810 = vst.msk [vmem:[#allocation2 + $0xb0] sm:$0xff] %vm1815, %v5737
        %5811 = vst.msk [vmem:[#allocation2 + $0xb8] sm:$0xff] %vm1815, %v5739
        %5812 = vst.msk [vmem:[#allocation2 + $0xc0] sm:$0xff] %vm1815, %v5741
        %5813 = vst.msk [vmem:[#allocation2 + $0xc8] sm:$0xff] %vm1815, %v5743
        %5814 = vst.msk [vmem:[#allocation2 + $0xd0] sm:$0xff] %vm1815, %v5745
        %5815 = vst.msk [vmem:[#allocation2 + $0xd8] sm:$0xff] %vm1815, %v5747
        %5816 = vst.msk [vmem:[#allocation2 + $0xe0] sm:$0xff] %vm1815, %v5749
        %5817 = vst.msk [vmem:[#allocation2 + $0xe8] sm:$0xff] %vm1815, %v5751
        %5818 = vst.msk [vmem:[#allocation2 + $0xf0] sm:$0xff] %vm1815, %v5753
        %5819 = vst.msk [vmem:[#allocation2 + $0xf8] sm:$0xff] %vm1815, %v5755
        %v5820 = vld [vmem:[%s3602 + $0x1] sm:$0xff]
        %v5821 = vld [vmem:[%s3602 + $0x9] sm:$0xff]
        %v5822 = vld [vmem:[%s3602 + $0x19] sm:$0xff]
        %v5823 = vld [vmem:[%s3602 + $0x21] sm:$0xff]
        %v5824 = vld [vmem:[%s3602 + $0x31] sm:$0xff]
        %v5825 = vld [vmem:[%s3602 + $0x39] sm:$0xff]
        %v5826 = vld [vmem:[%s3602 + $0x49] sm:$0xff]
        %v5827 = vld [vmem:[%s3602 + $0x51] sm:$0xff]
        %v5828 = vld [vmem:[%s3602 + $0x61] sm:$0xff]
        %v5829 = vld [vmem:[%s3602 + $0x69] sm:$0xff]
        %v5830 = vld [vmem:[%s3602 + $0x79] sm:$0xff]
        %v5831 = vld [vmem:[%s3602 + $0x81] sm:$0xff]
        %v5832 = vld [vmem:[%s3602 + $0x91] sm:$0xff]
        %v5833 = vld [vmem:[%s3602 + $0x99] sm:$0xff]
        %v5834 = vld [vmem:[%s3602 + $0xa9] sm:$0xff]
        %v5835 = vld [vmem:[%s3602 + $0xb1] sm:$0xff]
        %v5836 = vld [vmem:[%s3602 + $0xc1] sm:$0xff]
        %v5837 = vld [vmem:[%s3602 + $0xc9] sm:$0xff]
        %v5838 = vld [vmem:[%s3602 + $0xd9] sm:$0xff]
        %v5839 = vld [vmem:[%s3602 + $0xe1] sm:$0xff]
        %v5840 = vld [vmem:[%s3602 + $0xf1] sm:$0xff]
        %v5841 = vld [vmem:[%s3602 + $0xf9] sm:$0xff]
        %v5842 = vld [vmem:[%s3602 + $0x109] sm:$0xff]
        %v5843 = vld [vmem:[%s3602 + $0x111] sm:$0xff]
        %v5844 = vld [vmem:[%s3602 + $0x121] sm:$0xff]
        %v5845 = vld [vmem:[%s3602 + $0x129] sm:$0xff]
        %v5846 = vld [vmem:[%s3602 + $0x139] sm:$0xff]
        %v5847 = vld [vmem:[%s3602 + $0x141] sm:$0xff]
        %v5848 = vld [vmem:[%s3602 + $0x151] sm:$0xff]
        %v5849 = vld [vmem:[%s3602 + $0x159] sm:$0xff]
        %v5850 = vld [vmem:[%s3602 + $0x169] sm:$0xff]
        %v5851 = vld [vmem:[%s3602 + $0x171] sm:$0xff]
        %v5852 = vadd.f32 %v5596, %v5820
        %v5853 = vadd.f32 %v5597, %v5821
        %v5854 = vadd.f32 %v5598, %v5822
        %v5855 = vadd.f32 %v5599, %v5823
        %v5856 = vadd.f32 %v5600, %v5824
        %v5857 = vadd.f32 %v5601, %v5825
        %v5858 = vadd.f32 %v5602, %v5826
        %v5859 = vadd.f32 %v5603, %v5827
        %v5860 = vadd.f32 %v5604, %v5828
        %v5861 = vadd.f32 %v5605, %v5829
        %v5862 = vadd.f32 %v5606, %v5830
        %v5863 = vadd.f32 %v5607, %v5831
        %v5864 = vadd.f32 %v5608, %v5832
        %v5865 = vadd.f32 %v5609, %v5833
        %v5866 = vadd.f32 %v5610, %v5834
        %v5867 = vadd.f32 %v5611, %v5835
        %v5868 = vadd.f32 %v5612, %v5836
        %v5869 = vadd.f32 %v5613, %v5837
        %v5870 = vadd.f32 %v5614, %v5838
        %v5871 = vadd.f32 %v5615, %v5839
        %v5872 = vadd.f32 %v5616, %v5840
        %v5873 = vadd.f32 %v5617, %v5841
        %v5874 = vadd.f32 %v5618, %v5842
        %v5875 = vadd.f32 %v5619, %v5843
        %v5876 = vadd.f32 %v5620, %v5844
        %v5877 = vadd.f32 %v5621, %v5845
        %v5878 = vadd.f32 %v5622, %v5846
        %v5879 = vadd.f32 %v5623, %v5847
        %v5880 = vadd.f32 %v5624, %v5848
        %v5881 = vadd.f32 %v5625, %v5849
        %v5882 = vadd.f32 %v5626, %v5850
        %v5883 = vadd.f32 %v5627, %v5851
        %v5884 = vmax.f32 %v5820, 0.0
        %v5885 = vmax.f32 %v5821, 0.0
        %v5886 = vmax.f32 %v5822, 0.0
        %v5887 = vmax.f32 %v5823, 0.0
        %v5888 = vmax.f32 %v5824, 0.0
        %v5889 = vmax.f32 %v5825, 0.0
        %v5890 = vmax.f32 %v5826, 0.0
        %v5891 = vmax.f32 %v5827, 0.0
        %v5892 = vmax.f32 %v5828, 0.0
        %v5893 = vmax.f32 %v5829, 0.0
        %v5894 = vmax.f32 %v5830, 0.0
        %v5895 = vmax.f32 %v5831, 0.0
        %v5896 = vmax.f32 %v5832, 0.0
        %v5897 = vmax.f32 %v5833, 0.0
        %v5898 = vmax.f32 %v5834, 0.0
        %v5899 = vmax.f32 %v5835, 0.0
        %v5900 = vmax.f32 %v5836, 0.0
        %v5901 = vmax.f32 %v5837, 0.0
        %v5902 = vmax.f32 %v5838, 0.0
        %v5903 = vmax.f32 %v5839, 0.0
        %v5904 = vmax.f32 %v5840, 0.0
        %v5905 = vmax.f32 %v5841, 0.0
        %v5906 = vmax.f32 %v5842, 0.0
        %v5907 = vmax.f32 %v5843, 0.0
        %v5908 = vmax.f32 %v5844, 0.0
        %v5909 = vmax.f32 %v5845, 0.0
        %v5910 = vmax.f32 %v5846, 0.0
        %v5911 = vmax.f32 %v5847, 0.0
        %v5912 = vmax.f32 %v5848, 0.0
        %v5913 = vmax.f32 %v5849, 0.0
        %v5914 = vmax.f32 %v5850, 0.0
        %v5915 = vmax.f32 %v5851, 0.0
        %5948 = vrot.lane.b32.xlu0 %v5884, 32
        %v5949 = vpop.permute.xlu0 %5948
        %5950 = vrot.lane.b32.xlu0 %v5885, 32
        %v5951 = vpop.permute.xlu0 %5950
        %5952 = vrot.lane.b32.xlu0 %v5886, 32
        %v5953 = vpop.permute.xlu0 %5952
        %5954 = vrot.lane.b32.xlu0 %v5887, 32
        %v5955 = vpop.permute.xlu0 %5954
        %5956 = vrot.lane.b32.xlu0 %v5888, 32
        %v5957 = vpop.permute.xlu0 %5956
        %5958 = vrot.lane.b32.xlu0 %v5889, 32
        %v5959 = vpop.permute.xlu0 %5958
        %5960 = vrot.lane.b32.xlu0 %v5890, 32
        %v5961 = vpop.permute.xlu0 %5960
        %5962 = vrot.lane.b32.xlu0 %v5891, 32
        %v5963 = vpop.permute.xlu0 %5962
        %5964 = vrot.lane.b32.xlu0 %v5892, 32
        %v5965 = vpop.permute.xlu0 %5964
        %5966 = vrot.lane.b32.xlu0 %v5893, 32
        %v5967 = vpop.permute.xlu0 %5966
        %5968 = vrot.lane.b32.xlu0 %v5894, 32
        %v5969 = vpop.permute.xlu0 %5968
        %5970 = vrot.lane.b32.xlu0 %v5895, 32
        %v5971 = vpop.permute.xlu0 %5970
        %5972 = vrot.lane.b32.xlu0 %v5896, 32
        %v5973 = vpop.permute.xlu0 %5972
        %5974 = vrot.lane.b32.xlu0 %v5897, 32
        %v5975 = vpop.permute.xlu0 %5974
        %5976 = vrot.lane.b32.xlu0 %v5898, 32
        %v5977 = vpop.permute.xlu0 %5976
        %5978 = vrot.lane.b32.xlu0 %v5899, 32
        %v5979 = vpop.permute.xlu0 %5978
        %5980 = vrot.lane.b32.xlu0 %v5900, 32
        %v5981 = vpop.permute.xlu0 %5980
        %5982 = vrot.lane.b32.xlu0 %v5901, 32
        %v5983 = vpop.permute.xlu0 %5982
        %5984 = vrot.lane.b32.xlu0 %v5902, 32
        %v5985 = vpop.permute.xlu0 %5984
        %5986 = vrot.lane.b32.xlu0 %v5903, 32
        %v5987 = vpop.permute.xlu0 %5986
        %5988 = vrot.lane.b32.xlu0 %v5904, 32
        %v5989 = vpop.permute.xlu0 %5988
        %5990 = vrot.lane.b32.xlu0 %v5905, 32
        %v5991 = vpop.permute.xlu0 %5990
        %5992 = vrot.lane.b32.xlu0 %v5906, 32
        %v5993 = vpop.permute.xlu0 %5992
        %5994 = vrot.lane.b32.xlu0 %v5907, 32
        %v5995 = vpop.permute.xlu0 %5994
        %5996 = vrot.lane.b32.xlu0 %v5908, 32
        %v5997 = vpop.permute.xlu0 %5996
        %5998 = vrot.lane.b32.xlu0 %v5909, 32
        %v5999 = vpop.permute.xlu0 %5998
        %6000 = vrot.lane.b32.xlu0 %v5910, 32
        %v6001 = vpop.permute.xlu0 %6000
        %6002 = vrot.lane.b32.xlu0 %v5911, 32
        %v6003 = vpop.permute.xlu0 %6002
        %6004 = vrot.lane.b32.xlu0 %v5912, 32
        %v6005 = vpop.permute.xlu0 %6004
        %6006 = vrot.lane.b32.xlu0 %v5913, 32
        %v6007 = vpop.permute.xlu0 %6006
        %6008 = vrot.lane.b32.xlu0 %v5914, 32
        %v6009 = vpop.permute.xlu0 %6008
        %6010 = vrot.lane.b32.xlu0 %v5915, 32
        %v6011 = vpop.permute.xlu0 %6010
        %6044 = vst.msk [vmem:[#allocation2] sm:$0xff] %vm2072, %v5949
        %6045 = vst.msk [vmem:[#allocation2 + $0x8] sm:$0xff] %vm2072, %v5951
        %6046 = vst.msk [vmem:[#allocation2 + $0x10] sm:$0xff] %vm2072, %v5953
        %6047 = vst.msk [vmem:[#allocation2 + $0x18] sm:$0xff] %vm2072, %v5955
        %6048 = vst.msk [vmem:[#allocation2 + $0x20] sm:$0xff] %vm2072, %v5957
        %6049 = vst.msk [vmem:[#allocation2 + $0x28] sm:$0xff] %vm2072, %v5959
        %6050 = vst.msk [vmem:[#allocation2 + $0x30] sm:$0xff] %vm2072, %v5961
        %6051 = vst.msk [vmem:[#allocation2 + $0x38] sm:$0xff] %vm2072, %v5963
        %6052 = vst.msk [vmem:[#allocation2 + $0x40] sm:$0xff] %vm2072, %v5965
        %6053 = vst.msk [vmem:[#allocation2 + $0x48] sm:$0xff] %vm2072, %v5967
        %6054 = vst.msk [vmem:[#allocation2 + $0x50] sm:$0xff] %vm2072, %v5969
        %6055 = vst.msk [vmem:[#allocation2 + $0x58] sm:$0xff] %vm2072, %v5971
        %6056 = vst.msk [vmem:[#allocation2 + $0x60] sm:$0xff] %vm2072, %v5973
        %6057 = vst.msk [vmem:[#allocation2 + $0x68] sm:$0xff] %vm2072, %v5975
        %6058 = vst.msk [vmem:[#allocation2 + $0x70] sm:$0xff] %vm2072, %v5977
        %6059 = vst.msk [vmem:[#allocation2 + $0x78] sm:$0xff] %vm2072, %v5979
        %6060 = vst.msk [vmem:[#allocation2 + $0x80] sm:$0xff] %vm2072, %v5981
        %6061 = vst.msk [vmem:[#allocation2 + $0x88] sm:$0xff] %vm2072, %v5983
        %6062 = vst.msk [vmem:[#allocation2 + $0x90] sm:$0xff] %vm2072, %v5985
        %6063 = vst.msk [vmem:[#allocation2 + $0x98] sm:$0xff] %vm2072, %v5987
        %6064 = vst.msk [vmem:[#allocation2 + $0xa0] sm:$0xff] %vm2072, %v5989
        %6065 = vst.msk [vmem:[#allocation2 + $0xa8] sm:$0xff] %vm2072, %v5991
        %6066 = vst.msk [vmem:[#allocation2 + $0xb0] sm:$0xff] %vm2072, %v5993
        %6067 = vst.msk [vmem:[#allocation2 + $0xb8] sm:$0xff] %vm2072, %v5995
        %6068 = vst.msk [vmem:[#allocation2 + $0xc0] sm:$0xff] %vm2072, %v5997
        %6069 = vst.msk [vmem:[#allocation2 + $0xc8] sm:$0xff] %vm2072, %v5999
        %6070 = vst.msk [vmem:[#allocation2 + $0xd0] sm:$0xff] %vm2072, %v6001
        %6071 = vst.msk [vmem:[#allocation2 + $0xd8] sm:$0xff] %vm2072, %v6003
        %6072 = vst.msk [vmem:[#allocation2 + $0xe0] sm:$0xff] %vm2072, %v6005
        %6073 = vst.msk [vmem:[#allocation2 + $0xe8] sm:$0xff] %vm2072, %v6007
        %6074 = vst.msk [vmem:[#allocation2 + $0xf0] sm:$0xff] %vm2072, %v6009
        %6075 = vst.msk [vmem:[#allocation2 + $0xf8] sm:$0xff] %vm2072, %v6011
        %v6076 = vld [vmem:[%s3602 + $0x2] sm:$0xff]
        %v6077 = vld [vmem:[%s3602 + $0xa] sm:$0xff]
        %v6078 = vld [vmem:[%s3602 + $0x1a] sm:$0xff]
        %v6079 = vld [vmem:[%s3602 + $0x22] sm:$0xff]
        %v6080 = vld [vmem:[%s3602 + $0x32] sm:$0xff]
        %v6081 = vld [vmem:[%s3602 + $0x3a] sm:$0xff]
        %v6082 = vld [vmem:[%s3602 + $0x4a] sm:$0xff]
        %v6083 = vld [vmem:[%s3602 + $0x52] sm:$0xff]
        %v6084 = vld [vmem:[%s3602 + $0x62] sm:$0xff]
        %v6085 = vld [vmem:[%s3602 + $0x6a] sm:$0xff]
        %v6086 = vld [vmem:[%s3602 + $0x7a] sm:$0xff]
        %v6087 = vld [vmem:[%s3602 + $0x82] sm:$0xff]
        %v6088 = vld [vmem:[%s3602 + $0x92] sm:$0xff]
        %v6089 = vld [vmem:[%s3602 + $0x9a] sm:$0xff]
        %v6090 = vld [vmem:[%s3602 + $0xaa] sm:$0xff]
        %v6091 = vld [vmem:[%s3602 + $0xb2] sm:$0xff]
        %v6092 = vld [vmem:[%s3602 + $0xc2] sm:$0xff]
        %v6093 = vld [vmem:[%s3602 + $0xca] sm:$0xff]
        %v6094 = vld [vmem:[%s3602 + $0xda] sm:$0xff]
        %v6095 = vld [vmem:[%s3602 + $0xe2] sm:$0xff]
        %v6096 = vld [vmem:[%s3602 + $0xf2] sm:$0xff]
        %v6097 = vld [vmem:[%s3602 + $0xfa] sm:$0xff]
        %v6098 = vld [vmem:[%s3602 + $0x10a] sm:$0xff]
        %v6099 = vld [vmem:[%s3602 + $0x112] sm:$0xff]
        %v6100 = vld [vmem:[%s3602 + $0x122] sm:$0xff]
        %v6101 = vld [vmem:[%s3602 + $0x12a] sm:$0xff]
        %v6102 = vld [vmem:[%s3602 + $0x13a] sm:$0xff]
        %v6103 = vld [vmem:[%s3602 + $0x142] sm:$0xff]
        %v6104 = vld [vmem:[%s3602 + $0x152] sm:$0xff]
        %v6105 = vld [vmem:[%s3602 + $0x15a] sm:$0xff]
        %v6106 = vld [vmem:[%s3602 + $0x16a] sm:$0xff]
        %v6107 = vld [vmem:[%s3602 + $0x172] sm:$0xff]
        %v6108 = vadd.f32 %v5852, %v6076
        %v6109 = vadd.f32 %v5853, %v6077
        %v6110 = vadd.f32 %v5854, %v6078
        %v6111 = vadd.f32 %v5855, %v6079
        %v6112 = vadd.f32 %v5856, %v6080
        %v6113 = vadd.f32 %v5857, %v6081
        %v6114 = vadd.f32 %v5858, %v6082
        %v6115 = vadd.f32 %v5859, %v6083
        %v6116 = vadd.f32 %v5860, %v6084
        %v6117 = vadd.f32 %v5861, %v6085
        %v6118 = vadd.f32 %v5862, %v6086
        %v6119 = vadd.f32 %v5863, %v6087
        %v6120 = vadd.f32 %v5864, %v6088
        %v6121 = vadd.f32 %v5865, %v6089
        %v6122 = vadd.f32 %v5866, %v6090
        %v6123 = vadd.f32 %v5867, %v6091
        %v6124 = vadd.f32 %v5868, %v6092
        %v6125 = vadd.f32 %v5869, %v6093
        %v6126 = vadd.f32 %v5870, %v6094
        %v6127 = vadd.f32 %v5871, %v6095
        %v6128 = vadd.f32 %v5872, %v6096
        %v6129 = vadd.f32 %v5873, %v6097
        %v6130 = vadd.f32 %v5874, %v6098
        %v6131 = vadd.f32 %v5875, %v6099
        %v6132 = vadd.f32 %v5876, %v6100
        %v6133 = vadd.f32 %v5877, %v6101
        %v6134 = vadd.f32 %v5878, %v6102
        %v6135 = vadd.f32 %v5879, %v6103
        %v6136 = vadd.f32 %v5880, %v6104
        %v6137 = vadd.f32 %v5881, %v6105
        %v6138 = vadd.f32 %v5882, %v6106
        %v6139 = vadd.f32 %v5883, %v6107
        %v6140 = vmax.f32 %v6076, 0.0
        %v6141 = vmax.f32 %v6077, 0.0
        %v6142 = vmax.f32 %v6078, 0.0
        %v6143 = vmax.f32 %v6079, 0.0
        %v6144 = vmax.f32 %v6080, 0.0
        %v6145 = vmax.f32 %v6081, 0.0
        %v6146 = vmax.f32 %v6082, 0.0
        %v6147 = vmax.f32 %v6083, 0.0
        %v6148 = vmax.f32 %v6084, 0.0
        %v6149 = vmax.f32 %v6085, 0.0
        %v6150 = vmax.f32 %v6086, 0.0
        %v6151 = vmax.f32 %v6087, 0.0
        %v6152 = vmax.f32 %v6088, 0.0
        %v6153 = vmax.f32 %v6089, 0.0
        %v6154 = vmax.f32 %v6090, 0.0
        %v6155 = vmax.f32 %v6091, 0.0
        %v6156 = vmax.f32 %v6092, 0.0
        %v6157 = vmax.f32 %v6093, 0.0
        %v6158 = vmax.f32 %v6094, 0.0
        %v6159 = vmax.f32 %v6095, 0.0
        %v6160 = vmax.f32 %v6096, 0.0
        %v6161 = vmax.f32 %v6097, 0.0
        %v6162 = vmax.f32 %v6098, 0.0
        %v6163 = vmax.f32 %v6099, 0.0
        %v6164 = vmax.f32 %v6100, 0.0
        %v6165 = vmax.f32 %v6101, 0.0
        %v6166 = vmax.f32 %v6102, 0.0
        %v6167 = vmax.f32 %v6103, 0.0
        %v6168 = vmax.f32 %v6104, 0.0
        %v6169 = vmax.f32 %v6105, 0.0
        %v6170 = vmax.f32 %v6106, 0.0
        %v6171 = vmax.f32 %v6107, 0.0
        %6204 = vrot.lane.b32.xlu0 %v6140, 40
        %v6205 = vpop.permute.xlu0 %6204
        %6206 = vrot.lane.b32.xlu0 %v6141, 40
        %v6207 = vpop.permute.xlu0 %6206
        %6208 = vrot.lane.b32.xlu0 %v6142, 40
        %v6209 = vpop.permute.xlu0 %6208
        %6210 = vrot.lane.b32.xlu0 %v6143, 40
        %v6211 = vpop.permute.xlu0 %6210
        %6212 = vrot.lane.b32.xlu0 %v6144, 40
        %v6213 = vpop.permute.xlu0 %6212
        %6214 = vrot.lane.b32.xlu0 %v6145, 40
        %v6215 = vpop.permute.xlu0 %6214
        %6216 = vrot.lane.b32.xlu0 %v6146, 40
        %v6217 = vpop.permute.xlu0 %6216
        %6218 = vrot.lane.b32.xlu0 %v6147, 40
        %v6219 = vpop.permute.xlu0 %6218
        %6220 = vrot.lane.b32.xlu0 %v6148, 40
        %v6221 = vpop.permute.xlu0 %6220
        %6222 = vrot.lane.b32.xlu0 %v6149, 40
        %v6223 = vpop.permute.xlu0 %6222
        %6224 = vrot.lane.b32.xlu0 %v6150, 40
        %v6225 = vpop.permute.xlu0 %6224
        %6226 = vrot.lane.b32.xlu0 %v6151, 40
        %v6227 = vpop.permute.xlu0 %6226
        %6228 = vrot.lane.b32.xlu0 %v6152, 40
        %v6229 = vpop.permute.xlu0 %6228
        %6230 = vrot.lane.b32.xlu0 %v6153, 40
        %v6231 = vpop.permute.xlu0 %6230
        %6232 = vrot.lane.b32.xlu0 %v6154, 40
        %v6233 = vpop.permute.xlu0 %6232
        %6234 = vrot.lane.b32.xlu0 %v6155, 40
        %v6235 = vpop.permute.xlu0 %6234
        %6236 = vrot.lane.b32.xlu0 %v6156, 40
        %v6237 = vpop.permute.xlu0 %6236
        %6238 = vrot.lane.b32.xlu0 %v6157, 40
        %v6239 = vpop.permute.xlu0 %6238
        %6240 = vrot.lane.b32.xlu0 %v6158, 40
        %v6241 = vpop.permute.xlu0 %6240
        %6242 = vrot.lane.b32.xlu0 %v6159, 40
        %v6243 = vpop.permute.xlu0 %6242
        %6244 = vrot.lane.b32.xlu0 %v6160, 40
        %v6245 = vpop.permute.xlu0 %6244
        %6246 = vrot.lane.b32.xlu0 %v6161, 40
        %v6247 = vpop.permute.xlu0 %6246
        %6248 = vrot.lane.b32.xlu0 %v6162, 40
        %v6249 = vpop.permute.xlu0 %6248
        %6250 = vrot.lane.b32.xlu0 %v6163, 40
        %v6251 = vpop.permute.xlu0 %6250
        %6252 = vrot.lane.b32.xlu0 %v6164, 40
        %v6253 = vpop.permute.xlu0 %6252
        %6254 = vrot.lane.b32.xlu0 %v6165, 40
        %v6255 = vpop.permute.xlu0 %6254
        %6256 = vrot.lane.b32.xlu0 %v6166, 40
        %v6257 = vpop.permute.xlu0 %6256
        %6258 = vrot.lane.b32.xlu0 %v6167, 40
        %v6259 = vpop.permute.xlu0 %6258
        %6260 = vrot.lane.b32.xlu0 %v6168, 40
        %v6261 = vpop.permute.xlu0 %6260
        %6262 = vrot.lane.b32.xlu0 %v6169, 40
        %v6263 = vpop.permute.xlu0 %6262
        %6264 = vrot.lane.b32.xlu0 %v6170, 40
        %v6265 = vpop.permute.xlu0 %6264
        %6266 = vrot.lane.b32.xlu0 %v6171, 40
        %v6267 = vpop.permute.xlu0 %6266
        %6300 = vst.msk [vmem:[#allocation2] sm:$0xff] %vm2329, %v6205
        %6301 = vst.msk [vmem:[#allocation2 + $0x8] sm:$0xff] %vm2329, %v6207
        %6302 = vst.msk [vmem:[#allocation2 + $0x10] sm:$0xff] %vm2329, %v6209
        %6303 = vst.msk [vmem:[#allocation2 + $0x18] sm:$0xff] %vm2329, %v6211
        %6304 = vst.msk [vmem:[#allocation2 + $0x20] sm:$0xff] %vm2329, %v6213
        %6305 = vst.msk [vmem:[#allocation2 + $0x28] sm:$0xff] %vm2329, %v6215
        %6306 = vst.msk [vmem:[#allocation2 + $0x30] sm:$0xff] %vm2329, %v6217
        %6307 = vst.msk [vmem:[#allocation2 + $0x38] sm:$0xff] %vm2329, %v6219
        %6308 = vst.msk [vmem:[#allocation2 + $0x40] sm:$0xff] %vm2329, %v6221
        %6309 = vst.msk [vmem:[#allocation2 + $0x48] sm:$0xff] %vm2329, %v6223
        %6310 = vst.msk [vmem:[#allocation2 + $0x50] sm:$0xff] %vm2329, %v6225
        %6311 = vst.msk [vmem:[#allocation2 + $0x58] sm:$0xff] %vm2329, %v6227
        %6312 = vst.msk [vmem:[#allocation2 + $0x60] sm:$0xff] %vm2329, %v6229
        %6313 = vst.msk [vmem:[#allocation2 + $0x68] sm:$0xff] %vm2329, %v6231
        %6314 = vst.msk [vmem:[#allocation2 + $0x70] sm:$0xff] %vm2329, %v6233
        %6315 = vst.msk [vmem:[#allocation2 + $0x78] sm:$0xff] %vm2329, %v6235
        %6316 = vst.msk [vmem:[#allocation2 + $0x80] sm:$0xff] %vm2329, %v6237
        %6317 = vst.msk [vmem:[#allocation2 + $0x88] sm:$0xff] %vm2329, %v6239
        %6318 = vst.msk [vmem:[#allocation2 + $0x90] sm:$0xff] %vm2329, %v6241
        %6319 = vst.msk [vmem:[#allocation2 + $0x98] sm:$0xff] %vm2329, %v6243
        %6320 = vst.msk [vmem:[#allocation2 + $0xa0] sm:$0xff] %vm2329, %v6245
        %6321 = vst.msk [vmem:[#allocation2 + $0xa8] sm:$0xff] %vm2329, %v6247
        %6322 = vst.msk [vmem:[#allocation2 + $0xb0] sm:$0xff] %vm2329, %v6249
        %6323 = vst.msk [vmem:[#allocation2 + $0xb8] sm:$0xff] %vm2329, %v6251
        %6324 = vst.msk [vmem:[#allocation2 + $0xc0] sm:$0xff] %vm2329, %v6253
        %6325 = vst.msk [vmem:[#allocation2 + $0xc8] sm:$0xff] %vm2329, %v6255
        %6326 = vst.msk [vmem:[#allocation2 + $0xd0] sm:$0xff] %vm2329, %v6257
        %6327 = vst.msk [vmem:[#allocation2 + $0xd8] sm:$0xff] %vm2329, %v6259
        %6328 = vst.msk [vmem:[#allocation2 + $0xe0] sm:$0xff] %vm2329, %v6261
        %6329 = vst.msk [vmem:[#allocation2 + $0xe8] sm:$0xff] %vm2329, %v6263
        %6330 = vst.msk [vmem:[#allocation2 + $0xf0] sm:$0xff] %vm2329, %v6265
        %6331 = vst.msk [vmem:[#allocation2 + $0xf8] sm:$0xff] %vm2329, %v6267
        %s6332 = scalar_lea.vmem [#allocation4], 48
        %v6333 = vld [vmem:[%s6332] sm:$0xff]
        %v6334 = vld [vmem:[%s6332 + $0x8] sm:$0xff]
        %v6335 = vld [vmem:[%s6332 + $0x18] sm:$0xff]
        %v6336 = vld [vmem:[%s6332 + $0x20] sm:$0xff]
        %v6337 = vld [vmem:[%s6332 + $0x30] sm:$0xff]
        %v6338 = vld [vmem:[%s6332 + $0x38] sm:$0xff]
        %v6339 = vld [vmem:[%s6332 + $0x48] sm:$0xff]
        %v6340 = vld [vmem:[%s6332 + $0x50] sm:$0xff]
        %v6341 = vld [vmem:[%s6332 + $0x60] sm:$0xff]
        %v6342 = vld [vmem:[%s6332 + $0x68] sm:$0xff]
        %v6343 = vld [vmem:[%s6332 + $0x78] sm:$0xff]
        %v6344 = vld [vmem:[%s6332 + $0x80] sm:$0xff]
        %v6345 = vld [vmem:[%s6332 + $0x90] sm:$0xff]
        %v6346 = vld [vmem:[%s6332 + $0x98] sm:$0xff]
        %v6347 = vld [vmem:[%s6332 + $0xa8] sm:$0xff]
        %v6348 = vld [vmem:[%s6332 + $0xb0] sm:$0xff]
        %v6349 = vld [vmem:[%s6332 + $0xc0] sm:$0xff]
        %v6350 = vld [vmem:[%s6332 + $0xc8] sm:$0xff]
        %v6351 = vld [vmem:[%s6332 + $0xd8] sm:$0xff]
        %v6352 = vld [vmem:[%s6332 + $0xe0] sm:$0xff]
        %v6353 = vld [vmem:[%s6332 + $0xf0] sm:$0xff]
        %v6354 = vld [vmem:[%s6332 + $0xf8] sm:$0xff]
        %v6355 = vld [vmem:[%s6332 + $0x108] sm:$0xff]
        %v6356 = vld [vmem:[%s6332 + $0x110] sm:$0xff]
        %v6357 = vld [vmem:[%s6332 + $0x120] sm:$0xff]
        %v6358 = vld [vmem:[%s6332 + $0x128] sm:$0xff]
        %v6359 = vld [vmem:[%s6332 + $0x138] sm:$0xff]
        %v6360 = vld [vmem:[%s6332 + $0x140] sm:$0xff]
        %v6361 = vld [vmem:[%s6332 + $0x150] sm:$0xff]
        %v6362 = vld [vmem:[%s6332 + $0x158] sm:$0xff]
        %v6363 = vld [vmem:[%s6332 + $0x168] sm:$0xff]
        %v6364 = vld [vmem:[%s6332 + $0x170] sm:$0xff]
        %v6365 = vadd.f32 %v6108, %v6333
        %v6366 = vadd.f32 %v6109, %v6334
        %v6367 = vadd.f32 %v6110, %v6335
        %v6368 = vadd.f32 %v6111, %v6336
        %v6369 = vadd.f32 %v6112, %v6337
        %v6370 = vadd.f32 %v6113, %v6338
        %v6371 = vadd.f32 %v6114, %v6339
        %v6372 = vadd.f32 %v6115, %v6340
        %v6373 = vadd.f32 %v6116, %v6341
        %v6374 = vadd.f32 %v6117, %v6342
        %v6375 = vadd.f32 %v6118, %v6343
        %v6376 = vadd.f32 %v6119, %v6344
        %v6377 = vadd.f32 %v6120, %v6345
        %v6378 = vadd.f32 %v6121, %v6346
        %v6379 = vadd.f32 %v6122, %v6347
        %v6380 = vadd.f32 %v6123, %v6348
        %v6381 = vadd.f32 %v6124, %v6349
        %v6382 = vadd.f32 %v6125, %v6350
        %v6383 = vadd.f32 %v6126, %v6351
        %v6384 = vadd.f32 %v6127, %v6352
        %v6385 = vadd.f32 %v6128, %v6353
        %v6386 = vadd.f32 %v6129, %v6354
        %v6387 = vadd.f32 %v6130, %v6355
        %v6388 = vadd.f32 %v6131, %v6356
        %v6389 = vadd.f32 %v6132, %v6357
        %v6390 = vadd.f32 %v6133, %v6358
        %v6391 = vadd.f32 %v6134, %v6359
        %v6392 = vadd.f32 %v6135, %v6360
        %v6393 = vadd.f32 %v6136, %v6361
        %v6394 = vadd.f32 %v6137, %v6362
        %v6395 = vadd.f32 %v6138, %v6363
        %v6396 = vadd.f32 %v6139, %v6364
        %v6397 = vmax.f32 %v6333, 0.0
        %v6398 = vmax.f32 %v6334, 0.0
        %v6399 = vmax.f32 %v6335, 0.0
        %v6400 = vmax.f32 %v6336, 0.0
        %v6401 = vmax.f32 %v6337, 0.0
        %v6402 = vmax.f32 %v6338, 0.0
        %v6403 = vmax.f32 %v6339, 0.0
        %v6404 = vmax.f32 %v6340, 0.0
        %v6405 = vmax.f32 %v6341, 0.0
        %v6406 = vmax.f32 %v6342, 0.0
        %v6407 = vmax.f32 %v6343, 0.0
        %v6408 = vmax.f32 %v6344, 0.0
        %v6409 = vmax.f32 %v6345, 0.0
        %v6410 = vmax.f32 %v6346, 0.0
        %v6411 = vmax.f32 %v6347, 0.0
        %v6412 = vmax.f32 %v6348, 0.0
        %v6413 = vmax.f32 %v6349, 0.0
        %v6414 = vmax.f32 %v6350, 0.0
        %v6415 = vmax.f32 %v6351, 0.0
        %v6416 = vmax.f32 %v6352, 0.0
        %v6417 = vmax.f32 %v6353, 0.0
        %v6418 = vmax.f32 %v6354, 0.0
        %v6419 = vmax.f32 %v6355, 0.0
        %v6420 = vmax.f32 %v6356, 0.0
        %v6421 = vmax.f32 %v6357, 0.0
        %v6422 = vmax.f32 %v6358, 0.0
        %v6423 = vmax.f32 %v6359, 0.0
        %v6424 = vmax.f32 %v6360, 0.0
        %v6425 = vmax.f32 %v6361, 0.0
        %v6426 = vmax.f32 %v6362, 0.0
        %v6427 = vmax.f32 %v6363, 0.0
        %v6428 = vmax.f32 %v6364, 0.0
        %6461 = vrot.lane.b32.xlu0 %v6397, 48
        %v6462 = vpop.permute.xlu0 %6461
        %6463 = vrot.lane.b32.xlu0 %v6398, 48
        %v6464 = vpop.permute.xlu0 %6463
        %6465 = vrot.lane.b32.xlu0 %v6399, 48
        %v6466 = vpop.permute.xlu0 %6465
        %6467 = vrot.lane.b32.xlu0 %v6400, 48
        %v6468 = vpop.permute.xlu0 %6467
        %6469 = vrot.lane.b32.xlu0 %v6401, 48
        %v6470 = vpop.permute.xlu0 %6469
        %6471 = vrot.lane.b32.xlu0 %v6402, 48
        %v6472 = vpop.permute.xlu0 %6471
        %6473 = vrot.lane.b32.xlu0 %v6403, 48
        %v6474 = vpop.permute.xlu0 %6473
        %6475 = vrot.lane.b32.xlu0 %v6404, 48
        %v6476 = vpop.permute.xlu0 %6475
        %6477 = vrot.lane.b32.xlu0 %v6405, 48
        %v6478 = vpop.permute.xlu0 %6477
        %6479 = vrot.lane.b32.xlu0 %v6406, 48
        %v6480 = vpop.permute.xlu0 %6479
        %6481 = vrot.lane.b32.xlu0 %v6407, 48
        %v6482 = vpop.permute.xlu0 %6481
        %6483 = vrot.lane.b32.xlu0 %v6408, 48
        %v6484 = vpop.permute.xlu0 %6483
        %6485 = vrot.lane.b32.xlu0 %v6409, 48
        %v6486 = vpop.permute.xlu0 %6485
        %6487 = vrot.lane.b32.xlu0 %v6410, 48
        %v6488 = vpop.permute.xlu0 %6487
        %6489 = vrot.lane.b32.xlu0 %v6411, 48
        %v6490 = vpop.permute.xlu0 %6489
        %6491 = vrot.lane.b32.xlu0 %v6412, 48
        %v6492 = vpop.permute.xlu0 %6491
        %6493 = vrot.lane.b32.xlu0 %v6413, 48
        %v6494 = vpop.permute.xlu0 %6493
        %6495 = vrot.lane.b32.xlu0 %v6414, 48
        %v6496 = vpop.permute.xlu0 %6495
        %6497 = vrot.lane.b32.xlu0 %v6415, 48
        %v6498 = vpop.permute.xlu0 %6497
        %6499 = vrot.lane.b32.xlu0 %v6416, 48
        %v6500 = vpop.permute.xlu0 %6499
        %6501 = vrot.lane.b32.xlu0 %v6417, 48
        %v6502 = vpop.permute.xlu0 %6501
        %6503 = vrot.lane.b32.xlu0 %v6418, 48
        %v6504 = vpop.permute.xlu0 %6503
        %6505 = vrot.lane.b32.xlu0 %v6419, 48
        %v6506 = vpop.permute.xlu0 %6505
        %6507 = vrot.lane.b32.xlu0 %v6420, 48
        %v6508 = vpop.permute.xlu0 %6507
        %6509 = vrot.lane.b32.xlu0 %v6421, 48
        %v6510 = vpop.permute.xlu0 %6509
        %6511 = vrot.lane.b32.xlu0 %v6422, 48
        %v6512 = vpop.permute.xlu0 %6511
        %6513 = vrot.lane.b32.xlu0 %v6423, 48
        %v6514 = vpop.permute.xlu0 %6513
        %6515 = vrot.lane.b32.xlu0 %v6424, 48
        %v6516 = vpop.permute.xlu0 %6515
        %6517 = vrot.lane.b32.xlu0 %v6425, 48
        %v6518 = vpop.permute.xlu0 %6517
        %6519 = vrot.lane.b32.xlu0 %v6426, 48
        %v6520 = vpop.permute.xlu0 %6519
        %6521 = vrot.lane.b32.xlu0 %v6427, 48
        %v6522 = vpop.permute.xlu0 %6521
        %6523 = vrot.lane.b32.xlu0 %v6428, 48
        %v6524 = vpop.permute.xlu0 %6523
        %6557 = vst.msk [vmem:[#allocation2] sm:$0xff] %vm2587, %v6462
        %6558 = vst.msk [vmem:[#allocation2 + $0x8] sm:$0xff] %vm2587, %v6464
        %6559 = vst.msk [vmem:[#allocation2 + $0x10] sm:$0xff] %vm2587, %v6466
        %6560 = vst.msk [vmem:[#allocation2 + $0x18] sm:$0xff] %vm2587, %v6468
        %6561 = vst.msk [vmem:[#allocation2 + $0x20] sm:$0xff] %vm2587, %v6470
        %6562 = vst.msk [vmem:[#allocation2 + $0x28] sm:$0xff] %vm2587, %v6472
        %6563 = vst.msk [vmem:[#allocation2 + $0x30] sm:$0xff] %vm2587, %v6474
        %6564 = vst.msk [vmem:[#allocation2 + $0x38] sm:$0xff] %vm2587, %v6476
        %6565 = vst.msk [vmem:[#allocation2 + $0x40] sm:$0xff] %vm2587, %v6478
        %6566 = vst.msk [vmem:[#allocation2 + $0x48] sm:$0xff] %vm2587, %v6480
        %6567 = vst.msk [vmem:[#allocation2 + $0x50] sm:$0xff] %vm2587, %v6482
        %6568 = vst.msk [vmem:[#allocation2 + $0x58] sm:$0xff] %vm2587, %v6484
        %6569 = vst.msk [vmem:[#allocation2 + $0x60] sm:$0xff] %vm2587, %v6486
        %6570 = vst.msk [vmem:[#allocation2 + $0x68] sm:$0xff] %vm2587, %v6488
        %6571 = vst.msk [vmem:[#allocation2 + $0x70] sm:$0xff] %vm2587, %v6490
        %6572 = vst.msk [vmem:[#allocation2 + $0x78] sm:$0xff] %vm2587, %v6492
        %6573 = vst.msk [vmem:[#allocation2 + $0x80] sm:$0xff] %vm2587, %v6494
        %6574 = vst.msk [vmem:[#allocation2 + $0x88] sm:$0xff] %vm2587, %v6496
        %6575 = vst.msk [vmem:[#allocation2 + $0x90] sm:$0xff] %vm2587, %v6498
        %6576 = vst.msk [vmem:[#allocation2 + $0x98] sm:$0xff] %vm2587, %v6500
        %6577 = vst.msk [vmem:[#allocation2 + $0xa0] sm:$0xff] %vm2587, %v6502
        %6578 = vst.msk [vmem:[#allocation2 + $0xa8] sm:$0xff] %vm2587, %v6504
        %6579 = vst.msk [vmem:[#allocation2 + $0xb0] sm:$0xff] %vm2587, %v6506
        %6580 = vst.msk [vmem:[#allocation2 + $0xb8] sm:$0xff] %vm2587, %v6508
        %6581 = vst.msk [vmem:[#allocation2 + $0xc0] sm:$0xff] %vm2587, %v6510
        %6582 = vst.msk [vmem:[#allocation2 + $0xc8] sm:$0xff] %vm2587, %v6512
        %6583 = vst.msk [vmem:[#allocation2 + $0xd0] sm:$0xff] %vm2587, %v6514
        %6584 = vst.msk [vmem:[#allocation2 + $0xd8] sm:$0xff] %vm2587, %v6516
        %6585 = vst.msk [vmem:[#allocation2 + $0xe0] sm:$0xff] %vm2587, %v6518
        %6586 = vst.msk [vmem:[#allocation2 + $0xe8] sm:$0xff] %vm2587, %v6520
        %6587 = vst.msk [vmem:[#allocation2 + $0xf0] sm:$0xff] %vm2587, %v6522
        %6588 = vst.msk [vmem:[#allocation2 + $0xf8] sm:$0xff] %vm2587, %v6524
        %v6589 = vld [vmem:[%s6332 + $0x1] sm:$0xff]
        %v6590 = vld [vmem:[%s6332 + $0x9] sm:$0xff]
        %v6591 = vld [vmem:[%s6332 + $0x19] sm:$0xff]
        %v6592 = vld [vmem:[%s6332 + $0x21] sm:$0xff]
        %v6593 = vld [vmem:[%s6332 + $0x31] sm:$0xff]
        %v6594 = vld [vmem:[%s6332 + $0x39] sm:$0xff]
        %v6595 = vld [vmem:[%s6332 + $0x49] sm:$0xff]
        %v6596 = vld [vmem:[%s6332 + $0x51] sm:$0xff]
        %v6597 = vld [vmem:[%s6332 + $0x61] sm:$0xff]
        %v6598 = vld [vmem:[%s6332 + $0x69] sm:$0xff]
        %v6599 = vld [vmem:[%s6332 + $0x79] sm:$0xff]
        %v6600 = vld [vmem:[%s6332 + $0x81] sm:$0xff]
        %v6601 = vld [vmem:[%s6332 + $0x91] sm:$0xff]
        %v6602 = vld [vmem:[%s6332 + $0x99] sm:$0xff]
        %v6603 = vld [vmem:[%s6332 + $0xa9] sm:$0xff]
        %v6604 = vld [vmem:[%s6332 + $0xb1] sm:$0xff]
        %v6605 = vld [vmem:[%s6332 + $0xc1] sm:$0xff]
        %v6606 = vld [vmem:[%s6332 + $0xc9] sm:$0xff]
        %v6607 = vld [vmem:[%s6332 + $0xd9] sm:$0xff]
        %v6608 = vld [vmem:[%s6332 + $0xe1] sm:$0xff]
        %v6609 = vld [vmem:[%s6332 + $0xf1] sm:$0xff]
        %v6610 = vld [vmem:[%s6332 + $0xf9] sm:$0xff]
        %v6611 = vld [vmem:[%s6332 + $0x109] sm:$0xff]
        %v6612 = vld [vmem:[%s6332 + $0x111] sm:$0xff]
        %v6613 = vld [vmem:[%s6332 + $0x121] sm:$0xff]
        %v6614 = vld [vmem:[%s6332 + $0x129] sm:$0xff]
        %v6615 = vld [vmem:[%s6332 + $0x139] sm:$0xff]
        %v6616 = vld [vmem:[%s6332 + $0x141] sm:$0xff]
        %v6617 = vld [vmem:[%s6332 + $0x151] sm:$0xff]
        %v6618 = vld [vmem:[%s6332 + $0x159] sm:$0xff]
        %v6619 = vld [vmem:[%s6332 + $0x169] sm:$0xff]
        %v6620 = vld [vmem:[%s6332 + $0x171] sm:$0xff]
        %v6621 = vadd.f32 %v6365, %v6589
        %v6622 = vadd.f32 %v6366, %v6590
        %v6623 = vadd.f32 %v6367, %v6591
        %v6624 = vadd.f32 %v6368, %v6592
        %v6625 = vadd.f32 %v6369, %v6593
        %v6626 = vadd.f32 %v6370, %v6594
        %v6627 = vadd.f32 %v6371, %v6595
        %v6628 = vadd.f32 %v6372, %v6596
        %v6629 = vadd.f32 %v6373, %v6597
        %v6630 = vadd.f32 %v6374, %v6598
        %v6631 = vadd.f32 %v6375, %v6599
        %v6632 = vadd.f32 %v6376, %v6600
        %v6633 = vadd.f32 %v6377, %v6601
        %v6634 = vadd.f32 %v6378, %v6602
        %v6635 = vadd.f32 %v6379, %v6603
        %v6636 = vadd.f32 %v6380, %v6604
        %v6637 = vadd.f32 %v6381, %v6605
        %v6638 = vadd.f32 %v6382, %v6606
        %v6639 = vadd.f32 %v6383, %v6607
        %v6640 = vadd.f32 %v6384, %v6608
        %v6641 = vadd.f32 %v6385, %v6609
        %v6642 = vadd.f32 %v6386, %v6610
        %v6643 = vadd.f32 %v6387, %v6611
        %v6644 = vadd.f32 %v6388, %v6612
        %v6645 = vadd.f32 %v6389, %v6613
        %v6646 = vadd.f32 %v6390, %v6614
        %v6647 = vadd.f32 %v6391, %v6615
        %v6648 = vadd.f32 %v6392, %v6616
        %v6649 = vadd.f32 %v6393, %v6617
        %v6650 = vadd.f32 %v6394, %v6618
        %v6651 = vadd.f32 %v6395, %v6619
        %v6652 = vadd.f32 %v6396, %v6620
        %v6653 = vmax.f32 %v6589, 0.0
        %v6654 = vmax.f32 %v6590, 0.0
        %v6655 = vmax.f32 %v6591, 0.0
        %v6656 = vmax.f32 %v6592, 0.0
        %v6657 = vmax.f32 %v6593, 0.0
        %v6658 = vmax.f32 %v6594, 0.0
        %v6659 = vmax.f32 %v6595, 0.0
        %v6660 = vmax.f32 %v6596, 0.0
        %v6661 = vmax.f32 %v6597, 0.0
        %v6662 = vmax.f32 %v6598, 0.0
        %v6663 = vmax.f32 %v6599, 0.0
        %v6664 = vmax.f32 %v6600, 0.0
        %v6665 = vmax.f32 %v6601, 0.0
        %v6666 = vmax.f32 %v6602, 0.0
        %v6667 = vmax.f32 %v6603, 0.0
        %v6668 = vmax.f32 %v6604, 0.0
        %v6669 = vmax.f32 %v6605, 0.0
        %v6670 = vmax.f32 %v6606, 0.0
        %v6671 = vmax.f32 %v6607, 0.0
        %v6672 = vmax.f32 %v6608, 0.0
        %v6673 = vmax.f32 %v6609, 0.0
        %v6674 = vmax.f32 %v6610, 0.0
        %v6675 = vmax.f32 %v6611, 0.0
        %v6676 = vmax.f32 %v6612, 0.0
        %v6677 = vmax.f32 %v6613, 0.0
        %v6678 = vmax.f32 %v6614, 0.0
        %v6679 = vmax.f32 %v6615, 0.0
        %v6680 = vmax.f32 %v6616, 0.0
        %v6681 = vmax.f32 %v6617, 0.0
        %v6682 = vmax.f32 %v6618, 0.0
        %v6683 = vmax.f32 %v6619, 0.0
        %v6684 = vmax.f32 %v6620, 0.0
        %6717 = vrot.lane.b32.xlu0 %v6653, 56
        %v6718 = vpop.permute.xlu0 %6717
        %6719 = vrot.lane.b32.xlu0 %v6654, 56
        %v6720 = vpop.permute.xlu0 %6719
        %6721 = vrot.lane.b32.xlu0 %v6655, 56
        %v6722 = vpop.permute.xlu0 %6721
        %6723 = vrot.lane.b32.xlu0 %v6656, 56
        %v6724 = vpop.permute.xlu0 %6723
        %6725 = vrot.lane.b32.xlu0 %v6657, 56
        %v6726 = vpop.permute.xlu0 %6725
        %6727 = vrot.lane.b32.xlu0 %v6658, 56
        %v6728 = vpop.permute.xlu0 %6727
        %6729 = vrot.lane.b32.xlu0 %v6659, 56
        %v6730 = vpop.permute.xlu0 %6729
        %6731 = vrot.lane.b32.xlu0 %v6660, 56
        %v6732 = vpop.permute.xlu0 %6731
        %6733 = vrot.lane.b32.xlu0 %v6661, 56
        %v6734 = vpop.permute.xlu0 %6733
        %6735 = vrot.lane.b32.xlu0 %v6662, 56
        %v6736 = vpop.permute.xlu0 %6735
        %6737 = vrot.lane.b32.xlu0 %v6663, 56
        %v6738 = vpop.permute.xlu0 %6737
        %6739 = vrot.lane.b32.xlu0 %v6664, 56
        %v6740 = vpop.permute.xlu0 %6739
        %6741 = vrot.lane.b32.xlu0 %v6665, 56
        %v6742 = vpop.permute.xlu0 %6741
        %6743 = vrot.lane.b32.xlu0 %v6666, 56
        %v6744 = vpop.permute.xlu0 %6743
        %6745 = vrot.lane.b32.xlu0 %v6667, 56
        %v6746 = vpop.permute.xlu0 %6745
        %6747 = vrot.lane.b32.xlu0 %v6668, 56
        %v6748 = vpop.permute.xlu0 %6747
        %6749 = vrot.lane.b32.xlu0 %v6669, 56
        %v6750 = vpop.permute.xlu0 %6749
        %6751 = vrot.lane.b32.xlu0 %v6670, 56
        %v6752 = vpop.permute.xlu0 %6751
        %6753 = vrot.lane.b32.xlu0 %v6671, 56
        %v6754 = vpop.permute.xlu0 %6753
        %6755 = vrot.lane.b32.xlu0 %v6672, 56
        %v6756 = vpop.permute.xlu0 %6755
        %6757 = vrot.lane.b32.xlu0 %v6673, 56
        %v6758 = vpop.permute.xlu0 %6757
        %6759 = vrot.lane.b32.xlu0 %v6674, 56
        %v6760 = vpop.permute.xlu0 %6759
        %6761 = vrot.lane.b32.xlu0 %v6675, 56
        %v6762 = vpop.permute.xlu0 %6761
        %6763 = vrot.lane.b32.xlu0 %v6676, 56
        %v6764 = vpop.permute.xlu0 %6763
        %6765 = vrot.lane.b32.xlu0 %v6677, 56
        %v6766 = vpop.permute.xlu0 %6765
        %6767 = vrot.lane.b32.xlu0 %v6678, 56
        %v6768 = vpop.permute.xlu0 %6767
        %6769 = vrot.lane.b32.xlu0 %v6679, 56
        %v6770 = vpop.permute.xlu0 %6769
        %6771 = vrot.lane.b32.xlu0 %v6680, 56
        %v6772 = vpop.permute.xlu0 %6771
        %6773 = vrot.lane.b32.xlu0 %v6681, 56
        %v6774 = vpop.permute.xlu0 %6773
        %6775 = vrot.lane.b32.xlu0 %v6682, 56
        %v6776 = vpop.permute.xlu0 %6775
        %6777 = vrot.lane.b32.xlu0 %v6683, 56
        %v6778 = vpop.permute.xlu0 %6777
        %6779 = vrot.lane.b32.xlu0 %v6684, 56
        %v6780 = vpop.permute.xlu0 %6779
        %6813 = vst.msk [vmem:[#allocation2] sm:$0xff] %vm2844, %v6718
        %6814 = vst.msk [vmem:[#allocation2 + $0x8] sm:$0xff] %vm2844, %v6720
        %6815 = vst.msk [vmem:[#allocation2 + $0x10] sm:$0xff] %vm2844, %v6722
        %6816 = vst.msk [vmem:[#allocation2 + $0x18] sm:$0xff] %vm2844, %v6724
        %6817 = vst.msk [vmem:[#allocation2 + $0x20] sm:$0xff] %vm2844, %v6726
        %6818 = vst.msk [vmem:[#allocation2 + $0x28] sm:$0xff] %vm2844, %v6728
        %6819 = vst.msk [vmem:[#allocation2 + $0x30] sm:$0xff] %vm2844, %v6730
        %6820 = vst.msk [vmem:[#allocation2 + $0x38] sm:$0xff] %vm2844, %v6732
        %6821 = vst.msk [vmem:[#allocation2 + $0x40] sm:$0xff] %vm2844, %v6734
        %6822 = vst.msk [vmem:[#allocation2 + $0x48] sm:$0xff] %vm2844, %v6736
        %6823 = vst.msk [vmem:[#allocation2 + $0x50] sm:$0xff] %vm2844, %v6738
        %6824 = vst.msk [vmem:[#allocation2 + $0x58] sm:$0xff] %vm2844, %v6740
        %6825 = vst.msk [vmem:[#allocation2 + $0x60] sm:$0xff] %vm2844, %v6742
        %6826 = vst.msk [vmem:[#allocation2 + $0x68] sm:$0xff] %vm2844, %v6744
        %6827 = vst.msk [vmem:[#allocation2 + $0x70] sm:$0xff] %vm2844, %v6746
        %6828 = vst.msk [vmem:[#allocation2 + $0x78] sm:$0xff] %vm2844, %v6748
        %6829 = vst.msk [vmem:[#allocation2 + $0x80] sm:$0xff] %vm2844, %v6750
        %6830 = vst.msk [vmem:[#allocation2 + $0x88] sm:$0xff] %vm2844, %v6752
        %6831 = vst.msk [vmem:[#allocation2 + $0x90] sm:$0xff] %vm2844, %v6754
        %6832 = vst.msk [vmem:[#allocation2 + $0x98] sm:$0xff] %vm2844, %v6756
        %6833 = vst.msk [vmem:[#allocation2 + $0xa0] sm:$0xff] %vm2844, %v6758
        %6834 = vst.msk [vmem:[#allocation2 + $0xa8] sm:$0xff] %vm2844, %v6760
        %6835 = vst.msk [vmem:[#allocation2 + $0xb0] sm:$0xff] %vm2844, %v6762
        %6836 = vst.msk [vmem:[#allocation2 + $0xb8] sm:$0xff] %vm2844, %v6764
        %6837 = vst.msk [vmem:[#allocation2 + $0xc0] sm:$0xff] %vm2844, %v6766
        %6838 = vst.msk [vmem:[#allocation2 + $0xc8] sm:$0xff] %vm2844, %v6768
        %6839 = vst.msk [vmem:[#allocation2 + $0xd0] sm:$0xff] %vm2844, %v6770
        %6840 = vst.msk [vmem:[#allocation2 + $0xd8] sm:$0xff] %vm2844, %v6772
        %6841 = vst.msk [vmem:[#allocation2 + $0xe0] sm:$0xff] %vm2844, %v6774
        %6842 = vst.msk [vmem:[#allocation2 + $0xe8] sm:$0xff] %vm2844, %v6776
        %6843 = vst.msk [vmem:[#allocation2 + $0xf0] sm:$0xff] %vm2844, %v6778
        %6844 = vst.msk [vmem:[#allocation2 + $0xf8] sm:$0xff] %vm2844, %v6780
        %v6845 = vld [vmem:[%s6332 + $0x2] sm:$0xff]
        %v6846 = vld [vmem:[%s6332 + $0xa] sm:$0xff]
        %v6847 = vld [vmem:[%s6332 + $0x1a] sm:$0xff]
        %v6848 = vld [vmem:[%s6332 + $0x22] sm:$0xff]
        %v6849 = vld [vmem:[%s6332 + $0x32] sm:$0xff]
        %v6850 = vld [vmem:[%s6332 + $0x3a] sm:$0xff]
        %v6851 = vld [vmem:[%s6332 + $0x4a] sm:$0xff]
        %v6852 = vld [vmem:[%s6332 + $0x52] sm:$0xff]
        %v6853 = vld [vmem:[%s6332 + $0x62] sm:$0xff]
        %v6854 = vld [vmem:[%s6332 + $0x6a] sm:$0xff]
        %v6855 = vld [vmem:[%s6332 + $0x7a] sm:$0xff]
        %v6856 = vld [vmem:[%s6332 + $0x82] sm:$0xff]
        %v6857 = vld [vmem:[%s6332 + $0x92] sm:$0xff]
        %v6858 = vld [vmem:[%s6332 + $0x9a] sm:$0xff]
        %v6859 = vld [vmem:[%s6332 + $0xaa] sm:$0xff]
        %v6860 = vld [vmem:[%s6332 + $0xb2] sm:$0xff]
        %v6861 = vld [vmem:[%s6332 + $0xc2] sm:$0xff]
        %v6862 = vld [vmem:[%s6332 + $0xca] sm:$0xff]
        %v6863 = vld [vmem:[%s6332 + $0xda] sm:$0xff]
        %v6864 = vld [vmem:[%s6332 + $0xe2] sm:$0xff]
        %v6865 = vld [vmem:[%s6332 + $0xf2] sm:$0xff]
        %v6866 = vld [vmem:[%s6332 + $0xfa] sm:$0xff]
        %v6867 = vld [vmem:[%s6332 + $0x10a] sm:$0xff]
        %v6868 = vld [vmem:[%s6332 + $0x112] sm:$0xff]
        %v6869 = vld [vmem:[%s6332 + $0x122] sm:$0xff]
        %v6870 = vld [vmem:[%s6332 + $0x12a] sm:$0xff]
        %v6871 = vld [vmem:[%s6332 + $0x13a] sm:$0xff]
        %v6872 = vld [vmem:[%s6332 + $0x142] sm:$0xff]
        %v6873 = vld [vmem:[%s6332 + $0x152] sm:$0xff]
        %v6874 = vld [vmem:[%s6332 + $0x15a] sm:$0xff]
        %v6875 = vld [vmem:[%s6332 + $0x16a] sm:$0xff]
        %v6876 = vld [vmem:[%s6332 + $0x172] sm:$0xff]
        %v6877 = vadd.f32 %v6621, %v6845
        %v6878 = vadd.f32 %v6622, %v6846
        %v6879 = vadd.f32 %v6623, %v6847
        %v6880 = vadd.f32 %v6624, %v6848
        %v6881 = vadd.f32 %v6625, %v6849
        %v6882 = vadd.f32 %v6626, %v6850
        %v6883 = vadd.f32 %v6627, %v6851
        %v6884 = vadd.f32 %v6628, %v6852
        %v6885 = vadd.f32 %v6629, %v6853
        %v6886 = vadd.f32 %v6630, %v6854
        %v6887 = vadd.f32 %v6631, %v6855
        %v6888 = vadd.f32 %v6632, %v6856
        %v6889 = vadd.f32 %v6633, %v6857
        %v6890 = vadd.f32 %v6634, %v6858
        %v6891 = vadd.f32 %v6635, %v6859
        %v6892 = vadd.f32 %v6636, %v6860
        %v6893 = vadd.f32 %v6637, %v6861
        %v6894 = vadd.f32 %v6638, %v6862
        %v6895 = vadd.f32 %v6639, %v6863
        %v6896 = vadd.f32 %v6640, %v6864
        %v6897 = vadd.f32 %v6641, %v6865
        %v6898 = vadd.f32 %v6642, %v6866
        %v6899 = vadd.f32 %v6643, %v6867
        %v6900 = vadd.f32 %v6644, %v6868
        %v6901 = vadd.f32 %v6645, %v6869
        %v6902 = vadd.f32 %v6646, %v6870
        %v6903 = vadd.f32 %v6647, %v6871
        %v6904 = vadd.f32 %v6648, %v6872
        %v6905 = vadd.f32 %v6649, %v6873
        %v6906 = vadd.f32 %v6650, %v6874
        %v6907 = vadd.f32 %v6651, %v6875
        %v6908 = vadd.f32 %v6652, %v6876
        %v6909 = vmax.f32 %v6845, 0.0
        %v6910 = vmax.f32 %v6846, 0.0
        %v6911 = vmax.f32 %v6847, 0.0
        %v6912 = vmax.f32 %v6848, 0.0
        %v6913 = vmax.f32 %v6849, 0.0
        %v6914 = vmax.f32 %v6850, 0.0
        %v6915 = vmax.f32 %v6851, 0.0
        %v6916 = vmax.f32 %v6852, 0.0
        %v6917 = vmax.f32 %v6853, 0.0
        %v6918 = vmax.f32 %v6854, 0.0
        %v6919 = vmax.f32 %v6855, 0.0
        %v6920 = vmax.f32 %v6856, 0.0
        %v6921 = vmax.f32 %v6857, 0.0
        %v6922 = vmax.f32 %v6858, 0.0
        %v6923 = vmax.f32 %v6859, 0.0
        %v6924 = vmax.f32 %v6860, 0.0
        %v6925 = vmax.f32 %v6861, 0.0
        %v6926 = vmax.f32 %v6862, 0.0
        %v6927 = vmax.f32 %v6863, 0.0
        %v6928 = vmax.f32 %v6864, 0.0
        %v6929 = vmax.f32 %v6865, 0.0
        %v6930 = vmax.f32 %v6866, 0.0
        %v6931 = vmax.f32 %v6867, 0.0
        %v6932 = vmax.f32 %v6868, 0.0
        %v6933 = vmax.f32 %v6869, 0.0
        %v6934 = vmax.f32 %v6870, 0.0
        %v6935 = vmax.f32 %v6871, 0.0
        %v6936 = vmax.f32 %v6872, 0.0
        %v6937 = vmax.f32 %v6873, 0.0
        %v6938 = vmax.f32 %v6874, 0.0
        %v6939 = vmax.f32 %v6875, 0.0
        %v6940 = vmax.f32 %v6876, 0.0
        %6973 = vrot.lane.b32.xlu0 %v6909, 64
        %v6974 = vpop.permute.xlu0 %6973
        %6975 = vrot.lane.b32.xlu0 %v6910, 64
        %v6976 = vpop.permute.xlu0 %6975
        %6977 = vrot.lane.b32.xlu0 %v6911, 64
        %v6978 = vpop.permute.xlu0 %6977
        %6979 = vrot.lane.b32.xlu0 %v6912, 64
        %v6980 = vpop.permute.xlu0 %6979
        %6981 = vrot.lane.b32.xlu0 %v6913, 64
        %v6982 = vpop.permute.xlu0 %6981
        %6983 = vrot.lane.b32.xlu0 %v6914, 64
        %v6984 = vpop.permute.xlu0 %6983
        %6985 = vrot.lane.b32.xlu0 %v6915, 64
        %v6986 = vpop.permute.xlu0 %6985
        %6987 = vrot.lane.b32.xlu0 %v6916, 64
        %v6988 = vpop.permute.xlu0 %6987
        %6989 = vrot.lane.b32.xlu0 %v6917, 64
        %v6990 = vpop.permute.xlu0 %6989
        %6991 = vrot.lane.b32.xlu0 %v6918, 64
        %v6992 = vpop.permute.xlu0 %6991
        %6993 = vrot.lane.b32.xlu0 %v6919, 64
        %v6994 = vpop.permute.xlu0 %6993
        %6995 = vrot.lane.b32.xlu0 %v6920, 64
        %v6996 = vpop.permute.xlu0 %6995
        %6997 = vrot.lane.b32.xlu0 %v6921, 64
        %v6998 = vpop.permute.xlu0 %6997
        %6999 = vrot.lane.b32.xlu0 %v6922, 64
        %v7000 = vpop.permute.xlu0 %6999
        %7001 = vrot.lane.b32.xlu0 %v6923, 64
        %v7002 = vpop.permute.xlu0 %7001
        %7003 = vrot.lane.b32.xlu0 %v6924, 64
        %v7004 = vpop.permute.xlu0 %7003
        %7005 = vrot.lane.b32.xlu0 %v6925, 64
        %v7006 = vpop.permute.xlu0 %7005
        %7007 = vrot.lane.b32.xlu0 %v6926, 64
        %v7008 = vpop.permute.xlu0 %7007
        %7009 = vrot.lane.b32.xlu0 %v6927, 64
        %v7010 = vpop.permute.xlu0 %7009
        %7011 = vrot.lane.b32.xlu0 %v6928, 64
        %v7012 = vpop.permute.xlu0 %7011
        %7013 = vrot.lane.b32.xlu0 %v6929, 64
        %v7014 = vpop.permute.xlu0 %7013
        %7015 = vrot.lane.b32.xlu0 %v6930, 64
        %v7016 = vpop.permute.xlu0 %7015
        %7017 = vrot.lane.b32.xlu0 %v6931, 64
        %v7018 = vpop.permute.xlu0 %7017
        %7019 = vrot.lane.b32.xlu0 %v6932, 64
        %v7020 = vpop.permute.xlu0 %7019
        %7021 = vrot.lane.b32.xlu0 %v6933, 64
        %v7022 = vpop.permute.xlu0 %7021
        %7023 = vrot.lane.b32.xlu0 %v6934, 64
        %v7024 = vpop.permute.xlu0 %7023
        %7025 = vrot.lane.b32.xlu0 %v6935, 64
        %v7026 = vpop.permute.xlu0 %7025
        %7027 = vrot.lane.b32.xlu0 %v6936, 64
        %v7028 = vpop.permute.xlu0 %7027
        %7029 = vrot.lane.b32.xlu0 %v6937, 64
        %v7030 = vpop.permute.xlu0 %7029
        %7031 = vrot.lane.b32.xlu0 %v6938, 64
        %v7032 = vpop.permute.xlu0 %7031
        %7033 = vrot.lane.b32.xlu0 %v6939, 64
        %v7034 = vpop.permute.xlu0 %7033
        %7035 = vrot.lane.b32.xlu0 %v6940, 64
        %v7036 = vpop.permute.xlu0 %7035
        %7069 = vst.msk [vmem:[#allocation2] sm:$0xff] %vm3101, %v6974
        %7070 = vst.msk [vmem:[#allocation2 + $0x8] sm:$0xff] %vm3101, %v6976
        %7071 = vst.msk [vmem:[#allocation2 + $0x10] sm:$0xff] %vm3101, %v6978
        %7072 = vst.msk [vmem:[#allocation2 + $0x18] sm:$0xff] %vm3101, %v6980
        %7073 = vst.msk [vmem:[#allocation2 + $0x20] sm:$0xff] %vm3101, %v6982
        %7074 = vst.msk [vmem:[#allocation2 + $0x28] sm:$0xff] %vm3101, %v6984
        %7075 = vst.msk [vmem:[#allocation2 + $0x30] sm:$0xff] %vm3101, %v6986
        %7076 = vst.msk [vmem:[#allocation2 + $0x38] sm:$0xff] %vm3101, %v6988
        %7077 = vst.msk [vmem:[#allocation2 + $0x40] sm:$0xff] %vm3101, %v6990
        %7078 = vst.msk [vmem:[#allocation2 + $0x48] sm:$0xff] %vm3101, %v6992
        %7079 = vst.msk [vmem:[#allocation2 + $0x50] sm:$0xff] %vm3101, %v6994
        %7080 = vst.msk [vmem:[#allocation2 + $0x58] sm:$0xff] %vm3101, %v6996
        %7081 = vst.msk [vmem:[#allocation2 + $0x60] sm:$0xff] %vm3101, %v6998
        %7082 = vst.msk [vmem:[#allocation2 + $0x68] sm:$0xff] %vm3101, %v7000
        %7083 = vst.msk [vmem:[#allocation2 + $0x70] sm:$0xff] %vm3101, %v7002
        %7084 = vst.msk [vmem:[#allocation2 + $0x78] sm:$0xff] %vm3101, %v7004
        %7085 = vst.msk [vmem:[#allocation2 + $0x80] sm:$0xff] %vm3101, %v7006
        %7086 = vst.msk [vmem:[#allocation2 + $0x88] sm:$0xff] %vm3101, %v7008
        %7087 = vst.msk [vmem:[#allocation2 + $0x90] sm:$0xff] %vm3101, %v7010
        %7088 = vst.msk [vmem:[#allocation2 + $0x98] sm:$0xff] %vm3101, %v7012
        %7089 = vst.msk [vmem:[#allocation2 + $0xa0] sm:$0xff] %vm3101, %v7014
        %7090 = vst.msk [vmem:[#allocation2 + $0xa8] sm:$0xff] %vm3101, %v7016
        %7091 = vst.msk [vmem:[#allocation2 + $0xb0] sm:$0xff] %vm3101, %v7018
        %7092 = vst.msk [vmem:[#allocation2 + $0xb8] sm:$0xff] %vm3101, %v7020
        %7093 = vst.msk [vmem:[#allocation2 + $0xc0] sm:$0xff] %vm3101, %v7022
        %7094 = vst.msk [vmem:[#allocation2 + $0xc8] sm:$0xff] %vm3101, %v7024
        %7095 = vst.msk [vmem:[#allocation2 + $0xd0] sm:$0xff] %vm3101, %v7026
        %7096 = vst.msk [vmem:[#allocation2 + $0xd8] sm:$0xff] %vm3101, %v7028
        %7097 = vst.msk [vmem:[#allocation2 + $0xe0] sm:$0xff] %vm3101, %v7030
        %7098 = vst.msk [vmem:[#allocation2 + $0xe8] sm:$0xff] %vm3101, %v7032
        %7099 = vst.msk [vmem:[#allocation2 + $0xf0] sm:$0xff] %vm3101, %v7034
        %7100 = vst.msk [vmem:[#allocation2 + $0xf8] sm:$0xff] %vm3101, %v7036
        %v7101 = vmul.f32 %v6877, %v604
        %v7102 = vmul.f32 %v6878, %v606
        %v7103 = vmul.f32 %v6879, %v608
        %v7104 = vmul.f32 %v6880, %v610
        %v7105 = vmul.f32 %v6881, %v608
        %v7106 = vmul.f32 %v6882, %v610
        %v7107 = vmul.f32 %v6883, %v608
        %v7108 = vmul.f32 %v6884, %v610
        %v7109 = vmul.f32 %v6885, %v608
        %v7110 = vmul.f32 %v6886, %v610
        %v7111 = vmul.f32 %v6887, %v608
        %v7112 = vmul.f32 %v6888, %v610
        %v7113 = vmul.f32 %v6889, %v608
        %v7114 = vmul.f32 %v6890, %v610
        %v7115 = vmul.f32 %v6891, %v608
        %v7116 = vmul.f32 %v6892, %v610
        %v7117 = vmul.f32 %v6893, %v608
        %v7118 = vmul.f32 %v6894, %v610
        %v7119 = vmul.f32 %v6895, %v608
        %v7120 = vmul.f32 %v6896, %v610
        %v7121 = vmul.f32 %v6897, %v608
        %v7122 = vmul.f32 %v6898, %v610
        %v7123 = vmul.f32 %v6899, %v608
        %v7124 = vmul.f32 %v6900, %v610
        %v7125 = vmul.f32 %v6901, %v608
        %v7126 = vmul.f32 %v6902, %v610
        %v7127 = vmul.f32 %v6903, %v608
        %v7128 = vmul.f32 %v6904, %v610
        %v7129 = vmul.f32 %v6905, %v608
        %v7130 = vmul.f32 %v6906, %v610
        %v7131 = vmul.f32 %v6907, %v612
        %v7132 = vmul.f32 %v6908, %v614
        %v7133 = vld [vmem:[%s6] sm:$0xf]
        %v7134 = vld [vmem:[%s6 + $0x4] sm:$0xf]
        %v7135 = vld [vmem:[%s6 + $0x8] sm:$0xf]
        %v7136 = vld [vmem:[%s6 + $0xc] sm:$0xf]
        %v7137 = vld [vmem:[%s6 + $0x10] sm:$0xf]
        %v7138 = vld [vmem:[%s6 + $0x14] sm:$0xf]
        %v7139 = vld [vmem:[%s6 + $0x18] sm:$0xf]
        %v7140 = vld [vmem:[%s6 + $0x1c] sm:$0xf]
        %v7141 = vld [vmem:[%s6 + $0x20] sm:$0xf]
        %v7142 = vld [vmem:[%s7] sm:$0x1]
        %v7143 = vld [vmem:[#allocation2] sm:$0xff]
        %v7144 = vld [vmem:[#allocation2 + $0x8] sm:$0xff]
        %v7145 = vld [vmem:[#allocation2 + $0x10] sm:$0xff]
        %v7146 = vld [vmem:[#allocation2 + $0x18] sm:$0xff]
        %v7147 = vld [vmem:[#allocation2 + $0x20] sm:$0xff]
        %v7148 = vld [vmem:[#allocation2 + $0x28] sm:$0xff]
        %v7149 = vld [vmem:[#allocation2 + $0x30] sm:$0xff]
        %v7150 = vld [vmem:[#allocation2 + $0x38] sm:$0xff]
        %v7151 = vld [vmem:[#allocation2 + $0x40] sm:$0xff]
        %v7152 = vld [vmem:[#allocation2 + $0x48] sm:$0xff]
        %v7153 = vld [vmem:[#allocation2 + $0x50] sm:$0xff]
        %v7154 = vld [vmem:[#allocation2 + $0x58] sm:$0xff]
        %v7155 = vld [vmem:[#allocation2 + $0x60] sm:$0xff]
        %v7156 = vld [vmem:[#allocation2 + $0x68] sm:$0xff]
        %v7157 = vld [vmem:[#allocation2 + $0x70] sm:$0xff]
        %v7158 = vld [vmem:[#allocation2 + $0x78] sm:$0xff]
        %v7159 = vld [vmem:[#allocation2 + $0x80] sm:$0xff]
        %v7160 = vld [vmem:[#allocation2 + $0x88] sm:$0xff]
        %v7161 = vld [vmem:[#allocation2 + $0x90] sm:$0xff]
        %v7162 = vld [vmem:[#allocation2 + $0x98] sm:$0xff]
        %v7163 = vld [vmem:[#allocation2 + $0xa0] sm:$0xff]
        %v7164 = vld [vmem:[#allocation2 + $0xa8] sm:$0xff]
        %v7165 = vld [vmem:[#allocation2 + $0xb0] sm:$0xff]
        %v7166 = vld [vmem:[#allocation2 + $0xb8] sm:$0xff]
        %v7167 = vld [vmem:[#allocation2 + $0xc0] sm:$0xff]
        %v7168 = vld [vmem:[#allocation2 + $0xc8] sm:$0xff]
        %v7169 = vld [vmem:[#allocation2 + $0xd0] sm:$0xff]
        %v7170 = vld [vmem:[#allocation2 + $0xd8] sm:$0xff]
        %v7171 = vld [vmem:[#allocation2 + $0xe0] sm:$0xff]
        %v7172 = vld [vmem:[#allocation2 + $0xe8] sm:$0xff]
        %v7173 = vld [vmem:[#allocation2 + $0xf0] sm:$0xff]
        %v7174 = vld [vmem:[#allocation2 + $0xf8] sm:$0xff]
        %v7175 = vpack.c.bf16 %v7144, %v7143
        %v7176 = vpack.c.bf16 %v7146, %v7145
        %v7177 = vpack.c.bf16 %v7148, %v7147
        %v7178 = vpack.c.bf16 %v7150, %v7149
        %v7179 = vpack.c.bf16 %v7152, %v7151
        %v7180 = vpack.c.bf16 %v7154, %v7153
        %v7181 = vpack.c.bf16 %v7156, %v7155
        %v7182 = vpack.c.bf16 %v7158, %v7157
        %v7183 = vpack.c.bf16 %v7160, %v7159
        %v7184 = vpack.c.bf16 %v7162, %v7161
        %v7185 = vpack.c.bf16 %v7164, %v7163
        %v7186 = vpack.c.bf16 %v7166, %v7165
        %v7187 = vpack.c.bf16 %v7168, %v7167
        %v7188 = vpack.c.bf16 %v7170, %v7169
        %v7189 = vpack.c.bf16 %v7172, %v7171
        %v7190 = vpack.c.bf16 %v7174, %v7173
        %v7192 = vlaneseq
        %v7193 = vshrl.u32 %v7192, 7
        %v7194 = vsub.s32 0, %v7193
        %v7195 = vrot.slane %v7142, %v7194
        %v7206 = vunpack.c.l.b16 %v7133
        %v7207 = vunpack.c.l.b16 %v7134
        %v7208 = vunpack.c.l.b16 %v7135
        %v7209 = vunpack.c.l.b16 %v7136
        %v7210 = vunpack.c.l.b16 %v7137
        %v7211 = vunpack.c.l.b16 %v7138
        %v7212 = vunpack.c.l.b16 %v7139
        %v7213 = vunpack.c.l.b16 %v7140
        %v7214 = vunpack.c.l.b16 %v7141
        %v7215 = vpack.c.b16 %v7207, %v7206
        %v7216 = vpack.c.b16 %v7209, %v7208
        %v7217 = vpack.c.b16 %v7211, %v7210
        %v7218 = vpack.c.b16 %v7213, %v7212
        %v7219 = vpack.c.b16 %v7214, %v7214
        %v7225 = vsel %vm3257, %v7175, 0
        %v7228 = vsel %vm3257, %v7176, 0
        %v7231 = vsel %vm3257, %v7177, 0
        %v7234 = vsel %vm3257, %v7178, 0
        %v7237 = vsel %vm3257, %v7179, 0
        %v7240 = vsel %vm3257, %v7180, 0
        %v7243 = vsel %vm3257, %v7181, 0
        %v7246 = vsel %vm3257, %v7182, 0
        %v7249 = vsel %vm3257, %v7183, 0
        %v7252 = vsel %vm3257, %v7184, 0
        %v7255 = vsel %vm3257, %v7185, 0
        %v7258 = vsel %vm3257, %v7186, 0
        %v7261 = vsel %vm3257, %v7187, 0
        %v7264 = vsel %vm3257, %v7188, 0
        %v7267 = vsel %vm3257, %v7189, 0
        %v7270 = vsel %vm3257, %v7190, 0
        %v7273 = vsel %vm751, %v7219, 0
        %7275 = vmatprep.subr.bf16.mxu0 0
        %7276 = vmatpush1.bf16.msra.mxu0 %v7215
        %7277 = vmatprep.subr.bf16.mxu0 0
        %7278 = vmatpush1.bf16.msra.mxu0 %v7216
        %7279 = vmatprep.subr.bf16.mxu0 0
        %7280 = vmatpush1.bf16.msra.mxu0 %v7217
        %7281 = vmatprep.subr.bf16.mxu0 0
        %7282 = vmatpush1.bf16.msra.mxu0 %v7218
        %7283 = vmatprep.subr.bf16.mxu0 0
        %7284 = vmatpush1.bf16.msra.mxu0 %v7273
        %7285 = vmatprep.subr.bf16.mxu0 0
        %7286 = vmatpush1.bf16.msra.mxu0 0
        %7287 = vmatprep.subr.bf16.mxu0 0
        %7288 = vmatpush1.bf16.msra.mxu0 0
        %7289 = vmatprep.subr.bf16.mxu0 0
        %7290 = vmatpush1.bf16.msra.mxu0 0
        %7291 = vmatprep.subr.bf16.mxu0 0
        %7292 = vmatpush1.bf16.msra.mxu0 0
        %7293 = vmatprep.subr.bf16.mxu0 0
        %7294 = vmatpush1.bf16.msra.mxu0 0
        %7295 = vmatprep.subr.bf16.mxu0 0
        %7296 = vmatpush1.bf16.msra.mxu0 0
        %7297 = vmatprep.subr.bf16.mxu0 0
        %7298 = vmatpush1.bf16.msra.mxu0 0
        %7299 = vmatprep.subr.bf16.mxu0 0
        %7300 = vmatpush1.bf16.msra.mxu0 0
        %7301 = vmatprep.subr.bf16.mxu0 0
        %7302 = vmatpush1.bf16.msra.mxu0 0
        %7303 = vmatprep.subr.bf16.mxu0 0
        %7304 = vmatpush1.bf16.msra.mxu0 0
        %7305 = vmatprep.subr.bf16.mxu0 0
        %7306 = vmatpush1.bf16.msra.mxu0 0
        %7307 = vmatprep.mubr.bf16.mxu0 0
        %7308 = vmatmul.mubr.bf16.gmra.mrb[0].mxu0 %v7225
        %v7309 = vpop.f32.mrb[0].mxu0
        %v7310 = vadd.f32 %v7195, %v7309
        %v7311 = vpop.f32.mrb[0].mxu0
        %v7312 = vpop.f32.mrb[0].mxu0
        %v7313 = vadd.f32 %v7195, %v7312
        %v7314 = vpop.f32.mrb[0].mxu0
        %7315 = vmatprep.mubr.bf16.mxu0 0
        %7316 = vmatmul.mubr.bf16.gmra.mrb[0].mxu0 %v7228
        %v7317 = vpop.f32.mrb[0].mxu0
        %v7318 = vadd.f32 %v7195, %v7317
        %v7319 = vpop.f32.mrb[0].mxu0
        %v7320 = vpop.f32.mrb[0].mxu0
        %v7321 = vadd.f32 %v7195, %v7320
        %v7322 = vpop.f32.mrb[0].mxu0
        %7323 = vmatprep.mubr.bf16.mxu0 0
        %7324 = vmatmul.mubr.bf16.gmra.mrb[0].mxu0 %v7231
        %v7325 = vpop.f32.mrb[0].mxu0
        %v7326 = vadd.f32 %v7195, %v7325
        %v7327 = vpop.f32.mrb[0].mxu0
        %v7328 = vpop.f32.mrb[0].mxu0
        %v7329 = vadd.f32 %v7195, %v7328
        %v7330 = vpop.f32.mrb[0].mxu0
        %7331 = vmatprep.mubr.bf16.mxu0 0
        %7332 = vmatmul.mubr.bf16.gmra.mrb[0].mxu0 %v7234
        %v7333 = vpop.f32.mrb[0].mxu0
        %v7334 = vadd.f32 %v7195, %v7333
        %v7335 = vpop.f32.mrb[0].mxu0
        %v7336 = vpop.f32.mrb[0].mxu0
        %v7337 = vadd.f32 %v7195, %v7336
        %v7338 = vpop.f32.mrb[0].mxu0
        %7339 = vmatprep.mubr.bf16.mxu0 0
        %7340 = vmatmul.mubr.bf16.gmra.mrb[0].mxu0 %v7237
        %v7341 = vpop.f32.mrb[0].mxu0
        %v7342 = vadd.f32 %v7195, %v7341
        %v7343 = vpop.f32.mrb[0].mxu0
        %v7344 = vpop.f32.mrb[0].mxu0
        %v7345 = vadd.f32 %v7195, %v7344
        %v7346 = vpop.f32.mrb[0].mxu0
        %7347 = vmatprep.mubr.bf16.mxu0 0
        %7348 = vmatmul.mubr.bf16.gmra.mrb[0].mxu0 %v7240
        %v7349 = vpop.f32.mrb[0].mxu0
        %v7350 = vadd.f32 %v7195, %v7349
        %v7351 = vpop.f32.mrb[0].mxu0
        %v7352 = vpop.f32.mrb[0].mxu0
        %v7353 = vadd.f32 %v7195, %v7352
        %v7354 = vpop.f32.mrb[0].mxu0
        %7355 = vmatprep.mubr.bf16.mxu0 0
        %7356 = vmatmul.mubr.bf16.gmra.mrb[0].mxu0 %v7243
        %v7357 = vpop.f32.mrb[0].mxu0
        %v7358 = vadd.f32 %v7195, %v7357
        %v7359 = vpop.f32.mrb[0].mxu0
        %v7360 = vpop.f32.mrb[0].mxu0
        %v7361 = vadd.f32 %v7195, %v7360
        %v7362 = vpop.f32.mrb[0].mxu0
        %7363 = vmatprep.mubr.bf16.mxu0 0
        %7364 = vmatmul.mubr.bf16.gmra.mrb[0].mxu0 %v7246
        %v7365 = vpop.f32.mrb[0].mxu0
        %v7366 = vadd.f32 %v7195, %v7365
        %v7367 = vpop.f32.mrb[0].mxu0
        %v7368 = vpop.f32.mrb[0].mxu0
        %v7369 = vadd.f32 %v7195, %v7368
        %v7370 = vpop.f32.mrb[0].mxu0
        %7371 = vmatprep.mubr.bf16.mxu0 0
        %7372 = vmatmul.mubr.bf16.gmra.mrb[0].mxu0 %v7249
        %v7373 = vpop.f32.mrb[0].mxu0
        %v7374 = vadd.f32 %v7195, %v7373
        %v7375 = vpop.f32.mrb[0].mxu0
        %v7376 = vpop.f32.mrb[0].mxu0
        %v7377 = vadd.f32 %v7195, %v7376
        %v7378 = vpop.f32.mrb[0].mxu0
        %7379 = vmatprep.mubr.bf16.mxu0 0
        %7380 = vmatmul.mubr.bf16.gmra.mrb[0].mxu0 %v7252
        %v7381 = vpop.f32.mrb[0].mxu0
        %v7382 = vadd.f32 %v7195, %v7381
        %v7383 = vpop.f32.mrb[0].mxu0
        %v7384 = vpop.f32.mrb[0].mxu0
        %v7385 = vadd.f32 %v7195, %v7384
        %v7386 = vpop.f32.mrb[0].mxu0
        %7387 = vmatprep.mubr.bf16.mxu0 0
        %7388 = vmatmul.mubr.bf16.gmra.mrb[0].mxu0 %v7255
        %v7389 = vpop.f32.mrb[0].mxu0
        %v7390 = vadd.f32 %v7195, %v7389
        %v7391 = vpop.f32.mrb[0].mxu0
        %v7392 = vpop.f32.mrb[0].mxu0
        %v7393 = vadd.f32 %v7195, %v7392
        %v7394 = vpop.f32.mrb[0].mxu0
        %7395 = vmatprep.mubr.bf16.mxu0 0
        %7396 = vmatmul.mubr.bf16.gmra.mrb[0].mxu0 %v7258
        %v7397 = vpop.f32.mrb[0].mxu0
        %v7398 = vadd.f32 %v7195, %v7397
        %v7399 = vpop.f32.mrb[0].mxu0
        %v7400 = vpop.f32.mrb[0].mxu0
        %v7401 = vadd.f32 %v7195, %v7400
        %v7402 = vpop.f32.mrb[0].mxu0
        %7403 = vmatprep.mubr.bf16.mxu0 0
        %7404 = vmatmul.mubr.bf16.gmra.mrb[0].mxu0 %v7261
        %v7405 = vpop.f32.mrb[0].mxu0
        %v7406 = vadd.f32 %v7195, %v7405
        %v7407 = vpop.f32.mrb[0].mxu0
        %v7408 = vpop.f32.mrb[0].mxu0
        %v7409 = vadd.f32 %v7195, %v7408
        %v7410 = vpop.f32.mrb[0].mxu0
        %7411 = vmatprep.mubr.bf16.mxu0 0
        %7412 = vmatmul.mubr.bf16.gmra.mrb[0].mxu0 %v7264
        %v7413 = vpop.f32.mrb[0].mxu0
        %v7414 = vadd.f32 %v7195, %v7413
        %v7415 = vpop.f32.mrb[0].mxu0
        %v7416 = vpop.f32.mrb[0].mxu0
        %v7417 = vadd.f32 %v7195, %v7416
        %v7418 = vpop.f32.mrb[0].mxu0
        %7419 = vmatprep.mubr.bf16.mxu0 0
        %7420 = vmatmul.mubr.bf16.gmra.mrb[0].mxu0 %v7267
        %v7421 = vpop.f32.mrb[0].mxu0
        %v7422 = vadd.f32 %v7195, %v7421
        %v7423 = vpop.f32.mrb[0].mxu0
        %v7424 = vpop.f32.mrb[0].mxu0
        %v7425 = vadd.f32 %v7195, %v7424
        %v7426 = vpop.f32.mrb[0].mxu0
        %7427 = vmatprep.mubr.bf16.mxu0 0
        %7428 = vmatmul.mubr.bf16.gmra.mrb[0].mxu0 %v7270
        %v7429 = vpop.f32.mrb[0].mxu0
        %v7430 = vadd.f32 %v7195, %v7429
        %v7431 = vpop.f32.mrb[0].mxu0
        %v7432 = vpop.f32.mrb[0].mxu0
        %v7433 = vadd.f32 %v7195, %v7432
        %v7434 = vpop.f32.mrb[0].mxu0
        %7435 = vdwg.mxu0
        %s7436 = sld [smem:[#allocation6 + $0x101]]
        %s7437 = sld [smem:[#allocation6 + $0x104]]
        %v7438 = vstv %s7436
        %v7439 = vmul.f32 %v7438, %v5820
        %v7440 = vmul.f32 %v7438, %v5821
        %v7441 = vmul.f32 %v7438, %v5822
        %v7442 = vmul.f32 %v7438, %v5823
        %v7443 = vmul.f32 %v7438, %v5824
        %v7444 = vmul.f32 %v7438, %v5825
        %v7445 = vmul.f32 %v7438, %v5826
        %v7446 = vmul.f32 %v7438, %v5827
        %v7447 = vmul.f32 %v7438, %v5828
        %v7448 = vmul.f32 %v7438, %v5829
        %v7449 = vmul.f32 %v7438, %v5830
        %v7450 = vmul.f32 %v7438, %v5831
        %v7451 = vmul.f32 %v7438, %v5832
        %v7452 = vmul.f32 %v7438, %v5833
        %v7453 = vmul.f32 %v7438, %v5834
        %v7454 = vmul.f32 %v7438, %v5835
        %v7455 = vmul.f32 %v7438, %v5836
        %v7456 = vmul.f32 %v7438, %v5837
        %v7457 = vmul.f32 %v7438, %v5838
        %v7458 = vmul.f32 %v7438, %v5839
        %v7459 = vmul.f32 %v7438, %v5840
        %v7460 = vmul.f32 %v7438, %v5841
        %v7461 = vmul.f32 %v7438, %v5842
        %v7462 = vmul.f32 %v7438, %v5843
        %v7463 = vmul.f32 %v7438, %v5844
        %v7464 = vmul.f32 %v7438, %v5845
        %v7465 = vmul.f32 %v7438, %v5846
        %v7466 = vmul.f32 %v7438, %v5847
        %v7467 = vmul.f32 %v7438, %v5848
        %v7468 = vmul.f32 %v7438, %v5849
        %v7469 = vmul.f32 %v7438, %v5850
        %v7470 = vmul.f32 %v7438, %v5851
        %v7471 = vadd.f32 %v7310, %v7439
        %v7472 = vadd.f32 %v7313, %v7440
        %v7473 = vadd.f32 %v7318, %v7441
        %v7474 = vadd.f32 %v7321, %v7442
        %v7475 = vadd.f32 %v7326, %v7443
        %v7476 = vadd.f32 %v7329, %v7444
        %v7477 = vadd.f32 %v7334, %v7445
        %v7478 = vadd.f32 %v7337, %v7446
        %v7479 = vadd.f32 %v7342, %v7447
        %v7480 = vadd.f32 %v7345, %v7448
        %v7481 = vadd.f32 %v7350, %v7449
        %v7482 = vadd.f32 %v7353, %v7450
        %v7483 = vadd.f32 %v7358, %v7451
        %v7484 = vadd.f32 %v7361, %v7452
        %v7485 = vadd.f32 %v7366, %v7453
        %v7486 = vadd.f32 %v7369, %v7454
        %v7487 = vadd.f32 %v7374, %v7455
        %v7488 = vadd.f32 %v7377, %v7456
        %v7489 = vadd.f32 %v7382, %v7457
        %v7490 = vadd.f32 %v7385, %v7458
        %v7491 = vadd.f32 %v7390, %v7459
        %v7492 = vadd.f32 %v7393, %v7460
        %v7493 = vadd.f32 %v7398, %v7461
        %v7494 = vadd.f32 %v7401, %v7462
        %v7495 = vadd.f32 %v7406, %v7463
        %v7496 = vadd.f32 %v7409, %v7464
        %v7497 = vadd.f32 %v7414, %v7465
        %v7498 = vadd.f32 %v7417, %v7466
        %v7499 = vadd.f32 %v7422, %v7467
        %v7500 = vadd.f32 %v7425, %v7468
        %v7501 = vadd.f32 %v7430, %v7469
        %v7502 = vadd.f32 %v7433, %v7470
        %v7503 = vstv %s7437
        %v7504 = vmul.f32 %v7503, %v7101
        %v7505 = vmul.f32 %v7503, %v7102
        %v7506 = vmul.f32 %v7503, %v7103
        %v7507 = vmul.f32 %v7503, %v7104
        %v7508 = vmul.f32 %v7503, %v7105
        %v7509 = vmul.f32 %v7503, %v7106
        %v7510 = vmul.f32 %v7503, %v7107
        %v7511 = vmul.f32 %v7503, %v7108
        %v7512 = vmul.f32 %v7503, %v7109
        %v7513 = vmul.f32 %v7503, %v7110
        %v7514 = vmul.f32 %v7503, %v7111
        %v7515 = vmul.f32 %v7503, %v7112
        %v7516 = vmul.f32 %v7503, %v7113
        %v7517 = vmul.f32 %v7503, %v7114
        %v7518 = vmul.f32 %v7503, %v7115
        %v7519 = vmul.f32 %v7503, %v7116
        %v7520 = vmul.f32 %v7503, %v7117
        %v7521 = vmul.f32 %v7503, %v7118
        %v7522 = vmul.f32 %v7503, %v7119
        %v7523 = vmul.f32 %v7503, %v7120
        %v7524 = vmul.f32 %v7503, %v7121
        %v7525 = vmul.f32 %v7503, %v7122
        %v7526 = vmul.f32 %v7503, %v7123
        %v7527 = vmul.f32 %v7503, %v7124
        %v7528 = vmul.f32 %v7503, %v7125
        %v7529 = vmul.f32 %v7503, %v7126
        %v7530 = vmul.f32 %v7503, %v7127
        %v7531 = vmul.f32 %v7503, %v7128
        %v7532 = vmul.f32 %v7503, %v7129
        %v7533 = vmul.f32 %v7503, %v7130
        %v7534 = vmul.f32 %v7503, %v7131
        %v7535 = vmul.f32 %v7503, %v7132
        %v7536 = vadd.f32 %v7471, %v7504
        %v7537 = vadd.f32 %v7472, %v7505
        %v7538 = vadd.f32 %v7473, %v7506
        %v7539 = vadd.f32 %v7474, %v7507
        %v7540 = vadd.f32 %v7475, %v7508
        %v7541 = vadd.f32 %v7476, %v7509
        %v7542 = vadd.f32 %v7477, %v7510
        %v7543 = vadd.f32 %v7478, %v7511
        %v7544 = vadd.f32 %v7479, %v7512
        %v7545 = vadd.f32 %v7480, %v7513
        %v7546 = vadd.f32 %v7481, %v7514
        %v7547 = vadd.f32 %v7482, %v7515
        %v7548 = vadd.f32 %v7483, %v7516
        %v7549 = vadd.f32 %v7484, %v7517
        %v7550 = vadd.f32 %v7485, %v7518
        %v7551 = vadd.f32 %v7486, %v7519
        %v7552 = vadd.f32 %v7487, %v7520
        %v7553 = vadd.f32 %v7488, %v7521
        %v7554 = vadd.f32 %v7489, %v7522
        %v7555 = vadd.f32 %v7490, %v7523
        %v7556 = vadd.f32 %v7491, %v7524
        %v7557 = vadd.f32 %v7492, %v7525
        %v7558 = vadd.f32 %v7493, %v7526
        %v7559 = vadd.f32 %v7494, %v7527
        %v7560 = vadd.f32 %v7495, %v7528
        %v7561 = vadd.f32 %v7496, %v7529
        %v7562 = vadd.f32 %v7497, %v7530
        %v7563 = vadd.f32 %v7498, %v7531
        %v7564 = vadd.f32 %v7499, %v7532
        %v7565 = vadd.f32 %v7500, %v7533
        %v7566 = vadd.f32 %v7501, %v7534
        %v7567 = vadd.f32 %v7502, %v7535
        %v7568 = vld [vmem:[%s4087 + $0x1] sm:$0xff]
        %v7569 = vld [vmem:[%s4087 + $0x9] sm:$0xff]
        %v7570 = vld [vmem:[%s4087 + $0x19] sm:$0xff]
        %v7571 = vld [vmem:[%s4087 + $0x21] sm:$0xff]
        %v7572 = vld [vmem:[%s4087 + $0x31] sm:$0xff]
        %v7573 = vld [vmem:[%s4087 + $0x39] sm:$0xff]
        %v7574 = vld [vmem:[%s4087 + $0x49] sm:$0xff]
        %v7575 = vld [vmem:[%s4087 + $0x51] sm:$0xff]
        %v7576 = vld [vmem:[%s4087 + $0x61] sm:$0xff]
        %v7577 = vld [vmem:[%s4087 + $0x69] sm:$0xff]
        %v7578 = vld [vmem:[%s4087 + $0x79] sm:$0xff]
        %v7579 = vld [vmem:[%s4087 + $0x81] sm:$0xff]
        %v7580 = vld [vmem:[%s4087 + $0x91] sm:$0xff]
        %v7581 = vld [vmem:[%s4087 + $0x99] sm:$0xff]
        %v7582 = vld [vmem:[%s4087 + $0xa9] sm:$0xff]
        %v7583 = vld [vmem:[%s4087 + $0xb1] sm:$0xff]
        %v7584 = vld [vmem:[%s4087 + $0xc1] sm:$0xff]
        %v7585 = vld [vmem:[%s4087 + $0xc9] sm:$0xff]
        %v7586 = vld [vmem:[%s4087 + $0xd9] sm:$0xff]
        %v7587 = vld [vmem:[%s4087 + $0xe1] sm:$0xff]
        %v7588 = vld [vmem:[%s4087 + $0xf1] sm:$0xff]
        %v7589 = vld [vmem:[%s4087 + $0xf9] sm:$0xff]
        %v7590 = vld [vmem:[%s4087 + $0x109] sm:$0xff]
        %v7591 = vld [vmem:[%s4087 + $0x111] sm:$0xff]
        %v7592 = vld [vmem:[%s4087 + $0x121] sm:$0xff]
        %v7593 = vld [vmem:[%s4087 + $0x129] sm:$0xff]
        %v7594 = vld [vmem:[%s4087 + $0x139] sm:$0xff]
        %v7595 = vld [vmem:[%s4087 + $0x141] sm:$0xff]
        %v7596 = vld [vmem:[%s4087 + $0x151] sm:$0xff]
        %v7597 = vld [vmem:[%s4087 + $0x159] sm:$0xff]
        %v7598 = vld [vmem:[%s4087 + $0x169] sm:$0xff]
        %v7599 = vld [vmem:[%s4087 + $0x171] sm:$0xff]
        %v7600 = vadd.f32 %v7568, %v7536
        %v7601 = vadd.f32 %v7569, %v7537
        %v7602 = vadd.f32 %v7570, %v7538
        %v7603 = vadd.f32 %v7571, %v7539
        %v7604 = vadd.f32 %v7572, %v7540
        %v7605 = vadd.f32 %v7573, %v7541
        %v7606 = vadd.f32 %v7574, %v7542
        %v7607 = vadd.f32 %v7575, %v7543
        %v7608 = vadd.f32 %v7576, %v7544
        %v7609 = vadd.f32 %v7577, %v7545
        %v7610 = vadd.f32 %v7578, %v7546
        %v7611 = vadd.f32 %v7579, %v7547
        %v7612 = vadd.f32 %v7580, %v7548
        %v7613 = vadd.f32 %v7581, %v7549
        %v7614 = vadd.f32 %v7582, %v7550
        %v7615 = vadd.f32 %v7583, %v7551
        %v7616 = vadd.f32 %v7584, %v7552
        %v7617 = vadd.f32 %v7585, %v7553
        %v7618 = vadd.f32 %v7586, %v7554
        %v7619 = vadd.f32 %v7587, %v7555
        %v7620 = vadd.f32 %v7588, %v7556
        %v7621 = vadd.f32 %v7589, %v7557
        %v7622 = vadd.f32 %v7590, %v7558
        %v7623 = vadd.f32 %v7591, %v7559
        %v7624 = vadd.f32 %v7592, %v7560
        %v7625 = vadd.f32 %v7593, %v7561
        %v7626 = vadd.f32 %v7594, %v7562
        %v7627 = vadd.f32 %v7595, %v7563
        %v7628 = vadd.f32 %v7596, %v7564
        %v7629 = vadd.f32 %v7597, %v7565
        %v7630 = vadd.f32 %v7598, %v7566
        %v7631 = vadd.f32 %v7599, %v7567
        %7632 = vst.msk [vmem:[%s4087 + $0x1] sm:$0xff] %vm375, %v7600
        %7633 = vst.msk [vmem:[%s4087 + $0x9] sm:$0xff] %vm375, %v7601
        %7634 = vst.msk [vmem:[%s4087 + $0x19] sm:$0xff] %vm375, %v7602
        %7635 = vst.msk [vmem:[%s4087 + $0x21] sm:$0xff] %vm375, %v7603
        %7636 = vst.msk [vmem:[%s4087 + $0x31] sm:$0xff] %vm375, %v7604
        %7637 = vst.msk [vmem:[%s4087 + $0x39] sm:$0xff] %vm375, %v7605
        %7638 = vst.msk [vmem:[%s4087 + $0x49] sm:$0xff] %vm375, %v7606
        %7639 = vst.msk [vmem:[%s4087 + $0x51] sm:$0xff] %vm375, %v7607
        %7640 = vst.msk [vmem:[%s4087 + $0x61] sm:$0xff] %vm375, %v7608
        %7641 = vst.msk [vmem:[%s4087 + $0x69] sm:$0xff] %vm375, %v7609
        %7642 = vst.msk [vmem:[%s4087 + $0x79] sm:$0xff] %vm375, %v7610
        %7643 = vst.msk [vmem:[%s4087 + $0x81] sm:$0xff] %vm375, %v7611
        %7644 = vst.msk [vmem:[%s4087 + $0x91] sm:$0xff] %vm375, %v7612
        %7645 = vst.msk [vmem:[%s4087 + $0x99] sm:$0xff] %vm375, %v7613
        %7646 = vst.msk [vmem:[%s4087 + $0xa9] sm:$0xff] %vm375, %v7614
        %7647 = vst.msk [vmem:[%s4087 + $0xb1] sm:$0xff] %vm375, %v7615
        %7648 = vst.msk [vmem:[%s4087 + $0xc1] sm:$0xff] %vm375, %v7616
        %7649 = vst.msk [vmem:[%s4087 + $0xc9] sm:$0xff] %vm375, %v7617
        %7650 = vst.msk [vmem:[%s4087 + $0xd9] sm:$0xff] %vm375, %v7618
        %7651 = vst.msk [vmem:[%s4087 + $0xe1] sm:$0xff] %vm375, %v7619
        %7652 = vst.msk [vmem:[%s4087 + $0xf1] sm:$0xff] %vm375, %v7620
        %7653 = vst.msk [vmem:[%s4087 + $0xf9] sm:$0xff] %vm375, %v7621
        %7654 = vst.msk [vmem:[%s4087 + $0x109] sm:$0xff] %vm375, %v7622
        %7655 = vst.msk [vmem:[%s4087 + $0x111] sm:$0xff] %vm375, %v7623
        %7656 = vst.msk [vmem:[%s4087 + $0x121] sm:$0xff] %vm375, %v7624
        %7657 = vst.msk [vmem:[%s4087 + $0x129] sm:$0xff] %vm375, %v7625
        %7658 = vst.msk [vmem:[%s4087 + $0x139] sm:$0xff] %vm375, %v7626
        %7659 = vst.msk [vmem:[%s4087 + $0x141] sm:$0xff] %vm375, %v7627
        %7660 = vst.msk [vmem:[%s4087 + $0x151] sm:$0xff] %vm375, %v7628
        %7661 = vst.msk [vmem:[%s4087 + $0x159] sm:$0xff] %vm375, %v7629
        %7662 = vst.msk [vmem:[%s4087 + $0x169] sm:$0xff] %vm375, %v7630
        %7663 = vst.msk [vmem:[%s4087 + $0x171] sm:$0xff] %vm375, %v7631
        %s7664 = sld [smem:[#allocation6 + $0x201]]
        %s7665 = sld [smem:[#allocation6 + $0x204]]
        %v7666 = vstv %s7664
        %v7667 = vmul.f32 %v7666, %v5820
        %v7668 = vmul.f32 %v7666, %v5821
        %v7669 = vmul.f32 %v7666, %v5822
        %v7670 = vmul.f32 %v7666, %v5823
        %v7671 = vmul.f32 %v7666, %v5824
        %v7672 = vmul.f32 %v7666, %v5825
        %v7673 = vmul.f32 %v7666, %v5826
        %v7674 = vmul.f32 %v7666, %v5827
        %v7675 = vmul.f32 %v7666, %v5828
        %v7676 = vmul.f32 %v7666, %v5829
        %v7677 = vmul.f32 %v7666, %v5830
        %v7678 = vmul.f32 %v7666, %v5831
        %v7679 = vmul.f32 %v7666, %v5832
        %v7680 = vmul.f32 %v7666, %v5833
        %v7681 = vmul.f32 %v7666, %v5834
        %v7682 = vmul.f32 %v7666, %v5835
        %v7683 = vmul.f32 %v7666, %v5836
        %v7684 = vmul.f32 %v7666, %v5837
        %v7685 = vmul.f32 %v7666, %v5838
        %v7686 = vmul.f32 %v7666, %v5839
        %v7687 = vmul.f32 %v7666, %v5840
        %v7688 = vmul.f32 %v7666, %v5841
        %v7689 = vmul.f32 %v7666, %v5842
        %v7690 = vmul.f32 %v7666, %v5843
        %v7691 = vmul.f32 %v7666, %v5844
        %v7692 = vmul.f32 %v7666, %v5845
        %v7693 = vmul.f32 %v7666, %v5846
        %v7694 = vmul.f32 %v7666, %v5847
        %v7695 = vmul.f32 %v7666, %v5848
        %v7696 = vmul.f32 %v7666, %v5849
        %v7697 = vmul.f32 %v7666, %v5850
        %v7698 = vmul.f32 %v7666, %v5851
        %7731 = vrot.lane.b32.xlu0 %v7667, 8
        %v7732 = vpop.permute.xlu0 %7731
        %7733 = vrot.lane.b32.xlu0 %v7668, 8
        %v7734 = vpop.permute.xlu0 %7733
        %7735 = vrot.lane.b32.xlu0 %v7669, 8
        %v7736 = vpop.permute.xlu0 %7735
        %7737 = vrot.lane.b32.xlu0 %v7670, 8
        %v7738 = vpop.permute.xlu0 %7737
        %7739 = vrot.lane.b32.xlu0 %v7671, 8
        %v7740 = vpop.permute.xlu0 %7739
        %7741 = vrot.lane.b32.xlu0 %v7672, 8
        %v7742 = vpop.permute.xlu0 %7741
        %7743 = vrot.lane.b32.xlu0 %v7673, 8
        %v7744 = vpop.permute.xlu0 %7743
        %7745 = vrot.lane.b32.xlu0 %v7674, 8
        %v7746 = vpop.permute.xlu0 %7745
        %7747 = vrot.lane.b32.xlu0 %v7675, 8
        %v7748 = vpop.permute.xlu0 %7747
        %7749 = vrot.lane.b32.xlu0 %v7676, 8
        %v7750 = vpop.permute.xlu0 %7749
        %7751 = vrot.lane.b32.xlu0 %v7677, 8
        %v7752 = vpop.permute.xlu0 %7751
        %7753 = vrot.lane.b32.xlu0 %v7678, 8
        %v7754 = vpop.permute.xlu0 %7753
        %7755 = vrot.lane.b32.xlu0 %v7679, 8
        %v7756 = vpop.permute.xlu0 %7755
        %7757 = vrot.lane.b32.xlu0 %v7680, 8
        %v7758 = vpop.permute.xlu0 %7757
        %7759 = vrot.lane.b32.xlu0 %v7681, 8
        %v7760 = vpop.permute.xlu0 %7759
        %7761 = vrot.lane.b32.xlu0 %v7682, 8
        %v7762 = vpop.permute.xlu0 %7761
        %7763 = vrot.lane.b32.xlu0 %v7683, 8
        %v7764 = vpop.permute.xlu0 %7763
        %7765 = vrot.lane.b32.xlu0 %v7684, 8
        %v7766 = vpop.permute.xlu0 %7765
        %7767 = vrot.lane.b32.xlu0 %v7685, 8
        %v7768 = vpop.permute.xlu0 %7767
        %7769 = vrot.lane.b32.xlu0 %v7686, 8
        %v7770 = vpop.permute.xlu0 %7769
        %7771 = vrot.lane.b32.xlu0 %v7687, 8
        %v7772 = vpop.permute.xlu0 %7771
        %7773 = vrot.lane.b32.xlu0 %v7688, 8
        %v7774 = vpop.permute.xlu0 %7773
        %7775 = vrot.lane.b32.xlu0 %v7689, 8
        %v7776 = vpop.permute.xlu0 %7775
        %7777 = vrot.lane.b32.xlu0 %v7690, 8
        %v7778 = vpop.permute.xlu0 %7777
        %7779 = vrot.lane.b32.xlu0 %v7691, 8
        %v7780 = vpop.permute.xlu0 %7779
        %7781 = vrot.lane.b32.xlu0 %v7692, 8
        %v7782 = vpop.permute.xlu0 %7781
        %7783 = vrot.lane.b32.xlu0 %v7693, 8
        %v7784 = vpop.permute.xlu0 %7783
        %7785 = vrot.lane.b32.xlu0 %v7694, 8
        %v7786 = vpop.permute.xlu0 %7785
        %7787 = vrot.lane.b32.xlu0 %v7695, 8
        %v7788 = vpop.permute.xlu0 %7787
        %7789 = vrot.lane.b32.xlu0 %v7696, 8
        %v7790 = vpop.permute.xlu0 %7789
        %7791 = vrot.lane.b32.xlu0 %v7697, 8
        %v7792 = vpop.permute.xlu0 %7791
        %7793 = vrot.lane.b32.xlu0 %v7698, 8
        %v7794 = vpop.permute.xlu0 %7793
        %v7827 = vadd.f32 %v7310, %v7732
        %v7828 = vadd.f32 %v7313, %v7734
        %v7829 = vadd.f32 %v7318, %v7736
        %v7830 = vadd.f32 %v7321, %v7738
        %v7831 = vadd.f32 %v7326, %v7740
        %v7832 = vadd.f32 %v7329, %v7742
        %v7833 = vadd.f32 %v7334, %v7744
        %v7834 = vadd.f32 %v7337, %v7746
        %v7835 = vadd.f32 %v7342, %v7748
        %v7836 = vadd.f32 %v7345, %v7750
        %v7837 = vadd.f32 %v7350, %v7752
        %v7838 = vadd.f32 %v7353, %v7754
        %v7839 = vadd.f32 %v7358, %v7756
        %v7840 = vadd.f32 %v7361, %v7758
        %v7841 = vadd.f32 %v7366, %v7760
        %v7842 = vadd.f32 %v7369, %v7762
        %v7843 = vadd.f32 %v7374, %v7764
        %v7844 = vadd.f32 %v7377, %v7766
        %v7845 = vadd.f32 %v7382, %v7768
        %v7846 = vadd.f32 %v7385, %v7770
        %v7847 = vadd.f32 %v7390, %v7772
        %v7848 = vadd.f32 %v7393, %v7774
        %v7849 = vadd.f32 %v7398, %v7776
        %v7850 = vadd.f32 %v7401, %v7778
        %v7851 = vadd.f32 %v7406, %v7780
        %v7852 = vadd.f32 %v7409, %v7782
        %v7853 = vadd.f32 %v7414, %v7784
        %v7854 = vadd.f32 %v7417, %v7786
        %v7855 = vadd.f32 %v7422, %v7788
        %v7856 = vadd.f32 %v7425, %v7790
        %v7857 = vadd.f32 %v7430, %v7792
        %v7858 = vadd.f32 %v7433, %v7794
        %v7859 = vstv %s7665
        %v7860 = vmul.f32 %v7859, %v7101
        %v7861 = vmul.f32 %v7859, %v7102
        %v7862 = vmul.f32 %v7859, %v7103
        %v7863 = vmul.f32 %v7859, %v7104
        %v7864 = vmul.f32 %v7859, %v7105
        %v7865 = vmul.f32 %v7859, %v7106
        %v7866 = vmul.f32 %v7859, %v7107
        %v7867 = vmul.f32 %v7859, %v7108
        %v7868 = vmul.f32 %v7859, %v7109
        %v7869 = vmul.f32 %v7859, %v7110
        %v7870 = vmul.f32 %v7859, %v7111
        %v7871 = vmul.f32 %v7859, %v7112
        %v7872 = vmul.f32 %v7859, %v7113
        %v7873 = vmul.f32 %v7859, %v7114
        %v7874 = vmul.f32 %v7859, %v7115
        %v7875 = vmul.f32 %v7859, %v7116
        %v7876 = vmul.f32 %v7859, %v7117
        %v7877 = vmul.f32 %v7859, %v7118
        %v7878 = vmul.f32 %v7859, %v7119
        %v7879 = vmul.f32 %v7859, %v7120
        %v7880 = vmul.f32 %v7859, %v7121
        %v7881 = vmul.f32 %v7859, %v7122
        %v7882 = vmul.f32 %v7859, %v7123
        %v7883 = vmul.f32 %v7859, %v7124
        %v7884 = vmul.f32 %v7859, %v7125
        %v7885 = vmul.f32 %v7859, %v7126
        %v7886 = vmul.f32 %v7859, %v7127
        %v7887 = vmul.f32 %v7859, %v7128
        %v7888 = vmul.f32 %v7859, %v7129
        %v7889 = vmul.f32 %v7859, %v7130
        %v7890 = vmul.f32 %v7859, %v7131
        %v7891 = vmul.f32 %v7859, %v7132
        %7924 = vrot.lane.b32.xlu0 %v7860, 8
        %v7925 = vpop.permute.xlu0 %7924
        %7926 = vrot.lane.b32.xlu0 %v7861, 8
        %v7927 = vpop.permute.xlu0 %7926
        %7928 = vrot.lane.b32.xlu0 %v7862, 8
        %v7929 = vpop.permute.xlu0 %7928
        %7930 = vrot.lane.b32.xlu0 %v7863, 8
        %v7931 = vpop.permute.xlu0 %7930
        %7932 = vrot.lane.b32.xlu0 %v7864, 8
        %v7933 = vpop.permute.xlu0 %7932
        %7934 = vrot.lane.b32.xlu0 %v7865, 8
        %v7935 = vpop.permute.xlu0 %7934
        %7936 = vrot.lane.b32.xlu0 %v7866, 8
        %v7937 = vpop.permute.xlu0 %7936
        %7938 = vrot.lane.b32.xlu0 %v7867, 8
        %v7939 = vpop.permute.xlu0 %7938
        %7940 = vrot.lane.b32.xlu0 %v7868, 8
        %v7941 = vpop.permute.xlu0 %7940
        %7942 = vrot.lane.b32.xlu0 %v7869, 8
        %v7943 = vpop.permute.xlu0 %7942
        %7944 = vrot.lane.b32.xlu0 %v7870, 8
        %v7945 = vpop.permute.xlu0 %7944
        %7946 = vrot.lane.b32.xlu0 %v7871, 8
        %v7947 = vpop.permute.xlu0 %7946
        %7948 = vrot.lane.b32.xlu0 %v7872, 8
        %v7949 = vpop.permute.xlu0 %7948
        %7950 = vrot.lane.b32.xlu0 %v7873, 8
        %v7951 = vpop.permute.xlu0 %7950
        %7952 = vrot.lane.b32.xlu0 %v7874, 8
        %v7953 = vpop.permute.xlu0 %7952
        %7954 = vrot.lane.b32.xlu0 %v7875, 8
        %v7955 = vpop.permute.xlu0 %7954
        %7956 = vrot.lane.b32.xlu0 %v7876, 8
        %v7957 = vpop.permute.xlu0 %7956
        %7958 = vrot.lane.b32.xlu0 %v7877, 8
        %v7959 = vpop.permute.xlu0 %7958
        %7960 = vrot.lane.b32.xlu0 %v7878, 8
        %v7961 = vpop.permute.xlu0 %7960
        %7962 = vrot.lane.b32.xlu0 %v7879, 8
        %v7963 = vpop.permute.xlu0 %7962
        %7964 = vrot.lane.b32.xlu0 %v7880, 8
        %v7965 = vpop.permute.xlu0 %7964
        %7966 = vrot.lane.b32.xlu0 %v7881, 8
        %v7967 = vpop.permute.xlu0 %7966
        %7968 = vrot.lane.b32.xlu0 %v7882, 8
        %v7969 = vpop.permute.xlu0 %7968
        %7970 = vrot.lane.b32.xlu0 %v7883, 8
        %v7971 = vpop.permute.xlu0 %7970
        %7972 = vrot.lane.b32.xlu0 %v7884, 8
        %v7973 = vpop.permute.xlu0 %7972
        %7974 = vrot.lane.b32.xlu0 %v7885, 8
        %v7975 = vpop.permute.xlu0 %7974
        %7976 = vrot.lane.b32.xlu0 %v7886, 8
        %v7977 = vpop.permute.xlu0 %7976
        %7978 = vrot.lane.b32.xlu0 %v7887, 8
        %v7979 = vpop.permute.xlu0 %7978
        %7980 = vrot.lane.b32.xlu0 %v7888, 8
        %v7981 = vpop.permute.xlu0 %7980
        %7982 = vrot.lane.b32.xlu0 %v7889, 8
        %v7983 = vpop.permute.xlu0 %7982
        %7984 = vrot.lane.b32.xlu0 %v7890, 8
        %v7985 = vpop.permute.xlu0 %7984
        %7986 = vrot.lane.b32.xlu0 %v7891, 8
        %v7987 = vpop.permute.xlu0 %7986
        %v8020 = vadd.f32 %v7827, %v7925
        %v8021 = vadd.f32 %v7828, %v7927
        %v8022 = vadd.f32 %v7829, %v7929
        %v8023 = vadd.f32 %v7830, %v7931
        %v8024 = vadd.f32 %v7831, %v7933
        %v8025 = vadd.f32 %v7832, %v7935
        %v8026 = vadd.f32 %v7833, %v7937
        %v8027 = vadd.f32 %v7834, %v7939
        %v8028 = vadd.f32 %v7835, %v7941
        %v8029 = vadd.f32 %v7836, %v7943
        %v8030 = vadd.f32 %v7837, %v7945
        %v8031 = vadd.f32 %v7838, %v7947
        %v8032 = vadd.f32 %v7839, %v7949
        %v8033 = vadd.f32 %v7840, %v7951
        %v8034 = vadd.f32 %v7841, %v7953
        %v8035 = vadd.f32 %v7842, %v7955
        %v8036 = vadd.f32 %v7843, %v7957
        %v8037 = vadd.f32 %v7844, %v7959
        %v8038 = vadd.f32 %v7845, %v7961
        %v8039 = vadd.f32 %v7846, %v7963
        %v8040 = vadd.f32 %v7847, %v7965
        %v8041 = vadd.f32 %v7848, %v7967
        %v8042 = vadd.f32 %v7849, %v7969
        %v8043 = vadd.f32 %v7850, %v7971
        %v8044 = vadd.f32 %v7851, %v7973
        %v8045 = vadd.f32 %v7852, %v7975
        %v8046 = vadd.f32 %v7853, %v7977
        %v8047 = vadd.f32 %v7854, %v7979
        %v8048 = vadd.f32 %v7855, %v7981
        %v8049 = vadd.f32 %v7856, %v7983
        %v8050 = vadd.f32 %v7857, %v7985
        %v8051 = vadd.f32 %v7858, %v7987
        %v8052 = vld [vmem:[%s373] sm:$0xff]
        %v8053 = vld [vmem:[%s373 + $0x8] sm:$0xff]
        %v8054 = vld [vmem:[%s373 + $0x10] sm:$0xff]
        %v8055 = vld [vmem:[%s373 + $0x18] sm:$0xff]
        %v8056 = vld [vmem:[%s373 + $0x20] sm:$0xff]
        %v8057 = vld [vmem:[%s373 + $0x28] sm:$0xff]
        %v8058 = vld [vmem:[%s373 + $0x30] sm:$0xff]
        %v8059 = vld [vmem:[%s373 + $0x38] sm:$0xff]
        %v8060 = vld [vmem:[%s373 + $0x40] sm:$0xff]
        %v8061 = vld [vmem:[%s373 + $0x48] sm:$0xff]
        %v8062 = vld [vmem:[%s373 + $0x50] sm:$0xff]
        %v8063 = vld [vmem:[%s373 + $0x58] sm:$0xff]
        %v8064 = vld [vmem:[%s373 + $0x60] sm:$0xff]
        %v8065 = vld [vmem:[%s373 + $0x68] sm:$0xff]
        %v8066 = vld [vmem:[%s373 + $0x70] sm:$0xff]
        %v8067 = vld [vmem:[%s373 + $0x78] sm:$0xff]
        %v8068 = vld [vmem:[%s373 + $0x80] sm:$0xff]
        %v8069 = vld [vmem:[%s373 + $0x88] sm:$0xff]
        %v8070 = vld [vmem:[%s373 + $0x90] sm:$0xff]
        %v8071 = vld [vmem:[%s373 + $0x98] sm:$0xff]
        %v8072 = vld [vmem:[%s373 + $0xa0] sm:$0xff]
        %v8073 = vld [vmem:[%s373 + $0xa8] sm:$0xff]
        %v8074 = vld [vmem:[%s373 + $0xb0] sm:$0xff]
        %v8075 = vld [vmem:[%s373 + $0xb8] sm:$0xff]
        %v8076 = vld [vmem:[%s373 + $0xc0] sm:$0xff]
        %v8077 = vld [vmem:[%s373 + $0xc8] sm:$0xff]
        %v8078 = vld [vmem:[%s373 + $0xd0] sm:$0xff]
        %v8079 = vld [vmem:[%s373 + $0xd8] sm:$0xff]
        %v8080 = vld [vmem:[%s373 + $0xe0] sm:$0xff]
        %v8081 = vld [vmem:[%s373 + $0xe8] sm:$0xff]
        %v8082 = vld [vmem:[%s373 + $0xf0] sm:$0xff]
        %v8083 = vld [vmem:[%s373 + $0xf8] sm:$0xff]
        %8116 = vrot.lane.b32.xlu0 %v8020, 120
        %v8117 = vpop.permute.xlu0 %8116
        %8118 = vrot.lane.b32.xlu0 %v8021, 120
        %v8119 = vpop.permute.xlu0 %8118
        %8120 = vrot.lane.b32.xlu0 %v8022, 120
        %v8121 = vpop.permute.xlu0 %8120
        %8122 = vrot.lane.b32.xlu0 %v8023, 120
        %v8123 = vpop.permute.xlu0 %8122
        %8124 = vrot.lane.b32.xlu0 %v8024, 120
        %v8125 = vpop.permute.xlu0 %8124
        %8126 = vrot.lane.b32.xlu0 %v8025, 120
        %v8127 = vpop.permute.xlu0 %8126
        %8128 = vrot.lane.b32.xlu0 %v8026, 120
        %v8129 = vpop.permute.xlu0 %8128
        %8130 = vrot.lane.b32.xlu0 %v8027, 120
        %v8131 = vpop.permute.xlu0 %8130
        %8132 = vrot.lane.b32.xlu0 %v8028, 120
        %v8133 = vpop.permute.xlu0 %8132
        %8134 = vrot.lane.b32.xlu0 %v8029, 120
        %v8135 = vpop.permute.xlu0 %8134
        %8136 = vrot.lane.b32.xlu0 %v8030, 120
        %v8137 = vpop.permute.xlu0 %8136
        %8138 = vrot.lane.b32.xlu0 %v8031, 120
        %v8139 = vpop.permute.xlu0 %8138
        %8140 = vrot.lane.b32.xlu0 %v8032, 120
        %v8141 = vpop.permute.xlu0 %8140
        %8142 = vrot.lane.b32.xlu0 %v8033, 120
        %v8143 = vpop.permute.xlu0 %8142
        %8144 = vrot.lane.b32.xlu0 %v8034, 120
        %v8145 = vpop.permute.xlu0 %8144
        %8146 = vrot.lane.b32.xlu0 %v8035, 120
        %v8147 = vpop.permute.xlu0 %8146
        %8148 = vrot.lane.b32.xlu0 %v8036, 120
        %v8149 = vpop.permute.xlu0 %8148
        %8150 = vrot.lane.b32.xlu0 %v8037, 120
        %v8151 = vpop.permute.xlu0 %8150
        %8152 = vrot.lane.b32.xlu0 %v8038, 120
        %v8153 = vpop.permute.xlu0 %8152
        %8154 = vrot.lane.b32.xlu0 %v8039, 120
        %v8155 = vpop.permute.xlu0 %8154
        %8156 = vrot.lane.b32.xlu0 %v8040, 120
        %v8157 = vpop.permute.xlu0 %8156
        %8158 = vrot.lane.b32.xlu0 %v8041, 120
        %v8159 = vpop.permute.xlu0 %8158
        %8160 = vrot.lane.b32.xlu0 %v8042, 120
        %v8161 = vpop.permute.xlu0 %8160
        %8162 = vrot.lane.b32.xlu0 %v8043, 120
        %v8163 = vpop.permute.xlu0 %8162
        %8164 = vrot.lane.b32.xlu0 %v8044, 120
        %v8165 = vpop.permute.xlu0 %8164
        %8166 = vrot.lane.b32.xlu0 %v8045, 120
        %v8167 = vpop.permute.xlu0 %8166
        %8168 = vrot.lane.b32.xlu0 %v8046, 120
        %v8169 = vpop.permute.xlu0 %8168
        %8170 = vrot.lane.b32.xlu0 %v8047, 120
        %v8171 = vpop.permute.xlu0 %8170
        %8172 = vrot.lane.b32.xlu0 %v8048, 120
        %v8173 = vpop.permute.xlu0 %8172
        %8174 = vrot.lane.b32.xlu0 %v8049, 120
        %v8175 = vpop.permute.xlu0 %8174
        %8176 = vrot.lane.b32.xlu0 %v8050, 120
        %v8177 = vpop.permute.xlu0 %8176
        %8178 = vrot.lane.b32.xlu0 %v8051, 120
        %v8179 = vpop.permute.xlu0 %8178
        %v8212 = vadd.f32 %v8052, %v8117
        %v8213 = vadd.f32 %v8053, %v8119
        %v8214 = vadd.f32 %v8054, %v8121
        %v8215 = vadd.f32 %v8055, %v8123
        %v8216 = vadd.f32 %v8056, %v8125
        %v8217 = vadd.f32 %v8057, %v8127
        %v8218 = vadd.f32 %v8058, %v8129
        %v8219 = vadd.f32 %v8059, %v8131
        %v8220 = vadd.f32 %v8060, %v8133
        %v8221 = vadd.f32 %v8061, %v8135
        %v8222 = vadd.f32 %v8062, %v8137
        %v8223 = vadd.f32 %v8063, %v8139
        %v8224 = vadd.f32 %v8064, %v8141
        %v8225 = vadd.f32 %v8065, %v8143
        %v8226 = vadd.f32 %v8066, %v8145
        %v8227 = vadd.f32 %v8067, %v8147
        %v8228 = vadd.f32 %v8068, %v8149
        %v8229 = vadd.f32 %v8069, %v8151
        %v8230 = vadd.f32 %v8070, %v8153
        %v8231 = vadd.f32 %v8071, %v8155
        %v8232 = vadd.f32 %v8072, %v8157
        %v8233 = vadd.f32 %v8073, %v8159
        %v8234 = vadd.f32 %v8074, %v8161
        %v8235 = vadd.f32 %v8075, %v8163
        %v8236 = vadd.f32 %v8076, %v8165
        %v8237 = vadd.f32 %v8077, %v8167
        %v8238 = vadd.f32 %v8078, %v8169
        %v8239 = vadd.f32 %v8079, %v8171
        %v8240 = vadd.f32 %v8080, %v8173
        %v8241 = vadd.f32 %v8081, %v8175
        %v8242 = vadd.f32 %v8082, %v8177
        %v8243 = vadd.f32 %v8083, %v8179
        %8244 = vst.msk [vmem:[%s373] sm:$0xff] %vm375, %v8212
        %8245 = vst.msk [vmem:[%s373 + $0x8] sm:$0xff] %vm375, %v8213
        %8246 = vst.msk [vmem:[%s373 + $0x10] sm:$0xff] %vm375, %v8214
        %8247 = vst.msk [vmem:[%s373 + $0x18] sm:$0xff] %vm375, %v8215
        %8248 = vst.msk [vmem:[%s373 + $0x20] sm:$0xff] %vm375, %v8216
        %8249 = vst.msk [vmem:[%s373 + $0x28] sm:$0xff] %vm375, %v8217
        %8250 = vst.msk [vmem:[%s373 + $0x30] sm:$0xff] %vm375, %v8218
        %8251 = vst.msk [vmem:[%s373 + $0x38] sm:$0xff] %vm375, %v8219
        %8252 = vst.msk [vmem:[%s373 + $0x40] sm:$0xff] %vm375, %v8220
        %8253 = vst.msk [vmem:[%s373 + $0x48] sm:$0xff] %vm375, %v8221
        %8254 = vst.msk [vmem:[%s373 + $0x50] sm:$0xff] %vm375, %v8222
        %8255 = vst.msk [vmem:[%s373 + $0x58] sm:$0xff] %vm375, %v8223
        %8256 = vst.msk [vmem:[%s373 + $0x60] sm:$0xff] %vm375, %v8224
        %8257 = vst.msk [vmem:[%s373 + $0x68] sm:$0xff] %vm375, %v8225
        %8258 = vst.msk [vmem:[%s373 + $0x70] sm:$0xff] %vm375, %v8226
        %8259 = vst.msk [vmem:[%s373 + $0x78] sm:$0xff] %vm375, %v8227
        %8260 = vst.msk [vmem:[%s373 + $0x80] sm:$0xff] %vm375, %v8228
        %8261 = vst.msk [vmem:[%s373 + $0x88] sm:$0xff] %vm375, %v8229
        %8262 = vst.msk [vmem:[%s373 + $0x90] sm:$0xff] %vm375, %v8230
        %8263 = vst.msk [vmem:[%s373 + $0x98] sm:$0xff] %vm375, %v8231
        %8264 = vst.msk [vmem:[%s373 + $0xa0] sm:$0xff] %vm375, %v8232
        %8265 = vst.msk [vmem:[%s373 + $0xa8] sm:$0xff] %vm375, %v8233
        %8266 = vst.msk [vmem:[%s373 + $0xb0] sm:$0xff] %vm375, %v8234
        %8267 = vst.msk [vmem:[%s373 + $0xb8] sm:$0xff] %vm375, %v8235
        %8268 = vst.msk [vmem:[%s373 + $0xc0] sm:$0xff] %vm375, %v8236
        %8269 = vst.msk [vmem:[%s373 + $0xc8] sm:$0xff] %vm375, %v8237
        %8270 = vst.msk [vmem:[%s373 + $0xd0] sm:$0xff] %vm375, %v8238
        %8271 = vst.msk [vmem:[%s373 + $0xd8] sm:$0xff] %vm375, %v8239
        %8272 = vst.msk [vmem:[%s373 + $0xe0] sm:$0xff] %vm375, %v8240
        %8273 = vst.msk [vmem:[%s373 + $0xe8] sm:$0xff] %vm375, %v8241
        %8274 = vst.msk [vmem:[%s373 + $0xf0] sm:$0xff] %vm375, %v8242
        %8275 = vst.msk [vmem:[%s373 + $0xf8] sm:$0xff] %vm375, %v8243
        %v8276 = vld [vmem:[#allocation5] sm:$0xff]
        %v8277 = vld [vmem:[#allocation5 + $0x8] sm:$0xff]
        %v8278 = vld [vmem:[#allocation5 + $0x18] sm:$0xff]
        %v8279 = vld [vmem:[#allocation5 + $0x20] sm:$0xff]
        %v8280 = vld [vmem:[#allocation5 + $0x30] sm:$0xff]
        %v8281 = vld [vmem:[#allocation5 + $0x38] sm:$0xff]
        %v8282 = vld [vmem:[#allocation5 + $0x48] sm:$0xff]
        %v8283 = vld [vmem:[#allocation5 + $0x50] sm:$0xff]
        %v8284 = vld [vmem:[#allocation5 + $0x60] sm:$0xff]
        %v8285 = vld [vmem:[#allocation5 + $0x68] sm:$0xff]
        %v8286 = vld [vmem:[#allocation5 + $0x78] sm:$0xff]
        %v8287 = vld [vmem:[#allocation5 + $0x80] sm:$0xff]
        %v8288 = vld [vmem:[#allocation5 + $0x90] sm:$0xff]
        %v8289 = vld [vmem:[#allocation5 + $0x98] sm:$0xff]
        %v8290 = vld [vmem:[#allocation5 + $0xa8] sm:$0xff]
        %v8291 = vld [vmem:[#allocation5 + $0xb0] sm:$0xff]
        %v8292 = vld [vmem:[#allocation5 + $0xc0] sm:$0xff]
        %v8293 = vld [vmem:[#allocation5 + $0xc8] sm:$0xff]
        %v8294 = vld [vmem:[#allocation5 + $0xd8] sm:$0xff]
        %v8295 = vld [vmem:[#allocation5 + $0xe0] sm:$0xff]
        %v8296 = vld [vmem:[#allocation5 + $0xf0] sm:$0xff]
        %v8297 = vld [vmem:[#allocation5 + $0xf8] sm:$0xff]
        %v8298 = vld [vmem:[#allocation5 + $0x108] sm:$0xff]
        %v8299 = vld [vmem:[#allocation5 + $0x110] sm:$0xff]
        %v8300 = vld [vmem:[#allocation5 + $0x120] sm:$0xff]
        %v8301 = vld [vmem:[#allocation5 + $0x128] sm:$0xff]
        %v8302 = vld [vmem:[#allocation5 + $0x138] sm:$0xff]
        %v8303 = vld [vmem:[#allocation5 + $0x140] sm:$0xff]
        %v8304 = vld [vmem:[#allocation5 + $0x150] sm:$0xff]
        %v8305 = vld [vmem:[#allocation5 + $0x158] sm:$0xff]
        %v8306 = vld [vmem:[#allocation5 + $0x168] sm:$0xff]
        %v8307 = vld [vmem:[#allocation5 + $0x170] sm:$0xff]
        %v8308 = vadd.f32 %v8276, 0.0
        %v8309 = vadd.f32 %v8277, 0.0
        %v8310 = vadd.f32 %v8278, 0.0
        %v8311 = vadd.f32 %v8279, 0.0
        %v8312 = vadd.f32 %v8280, 0.0
        %v8313 = vadd.f32 %v8281, 0.0
        %v8314 = vadd.f32 %v8282, 0.0
        %v8315 = vadd.f32 %v8283, 0.0
        %v8316 = vadd.f32 %v8284, 0.0
        %v8317 = vadd.f32 %v8285, 0.0
        %v8318 = vadd.f32 %v8286, 0.0
        %v8319 = vadd.f32 %v8287, 0.0
        %v8320 = vadd.f32 %v8288, 0.0
        %v8321 = vadd.f32 %v8289, 0.0
        %v8322 = vadd.f32 %v8290, 0.0
        %v8323 = vadd.f32 %v8291, 0.0
        %v8324 = vadd.f32 %v8292, 0.0
        %v8325 = vadd.f32 %v8293, 0.0
        %v8326 = vadd.f32 %v8294, 0.0
        %v8327 = vadd.f32 %v8295, 0.0
        %v8328 = vadd.f32 %v8296, 0.0
        %v8329 = vadd.f32 %v8297, 0.0
        %v8330 = vadd.f32 %v8298, 0.0
        %v8331 = vadd.f32 %v8299, 0.0
        %v8332 = vadd.f32 %v8300, 0.0
        %v8333 = vadd.f32 %v8301, 0.0
        %v8334 = vadd.f32 %v8302, 0.0
        %v8335 = vadd.f32 %v8303, 0.0
        %v8336 = vadd.f32 %v8304, 0.0
        %v8337 = vadd.f32 %v8305, 0.0
        %v8338 = vadd.f32 %v8306, 0.0
        %v8339 = vadd.f32 %v8307, 0.0
        %v8340 = vmax.f32 %v8276, 0.0
        %v8341 = vmax.f32 %v8277, 0.0
        %v8342 = vmax.f32 %v8278, 0.0
        %v8343 = vmax.f32 %v8279, 0.0
        %v8344 = vmax.f32 %v8280, 0.0
        %v8345 = vmax.f32 %v8281, 0.0
        %v8346 = vmax.f32 %v8282, 0.0
        %v8347 = vmax.f32 %v8283, 0.0
        %v8348 = vmax.f32 %v8284, 0.0
        %v8349 = vmax.f32 %v8285, 0.0
        %v8350 = vmax.f32 %v8286, 0.0
        %v8351 = vmax.f32 %v8287, 0.0
        %v8352 = vmax.f32 %v8288, 0.0
        %v8353 = vmax.f32 %v8289, 0.0
        %v8354 = vmax.f32 %v8290, 0.0
        %v8355 = vmax.f32 %v8291, 0.0
        %v8356 = vmax.f32 %v8292, 0.0
        %v8357 = vmax.f32 %v8293, 0.0
        %v8358 = vmax.f32 %v8294, 0.0
        %v8359 = vmax.f32 %v8295, 0.0
        %v8360 = vmax.f32 %v8296, 0.0
        %v8361 = vmax.f32 %v8297, 0.0
        %v8362 = vmax.f32 %v8298, 0.0
        %v8363 = vmax.f32 %v8299, 0.0
        %v8364 = vmax.f32 %v8300, 0.0
        %v8365 = vmax.f32 %v8301, 0.0
        %v8366 = vmax.f32 %v8302, 0.0
        %v8367 = vmax.f32 %v8303, 0.0
        %v8368 = vmax.f32 %v8304, 0.0
        %v8369 = vmax.f32 %v8305, 0.0
        %v8370 = vmax.f32 %v8306, 0.0
        %v8371 = vmax.f32 %v8307, 0.0
        %8372 = vst.msk [vmem:[#allocation2] sm:$0xff] %vm375, %v8340
        %8373 = vst.msk [vmem:[#allocation2 + $0x8] sm:$0xff] %vm375, %v8341
        %8374 = vst.msk [vmem:[#allocation2 + $0x10] sm:$0xff] %vm375, %v8342
        %8375 = vst.msk [vmem:[#allocation2 + $0x18] sm:$0xff] %vm375, %v8343
        %8376 = vst.msk [vmem:[#allocation2 + $0x20] sm:$0xff] %vm375, %v8344
        %8377 = vst.msk [vmem:[#allocation2 + $0x28] sm:$0xff] %vm375, %v8345
        %8378 = vst.msk [vmem:[#allocation2 + $0x30] sm:$0xff] %vm375, %v8346
        %8379 = vst.msk [vmem:[#allocation2 + $0x38] sm:$0xff] %vm375, %v8347
        %8380 = vst.msk [vmem:[#allocation2 + $0x40] sm:$0xff] %vm375, %v8348
        %8381 = vst.msk [vmem:[#allocation2 + $0x48] sm:$0xff] %vm375, %v8349
        %8382 = vst.msk [vmem:[#allocation2 + $0x50] sm:$0xff] %vm375, %v8350
        %8383 = vst.msk [vmem:[#allocation2 + $0x58] sm:$0xff] %vm375, %v8351
        %8384 = vst.msk [vmem:[#allocation2 + $0x60] sm:$0xff] %vm375, %v8352
        %8385 = vst.msk [vmem:[#allocation2 + $0x68] sm:$0xff] %vm375, %v8353
        %8386 = vst.msk [vmem:[#allocation2 + $0x70] sm:$0xff] %vm375, %v8354
        %8387 = vst.msk [vmem:[#allocation2 + $0x78] sm:$0xff] %vm375, %v8355
        %8388 = vst.msk [vmem:[#allocation2 + $0x80] sm:$0xff] %vm375, %v8356
        %8389 = vst.msk [vmem:[#allocation2 + $0x88] sm:$0xff] %vm375, %v8357
        %8390 = vst.msk [vmem:[#allocation2 + $0x90] sm:$0xff] %vm375, %v8358
        %8391 = vst.msk [vmem:[#allocation2 + $0x98] sm:$0xff] %vm375, %v8359
        %8392 = vst.msk [vmem:[#allocation2 + $0xa0] sm:$0xff] %vm375, %v8360
        %8393 = vst.msk [vmem:[#allocation2 + $0xa8] sm:$0xff] %vm375, %v8361
        %8394 = vst.msk [vmem:[#allocation2 + $0xb0] sm:$0xff] %vm375, %v8362
        %8395 = vst.msk [vmem:[#allocation2 + $0xb8] sm:$0xff] %vm375, %v8363
        %8396 = vst.msk [vmem:[#allocation2 + $0xc0] sm:$0xff] %vm375, %v8364
        %8397 = vst.msk [vmem:[#allocation2 + $0xc8] sm:$0xff] %vm375, %v8365
        %8398 = vst.msk [vmem:[#allocation2 + $0xd0] sm:$0xff] %vm375, %v8366
        %8399 = vst.msk [vmem:[#allocation2 + $0xd8] sm:$0xff] %vm375, %v8367
        %8400 = vst.msk [vmem:[#allocation2 + $0xe0] sm:$0xff] %vm375, %v8368
        %8401 = vst.msk [vmem:[#allocation2 + $0xe8] sm:$0xff] %vm375, %v8369
        %8402 = vst.msk [vmem:[#allocation2 + $0xf0] sm:$0xff] %vm375, %v8370
        %8403 = vst.msk [vmem:[#allocation2 + $0xf8] sm:$0xff] %vm375, %v8371
        %v8404 = vld [vmem:[#allocation5 + $0x1] sm:$0xff]
        %v8405 = vld [vmem:[#allocation5 + $0x9] sm:$0xff]
        %v8406 = vld [vmem:[#allocation5 + $0x19] sm:$0xff]
        %v8407 = vld [vmem:[#allocation5 + $0x21] sm:$0xff]
        %v8408 = vld [vmem:[#allocation5 + $0x31] sm:$0xff]
        %v8409 = vld [vmem:[#allocation5 + $0x39] sm:$0xff]
        %v8410 = vld [vmem:[#allocation5 + $0x49] sm:$0xff]
        %v8411 = vld [vmem:[#allocation5 + $0x51] sm:$0xff]
        %v8412 = vld [vmem:[#allocation5 + $0x61] sm:$0xff]
        %v8413 = vld [vmem:[#allocation5 + $0x69] sm:$0xff]
        %v8414 = vld [vmem:[#allocation5 + $0x79] sm:$0xff]
        %v8415 = vld [vmem:[#allocation5 + $0x81] sm:$0xff]
        %v8416 = vld [vmem:[#allocation5 + $0x91] sm:$0xff]
        %v8417 = vld [vmem:[#allocation5 + $0x99] sm:$0xff]
        %v8418 = vld [vmem:[#allocation5 + $0xa9] sm:$0xff]
        %v8419 = vld [vmem:[#allocation5 + $0xb1] sm:$0xff]
        %v8420 = vld [vmem:[#allocation5 + $0xc1] sm:$0xff]
        %v8421 = vld [vmem:[#allocation5 + $0xc9] sm:$0xff]
        %v8422 = vld [vmem:[#allocation5 + $0xd9] sm:$0xff]
        %v8423 = vld [vmem:[#allocation5 + $0xe1] sm:$0xff]
        %v8424 = vld [vmem:[#allocation5 + $0xf1] sm:$0xff]
        %v8425 = vld [vmem:[#allocation5 + $0xf9] sm:$0xff]
        %v8426 = vld [vmem:[#allocation5 + $0x109] sm:$0xff]
        %v8427 = vld [vmem:[#allocation5 + $0x111] sm:$0xff]
        %v8428 = vld [vmem:[#allocation5 + $0x121] sm:$0xff]
        %v8429 = vld [vmem:[#allocation5 + $0x129] sm:$0xff]
        %v8430 = vld [vmem:[#allocation5 + $0x139] sm:$0xff]
        %v8431 = vld [vmem:[#allocation5 + $0x141] sm:$0xff]
        %v8432 = vld [vmem:[#allocation5 + $0x151] sm:$0xff]
        %v8433 = vld [vmem:[#allocation5 + $0x159] sm:$0xff]
        %v8434 = vld [vmem:[#allocation5 + $0x169] sm:$0xff]
        %v8435 = vld [vmem:[#allocation5 + $0x171] sm:$0xff]
        %v8436 = vadd.f32 %v8308, %v8404
        %v8437 = vadd.f32 %v8309, %v8405
        %v8438 = vadd.f32 %v8310, %v8406
        %v8439 = vadd.f32 %v8311, %v8407
        %v8440 = vadd.f32 %v8312, %v8408
        %v8441 = vadd.f32 %v8313, %v8409
        %v8442 = vadd.f32 %v8314, %v8410
        %v8443 = vadd.f32 %v8315, %v8411
        %v8444 = vadd.f32 %v8316, %v8412
        %v8445 = vadd.f32 %v8317, %v8413
        %v8446 = vadd.f32 %v8318, %v8414
        %v8447 = vadd.f32 %v8319, %v8415
        %v8448 = vadd.f32 %v8320, %v8416
        %v8449 = vadd.f32 %v8321, %v8417
        %v8450 = vadd.f32 %v8322, %v8418
        %v8451 = vadd.f32 %v8323, %v8419
        %v8452 = vadd.f32 %v8324, %v8420
        %v8453 = vadd.f32 %v8325, %v8421
        %v8454 = vadd.f32 %v8326, %v8422
        %v8455 = vadd.f32 %v8327, %v8423
        %v8456 = vadd.f32 %v8328, %v8424
        %v8457 = vadd.f32 %v8329, %v8425
        %v8458 = vadd.f32 %v8330, %v8426
        %v8459 = vadd.f32 %v8331, %v8427
        %v8460 = vadd.f32 %v8332, %v8428
        %v8461 = vadd.f32 %v8333, %v8429
        %v8462 = vadd.f32 %v8334, %v8430
        %v8463 = vadd.f32 %v8335, %v8431
        %v8464 = vadd.f32 %v8336, %v8432
        %v8465 = vadd.f32 %v8337, %v8433
        %v8466 = vadd.f32 %v8338, %v8434
        %v8467 = vadd.f32 %v8339, %v8435
        %v8468 = vmax.f32 %v8404, 0.0
        %v8469 = vmax.f32 %v8405, 0.0
        %v8470 = vmax.f32 %v8406, 0.0
        %v8471 = vmax.f32 %v8407, 0.0
        %v8472 = vmax.f32 %v8408, 0.0
        %v8473 = vmax.f32 %v8409, 0.0
        %v8474 = vmax.f32 %v8410, 0.0
        %v8475 = vmax.f32 %v8411, 0.0
        %v8476 = vmax.f32 %v8412, 0.0
        %v8477 = vmax.f32 %v8413, 0.0
        %v8478 = vmax.f32 %v8414, 0.0
        %v8479 = vmax.f32 %v8415, 0.0
        %v8480 = vmax.f32 %v8416, 0.0
        %v8481 = vmax.f32 %v8417, 0.0
        %v8482 = vmax.f32 %v8418, 0.0
        %v8483 = vmax.f32 %v8419, 0.0
        %v8484 = vmax.f32 %v8420, 0.0
        %v8485 = vmax.f32 %v8421, 0.0
        %v8486 = vmax.f32 %v8422, 0.0
        %v8487 = vmax.f32 %v8423, 0.0
        %v8488 = vmax.f32 %v8424, 0.0
        %v8489 = vmax.f32 %v8425, 0.0
        %v8490 = vmax.f32 %v8426, 0.0
        %v8491 = vmax.f32 %v8427, 0.0
        %v8492 = vmax.f32 %v8428, 0.0
        %v8493 = vmax.f32 %v8429, 0.0
        %v8494 = vmax.f32 %v8430, 0.0
        %v8495 = vmax.f32 %v8431, 0.0
        %v8496 = vmax.f32 %v8432, 0.0
        %v8497 = vmax.f32 %v8433, 0.0
        %v8498 = vmax.f32 %v8434, 0.0
        %v8499 = vmax.f32 %v8435, 0.0
        %8532 = vrot.lane.b32.xlu0 %v8468, 8
        %v8533 = vpop.permute.xlu0 %8532
        %8534 = vrot.lane.b32.xlu0 %v8469, 8
        %v8535 = vpop.permute.xlu0 %8534
        %8536 = vrot.lane.b32.xlu0 %v8470, 8
        %v8537 = vpop.permute.xlu0 %8536
        %8538 = vrot.lane.b32.xlu0 %v8471, 8
        %v8539 = vpop.permute.xlu0 %8538
        %8540 = vrot.lane.b32.xlu0 %v8472, 8
        %v8541 = vpop.permute.xlu0 %8540
        %8542 = vrot.lane.b32.xlu0 %v8473, 8
        %v8543 = vpop.permute.xlu0 %8542
        %8544 = vrot.lane.b32.xlu0 %v8474, 8
        %v8545 = vpop.permute.xlu0 %8544
        %8546 = vrot.lane.b32.xlu0 %v8475, 8
        %v8547 = vpop.permute.xlu0 %8546
        %8548 = vrot.lane.b32.xlu0 %v8476, 8
        %v8549 = vpop.permute.xlu0 %8548
        %8550 = vrot.lane.b32.xlu0 %v8477, 8
        %v8551 = vpop.permute.xlu0 %8550
        %8552 = vrot.lane.b32.xlu0 %v8478, 8
        %v8553 = vpop.permute.xlu0 %8552
        %8554 = vrot.lane.b32.xlu0 %v8479, 8
        %v8555 = vpop.permute.xlu0 %8554
        %8556 = vrot.lane.b32.xlu0 %v8480, 8
        %v8557 = vpop.permute.xlu0 %8556
        %8558 = vrot.lane.b32.xlu0 %v8481, 8
        %v8559 = vpop.permute.xlu0 %8558
        %8560 = vrot.lane.b32.xlu0 %v8482, 8
        %v8561 = vpop.permute.xlu0 %8560
        %8562 = vrot.lane.b32.xlu0 %v8483, 8
        %v8563 = vpop.permute.xlu0 %8562
        %8564 = vrot.lane.b32.xlu0 %v8484, 8
        %v8565 = vpop.permute.xlu0 %8564
        %8566 = vrot.lane.b32.xlu0 %v8485, 8
        %v8567 = vpop.permute.xlu0 %8566
        %8568 = vrot.lane.b32.xlu0 %v8486, 8
        %v8569 = vpop.permute.xlu0 %8568
        %8570 = vrot.lane.b32.xlu0 %v8487, 8
        %v8571 = vpop.permute.xlu0 %8570
        %8572 = vrot.lane.b32.xlu0 %v8488, 8
        %v8573 = vpop.permute.xlu0 %8572
        %8574 = vrot.lane.b32.xlu0 %v8489, 8
        %v8575 = vpop.permute.xlu0 %8574
        %8576 = vrot.lane.b32.xlu0 %v8490, 8
        %v8577 = vpop.permute.xlu0 %8576
        %8578 = vrot.lane.b32.xlu0 %v8491, 8
        %v8579 = vpop.permute.xlu0 %8578
        %8580 = vrot.lane.b32.xlu0 %v8492, 8
        %v8581 = vpop.permute.xlu0 %8580
        %8582 = vrot.lane.b32.xlu0 %v8493, 8
        %v8583 = vpop.permute.xlu0 %8582
        %8584 = vrot.lane.b32.xlu0 %v8494, 8
        %v8585 = vpop.permute.xlu0 %8584
        %8586 = vrot.lane.b32.xlu0 %v8495, 8
        %v8587 = vpop.permute.xlu0 %8586
        %8588 = vrot.lane.b32.xlu0 %v8496, 8
        %v8589 = vpop.permute.xlu0 %8588
        %8590 = vrot.lane.b32.xlu0 %v8497, 8
        %v8591 = vpop.permute.xlu0 %8590
        %8592 = vrot.lane.b32.xlu0 %v8498, 8
        %v8593 = vpop.permute.xlu0 %8592
        %8594 = vrot.lane.b32.xlu0 %v8499, 8
        %v8595 = vpop.permute.xlu0 %8594
        %8628 = vst.msk [vmem:[#allocation2] sm:$0xff] %vm1301, %v8533
        %8629 = vst.msk [vmem:[#allocation2 + $0x8] sm:$0xff] %vm1301, %v8535
        %8630 = vst.msk [vmem:[#allocation2 + $0x10] sm:$0xff] %vm1301, %v8537
        %8631 = vst.msk [vmem:[#allocation2 + $0x18] sm:$0xff] %vm1301, %v8539
        %8632 = vst.msk [vmem:[#allocation2 + $0x20] sm:$0xff] %vm1301, %v8541
        %8633 = vst.msk [vmem:[#allocation2 + $0x28] sm:$0xff] %vm1301, %v8543
        %8634 = vst.msk [vmem:[#allocation2 + $0x30] sm:$0xff] %vm1301, %v8545
        %8635 = vst.msk [vmem:[#allocation2 + $0x38] sm:$0xff] %vm1301, %v8547
        %8636 = vst.msk [vmem:[#allocation2 + $0x40] sm:$0xff] %vm1301, %v8549
        %8637 = vst.msk [vmem:[#allocation2 + $0x48] sm:$0xff] %vm1301, %v8551
        %8638 = vst.msk [vmem:[#allocation2 + $0x50] sm:$0xff] %vm1301, %v8553
        %8639 = vst.msk [vmem:[#allocation2 + $0x58] sm:$0xff] %vm1301, %v8555
        %8640 = vst.msk [vmem:[#allocation2 + $0x60] sm:$0xff] %vm1301, %v8557
        %8641 = vst.msk [vmem:[#allocation2 + $0x68] sm:$0xff] %vm1301, %v8559
        %8642 = vst.msk [vmem:[#allocation2 + $0x70] sm:$0xff] %vm1301, %v8561
        %8643 = vst.msk [vmem:[#allocation2 + $0x78] sm:$0xff] %vm1301, %v8563
        %8644 = vst.msk [vmem:[#allocation2 + $0x80] sm:$0xff] %vm1301, %v8565
        %8645 = vst.msk [vmem:[#allocation2 + $0x88] sm:$0xff] %vm1301, %v8567
        %8646 = vst.msk [vmem:[#allocation2 + $0x90] sm:$0xff] %vm1301, %v8569
        %8647 = vst.msk [vmem:[#allocation2 + $0x98] sm:$0xff] %vm1301, %v8571
        %8648 = vst.msk [vmem:[#allocation2 + $0xa0] sm:$0xff] %vm1301, %v8573
        %8649 = vst.msk [vmem:[#allocation2 + $0xa8] sm:$0xff] %vm1301, %v8575
        %8650 = vst.msk [vmem:[#allocation2 + $0xb0] sm:$0xff] %vm1301, %v8577
        %8651 = vst.msk [vmem:[#allocation2 + $0xb8] sm:$0xff] %vm1301, %v8579
        %8652 = vst.msk [vmem:[#allocation2 + $0xc0] sm:$0xff] %vm1301, %v8581
        %8653 = vst.msk [vmem:[#allocation2 + $0xc8] sm:$0xff] %vm1301, %v8583
        %8654 = vst.msk [vmem:[#allocation2 + $0xd0] sm:$0xff] %vm1301, %v8585
        %8655 = vst.msk [vmem:[#allocation2 + $0xd8] sm:$0xff] %vm1301, %v8587
        %8656 = vst.msk [vmem:[#allocation2 + $0xe0] sm:$0xff] %vm1301, %v8589
        %8657 = vst.msk [vmem:[#allocation2 + $0xe8] sm:$0xff] %vm1301, %v8591
        %8658 = vst.msk [vmem:[#allocation2 + $0xf0] sm:$0xff] %vm1301, %v8593
        %8659 = vst.msk [vmem:[#allocation2 + $0xf8] sm:$0xff] %vm1301, %v8595
        %v8660 = vld [vmem:[#allocation5 + $0x2] sm:$0xff]
        %v8661 = vld [vmem:[#allocation5 + $0xa] sm:$0xff]
        %v8662 = vld [vmem:[#allocation5 + $0x1a] sm:$0xff]
        %v8663 = vld [vmem:[#allocation5 + $0x22] sm:$0xff]
        %v8664 = vld [vmem:[#allocation5 + $0x32] sm:$0xff]
        %v8665 = vld [vmem:[#allocation5 + $0x3a] sm:$0xff]
        %v8666 = vld [vmem:[#allocation5 + $0x4a] sm:$0xff]
        %v8667 = vld [vmem:[#allocation5 + $0x52] sm:$0xff]
        %v8668 = vld [vmem:[#allocation5 + $0x62] sm:$0xff]
        %v8669 = vld [vmem:[#allocation5 + $0x6a] sm:$0xff]
        %v8670 = vld [vmem:[#allocation5 + $0x7a] sm:$0xff]
        %v8671 = vld [vmem:[#allocation5 + $0x82] sm:$0xff]
        %v8672 = vld [vmem:[#allocation5 + $0x92] sm:$0xff]
        %v8673 = vld [vmem:[#allocation5 + $0x9a] sm:$0xff]
        %v8674 = vld [vmem:[#allocation5 + $0xaa] sm:$0xff]
        %v8675 = vld [vmem:[#allocation5 + $0xb2] sm:$0xff]
        %v8676 = vld [vmem:[#allocation5 + $0xc2] sm:$0xff]
        %v8677 = vld [vmem:[#allocation5 + $0xca] sm:$0xff]
        %v8678 = vld [vmem:[#allocation5 + $0xda] sm:$0xff]
        %v8679 = vld [vmem:[#allocation5 + $0xe2] sm:$0xff]
        %v8680 = vld [vmem:[#allocation5 + $0xf2] sm:$0xff]
        %v8681 = vld [vmem:[#allocation5 + $0xfa] sm:$0xff]
        %v8682 = vld [vmem:[#allocation5 + $0x10a] sm:$0xff]
        %v8683 = vld [vmem:[#allocation5 + $0x112] sm:$0xff]
        %v8684 = vld [vmem:[#allocation5 + $0x122] sm:$0xff]
        %v8685 = vld [vmem:[#allocation5 + $0x12a] sm:$0xff]
        %v8686 = vld [vmem:[#allocation5 + $0x13a] sm:$0xff]
        %v8687 = vld [vmem:[#allocation5 + $0x142] sm:$0xff]
        %v8688 = vld [vmem:[#allocation5 + $0x152] sm:$0xff]
        %v8689 = vld [vmem:[#allocation5 + $0x15a] sm:$0xff]
        %v8690 = vld [vmem:[#allocation5 + $0x16a] sm:$0xff]
        %v8691 = vld [vmem:[#allocation5 + $0x172] sm:$0xff]
        %v8692 = vadd.f32 %v8436, %v8660
        %v8693 = vadd.f32 %v8437, %v8661
        %v8694 = vadd.f32 %v8438, %v8662
        %v8695 = vadd.f32 %v8439, %v8663
        %v8696 = vadd.f32 %v8440, %v8664
        %v8697 = vadd.f32 %v8441, %v8665
        %v8698 = vadd.f32 %v8442, %v8666
        %v8699 = vadd.f32 %v8443, %v8667
        %v8700 = vadd.f32 %v8444, %v8668
        %v8701 = vadd.f32 %v8445, %v8669
        %v8702 = vadd.f32 %v8446, %v8670
        %v8703 = vadd.f32 %v8447, %v8671
        %v8704 = vadd.f32 %v8448, %v8672
        %v8705 = vadd.f32 %v8449, %v8673
        %v8706 = vadd.f32 %v8450, %v8674
        %v8707 = vadd.f32 %v8451, %v8675
        %v8708 = vadd.f32 %v8452, %v8676
        %v8709 = vadd.f32 %v8453, %v8677
        %v8710 = vadd.f32 %v8454, %v8678
        %v8711 = vadd.f32 %v8455, %v8679
        %v8712 = vadd.f32 %v8456, %v8680
        %v8713 = vadd.f32 %v8457, %v8681
        %v8714 = vadd.f32 %v8458, %v8682
        %v8715 = vadd.f32 %v8459, %v8683
        %v8716 = vadd.f32 %v8460, %v8684
        %v8717 = vadd.f32 %v8461, %v8685
        %v8718 = vadd.f32 %v8462, %v8686
        %v8719 = vadd.f32 %v8463, %v8687
        %v8720 = vadd.f32 %v8464, %v8688
        %v8721 = vadd.f32 %v8465, %v8689
        %v8722 = vadd.f32 %v8466, %v8690
        %v8723 = vadd.f32 %v8467, %v8691
        %v8724 = vmax.f32 %v8660, 0.0
        %v8725 = vmax.f32 %v8661, 0.0
        %v8726 = vmax.f32 %v8662, 0.0
        %v8727 = vmax.f32 %v8663, 0.0
        %v8728 = vmax.f32 %v8664, 0.0
        %v8729 = vmax.f32 %v8665, 0.0
        %v8730 = vmax.f32 %v8666, 0.0
        %v8731 = vmax.f32 %v8667, 0.0
        %v8732 = vmax.f32 %v8668, 0.0
        %v8733 = vmax.f32 %v8669, 0.0
        %v8734 = vmax.f32 %v8670, 0.0
        %v8735 = vmax.f32 %v8671, 0.0
        %v8736 = vmax.f32 %v8672, 0.0
        %v8737 = vmax.f32 %v8673, 0.0
        %v8738 = vmax.f32 %v8674, 0.0
        %v8739 = vmax.f32 %v8675, 0.0
        %v8740 = vmax.f32 %v8676, 0.0
        %v8741 = vmax.f32 %v8677, 0.0
        %v8742 = vmax.f32 %v8678, 0.0
        %v8743 = vmax.f32 %v8679, 0.0
        %v8744 = vmax.f32 %v8680, 0.0
        %v8745 = vmax.f32 %v8681, 0.0
        %v8746 = vmax.f32 %v8682, 0.0
        %v8747 = vmax.f32 %v8683, 0.0
        %v8748 = vmax.f32 %v8684, 0.0
        %v8749 = vmax.f32 %v8685, 0.0
        %v8750 = vmax.f32 %v8686, 0.0
        %v8751 = vmax.f32 %v8687, 0.0
        %v8752 = vmax.f32 %v8688, 0.0
        %v8753 = vmax.f32 %v8689, 0.0
        %v8754 = vmax.f32 %v8690, 0.0
        %v8755 = vmax.f32 %v8691, 0.0
        %8788 = vrot.lane.b32.xlu0 %v8724, 16
        %v8789 = vpop.permute.xlu0 %8788
        %8790 = vrot.lane.b32.xlu0 %v8725, 16
        %v8791 = vpop.permute.xlu0 %8790
        %8792 = vrot.lane.b32.xlu0 %v8726, 16
        %v8793 = vpop.permute.xlu0 %8792
        %8794 = vrot.lane.b32.xlu0 %v8727, 16
        %v8795 = vpop.permute.xlu0 %8794
        %8796 = vrot.lane.b32.xlu0 %v8728, 16
        %v8797 = vpop.permute.xlu0 %8796
        %8798 = vrot.lane.b32.xlu0 %v8729, 16
        %v8799 = vpop.permute.xlu0 %8798
        %8800 = vrot.lane.b32.xlu0 %v8730, 16
        %v8801 = vpop.permute.xlu0 %8800
        %8802 = vrot.lane.b32.xlu0 %v8731, 16
        %v8803 = vpop.permute.xlu0 %8802
        %8804 = vrot.lane.b32.xlu0 %v8732, 16
        %v8805 = vpop.permute.xlu0 %8804
        %8806 = vrot.lane.b32.xlu0 %v8733, 16
        %v8807 = vpop.permute.xlu0 %8806
        %8808 = vrot.lane.b32.xlu0 %v8734, 16
        %v8809 = vpop.permute.xlu0 %8808
        %8810 = vrot.lane.b32.xlu0 %v8735, 16
        %v8811 = vpop.permute.xlu0 %8810
        %8812 = vrot.lane.b32.xlu0 %v8736, 16
        %v8813 = vpop.permute.xlu0 %8812
        %8814 = vrot.lane.b32.xlu0 %v8737, 16
        %v8815 = vpop.permute.xlu0 %8814
        %8816 = vrot.lane.b32.xlu0 %v8738, 16
        %v8817 = vpop.permute.xlu0 %8816
        %8818 = vrot.lane.b32.xlu0 %v8739, 16
        %v8819 = vpop.permute.xlu0 %8818
        %8820 = vrot.lane.b32.xlu0 %v8740, 16
        %v8821 = vpop.permute.xlu0 %8820
        %8822 = vrot.lane.b32.xlu0 %v8741, 16
        %v8823 = vpop.permute.xlu0 %8822
        %8824 = vrot.lane.b32.xlu0 %v8742, 16
        %v8825 = vpop.permute.xlu0 %8824
        %8826 = vrot.lane.b32.xlu0 %v8743, 16
        %v8827 = vpop.permute.xlu0 %8826
        %8828 = vrot.lane.b32.xlu0 %v8744, 16
        %v8829 = vpop.permute.xlu0 %8828
        %8830 = vrot.lane.b32.xlu0 %v8745, 16
        %v8831 = vpop.permute.xlu0 %8830
        %8832 = vrot.lane.b32.xlu0 %v8746, 16
        %v8833 = vpop.permute.xlu0 %8832
        %8834 = vrot.lane.b32.xlu0 %v8747, 16
        %v8835 = vpop.permute.xlu0 %8834
        %8836 = vrot.lane.b32.xlu0 %v8748, 16
        %v8837 = vpop.permute.xlu0 %8836
        %8838 = vrot.lane.b32.xlu0 %v8749, 16
        %v8839 = vpop.permute.xlu0 %8838
        %8840 = vrot.lane.b32.xlu0 %v8750, 16
        %v8841 = vpop.permute.xlu0 %8840
        %8842 = vrot.lane.b32.xlu0 %v8751, 16
        %v8843 = vpop.permute.xlu0 %8842
        %8844 = vrot.lane.b32.xlu0 %v8752, 16
        %v8845 = vpop.permute.xlu0 %8844
        %8846 = vrot.lane.b32.xlu0 %v8753, 16
        %v8847 = vpop.permute.xlu0 %8846
        %8848 = vrot.lane.b32.xlu0 %v8754, 16
        %v8849 = vpop.permute.xlu0 %8848
        %8850 = vrot.lane.b32.xlu0 %v8755, 16
        %v8851 = vpop.permute.xlu0 %8850
        %8884 = vst.msk [vmem:[#allocation2] sm:$0xff] %vm1558, %v8789
        %8885 = vst.msk [vmem:[#allocation2 + $0x8] sm:$0xff] %vm1558, %v8791
        %8886 = vst.msk [vmem:[#allocation2 + $0x10] sm:$0xff] %vm1558, %v8793
        %8887 = vst.msk [vmem:[#allocation2 + $0x18] sm:$0xff] %vm1558, %v8795
        %8888 = vst.msk [vmem:[#allocation2 + $0x20] sm:$0xff] %vm1558, %v8797
        %8889 = vst.msk [vmem:[#allocation2 + $0x28] sm:$0xff] %vm1558, %v8799
        %8890 = vst.msk [vmem:[#allocation2 + $0x30] sm:$0xff] %vm1558, %v8801
        %8891 = vst.msk [vmem:[#allocation2 + $0x38] sm:$0xff] %vm1558, %v8803
        %8892 = vst.msk [vmem:[#allocation2 + $0x40] sm:$0xff] %vm1558, %v8805
        %8893 = vst.msk [vmem:[#allocation2 + $0x48] sm:$0xff] %vm1558, %v8807
        %8894 = vst.msk [vmem:[#allocation2 + $0x50] sm:$0xff] %vm1558, %v8809
        %8895 = vst.msk [vmem:[#allocation2 + $0x58] sm:$0xff] %vm1558, %v8811
        %8896 = vst.msk [vmem:[#allocation2 + $0x60] sm:$0xff] %vm1558, %v8813
        %8897 = vst.msk [vmem:[#allocation2 + $0x68] sm:$0xff] %vm1558, %v8815
        %8898 = vst.msk [vmem:[#allocation2 + $0x70] sm:$0xff] %vm1558, %v8817
        %8899 = vst.msk [vmem:[#allocation2 + $0x78] sm:$0xff] %vm1558, %v8819
        %8900 = vst.msk [vmem:[#allocation2 + $0x80] sm:$0xff] %vm1558, %v8821
        %8901 = vst.msk [vmem:[#allocation2 + $0x88] sm:$0xff] %vm1558, %v8823
        %8902 = vst.msk [vmem:[#allocation2 + $0x90] sm:$0xff] %vm1558, %v8825
        %8903 = vst.msk [vmem:[#allocation2 + $0x98] sm:$0xff] %vm1558, %v8827
        %8904 = vst.msk [vmem:[#allocation2 + $0xa0] sm:$0xff] %vm1558, %v8829
        %8905 = vst.msk [vmem:[#allocation2 + $0xa8] sm:$0xff] %vm1558, %v8831
        %8906 = vst.msk [vmem:[#allocation2 + $0xb0] sm:$0xff] %vm1558, %v8833
        %8907 = vst.msk [vmem:[#allocation2 + $0xb8] sm:$0xff] %vm1558, %v8835
        %8908 = vst.msk [vmem:[#allocation2 + $0xc0] sm:$0xff] %vm1558, %v8837
        %8909 = vst.msk [vmem:[#allocation2 + $0xc8] sm:$0xff] %vm1558, %v8839
        %8910 = vst.msk [vmem:[#allocation2 + $0xd0] sm:$0xff] %vm1558, %v8841
        %8911 = vst.msk [vmem:[#allocation2 + $0xd8] sm:$0xff] %vm1558, %v8843
        %8912 = vst.msk [vmem:[#allocation2 + $0xe0] sm:$0xff] %vm1558, %v8845
        %8913 = vst.msk [vmem:[#allocation2 + $0xe8] sm:$0xff] %vm1558, %v8847
        %8914 = vst.msk [vmem:[#allocation2 + $0xf0] sm:$0xff] %vm1558, %v8849
        %8915 = vst.msk [vmem:[#allocation2 + $0xf8] sm:$0xff] %vm1558, %v8851
        %v8916 = vld [vmem:[%s4087] sm:$0xff]
        %v8917 = vld [vmem:[%s4087 + $0x8] sm:$0xff]
        %v8918 = vld [vmem:[%s4087 + $0x18] sm:$0xff]
        %v8919 = vld [vmem:[%s4087 + $0x20] sm:$0xff]
        %v8920 = vld [vmem:[%s4087 + $0x30] sm:$0xff]
        %v8921 = vld [vmem:[%s4087 + $0x38] sm:$0xff]
        %v8922 = vld [vmem:[%s4087 + $0x48] sm:$0xff]
        %v8923 = vld [vmem:[%s4087 + $0x50] sm:$0xff]
        %v8924 = vld [vmem:[%s4087 + $0x60] sm:$0xff]
        %v8925 = vld [vmem:[%s4087 + $0x68] sm:$0xff]
        %v8926 = vld [vmem:[%s4087 + $0x78] sm:$0xff]
        %v8927 = vld [vmem:[%s4087 + $0x80] sm:$0xff]
        %v8928 = vld [vmem:[%s4087 + $0x90] sm:$0xff]
        %v8929 = vld [vmem:[%s4087 + $0x98] sm:$0xff]
        %v8930 = vld [vmem:[%s4087 + $0xa8] sm:$0xff]
        %v8931 = vld [vmem:[%s4087 + $0xb0] sm:$0xff]
        %v8932 = vld [vmem:[%s4087 + $0xc0] sm:$0xff]
        %v8933 = vld [vmem:[%s4087 + $0xc8] sm:$0xff]
        %v8934 = vld [vmem:[%s4087 + $0xd8] sm:$0xff]
        %v8935 = vld [vmem:[%s4087 + $0xe0] sm:$0xff]
        %v8936 = vld [vmem:[%s4087 + $0xf0] sm:$0xff]
        %v8937 = vld [vmem:[%s4087 + $0xf8] sm:$0xff]
        %v8938 = vld [vmem:[%s4087 + $0x108] sm:$0xff]
        %v8939 = vld [vmem:[%s4087 + $0x110] sm:$0xff]
        %v8940 = vld [vmem:[%s4087 + $0x120] sm:$0xff]
        %v8941 = vld [vmem:[%s4087 + $0x128] sm:$0xff]
        %v8942 = vld [vmem:[%s4087 + $0x138] sm:$0xff]
        %v8943 = vld [vmem:[%s4087 + $0x140] sm:$0xff]
        %v8944 = vld [vmem:[%s4087 + $0x150] sm:$0xff]
        %v8945 = vld [vmem:[%s4087 + $0x158] sm:$0xff]
        %v8946 = vld [vmem:[%s4087 + $0x168] sm:$0xff]
        %v8947 = vld [vmem:[%s4087 + $0x170] sm:$0xff]
        %v8948 = vadd.f32 %v8692, %v8916
        %v8949 = vadd.f32 %v8693, %v8917
        %v8950 = vadd.f32 %v8694, %v8918
        %v8951 = vadd.f32 %v8695, %v8919
        %v8952 = vadd.f32 %v8696, %v8920
        %v8953 = vadd.f32 %v8697, %v8921
        %v8954 = vadd.f32 %v8698, %v8922
        %v8955 = vadd.f32 %v8699, %v8923
        %v8956 = vadd.f32 %v8700, %v8924
        %v8957 = vadd.f32 %v8701, %v8925
        %v8958 = vadd.f32 %v8702, %v8926
        %v8959 = vadd.f32 %v8703, %v8927
        %v8960 = vadd.f32 %v8704, %v8928
        %v8961 = vadd.f32 %v8705, %v8929
        %v8962 = vadd.f32 %v8706, %v8930
        %v8963 = vadd.f32 %v8707, %v8931
        %v8964 = vadd.f32 %v8708, %v8932
        %v8965 = vadd.f32 %v8709, %v8933
        %v8966 = vadd.f32 %v8710, %v8934
        %v8967 = vadd.f32 %v8711, %v8935
        %v8968 = vadd.f32 %v8712, %v8936
        %v8969 = vadd.f32 %v8713, %v8937
        %v8970 = vadd.f32 %v8714, %v8938
        %v8971 = vadd.f32 %v8715, %v8939
        %v8972 = vadd.f32 %v8716, %v8940
        %v8973 = vadd.f32 %v8717, %v8941
        %v8974 = vadd.f32 %v8718, %v8942
        %v8975 = vadd.f32 %v8719, %v8943
        %v8976 = vadd.f32 %v8720, %v8944
        %v8977 = vadd.f32 %v8721, %v8945
        %v8978 = vadd.f32 %v8722, %v8946
        %v8979 = vadd.f32 %v8723, %v8947
        %v8980 = vmax.f32 %v8916, 0.0
        %v8981 = vmax.f32 %v8917, 0.0
        %v8982 = vmax.f32 %v8918, 0.0
        %v8983 = vmax.f32 %v8919, 0.0
        %v8984 = vmax.f32 %v8920, 0.0
        %v8985 = vmax.f32 %v8921, 0.0
        %v8986 = vmax.f32 %v8922, 0.0
        %v8987 = vmax.f32 %v8923, 0.0
        %v8988 = vmax.f32 %v8924, 0.0
        %v8989 = vmax.f32 %v8925, 0.0
        %v8990 = vmax.f32 %v8926, 0.0
        %v8991 = vmax.f32 %v8927, 0.0
        %v8992 = vmax.f32 %v8928, 0.0
        %v8993 = vmax.f32 %v8929, 0.0
        %v8994 = vmax.f32 %v8930, 0.0
        %v8995 = vmax.f32 %v8931, 0.0
        %v8996 = vmax.f32 %v8932, 0.0
        %v8997 = vmax.f32 %v8933, 0.0
        %v8998 = vmax.f32 %v8934, 0.0
        %v8999 = vmax.f32 %v8935, 0.0
        %v9000 = vmax.f32 %v8936, 0.0
        %v9001 = vmax.f32 %v8937, 0.0
        %v9002 = vmax.f32 %v8938, 0.0
        %v9003 = vmax.f32 %v8939, 0.0
        %v9004 = vmax.f32 %v8940, 0.0
        %v9005 = vmax.f32 %v8941, 0.0
        %v9006 = vmax.f32 %v8942, 0.0
        %v9007 = vmax.f32 %v8943, 0.0
        %v9008 = vmax.f32 %v8944, 0.0
        %v9009 = vmax.f32 %v8945, 0.0
        %v9010 = vmax.f32 %v8946, 0.0
        %v9011 = vmax.f32 %v8947, 0.0
        %9044 = vrot.lane.b32.xlu0 %v8980, 24
        %v9045 = vpop.permute.xlu0 %9044
        %9046 = vrot.lane.b32.xlu0 %v8981, 24
        %v9047 = vpop.permute.xlu0 %9046
        %9048 = vrot.lane.b32.xlu0 %v8982, 24
        %v9049 = vpop.permute.xlu0 %9048
        %9050 = vrot.lane.b32.xlu0 %v8983, 24
        %v9051 = vpop.permute.xlu0 %9050
        %9052 = vrot.lane.b32.xlu0 %v8984, 24
        %v9053 = vpop.permute.xlu0 %9052
        %9054 = vrot.lane.b32.xlu0 %v8985, 24
        %v9055 = vpop.permute.xlu0 %9054
        %9056 = vrot.lane.b32.xlu0 %v8986, 24
        %v9057 = vpop.permute.xlu0 %9056
        %9058 = vrot.lane.b32.xlu0 %v8987, 24
        %v9059 = vpop.permute.xlu0 %9058
        %9060 = vrot.lane.b32.xlu0 %v8988, 24
        %v9061 = vpop.permute.xlu0 %9060
        %9062 = vrot.lane.b32.xlu0 %v8989, 24
        %v9063 = vpop.permute.xlu0 %9062
        %9064 = vrot.lane.b32.xlu0 %v8990, 24
        %v9065 = vpop.permute.xlu0 %9064
        %9066 = vrot.lane.b32.xlu0 %v8991, 24
        %v9067 = vpop.permute.xlu0 %9066
        %9068 = vrot.lane.b32.xlu0 %v8992, 24
        %v9069 = vpop.permute.xlu0 %9068
        %9070 = vrot.lane.b32.xlu0 %v8993, 24
        %v9071 = vpop.permute.xlu0 %9070
        %9072 = vrot.lane.b32.xlu0 %v8994, 24
        %v9073 = vpop.permute.xlu0 %9072
        %9074 = vrot.lane.b32.xlu0 %v8995, 24
        %v9075 = vpop.permute.xlu0 %9074
        %9076 = vrot.lane.b32.xlu0 %v8996, 24
        %v9077 = vpop.permute.xlu0 %9076
        %9078 = vrot.lane.b32.xlu0 %v8997, 24
        %v9079 = vpop.permute.xlu0 %9078
        %9080 = vrot.lane.b32.xlu0 %v8998, 24
        %v9081 = vpop.permute.xlu0 %9080
        %9082 = vrot.lane.b32.xlu0 %v8999, 24
        %v9083 = vpop.permute.xlu0 %9082
        %9084 = vrot.lane.b32.xlu0 %v9000, 24
        %v9085 = vpop.permute.xlu0 %9084
        %9086 = vrot.lane.b32.xlu0 %v9001, 24
        %v9087 = vpop.permute.xlu0 %9086
        %9088 = vrot.lane.b32.xlu0 %v9002, 24
        %v9089 = vpop.permute.xlu0 %9088
        %9090 = vrot.lane.b32.xlu0 %v9003, 24
        %v9091 = vpop.permute.xlu0 %9090
        %9092 = vrot.lane.b32.xlu0 %v9004, 24
        %v9093 = vpop.permute.xlu0 %9092
        %9094 = vrot.lane.b32.xlu0 %v9005, 24
        %v9095 = vpop.permute.xlu0 %9094
        %9096 = vrot.lane.b32.xlu0 %v9006, 24
        %v9097 = vpop.permute.xlu0 %9096
        %9098 = vrot.lane.b32.xlu0 %v9007, 24
        %v9099 = vpop.permute.xlu0 %9098
        %9100 = vrot.lane.b32.xlu0 %v9008, 24
        %v9101 = vpop.permute.xlu0 %9100
        %9102 = vrot.lane.b32.xlu0 %v9009, 24
        %v9103 = vpop.permute.xlu0 %9102
        %9104 = vrot.lane.b32.xlu0 %v9010, 24
        %v9105 = vpop.permute.xlu0 %9104
        %9106 = vrot.lane.b32.xlu0 %v9011, 24
        %v9107 = vpop.permute.xlu0 %9106
        %9140 = vst.msk [vmem:[#allocation2] sm:$0xff] %vm1815, %v9045
        %9141 = vst.msk [vmem:[#allocation2 + $0x8] sm:$0xff] %vm1815, %v9047
        %9142 = vst.msk [vmem:[#allocation2 + $0x10] sm:$0xff] %vm1815, %v9049
        %9143 = vst.msk [vmem:[#allocation2 + $0x18] sm:$0xff] %vm1815, %v9051
        %9144 = vst.msk [vmem:[#allocation2 + $0x20] sm:$0xff] %vm1815, %v9053
        %9145 = vst.msk [vmem:[#allocation2 + $0x28] sm:$0xff] %vm1815, %v9055
        %9146 = vst.msk [vmem:[#allocation2 + $0x30] sm:$0xff] %vm1815, %v9057
        %9147 = vst.msk [vmem:[#allocation2 + $0x38] sm:$0xff] %vm1815, %v9059
        %9148 = vst.msk [vmem:[#allocation2 + $0x40] sm:$0xff] %vm1815, %v9061
        %9149 = vst.msk [vmem:[#allocation2 + $0x48] sm:$0xff] %vm1815, %v9063
        %9150 = vst.msk [vmem:[#allocation2 + $0x50] sm:$0xff] %vm1815, %v9065
        %9151 = vst.msk [vmem:[#allocation2 + $0x58] sm:$0xff] %vm1815, %v9067
        %9152 = vst.msk [vmem:[#allocation2 + $0x60] sm:$0xff] %vm1815, %v9069
        %9153 = vst.msk [vmem:[#allocation2 + $0x68] sm:$0xff] %vm1815, %v9071
        %9154 = vst.msk [vmem:[#allocation2 + $0x70] sm:$0xff] %vm1815, %v9073
        %9155 = vst.msk [vmem:[#allocation2 + $0x78] sm:$0xff] %vm1815, %v9075
        %9156 = vst.msk [vmem:[#allocation2 + $0x80] sm:$0xff] %vm1815, %v9077
        %9157 = vst.msk [vmem:[#allocation2 + $0x88] sm:$0xff] %vm1815, %v9079
        %9158 = vst.msk [vmem:[#allocation2 + $0x90] sm:$0xff] %vm1815, %v9081
        %9159 = vst.msk [vmem:[#allocation2 + $0x98] sm:$0xff] %vm1815, %v9083
        %9160 = vst.msk [vmem:[#allocation2 + $0xa0] sm:$0xff] %vm1815, %v9085
        %9161 = vst.msk [vmem:[#allocation2 + $0xa8] sm:$0xff] %vm1815, %v9087
        %9162 = vst.msk [vmem:[#allocation2 + $0xb0] sm:$0xff] %vm1815, %v9089
        %9163 = vst.msk [vmem:[#allocation2 + $0xb8] sm:$0xff] %vm1815, %v9091
        %9164 = vst.msk [vmem:[#allocation2 + $0xc0] sm:$0xff] %vm1815, %v9093
        %9165 = vst.msk [vmem:[#allocation2 + $0xc8] sm:$0xff] %vm1815, %v9095
        %9166 = vst.msk [vmem:[#allocation2 + $0xd0] sm:$0xff] %vm1815, %v9097
        %9167 = vst.msk [vmem:[#allocation2 + $0xd8] sm:$0xff] %vm1815, %v9099
        %9168 = vst.msk [vmem:[#allocation2 + $0xe0] sm:$0xff] %vm1815, %v9101
        %9169 = vst.msk [vmem:[#allocation2 + $0xe8] sm:$0xff] %vm1815, %v9103
        %9170 = vst.msk [vmem:[#allocation2 + $0xf0] sm:$0xff] %vm1815, %v9105
        %9171 = vst.msk [vmem:[#allocation2 + $0xf8] sm:$0xff] %vm1815, %v9107
        %v9172 = vld [vmem:[%s4087 + $0x1] sm:$0xff]
        %v9173 = vld [vmem:[%s4087 + $0x9] sm:$0xff]
        %v9174 = vld [vmem:[%s4087 + $0x19] sm:$0xff]
        %v9175 = vld [vmem:[%s4087 + $0x21] sm:$0xff]
        %v9176 = vld [vmem:[%s4087 + $0x31] sm:$0xff]
        %v9177 = vld [vmem:[%s4087 + $0x39] sm:$0xff]
        %v9178 = vld [vmem:[%s4087 + $0x49] sm:$0xff]
        %v9179 = vld [vmem:[%s4087 + $0x51] sm:$0xff]
        %v9180 = vld [vmem:[%s4087 + $0x61] sm:$0xff]
        %v9181 = vld [vmem:[%s4087 + $0x69] sm:$0xff]
        %v9182 = vld [vmem:[%s4087 + $0x79] sm:$0xff]
        %v9183 = vld [vmem:[%s4087 + $0x81] sm:$0xff]
        %v9184 = vld [vmem:[%s4087 + $0x91] sm:$0xff]
        %v9185 = vld [vmem:[%s4087 + $0x99] sm:$0xff]
        %v9186 = vld [vmem:[%s4087 + $0xa9] sm:$0xff]
        %v9187 = vld [vmem:[%s4087 + $0xb1] sm:$0xff]
        %v9188 = vld [vmem:[%s4087 + $0xc1] sm:$0xff]
        %v9189 = vld [vmem:[%s4087 + $0xc9] sm:$0xff]
        %v9190 = vld [vmem:[%s4087 + $0xd9] sm:$0xff]
        %v9191 = vld [vmem:[%s4087 + $0xe1] sm:$0xff]
        %v9192 = vld [vmem:[%s4087 + $0xf1] sm:$0xff]
        %v9193 = vld [vmem:[%s4087 + $0xf9] sm:$0xff]
        %v9194 = vld [vmem:[%s4087 + $0x109] sm:$0xff]
        %v9195 = vld [vmem:[%s4087 + $0x111] sm:$0xff]
        %v9196 = vld [vmem:[%s4087 + $0x121] sm:$0xff]
        %v9197 = vld [vmem:[%s4087 + $0x129] sm:$0xff]
        %v9198 = vld [vmem:[%s4087 + $0x139] sm:$0xff]
        %v9199 = vld [vmem:[%s4087 + $0x141] sm:$0xff]
        %v9200 = vld [vmem:[%s4087 + $0x151] sm:$0xff]
        %v9201 = vld [vmem:[%s4087 + $0x159] sm:$0xff]
        %v9202 = vld [vmem:[%s4087 + $0x169] sm:$0xff]
        %v9203 = vld [vmem:[%s4087 + $0x171] sm:$0xff]
        %v9204 = vadd.f32 %v8948, %v9172
        %v9205 = vadd.f32 %v8949, %v9173
        %v9206 = vadd.f32 %v8950, %v9174
        %v9207 = vadd.f32 %v8951, %v9175
        %v9208 = vadd.f32 %v8952, %v9176
        %v9209 = vadd.f32 %v8953, %v9177
        %v9210 = vadd.f32 %v8954, %v9178
        %v9211 = vadd.f32 %v8955, %v9179
        %v9212 = vadd.f32 %v8956, %v9180
        %v9213 = vadd.f32 %v8957, %v9181
        %v9214 = vadd.f32 %v8958, %v9182
        %v9215 = vadd.f32 %v8959, %v9183
        %v9216 = vadd.f32 %v8960, %v9184
        %v9217 = vadd.f32 %v8961, %v9185
        %v9218 = vadd.f32 %v8962, %v9186
        %v9219 = vadd.f32 %v8963, %v9187
        %v9220 = vadd.f32 %v8964, %v9188
        %v9221 = vadd.f32 %v8965, %v9189
        %v9222 = vadd.f32 %v8966, %v9190
        %v9223 = vadd.f32 %v8967, %v9191
        %v9224 = vadd.f32 %v8968, %v9192
        %v9225 = vadd.f32 %v8969, %v9193
        %v9226 = vadd.f32 %v8970, %v9194
        %v9227 = vadd.f32 %v8971, %v9195
        %v9228 = vadd.f32 %v8972, %v9196
        %v9229 = vadd.f32 %v8973, %v9197
        %v9230 = vadd.f32 %v8974, %v9198
        %v9231 = vadd.f32 %v8975, %v9199
        %v9232 = vadd.f32 %v8976, %v9200
        %v9233 = vadd.f32 %v8977, %v9201
        %v9234 = vadd.f32 %v8978, %v9202
        %v9235 = vadd.f32 %v8979, %v9203
        %v9236 = vmax.f32 %v9172, 0.0
        %v9237 = vmax.f32 %v9173, 0.0
        %v9238 = vmax.f32 %v9174, 0.0
        %v9239 = vmax.f32 %v9175, 0.0
        %v9240 = vmax.f32 %v9176, 0.0
        %v9241 = vmax.f32 %v9177, 0.0
        %v9242 = vmax.f32 %v9178, 0.0
        %v9243 = vmax.f32 %v9179, 0.0
        %v9244 = vmax.f32 %v9180, 0.0
        %v9245 = vmax.f32 %v9181, 0.0
        %v9246 = vmax.f32 %v9182, 0.0
        %v9247 = vmax.f32 %v9183, 0.0
        %v9248 = vmax.f32 %v9184, 0.0
        %v9249 = vmax.f32 %v9185, 0.0
        %v9250 = vmax.f32 %v9186, 0.0
        %v9251 = vmax.f32 %v9187, 0.0
        %v9252 = vmax.f32 %v9188, 0.0
        %v9253 = vmax.f32 %v9189, 0.0
        %v9254 = vmax.f32 %v9190, 0.0
        %v9255 = vmax.f32 %v9191, 0.0
        %v9256 = vmax.f32 %v9192, 0.0
        %v9257 = vmax.f32 %v9193, 0.0
        %v9258 = vmax.f32 %v9194, 0.0
        %v9259 = vmax.f32 %v9195, 0.0
        %v9260 = vmax.f32 %v9196, 0.0
        %v9261 = vmax.f32 %v9197, 0.0
        %v9262 = vmax.f32 %v9198, 0.0
        %v9263 = vmax.f32 %v9199, 0.0
        %v9264 = vmax.f32 %v9200, 0.0
        %v9265 = vmax.f32 %v9201, 0.0
        %v9266 = vmax.f32 %v9202, 0.0
        %v9267 = vmax.f32 %v9203, 0.0
        %9300 = vrot.lane.b32.xlu0 %v9236, 32
        %v9301 = vpop.permute.xlu0 %9300
        %9302 = vrot.lane.b32.xlu0 %v9237, 32
        %v9303 = vpop.permute.xlu0 %9302
        %9304 = vrot.lane.b32.xlu0 %v9238, 32
        %v9305 = vpop.permute.xlu0 %9304
        %9306 = vrot.lane.b32.xlu0 %v9239, 32
        %v9307 = vpop.permute.xlu0 %9306
        %9308 = vrot.lane.b32.xlu0 %v9240, 32
        %v9309 = vpop.permute.xlu0 %9308
        %9310 = vrot.lane.b32.xlu0 %v9241, 32
        %v9311 = vpop.permute.xlu0 %9310
        %9312 = vrot.lane.b32.xlu0 %v9242, 32
        %v9313 = vpop.permute.xlu0 %9312
        %9314 = vrot.lane.b32.xlu0 %v9243, 32
        %v9315 = vpop.permute.xlu0 %9314
        %9316 = vrot.lane.b32.xlu0 %v9244, 32
        %v9317 = vpop.permute.xlu0 %9316
        %9318 = vrot.lane.b32.xlu0 %v9245, 32
        %v9319 = vpop.permute.xlu0 %9318
        %9320 = vrot.lane.b32.xlu0 %v9246, 32
        %v9321 = vpop.permute.xlu0 %9320
        %9322 = vrot.lane.b32.xlu0 %v9247, 32
        %v9323 = vpop.permute.xlu0 %9322
        %9324 = vrot.lane.b32.xlu0 %v9248, 32
        %v9325 = vpop.permute.xlu0 %9324
        %9326 = vrot.lane.b32.xlu0 %v9249, 32
        %v9327 = vpop.permute.xlu0 %9326
        %9328 = vrot.lane.b32.xlu0 %v9250, 32
        %v9329 = vpop.permute.xlu0 %9328
        %9330 = vrot.lane.b32.xlu0 %v9251, 32
        %v9331 = vpop.permute.xlu0 %9330
        %9332 = vrot.lane.b32.xlu0 %v9252, 32
        %v9333 = vpop.permute.xlu0 %9332
        %9334 = vrot.lane.b32.xlu0 %v9253, 32
        %v9335 = vpop.permute.xlu0 %9334
        %9336 = vrot.lane.b32.xlu0 %v9254, 32
        %v9337 = vpop.permute.xlu0 %9336
        %9338 = vrot.lane.b32.xlu0 %v9255, 32
        %v9339 = vpop.permute.xlu0 %9338
        %9340 = vrot.lane.b32.xlu0 %v9256, 32
        %v9341 = vpop.permute.xlu0 %9340
        %9342 = vrot.lane.b32.xlu0 %v9257, 32
        %v9343 = vpop.permute.xlu0 %9342
        %9344 = vrot.lane.b32.xlu0 %v9258, 32
        %v9345 = vpop.permute.xlu0 %9344
        %9346 = vrot.lane.b32.xlu0 %v9259, 32
        %v9347 = vpop.permute.xlu0 %9346
        %9348 = vrot.lane.b32.xlu0 %v9260, 32
        %v9349 = vpop.permute.xlu0 %9348
        %9350 = vrot.lane.b32.xlu0 %v9261, 32
        %v9351 = vpop.permute.xlu0 %9350
        %9352 = vrot.lane.b32.xlu0 %v9262, 32
        %v9353 = vpop.permute.xlu0 %9352
        %9354 = vrot.lane.b32.xlu0 %v9263, 32
        %v9355 = vpop.permute.xlu0 %9354
        %9356 = vrot.lane.b32.xlu0 %v9264, 32
        %v9357 = vpop.permute.xlu0 %9356
        %9358 = vrot.lane.b32.xlu0 %v9265, 32
        %v9359 = vpop.permute.xlu0 %9358
        %9360 = vrot.lane.b32.xlu0 %v9266, 32
        %v9361 = vpop.permute.xlu0 %9360
        %9362 = vrot.lane.b32.xlu0 %v9267, 32
        %v9363 = vpop.permute.xlu0 %9362
        %9396 = vst.msk [vmem:[#allocation2] sm:$0xff] %vm2072, %v9301
        %9397 = vst.msk [vmem:[#allocation2 + $0x8] sm:$0xff] %vm2072, %v9303
        %9398 = vst.msk [vmem:[#allocation2 + $0x10] sm:$0xff] %vm2072, %v9305
        %9399 = vst.msk [vmem:[#allocation2 + $0x18] sm:$0xff] %vm2072, %v9307
        %9400 = vst.msk [vmem:[#allocation2 + $0x20] sm:$0xff] %vm2072, %v9309
        %9401 = vst.msk [vmem:[#allocation2 + $0x28] sm:$0xff] %vm2072, %v9311
        %9402 = vst.msk [vmem:[#allocation2 + $0x30] sm:$0xff] %vm2072, %v9313
        %9403 = vst.msk [vmem:[#allocation2 + $0x38] sm:$0xff] %vm2072, %v9315
        %9404 = vst.msk [vmem:[#allocation2 + $0x40] sm:$0xff] %vm2072, %v9317
        %9405 = vst.msk [vmem:[#allocation2 + $0x48] sm:$0xff] %vm2072, %v9319
        %9406 = vst.msk [vmem:[#allocation2 + $0x50] sm:$0xff] %vm2072, %v9321
        %9407 = vst.msk [vmem:[#allocation2 + $0x58] sm:$0xff] %vm2072, %v9323
        %9408 = vst.msk [vmem:[#allocation2 + $0x60] sm:$0xff] %vm2072, %v9325
        %9409 = vst.msk [vmem:[#allocation2 + $0x68] sm:$0xff] %vm2072, %v9327
        %9410 = vst.msk [vmem:[#allocation2 + $0x70] sm:$0xff] %vm2072, %v9329
        %9411 = vst.msk [vmem:[#allocation2 + $0x78] sm:$0xff] %vm2072, %v9331
        %9412 = vst.msk [vmem:[#allocation2 + $0x80] sm:$0xff] %vm2072, %v9333
        %9413 = vst.msk [vmem:[#allocation2 + $0x88] sm:$0xff] %vm2072, %v9335
        %9414 = vst.msk [vmem:[#allocation2 + $0x90] sm:$0xff] %vm2072, %v9337
        %9415 = vst.msk [vmem:[#allocation2 + $0x98] sm:$0xff] %vm2072, %v9339
        %9416 = vst.msk [vmem:[#allocation2 + $0xa0] sm:$0xff] %vm2072, %v9341
        %9417 = vst.msk [vmem:[#allocation2 + $0xa8] sm:$0xff] %vm2072, %v9343
        %9418 = vst.msk [vmem:[#allocation2 + $0xb0] sm:$0xff] %vm2072, %v9345
        %9419 = vst.msk [vmem:[#allocation2 + $0xb8] sm:$0xff] %vm2072, %v9347
        %9420 = vst.msk [vmem:[#allocation2 + $0xc0] sm:$0xff] %vm2072, %v9349
        %9421 = vst.msk [vmem:[#allocation2 + $0xc8] sm:$0xff] %vm2072, %v9351
        %9422 = vst.msk [vmem:[#allocation2 + $0xd0] sm:$0xff] %vm2072, %v9353
        %9423 = vst.msk [vmem:[#allocation2 + $0xd8] sm:$0xff] %vm2072, %v9355
        %9424 = vst.msk [vmem:[#allocation2 + $0xe0] sm:$0xff] %vm2072, %v9357
        %9425 = vst.msk [vmem:[#allocation2 + $0xe8] sm:$0xff] %vm2072, %v9359
        %9426 = vst.msk [vmem:[#allocation2 + $0xf0] sm:$0xff] %vm2072, %v9361
        %9427 = vst.msk [vmem:[#allocation2 + $0xf8] sm:$0xff] %vm2072, %v9363
        %v9428 = vld [vmem:[%s4087 + $0x2] sm:$0xff]
        %v9429 = vld [vmem:[%s4087 + $0xa] sm:$0xff]
        %v9430 = vld [vmem:[%s4087 + $0x1a] sm:$0xff]
        %v9431 = vld [vmem:[%s4087 + $0x22] sm:$0xff]
        %v9432 = vld [vmem:[%s4087 + $0x32] sm:$0xff]
        %v9433 = vld [vmem:[%s4087 + $0x3a] sm:$0xff]
        %v9434 = vld [vmem:[%s4087 + $0x4a] sm:$0xff]
        %v9435 = vld [vmem:[%s4087 + $0x52] sm:$0xff]
        %v9436 = vld [vmem:[%s4087 + $0x62] sm:$0xff]
        %v9437 = vld [vmem:[%s4087 + $0x6a] sm:$0xff]
        %v9438 = vld [vmem:[%s4087 + $0x7a] sm:$0xff]
        %v9439 = vld [vmem:[%s4087 + $0x82] sm:$0xff]
        %v9440 = vld [vmem:[%s4087 + $0x92] sm:$0xff]
        %v9441 = vld [vmem:[%s4087 + $0x9a] sm:$0xff]
        %v9442 = vld [vmem:[%s4087 + $0xaa] sm:$0xff]
        %v9443 = vld [vmem:[%s4087 + $0xb2] sm:$0xff]
        %v9444 = vld [vmem:[%s4087 + $0xc2] sm:$0xff]
        %v9445 = vld [vmem:[%s4087 + $0xca] sm:$0xff]
        %v9446 = vld [vmem:[%s4087 + $0xda] sm:$0xff]
        %v9447 = vld [vmem:[%s4087 + $0xe2] sm:$0xff]
        %v9448 = vld [vmem:[%s4087 + $0xf2] sm:$0xff]
        %v9449 = vld [vmem:[%s4087 + $0xfa] sm:$0xff]
        %v9450 = vld [vmem:[%s4087 + $0x10a] sm:$0xff]
        %v9451 = vld [vmem:[%s4087 + $0x112] sm:$0xff]
        %v9452 = vld [vmem:[%s4087 + $0x122] sm:$0xff]
        %v9453 = vld [vmem:[%s4087 + $0x12a] sm:$0xff]
        %v9454 = vld [vmem:[%s4087 + $0x13a] sm:$0xff]
        %v9455 = vld [vmem:[%s4087 + $0x142] sm:$0xff]
        %v9456 = vld [vmem:[%s4087 + $0x152] sm:$0xff]
        %v9457 = vld [vmem:[%s4087 + $0x15a] sm:$0xff]
        %v9458 = vld [vmem:[%s4087 + $0x16a] sm:$0xff]
        %v9459 = vld [vmem:[%s4087 + $0x172] sm:$0xff]
        %v9460 = vadd.f32 %v9204, %v9428
        %v9461 = vadd.f32 %v9205, %v9429
        %v9462 = vadd.f32 %v9206, %v9430
        %v9463 = vadd.f32 %v9207, %v9431
        %v9464 = vadd.f32 %v9208, %v9432
        %v9465 = vadd.f32 %v9209, %v9433
        %v9466 = vadd.f32 %v9210, %v9434
        %v9467 = vadd.f32 %v9211, %v9435
        %v9468 = vadd.f32 %v9212, %v9436
        %v9469 = vadd.f32 %v9213, %v9437
        %v9470 = vadd.f32 %v9214, %v9438
        %v9471 = vadd.f32 %v9215, %v9439
        %v9472 = vadd.f32 %v9216, %v9440
        %v9473 = vadd.f32 %v9217, %v9441
        %v9474 = vadd.f32 %v9218, %v9442
        %v9475 = vadd.f32 %v9219, %v9443
        %v9476 = vadd.f32 %v9220, %v9444
        %v9477 = vadd.f32 %v9221, %v9445
        %v9478 = vadd.f32 %v9222, %v9446
        %v9479 = vadd.f32 %v9223, %v9447
        %v9480 = vadd.f32 %v9224, %v9448
        %v9481 = vadd.f32 %v9225, %v9449
        %v9482 = vadd.f32 %v9226, %v9450
        %v9483 = vadd.f32 %v9227, %v9451
        %v9484 = vadd.f32 %v9228, %v9452
        %v9485 = vadd.f32 %v9229, %v9453
        %v9486 = vadd.f32 %v9230, %v9454
        %v9487 = vadd.f32 %v9231, %v9455
        %v9488 = vadd.f32 %v9232, %v9456
        %v9489 = vadd.f32 %v9233, %v9457
        %v9490 = vadd.f32 %v9234, %v9458
        %v9491 = vadd.f32 %v9235, %v9459
        %v9492 = vmax.f32 %v9428, 0.0
        %v9493 = vmax.f32 %v9429, 0.0
        %v9494 = vmax.f32 %v9430, 0.0
        %v9495 = vmax.f32 %v9431, 0.0
        %v9496 = vmax.f32 %v9432, 0.0
        %v9497 = vmax.f32 %v9433, 0.0
        %v9498 = vmax.f32 %v9434, 0.0
        %v9499 = vmax.f32 %v9435, 0.0
        %v9500 = vmax.f32 %v9436, 0.0
        %v9501 = vmax.f32 %v9437, 0.0
        %v9502 = vmax.f32 %v9438, 0.0
        %v9503 = vmax.f32 %v9439, 0.0
        %v9504 = vmax.f32 %v9440, 0.0
        %v9505 = vmax.f32 %v9441, 0.0
        %v9506 = vmax.f32 %v9442, 0.0
        %v9507 = vmax.f32 %v9443, 0.0
        %v9508 = vmax.f32 %v9444, 0.0
        %v9509 = vmax.f32 %v9445, 0.0
        %v9510 = vmax.f32 %v9446, 0.0
        %v9511 = vmax.f32 %v9447, 0.0
        %v9512 = vmax.f32 %v9448, 0.0
        %v9513 = vmax.f32 %v9449, 0.0
        %v9514 = vmax.f32 %v9450, 0.0
        %v9515 = vmax.f32 %v9451, 0.0
        %v9516 = vmax.f32 %v9452, 0.0
        %v9517 = vmax.f32 %v9453, 0.0
        %v9518 = vmax.f32 %v9454, 0.0
        %v9519 = vmax.f32 %v9455, 0.0
        %v9520 = vmax.f32 %v9456, 0.0
        %v9521 = vmax.f32 %v9457, 0.0
        %v9522 = vmax.f32 %v9458, 0.0
        %v9523 = vmax.f32 %v9459, 0.0
        %9556 = vrot.lane.b32.xlu0 %v9492, 40
        %v9557 = vpop.permute.xlu0 %9556
        %9558 = vrot.lane.b32.xlu0 %v9493, 40
        %v9559 = vpop.permute.xlu0 %9558
        %9560 = vrot.lane.b32.xlu0 %v9494, 40
        %v9561 = vpop.permute.xlu0 %9560
        %9562 = vrot.lane.b32.xlu0 %v9495, 40
        %v9563 = vpop.permute.xlu0 %9562
        %9564 = vrot.lane.b32.xlu0 %v9496, 40
        %v9565 = vpop.permute.xlu0 %9564
        %9566 = vrot.lane.b32.xlu0 %v9497, 40
        %v9567 = vpop.permute.xlu0 %9566
        %9568 = vrot.lane.b32.xlu0 %v9498, 40
        %v9569 = vpop.permute.xlu0 %9568
        %9570 = vrot.lane.b32.xlu0 %v9499, 40
        %v9571 = vpop.permute.xlu0 %9570
        %9572 = vrot.lane.b32.xlu0 %v9500, 40
        %v9573 = vpop.permute.xlu0 %9572
        %9574 = vrot.lane.b32.xlu0 %v9501, 40
        %v9575 = vpop.permute.xlu0 %9574
        %9576 = vrot.lane.b32.xlu0 %v9502, 40
        %v9577 = vpop.permute.xlu0 %9576
        %9578 = vrot.lane.b32.xlu0 %v9503, 40
        %v9579 = vpop.permute.xlu0 %9578
        %9580 = vrot.lane.b32.xlu0 %v9504, 40
        %v9581 = vpop.permute.xlu0 %9580
        %9582 = vrot.lane.b32.xlu0 %v9505, 40
        %v9583 = vpop.permute.xlu0 %9582
        %9584 = vrot.lane.b32.xlu0 %v9506, 40
        %v9585 = vpop.permute.xlu0 %9584
        %9586 = vrot.lane.b32.xlu0 %v9507, 40
        %v9587 = vpop.permute.xlu0 %9586
        %9588 = vrot.lane.b32.xlu0 %v9508, 40
        %v9589 = vpop.permute.xlu0 %9588
        %9590 = vrot.lane.b32.xlu0 %v9509, 40
        %v9591 = vpop.permute.xlu0 %9590
        %9592 = vrot.lane.b32.xlu0 %v9510, 40
        %v9593 = vpop.permute.xlu0 %9592
        %9594 = vrot.lane.b32.xlu0 %v9511, 40
        %v9595 = vpop.permute.xlu0 %9594
        %9596 = vrot.lane.b32.xlu0 %v9512, 40
        %v9597 = vpop.permute.xlu0 %9596
        %9598 = vrot.lane.b32.xlu0 %v9513, 40
        %v9599 = vpop.permute.xlu0 %9598
        %9600 = vrot.lane.b32.xlu0 %v9514, 40
        %v9601 = vpop.permute.xlu0 %9600
        %9602 = vrot.lane.b32.xlu0 %v9515, 40
        %v9603 = vpop.permute.xlu0 %9602
        %9604 = vrot.lane.b32.xlu0 %v9516, 40
        %v9605 = vpop.permute.xlu0 %9604
        %9606 = vrot.lane.b32.xlu0 %v9517, 40
        %v9607 = vpop.permute.xlu0 %9606
        %9608 = vrot.lane.b32.xlu0 %v9518, 40
        %v9609 = vpop.permute.xlu0 %9608
        %9610 = vrot.lane.b32.xlu0 %v9519, 40
        %v9611 = vpop.permute.xlu0 %9610
        %9612 = vrot.lane.b32.xlu0 %v9520, 40
        %v9613 = vpop.permute.xlu0 %9612
        %9614 = vrot.lane.b32.xlu0 %v9521, 40
        %v9615 = vpop.permute.xlu0 %9614
        %9616 = vrot.lane.b32.xlu0 %v9522, 40
        %v9617 = vpop.permute.xlu0 %9616
        %9618 = vrot.lane.b32.xlu0 %v9523, 40
        %v9619 = vpop.permute.xlu0 %9618
        %9652 = vst.msk [vmem:[#allocation2] sm:$0xff] %vm2329, %v9557
        %9653 = vst.msk [vmem:[#allocation2 + $0x8] sm:$0xff] %vm2329, %v9559
        %9654 = vst.msk [vmem:[#allocation2 + $0x10] sm:$0xff] %vm2329, %v9561
        %9655 = vst.msk [vmem:[#allocation2 + $0x18] sm:$0xff] %vm2329, %v9563
        %9656 = vst.msk [vmem:[#allocation2 + $0x20] sm:$0xff] %vm2329, %v9565
        %9657 = vst.msk [vmem:[#allocation2 + $0x28] sm:$0xff] %vm2329, %v9567
        %9658 = vst.msk [vmem:[#allocation2 + $0x30] sm:$0xff] %vm2329, %v9569
        %9659 = vst.msk [vmem:[#allocation2 + $0x38] sm:$0xff] %vm2329, %v9571
        %9660 = vst.msk [vmem:[#allocation2 + $0x40] sm:$0xff] %vm2329, %v9573
        %9661 = vst.msk [vmem:[#allocation2 + $0x48] sm:$0xff] %vm2329, %v9575
        %9662 = vst.msk [vmem:[#allocation2 + $0x50] sm:$0xff] %vm2329, %v9577
        %9663 = vst.msk [vmem:[#allocation2 + $0x58] sm:$0xff] %vm2329, %v9579
        %9664 = vst.msk [vmem:[#allocation2 + $0x60] sm:$0xff] %vm2329, %v9581
        %9665 = vst.msk [vmem:[#allocation2 + $0x68] sm:$0xff] %vm2329, %v9583
        %9666 = vst.msk [vmem:[#allocation2 + $0x70] sm:$0xff] %vm2329, %v9585
        %9667 = vst.msk [vmem:[#allocation2 + $0x78] sm:$0xff] %vm2329, %v9587
        %9668 = vst.msk [vmem:[#allocation2 + $0x80] sm:$0xff] %vm2329, %v9589
        %9669 = vst.msk [vmem:[#allocation2 + $0x88] sm:$0xff] %vm2329, %v9591
        %9670 = vst.msk [vmem:[#allocation2 + $0x90] sm:$0xff] %vm2329, %v9593
        %9671 = vst.msk [vmem:[#allocation2 + $0x98] sm:$0xff] %vm2329, %v9595
        %9672 = vst.msk [vmem:[#allocation2 + $0xa0] sm:$0xff] %vm2329, %v9597
        %9673 = vst.msk [vmem:[#allocation2 + $0xa8] sm:$0xff] %vm2329, %v9599
        %9674 = vst.msk [vmem:[#allocation2 + $0xb0] sm:$0xff] %vm2329, %v9601
        %9675 = vst.msk [vmem:[#allocation2 + $0xb8] sm:$0xff] %vm2329, %v9603
        %9676 = vst.msk [vmem:[#allocation2 + $0xc0] sm:$0xff] %vm2329, %v9605
        %9677 = vst.msk [vmem:[#allocation2 + $0xc8] sm:$0xff] %vm2329, %v9607
        %9678 = vst.msk [vmem:[#allocation2 + $0xd0] sm:$0xff] %vm2329, %v9609
        %9679 = vst.msk [vmem:[#allocation2 + $0xd8] sm:$0xff] %vm2329, %v9611
        %9680 = vst.msk [vmem:[#allocation2 + $0xe0] sm:$0xff] %vm2329, %v9613
        %9681 = vst.msk [vmem:[#allocation2 + $0xe8] sm:$0xff] %vm2329, %v9615
        %9682 = vst.msk [vmem:[#allocation2 + $0xf0] sm:$0xff] %vm2329, %v9617
        %9683 = vst.msk [vmem:[#allocation2 + $0xf8] sm:$0xff] %vm2329, %v9619
        %s9684 = scalar_lea.vmem [#allocation5], 48
        %v9685 = vld [vmem:[%s9684] sm:$0xff]
        %v9686 = vld [vmem:[%s9684 + $0x8] sm:$0xff]
        %v9687 = vld [vmem:[%s9684 + $0x18] sm:$0xff]
        %v9688 = vld [vmem:[%s9684 + $0x20] sm:$0xff]
        %v9689 = vld [vmem:[%s9684 + $0x30] sm:$0xff]
        %v9690 = vld [vmem:[%s9684 + $0x38] sm:$0xff]
        %v9691 = vld [vmem:[%s9684 + $0x48] sm:$0xff]
        %v9692 = vld [vmem:[%s9684 + $0x50] sm:$0xff]
        %v9693 = vld [vmem:[%s9684 + $0x60] sm:$0xff]
        %v9694 = vld [vmem:[%s9684 + $0x68] sm:$0xff]
        %v9695 = vld [vmem:[%s9684 + $0x78] sm:$0xff]
        %v9696 = vld [vmem:[%s9684 + $0x80] sm:$0xff]
        %v9697 = vld [vmem:[%s9684 + $0x90] sm:$0xff]
        %v9698 = vld [vmem:[%s9684 + $0x98] sm:$0xff]
        %v9699 = vld [vmem:[%s9684 + $0xa8] sm:$0xff]
        %v9700 = vld [vmem:[%s9684 + $0xb0] sm:$0xff]
        %v9701 = vld [vmem:[%s9684 + $0xc0] sm:$0xff]
        %v9702 = vld [vmem:[%s9684 + $0xc8] sm:$0xff]
        %v9703 = vld [vmem:[%s9684 + $0xd8] sm:$0xff]
        %v9704 = vld [vmem:[%s9684 + $0xe0] sm:$0xff]
        %v9705 = vld [vmem:[%s9684 + $0xf0] sm:$0xff]
        %v9706 = vld [vmem:[%s9684 + $0xf8] sm:$0xff]
        %v9707 = vld [vmem:[%s9684 + $0x108] sm:$0xff]
        %v9708 = vld [vmem:[%s9684 + $0x110] sm:$0xff]
        %v9709 = vld [vmem:[%s9684 + $0x120] sm:$0xff]
        %v9710 = vld [vmem:[%s9684 + $0x128] sm:$0xff]
        %v9711 = vld [vmem:[%s9684 + $0x138] sm:$0xff]
        %v9712 = vld [vmem:[%s9684 + $0x140] sm:$0xff]
        %v9713 = vld [vmem:[%s9684 + $0x150] sm:$0xff]
        %v9714 = vld [vmem:[%s9684 + $0x158] sm:$0xff]
        %v9715 = vld [vmem:[%s9684 + $0x168] sm:$0xff]
        %v9716 = vld [vmem:[%s9684 + $0x170] sm:$0xff]
        %v9717 = vadd.f32 %v9460, %v9685
        %v9718 = vadd.f32 %v9461, %v9686
        %v9719 = vadd.f32 %v9462, %v9687
        %v9720 = vadd.f32 %v9463, %v9688
        %v9721 = vadd.f32 %v9464, %v9689
        %v9722 = vadd.f32 %v9465, %v9690
        %v9723 = vadd.f32 %v9466, %v9691
        %v9724 = vadd.f32 %v9467, %v9692
        %v9725 = vadd.f32 %v9468, %v9693
        %v9726 = vadd.f32 %v9469, %v9694
        %v9727 = vadd.f32 %v9470, %v9695
        %v9728 = vadd.f32 %v9471, %v9696
        %v9729 = vadd.f32 %v9472, %v9697
        %v9730 = vadd.f32 %v9473, %v9698
        %v9731 = vadd.f32 %v9474, %v9699
        %v9732 = vadd.f32 %v9475, %v9700
        %v9733 = vadd.f32 %v9476, %v9701
        %v9734 = vadd.f32 %v9477, %v9702
        %v9735 = vadd.f32 %v9478, %v9703
        %v9736 = vadd.f32 %v9479, %v9704
        %v9737 = vadd.f32 %v9480, %v9705
        %v9738 = vadd.f32 %v9481, %v9706
        %v9739 = vadd.f32 %v9482, %v9707
        %v9740 = vadd.f32 %v9483, %v9708
        %v9741 = vadd.f32 %v9484, %v9709
        %v9742 = vadd.f32 %v9485, %v9710
        %v9743 = vadd.f32 %v9486, %v9711
        %v9744 = vadd.f32 %v9487, %v9712
        %v9745 = vadd.f32 %v9488, %v9713
        %v9746 = vadd.f32 %v9489, %v9714
        %v9747 = vadd.f32 %v9490, %v9715
        %v9748 = vadd.f32 %v9491, %v9716
        %v9749 = vmax.f32 %v9685, 0.0
        %v9750 = vmax.f32 %v9686, 0.0
        %v9751 = vmax.f32 %v9687, 0.0
        %v9752 = vmax.f32 %v9688, 0.0
        %v9753 = vmax.f32 %v9689, 0.0
        %v9754 = vmax.f32 %v9690, 0.0
        %v9755 = vmax.f32 %v9691, 0.0
        %v9756 = vmax.f32 %v9692, 0.0
        %v9757 = vmax.f32 %v9693, 0.0
        %v9758 = vmax.f32 %v9694, 0.0
        %v9759 = vmax.f32 %v9695, 0.0
        %v9760 = vmax.f32 %v9696, 0.0
        %v9761 = vmax.f32 %v9697, 0.0
        %v9762 = vmax.f32 %v9698, 0.0
        %v9763 = vmax.f32 %v9699, 0.0
        %v9764 = vmax.f32 %v9700, 0.0
        %v9765 = vmax.f32 %v9701, 0.0
        %v9766 = vmax.f32 %v9702, 0.0
        %v9767 = vmax.f32 %v9703, 0.0
        %v9768 = vmax.f32 %v9704, 0.0
        %v9769 = vmax.f32 %v9705, 0.0
        %v9770 = vmax.f32 %v9706, 0.0
        %v9771 = vmax.f32 %v9707, 0.0
        %v9772 = vmax.f32 %v9708, 0.0
        %v9773 = vmax.f32 %v9709, 0.0
        %v9774 = vmax.f32 %v9710, 0.0
        %v9775 = vmax.f32 %v9711, 0.0
        %v9776 = vmax.f32 %v9712, 0.0
        %v9777 = vmax.f32 %v9713, 0.0
        %v9778 = vmax.f32 %v9714, 0.0
        %v9779 = vmax.f32 %v9715, 0.0
        %v9780 = vmax.f32 %v9716, 0.0
        %9813 = vrot.lane.b32.xlu0 %v9749, 48
        %v9814 = vpop.permute.xlu0 %9813
        %9815 = vrot.lane.b32.xlu0 %v9750, 48
        %v9816 = vpop.permute.xlu0 %9815
        %9817 = vrot.lane.b32.xlu0 %v9751, 48
        %v9818 = vpop.permute.xlu0 %9817
        %9819 = vrot.lane.b32.xlu0 %v9752, 48
        %v9820 = vpop.permute.xlu0 %9819
        %9821 = vrot.lane.b32.xlu0 %v9753, 48
        %v9822 = vpop.permute.xlu0 %9821
        %9823 = vrot.lane.b32.xlu0 %v9754, 48
        %v9824 = vpop.permute.xlu0 %9823
        %9825 = vrot.lane.b32.xlu0 %v9755, 48
        %v9826 = vpop.permute.xlu0 %9825
        %9827 = vrot.lane.b32.xlu0 %v9756, 48
        %v9828 = vpop.permute.xlu0 %9827
        %9829 = vrot.lane.b32.xlu0 %v9757, 48
        %v9830 = vpop.permute.xlu0 %9829
        %9831 = vrot.lane.b32.xlu0 %v9758, 48
        %v9832 = vpop.permute.xlu0 %9831
        %9833 = vrot.lane.b32.xlu0 %v9759, 48
        %v9834 = vpop.permute.xlu0 %9833
        %9835 = vrot.lane.b32.xlu0 %v9760, 48
        %v9836 = vpop.permute.xlu0 %9835
        %9837 = vrot.lane.b32.xlu0 %v9761, 48
        %v9838 = vpop.permute.xlu0 %9837
        %9839 = vrot.lane.b32.xlu0 %v9762, 48
        %v9840 = vpop.permute.xlu0 %9839
        %9841 = vrot.lane.b32.xlu0 %v9763, 48
        %v9842 = vpop.permute.xlu0 %9841
        %9843 = vrot.lane.b32.xlu0 %v9764, 48
        %v9844 = vpop.permute.xlu0 %9843
        %9845 = vrot.lane.b32.xlu0 %v9765, 48
        %v9846 = vpop.permute.xlu0 %9845
        %9847 = vrot.lane.b32.xlu0 %v9766, 48
        %v9848 = vpop.permute.xlu0 %9847
        %9849 = vrot.lane.b32.xlu0 %v9767, 48
        %v9850 = vpop.permute.xlu0 %9849
        %9851 = vrot.lane.b32.xlu0 %v9768, 48
        %v9852 = vpop.permute.xlu0 %9851
        %9853 = vrot.lane.b32.xlu0 %v9769, 48
        %v9854 = vpop.permute.xlu0 %9853
        %9855 = vrot.lane.b32.xlu0 %v9770, 48
        %v9856 = vpop.permute.xlu0 %9855
        %9857 = vrot.lane.b32.xlu0 %v9771, 48
        %v9858 = vpop.permute.xlu0 %9857
        %9859 = vrot.lane.b32.xlu0 %v9772, 48
        %v9860 = vpop.permute.xlu0 %9859
        %9861 = vrot.lane.b32.xlu0 %v9773, 48
        %v9862 = vpop.permute.xlu0 %9861
        %9863 = vrot.lane.b32.xlu0 %v9774, 48
        %v9864 = vpop.permute.xlu0 %9863
        %9865 = vrot.lane.b32.xlu0 %v9775, 48
        %v9866 = vpop.permute.xlu0 %9865
        %9867 = vrot.lane.b32.xlu0 %v9776, 48
        %v9868 = vpop.permute.xlu0 %9867
        %9869 = vrot.lane.b32.xlu0 %v9777, 48
        %v9870 = vpop.permute.xlu0 %9869
        %9871 = vrot.lane.b32.xlu0 %v9778, 48
        %v9872 = vpop.permute.xlu0 %9871
        %9873 = vrot.lane.b32.xlu0 %v9779, 48
        %v9874 = vpop.permute.xlu0 %9873
        %9875 = vrot.lane.b32.xlu0 %v9780, 48
        %v9876 = vpop.permute.xlu0 %9875
        %9909 = vst.msk [vmem:[#allocation2] sm:$0xff] %vm2587, %v9814
        %9910 = vst.msk [vmem:[#allocation2 + $0x8] sm:$0xff] %vm2587, %v9816
        %9911 = vst.msk [vmem:[#allocation2 + $0x10] sm:$0xff] %vm2587, %v9818
        %9912 = vst.msk [vmem:[#allocation2 + $0x18] sm:$0xff] %vm2587, %v9820
        %9913 = vst.msk [vmem:[#allocation2 + $0x20] sm:$0xff] %vm2587, %v9822
        %9914 = vst.msk [vmem:[#allocation2 + $0x28] sm:$0xff] %vm2587, %v9824
        %9915 = vst.msk [vmem:[#allocation2 + $0x30] sm:$0xff] %vm2587, %v9826
        %9916 = vst.msk [vmem:[#allocation2 + $0x38] sm:$0xff] %vm2587, %v9828
        %9917 = vst.msk [vmem:[#allocation2 + $0x40] sm:$0xff] %vm2587, %v9830
        %9918 = vst.msk [vmem:[#allocation2 + $0x48] sm:$0xff] %vm2587, %v9832
        %9919 = vst.msk [vmem:[#allocation2 + $0x50] sm:$0xff] %vm2587, %v9834
        %9920 = vst.msk [vmem:[#allocation2 + $0x58] sm:$0xff] %vm2587, %v9836
        %9921 = vst.msk [vmem:[#allocation2 + $0x60] sm:$0xff] %vm2587, %v9838
        %9922 = vst.msk [vmem:[#allocation2 + $0x68] sm:$0xff] %vm2587, %v9840
        %9923 = vst.msk [vmem:[#allocation2 + $0x70] sm:$0xff] %vm2587, %v9842
        %9924 = vst.msk [vmem:[#allocation2 + $0x78] sm:$0xff] %vm2587, %v9844
        %9925 = vst.msk [vmem:[#allocation2 + $0x80] sm:$0xff] %vm2587, %v9846
        %9926 = vst.msk [vmem:[#allocation2 + $0x88] sm:$0xff] %vm2587, %v9848
        %9927 = vst.msk [vmem:[#allocation2 + $0x90] sm:$0xff] %vm2587, %v9850
        %9928 = vst.msk [vmem:[#allocation2 + $0x98] sm:$0xff] %vm2587, %v9852
        %9929 = vst.msk [vmem:[#allocation2 + $0xa0] sm:$0xff] %vm2587, %v9854
        %9930 = vst.msk [vmem:[#allocation2 + $0xa8] sm:$0xff] %vm2587, %v9856
        %9931 = vst.msk [vmem:[#allocation2 + $0xb0] sm:$0xff] %vm2587, %v9858
        %9932 = vst.msk [vmem:[#allocation2 + $0xb8] sm:$0xff] %vm2587, %v9860
        %9933 = vst.msk [vmem:[#allocation2 + $0xc0] sm:$0xff] %vm2587, %v9862
        %9934 = vst.msk [vmem:[#allocation2 + $0xc8] sm:$0xff] %vm2587, %v9864
        %9935 = vst.msk [vmem:[#allocation2 + $0xd0] sm:$0xff] %vm2587, %v9866
        %9936 = vst.msk [vmem:[#allocation2 + $0xd8] sm:$0xff] %vm2587, %v9868
        %9937 = vst.msk [vmem:[#allocation2 + $0xe0] sm:$0xff] %vm2587, %v9870
        %9938 = vst.msk [vmem:[#allocation2 + $0xe8] sm:$0xff] %vm2587, %v9872
        %9939 = vst.msk [vmem:[#allocation2 + $0xf0] sm:$0xff] %vm2587, %v9874
        %9940 = vst.msk [vmem:[#allocation2 + $0xf8] sm:$0xff] %vm2587, %v9876
        %v9941 = vld [vmem:[%s9684 + $0x1] sm:$0xff]
        %v9942 = vld [vmem:[%s9684 + $0x9] sm:$0xff]
        %v9943 = vld [vmem:[%s9684 + $0x19] sm:$0xff]
        %v9944 = vld [vmem:[%s9684 + $0x21] sm:$0xff]
        %v9945 = vld [vmem:[%s9684 + $0x31] sm:$0xff]
        %v9946 = vld [vmem:[%s9684 + $0x39] sm:$0xff]
        %v9947 = vld [vmem:[%s9684 + $0x49] sm:$0xff]
        %v9948 = vld [vmem:[%s9684 + $0x51] sm:$0xff]
        %v9949 = vld [vmem:[%s9684 + $0x61] sm:$0xff]
        %v9950 = vld [vmem:[%s9684 + $0x69] sm:$0xff]
        %v9951 = vld [vmem:[%s9684 + $0x79] sm:$0xff]
        %v9952 = vld [vmem:[%s9684 + $0x81] sm:$0xff]
        %v9953 = vld [vmem:[%s9684 + $0x91] sm:$0xff]
        %v9954 = vld [vmem:[%s9684 + $0x99] sm:$0xff]
        %v9955 = vld [vmem:[%s9684 + $0xa9] sm:$0xff]
        %v9956 = vld [vmem:[%s9684 + $0xb1] sm:$0xff]
        %v9957 = vld [vmem:[%s9684 + $0xc1] sm:$0xff]
        %v9958 = vld [vmem:[%s9684 + $0xc9] sm:$0xff]
        %v9959 = vld [vmem:[%s9684 + $0xd9] sm:$0xff]
        %v9960 = vld [vmem:[%s9684 + $0xe1] sm:$0xff]
        %v9961 = vld [vmem:[%s9684 + $0xf1] sm:$0xff]
        %v9962 = vld [vmem:[%s9684 + $0xf9] sm:$0xff]
        %v9963 = vld [vmem:[%s9684 + $0x109] sm:$0xff]
        %v9964 = vld [vmem:[%s9684 + $0x111] sm:$0xff]
        %v9965 = vld [vmem:[%s9684 + $0x121] sm:$0xff]
        %v9966 = vld [vmem:[%s9684 + $0x129] sm:$0xff]
        %v9967 = vld [vmem:[%s9684 + $0x139] sm:$0xff]
        %v9968 = vld [vmem:[%s9684 + $0x141] sm:$0xff]
        %v9969 = vld [vmem:[%s9684 + $0x151] sm:$0xff]
        %v9970 = vld [vmem:[%s9684 + $0x159] sm:$0xff]
        %v9971 = vld [vmem:[%s9684 + $0x169] sm:$0xff]
        %v9972 = vld [vmem:[%s9684 + $0x171] sm:$0xff]
        %v9973 = vadd.f32 %v9717, %v9941
        %v9974 = vadd.f32 %v9718, %v9942
        %v9975 = vadd.f32 %v9719, %v9943
        %v9976 = vadd.f32 %v9720, %v9944
        %v9977 = vadd.f32 %v9721, %v9945
        %v9978 = vadd.f32 %v9722, %v9946
        %v9979 = vadd.f32 %v9723, %v9947
        %v9980 = vadd.f32 %v9724, %v9948
        %v9981 = vadd.f32 %v9725, %v9949
        %v9982 = vadd.f32 %v9726, %v9950
        %v9983 = vadd.f32 %v9727, %v9951
        %v9984 = vadd.f32 %v9728, %v9952
        %v9985 = vadd.f32 %v9729, %v9953
        %v9986 = vadd.f32 %v9730, %v9954
        %v9987 = vadd.f32 %v9731, %v9955
        %v9988 = vadd.f32 %v9732, %v9956
        %v9989 = vadd.f32 %v9733, %v9957
        %v9990 = vadd.f32 %v9734, %v9958
        %v9991 = vadd.f32 %v9735, %v9959
        %v9992 = vadd.f32 %v9736, %v9960
        %v9993 = vadd.f32 %v9737, %v9961
        %v9994 = vadd.f32 %v9738, %v9962
        %v9995 = vadd.f32 %v9739, %v9963
        %v9996 = vadd.f32 %v9740, %v9964
        %v9997 = vadd.f32 %v9741, %v9965
        %v9998 = vadd.f32 %v9742, %v9966
        %v9999 = vadd.f32 %v9743, %v9967
        %v10000 = vadd.f32 %v9744, %v9968
        %v10001 = vadd.f32 %v9745, %v9969
        %v10002 = vadd.f32 %v9746, %v9970
        %v10003 = vadd.f32 %v9747, %v9971
        %v10004 = vadd.f32 %v9748, %v9972
        %v10005 = vmax.f32 %v9941, 0.0
        %v10006 = vmax.f32 %v9942, 0.0
        %v10007 = vmax.f32 %v9943, 0.0
        %v10008 = vmax.f32 %v9944, 0.0
        %v10009 = vmax.f32 %v9945, 0.0
        %v10010 = vmax.f32 %v9946, 0.0
        %v10011 = vmax.f32 %v9947, 0.0
        %v10012 = vmax.f32 %v9948, 0.0
        %v10013 = vmax.f32 %v9949, 0.0
        %v10014 = vmax.f32 %v9950, 0.0
        %v10015 = vmax.f32 %v9951, 0.0
        %v10016 = vmax.f32 %v9952, 0.0
        %v10017 = vmax.f32 %v9953, 0.0
        %v10018 = vmax.f32 %v9954, 0.0
        %v10019 = vmax.f32 %v9955, 0.0
        %v10020 = vmax.f32 %v9956, 0.0
        %v10021 = vmax.f32 %v9957, 0.0
        %v10022 = vmax.f32 %v9958, 0.0
        %v10023 = vmax.f32 %v9959, 0.0
        %v10024 = vmax.f32 %v9960, 0.0
        %v10025 = vmax.f32 %v9961, 0.0
        %v10026 = vmax.f32 %v9962, 0.0
        %v10027 = vmax.f32 %v9963, 0.0
        %v10028 = vmax.f32 %v9964, 0.0
        %v10029 = vmax.f32 %v9965, 0.0
        %v10030 = vmax.f32 %v9966, 0.0
        %v10031 = vmax.f32 %v9967, 0.0
        %v10032 = vmax.f32 %v9968, 0.0
        %v10033 = vmax.f32 %v9969, 0.0
        %v10034 = vmax.f32 %v9970, 0.0
        %v10035 = vmax.f32 %v9971, 0.0
        %v10036 = vmax.f32 %v9972, 0.0
        %10069 = vrot.lane.b32.xlu0 %v10005, 56
        %v10070 = vpop.permute.xlu0 %10069
        %10071 = vrot.lane.b32.xlu0 %v10006, 56
        %v10072 = vpop.permute.xlu0 %10071
        %10073 = vrot.lane.b32.xlu0 %v10007, 56
        %v10074 = vpop.permute.xlu0 %10073
        %10075 = vrot.lane.b32.xlu0 %v10008, 56
        %v10076 = vpop.permute.xlu0 %10075
        %10077 = vrot.lane.b32.xlu0 %v10009, 56
        %v10078 = vpop.permute.xlu0 %10077
        %10079 = vrot.lane.b32.xlu0 %v10010, 56
        %v10080 = vpop.permute.xlu0 %10079
        %10081 = vrot.lane.b32.xlu0 %v10011, 56
        %v10082 = vpop.permute.xlu0 %10081
        %10083 = vrot.lane.b32.xlu0 %v10012, 56
        %v10084 = vpop.permute.xlu0 %10083
        %10085 = vrot.lane.b32.xlu0 %v10013, 56
        %v10086 = vpop.permute.xlu0 %10085
        %10087 = vrot.lane.b32.xlu0 %v10014, 56
        %v10088 = vpop.permute.xlu0 %10087
        %10089 = vrot.lane.b32.xlu0 %v10015, 56
        %v10090 = vpop.permute.xlu0 %10089
        %10091 = vrot.lane.b32.xlu0 %v10016, 56
        %v10092 = vpop.permute.xlu0 %10091
        %10093 = vrot.lane.b32.xlu0 %v10017, 56
        %v10094 = vpop.permute.xlu0 %10093
        %10095 = vrot.lane.b32.xlu0 %v10018, 56
        %v10096 = vpop.permute.xlu0 %10095
        %10097 = vrot.lane.b32.xlu0 %v10019, 56
        %v10098 = vpop.permute.xlu0 %10097
        %10099 = vrot.lane.b32.xlu0 %v10020, 56
        %v10100 = vpop.permute.xlu0 %10099
        %10101 = vrot.lane.b32.xlu0 %v10021, 56
        %v10102 = vpop.permute.xlu0 %10101
        %10103 = vrot.lane.b32.xlu0 %v10022, 56
        %v10104 = vpop.permute.xlu0 %10103
        %10105 = vrot.lane.b32.xlu0 %v10023, 56
        %v10106 = vpop.permute.xlu0 %10105
        %10107 = vrot.lane.b32.xlu0 %v10024, 56
        %v10108 = vpop.permute.xlu0 %10107
        %10109 = vrot.lane.b32.xlu0 %v10025, 56
        %v10110 = vpop.permute.xlu0 %10109
        %10111 = vrot.lane.b32.xlu0 %v10026, 56
        %v10112 = vpop.permute.xlu0 %10111
        %10113 = vrot.lane.b32.xlu0 %v10027, 56
        %v10114 = vpop.permute.xlu0 %10113
        %10115 = vrot.lane.b32.xlu0 %v10028, 56
        %v10116 = vpop.permute.xlu0 %10115
        %10117 = vrot.lane.b32.xlu0 %v10029, 56
        %v10118 = vpop.permute.xlu0 %10117
        %10119 = vrot.lane.b32.xlu0 %v10030, 56
        %v10120 = vpop.permute.xlu0 %10119
        %10121 = vrot.lane.b32.xlu0 %v10031, 56
        %v10122 = vpop.permute.xlu0 %10121
        %10123 = vrot.lane.b32.xlu0 %v10032, 56
        %v10124 = vpop.permute.xlu0 %10123
        %10125 = vrot.lane.b32.xlu0 %v10033, 56
        %v10126 = vpop.permute.xlu0 %10125
        %10127 = vrot.lane.b32.xlu0 %v10034, 56
        %v10128 = vpop.permute.xlu0 %10127
        %10129 = vrot.lane.b32.xlu0 %v10035, 56
        %v10130 = vpop.permute.xlu0 %10129
        %10131 = vrot.lane.b32.xlu0 %v10036, 56
        %v10132 = vpop.permute.xlu0 %10131
        %10165 = vst.msk [vmem:[#allocation2] sm:$0xff] %vm2844, %v10070
        %10166 = vst.msk [vmem:[#allocation2 + $0x8] sm:$0xff] %vm2844, %v10072
        %10167 = vst.msk [vmem:[#allocation2 + $0x10] sm:$0xff] %vm2844, %v10074
        %10168 = vst.msk [vmem:[#allocation2 + $0x18] sm:$0xff] %vm2844, %v10076
        %10169 = vst.msk [vmem:[#allocation2 + $0x20] sm:$0xff] %vm2844, %v10078
        %10170 = vst.msk [vmem:[#allocation2 + $0x28] sm:$0xff] %vm2844, %v10080
        %10171 = vst.msk [vmem:[#allocation2 + $0x30] sm:$0xff] %vm2844, %v10082
        %10172 = vst.msk [vmem:[#allocation2 + $0x38] sm:$0xff] %vm2844, %v10084
        %10173 = vst.msk [vmem:[#allocation2 + $0x40] sm:$0xff] %vm2844, %v10086
        %10174 = vst.msk [vmem:[#allocation2 + $0x48] sm:$0xff] %vm2844, %v10088
        %10175 = vst.msk [vmem:[#allocation2 + $0x50] sm:$0xff] %vm2844, %v10090
        %10176 = vst.msk [vmem:[#allocation2 + $0x58] sm:$0xff] %vm2844, %v10092
        %10177 = vst.msk [vmem:[#allocation2 + $0x60] sm:$0xff] %vm2844, %v10094
        %10178 = vst.msk [vmem:[#allocation2 + $0x68] sm:$0xff] %vm2844, %v10096
        %10179 = vst.msk [vmem:[#allocation2 + $0x70] sm:$0xff] %vm2844, %v10098
        %10180 = vst.msk [vmem:[#allocation2 + $0x78] sm:$0xff] %vm2844, %v10100
        %10181 = vst.msk [vmem:[#allocation2 + $0x80] sm:$0xff] %vm2844, %v10102
        %10182 = vst.msk [vmem:[#allocation2 + $0x88] sm:$0xff] %vm2844, %v10104
        %10183 = vst.msk [vmem:[#allocation2 + $0x90] sm:$0xff] %vm2844, %v10106
        %10184 = vst.msk [vmem:[#allocation2 + $0x98] sm:$0xff] %vm2844, %v10108
        %10185 = vst.msk [vmem:[#allocation2 + $0xa0] sm:$0xff] %vm2844, %v10110
        %10186 = vst.msk [vmem:[#allocation2 + $0xa8] sm:$0xff] %vm2844, %v10112
        %10187 = vst.msk [vmem:[#allocation2 + $0xb0] sm:$0xff] %vm2844, %v10114
        %10188 = vst.msk [vmem:[#allocation2 + $0xb8] sm:$0xff] %vm2844, %v10116
        %10189 = vst.msk [vmem:[#allocation2 + $0xc0] sm:$0xff] %vm2844, %v10118
        %10190 = vst.msk [vmem:[#allocation2 + $0xc8] sm:$0xff] %vm2844, %v10120
        %10191 = vst.msk [vmem:[#allocation2 + $0xd0] sm:$0xff] %vm2844, %v10122
        %10192 = vst.msk [vmem:[#allocation2 + $0xd8] sm:$0xff] %vm2844, %v10124
        %10193 = vst.msk [vmem:[#allocation2 + $0xe0] sm:$0xff] %vm2844, %v10126
        %10194 = vst.msk [vmem:[#allocation2 + $0xe8] sm:$0xff] %vm2844, %v10128
        %10195 = vst.msk [vmem:[#allocation2 + $0xf0] sm:$0xff] %vm2844, %v10130
        %10196 = vst.msk [vmem:[#allocation2 + $0xf8] sm:$0xff] %vm2844, %v10132
        %v10197 = vld [vmem:[%s9684 + $0x2] sm:$0xff]
        %v10198 = vld [vmem:[%s9684 + $0xa] sm:$0xff]
        %v10199 = vld [vmem:[%s9684 + $0x1a] sm:$0xff]
        %v10200 = vld [vmem:[%s9684 + $0x22] sm:$0xff]
        %v10201 = vld [vmem:[%s9684 + $0x32] sm:$0xff]
        %v10202 = vld [vmem:[%s9684 + $0x3a] sm:$0xff]
        %v10203 = vld [vmem:[%s9684 + $0x4a] sm:$0xff]
        %v10204 = vld [vmem:[%s9684 + $0x52] sm:$0xff]
        %v10205 = vld [vmem:[%s9684 + $0x62] sm:$0xff]
        %v10206 = vld [vmem:[%s9684 + $0x6a] sm:$0xff]
        %v10207 = vld [vmem:[%s9684 + $0x7a] sm:$0xff]
        %v10208 = vld [vmem:[%s9684 + $0x82] sm:$0xff]
        %v10209 = vld [vmem:[%s9684 + $0x92] sm:$0xff]
        %v10210 = vld [vmem:[%s9684 + $0x9a] sm:$0xff]
        %v10211 = vld [vmem:[%s9684 + $0xaa] sm:$0xff]
        %v10212 = vld [vmem:[%s9684 + $0xb2] sm:$0xff]
        %v10213 = vld [vmem:[%s9684 + $0xc2] sm:$0xff]
        %v10214 = vld [vmem:[%s9684 + $0xca] sm:$0xff]
        %v10215 = vld [vmem:[%s9684 + $0xda] sm:$0xff]
        %v10216 = vld [vmem:[%s9684 + $0xe2] sm:$0xff]
        %v10217 = vld [vmem:[%s9684 + $0xf2] sm:$0xff]
        %v10218 = vld [vmem:[%s9684 + $0xfa] sm:$0xff]
        %v10219 = vld [vmem:[%s9684 + $0x10a] sm:$0xff]
        %v10220 = vld [vmem:[%s9684 + $0x112] sm:$0xff]
        %v10221 = vld [vmem:[%s9684 + $0x122] sm:$0xff]
        %v10222 = vld [vmem:[%s9684 + $0x12a] sm:$0xff]
        %v10223 = vld [vmem:[%s9684 + $0x13a] sm:$0xff]
        %v10224 = vld [vmem:[%s9684 + $0x142] sm:$0xff]
        %v10225 = vld [vmem:[%s9684 + $0x152] sm:$0xff]
        %v10226 = vld [vmem:[%s9684 + $0x15a] sm:$0xff]
        %v10227 = vld [vmem:[%s9684 + $0x16a] sm:$0xff]
        %v10228 = vld [vmem:[%s9684 + $0x172] sm:$0xff]
        %v10229 = vadd.f32 %v9973, %v10197
        %v10230 = vadd.f32 %v9974, %v10198
        %v10231 = vadd.f32 %v9975, %v10199
        %v10232 = vadd.f32 %v9976, %v10200
        %v10233 = vadd.f32 %v9977, %v10201
        %v10234 = vadd.f32 %v9978, %v10202
        %v10235 = vadd.f32 %v9979, %v10203
        %v10236 = vadd.f32 %v9980, %v10204
        %v10237 = vadd.f32 %v9981, %v10205
        %v10238 = vadd.f32 %v9982, %v10206
        %v10239 = vadd.f32 %v9983, %v10207
        %v10240 = vadd.f32 %v9984, %v10208
        %v10241 = vadd.f32 %v9985, %v10209
        %v10242 = vadd.f32 %v9986, %v10210
        %v10243 = vadd.f32 %v9987, %v10211
        %v10244 = vadd.f32 %v9988, %v10212
        %v10245 = vadd.f32 %v9989, %v10213
        %v10246 = vadd.f32 %v9990, %v10214
        %v10247 = vadd.f32 %v9991, %v10215
        %v10248 = vadd.f32 %v9992, %v10216
        %v10249 = vadd.f32 %v9993, %v10217
        %v10250 = vadd.f32 %v9994, %v10218
        %v10251 = vadd.f32 %v9995, %v10219
        %v10252 = vadd.f32 %v9996, %v10220
        %v10253 = vadd.f32 %v9997, %v10221
        %v10254 = vadd.f32 %v9998, %v10222
        %v10255 = vadd.f32 %v9999, %v10223
        %v10256 = vadd.f32 %v10000, %v10224
        %v10257 = vadd.f32 %v10001, %v10225
        %v10258 = vadd.f32 %v10002, %v10226
        %v10259 = vadd.f32 %v10003, %v10227
        %v10260 = vadd.f32 %v10004, %v10228
        %v10261 = vmax.f32 %v10197, 0.0
        %v10262 = vmax.f32 %v10198, 0.0
        %v10263 = vmax.f32 %v10199, 0.0
        %v10264 = vmax.f32 %v10200, 0.0
        %v10265 = vmax.f32 %v10201, 0.0
        %v10266 = vmax.f32 %v10202, 0.0
        %v10267 = vmax.f32 %v10203, 0.0
        %v10268 = vmax.f32 %v10204, 0.0
        %v10269 = vmax.f32 %v10205, 0.0
        %v10270 = vmax.f32 %v10206, 0.0
        %v10271 = vmax.f32 %v10207, 0.0
        %v10272 = vmax.f32 %v10208, 0.0
        %v10273 = vmax.f32 %v10209, 0.0
        %v10274 = vmax.f32 %v10210, 0.0
        %v10275 = vmax.f32 %v10211, 0.0
        %v10276 = vmax.f32 %v10212, 0.0
        %v10277 = vmax.f32 %v10213, 0.0
        %v10278 = vmax.f32 %v10214, 0.0
        %v10279 = vmax.f32 %v10215, 0.0
        %v10280 = vmax.f32 %v10216, 0.0
        %v10281 = vmax.f32 %v10217, 0.0
        %v10282 = vmax.f32 %v10218, 0.0
        %v10283 = vmax.f32 %v10219, 0.0
        %v10284 = vmax.f32 %v10220, 0.0
        %v10285 = vmax.f32 %v10221, 0.0
        %v10286 = vmax.f32 %v10222, 0.0
        %v10287 = vmax.f32 %v10223, 0.0
        %v10288 = vmax.f32 %v10224, 0.0
        %v10289 = vmax.f32 %v10225, 0.0
        %v10290 = vmax.f32 %v10226, 0.0
        %v10291 = vmax.f32 %v10227, 0.0
        %v10292 = vmax.f32 %v10228, 0.0
        %10325 = vrot.lane.b32.xlu0 %v10261, 64
        %v10326 = vpop.permute.xlu0 %10325
        %10327 = vrot.lane.b32.xlu0 %v10262, 64
        %v10328 = vpop.permute.xlu0 %10327
        %10329 = vrot.lane.b32.xlu0 %v10263, 64
        %v10330 = vpop.permute.xlu0 %10329
        %10331 = vrot.lane.b32.xlu0 %v10264, 64
        %v10332 = vpop.permute.xlu0 %10331
        %10333 = vrot.lane.b32.xlu0 %v10265, 64
        %v10334 = vpop.permute.xlu0 %10333
        %10335 = vrot.lane.b32.xlu0 %v10266, 64
        %v10336 = vpop.permute.xlu0 %10335
        %10337 = vrot.lane.b32.xlu0 %v10267, 64
        %v10338 = vpop.permute.xlu0 %10337
        %10339 = vrot.lane.b32.xlu0 %v10268, 64
        %v10340 = vpop.permute.xlu0 %10339
        %10341 = vrot.lane.b32.xlu0 %v10269, 64
        %v10342 = vpop.permute.xlu0 %10341
        %10343 = vrot.lane.b32.xlu0 %v10270, 64
        %v10344 = vpop.permute.xlu0 %10343
        %10345 = vrot.lane.b32.xlu0 %v10271, 64
        %v10346 = vpop.permute.xlu0 %10345
        %10347 = vrot.lane.b32.xlu0 %v10272, 64
        %v10348 = vpop.permute.xlu0 %10347
        %10349 = vrot.lane.b32.xlu0 %v10273, 64
        %v10350 = vpop.permute.xlu0 %10349
        %10351 = vrot.lane.b32.xlu0 %v10274, 64
        %v10352 = vpop.permute.xlu0 %10351
        %10353 = vrot.lane.b32.xlu0 %v10275, 64
        %v10354 = vpop.permute.xlu0 %10353
        %10355 = vrot.lane.b32.xlu0 %v10276, 64
        %v10356 = vpop.permute.xlu0 %10355
        %10357 = vrot.lane.b32.xlu0 %v10277, 64
        %v10358 = vpop.permute.xlu0 %10357
        %10359 = vrot.lane.b32.xlu0 %v10278, 64
        %v10360 = vpop.permute.xlu0 %10359
        %10361 = vrot.lane.b32.xlu0 %v10279, 64
        %v10362 = vpop.permute.xlu0 %10361
        %10363 = vrot.lane.b32.xlu0 %v10280, 64
        %v10364 = vpop.permute.xlu0 %10363
        %10365 = vrot.lane.b32.xlu0 %v10281, 64
        %v10366 = vpop.permute.xlu0 %10365
        %10367 = vrot.lane.b32.xlu0 %v10282, 64
        %v10368 = vpop.permute.xlu0 %10367
        %10369 = vrot.lane.b32.xlu0 %v10283, 64
        %v10370 = vpop.permute.xlu0 %10369
        %10371 = vrot.lane.b32.xlu0 %v10284, 64
        %v10372 = vpop.permute.xlu0 %10371
        %10373 = vrot.lane.b32.xlu0 %v10285, 64
        %v10374 = vpop.permute.xlu0 %10373
        %10375 = vrot.lane.b32.xlu0 %v10286, 64
        %v10376 = vpop.permute.xlu0 %10375
        %10377 = vrot.lane.b32.xlu0 %v10287, 64
        %v10378 = vpop.permute.xlu0 %10377
        %10379 = vrot.lane.b32.xlu0 %v10288, 64
        %v10380 = vpop.permute.xlu0 %10379
        %10381 = vrot.lane.b32.xlu0 %v10289, 64
        %v10382 = vpop.permute.xlu0 %10381
        %10383 = vrot.lane.b32.xlu0 %v10290, 64
        %v10384 = vpop.permute.xlu0 %10383
        %10385 = vrot.lane.b32.xlu0 %v10291, 64
        %v10386 = vpop.permute.xlu0 %10385
        %10387 = vrot.lane.b32.xlu0 %v10292, 64
        %v10388 = vpop.permute.xlu0 %10387
        %10421 = vst.msk [vmem:[#allocation2] sm:$0xff] %vm3101, %v10326
        %10422 = vst.msk [vmem:[#allocation2 + $0x8] sm:$0xff] %vm3101, %v10328
        %10423 = vst.msk [vmem:[#allocation2 + $0x10] sm:$0xff] %vm3101, %v10330
        %10424 = vst.msk [vmem:[#allocation2 + $0x18] sm:$0xff] %vm3101, %v10332
        %10425 = vst.msk [vmem:[#allocation2 + $0x20] sm:$0xff] %vm3101, %v10334
        %10426 = vst.msk [vmem:[#allocation2 + $0x28] sm:$0xff] %vm3101, %v10336
        %10427 = vst.msk [vmem:[#allocation2 + $0x30] sm:$0xff] %vm3101, %v10338
        %10428 = vst.msk [vmem:[#allocation2 + $0x38] sm:$0xff] %vm3101, %v10340
        %10429 = vst.msk [vmem:[#allocation2 + $0x40] sm:$0xff] %vm3101, %v10342
        %10430 = vst.msk [vmem:[#allocation2 + $0x48] sm:$0xff] %vm3101, %v10344
        %10431 = vst.msk [vmem:[#allocation2 + $0x50] sm:$0xff] %vm3101, %v10346
        %10432 = vst.msk [vmem:[#allocation2 + $0x58] sm:$0xff] %vm3101, %v10348
        %10433 = vst.msk [vmem:[#allocation2 + $0x60] sm:$0xff] %vm3101, %v10350
        %10434 = vst.msk [vmem:[#allocation2 + $0x68] sm:$0xff] %vm3101, %v10352
        %10435 = vst.msk [vmem:[#allocation2 + $0x70] sm:$0xff] %vm3101, %v10354
        %10436 = vst.msk [vmem:[#allocation2 + $0x78] sm:$0xff] %vm3101, %v10356
        %10437 = vst.msk [vmem:[#allocation2 + $0x80] sm:$0xff] %vm3101, %v10358
        %10438 = vst.msk [vmem:[#allocation2 + $0x88] sm:$0xff] %vm3101, %v10360
        %10439 = vst.msk [vmem:[#allocation2 + $0x90] sm:$0xff] %vm3101, %v10362
        %10440 = vst.msk [vmem:[#allocation2 + $0x98] sm:$0xff] %vm3101, %v10364
        %10441 = vst.msk [vmem:[#allocation2 + $0xa0] sm:$0xff] %vm3101, %v10366
        %10442 = vst.msk [vmem:[#allocation2 + $0xa8] sm:$0xff] %vm3101, %v10368
        %10443 = vst.msk [vmem:[#allocation2 + $0xb0] sm:$0xff] %vm3101, %v10370
        %10444 = vst.msk [vmem:[#allocation2 + $0xb8] sm:$0xff] %vm3101, %v10372
        %10445 = vst.msk [vmem:[#allocation2 + $0xc0] sm:$0xff] %vm3101, %v10374
        %10446 = vst.msk [vmem:[#allocation2 + $0xc8] sm:$0xff] %vm3101, %v10376
        %10447 = vst.msk [vmem:[#allocation2 + $0xd0] sm:$0xff] %vm3101, %v10378
        %10448 = vst.msk [vmem:[#allocation2 + $0xd8] sm:$0xff] %vm3101, %v10380
        %10449 = vst.msk [vmem:[#allocation2 + $0xe0] sm:$0xff] %vm3101, %v10382
        %10450 = vst.msk [vmem:[#allocation2 + $0xe8] sm:$0xff] %vm3101, %v10384
        %10451 = vst.msk [vmem:[#allocation2 + $0xf0] sm:$0xff] %vm3101, %v10386
        %10452 = vst.msk [vmem:[#allocation2 + $0xf8] sm:$0xff] %vm3101, %v10388
        %v10453 = vmul.f32 %v10229, %v604
        %v10454 = vmul.f32 %v10230, %v606
        %v10455 = vmul.f32 %v10231, %v608
        %v10456 = vmul.f32 %v10232, %v610
        %v10457 = vmul.f32 %v10233, %v608
        %v10458 = vmul.f32 %v10234, %v610
        %v10459 = vmul.f32 %v10235, %v608
        %v10460 = vmul.f32 %v10236, %v610
        %v10461 = vmul.f32 %v10237, %v608
        %v10462 = vmul.f32 %v10238, %v610
        %v10463 = vmul.f32 %v10239, %v608
        %v10464 = vmul.f32 %v10240, %v610
        %v10465 = vmul.f32 %v10241, %v608
        %v10466 = vmul.f32 %v10242, %v610
        %v10467 = vmul.f32 %v10243, %v608
        %v10468 = vmul.f32 %v10244, %v610
        %v10469 = vmul.f32 %v10245, %v608
        %v10470 = vmul.f32 %v10246, %v610
        %v10471 = vmul.f32 %v10247, %v608
        %v10472 = vmul.f32 %v10248, %v610
        %v10473 = vmul.f32 %v10249, %v608
        %v10474 = vmul.f32 %v10250, %v610
        %v10475 = vmul.f32 %v10251, %v608
        %v10476 = vmul.f32 %v10252, %v610
        %v10477 = vmul.f32 %v10253, %v608
        %v10478 = vmul.f32 %v10254, %v610
        %v10479 = vmul.f32 %v10255, %v608
        %v10480 = vmul.f32 %v10256, %v610
        %v10481 = vmul.f32 %v10257, %v608
        %v10482 = vmul.f32 %v10258, %v610
        %v10483 = vmul.f32 %v10259, %v612
        %v10484 = vmul.f32 %v10260, %v614
        %v10485 = vld [vmem:[%s8] sm:$0xf]
        %v10486 = vld [vmem:[%s8 + $0x4] sm:$0xf]
        %v10487 = vld [vmem:[%s8 + $0x8] sm:$0xf]
        %v10488 = vld [vmem:[%s8 + $0xc] sm:$0xf]
        %v10489 = vld [vmem:[%s8 + $0x10] sm:$0xf]
        %v10490 = vld [vmem:[%s8 + $0x14] sm:$0xf]
        %v10491 = vld [vmem:[%s8 + $0x18] sm:$0xf]
        %v10492 = vld [vmem:[%s8 + $0x1c] sm:$0xf]
        %v10493 = vld [vmem:[%s8 + $0x20] sm:$0xf]
        %v10494 = vld [vmem:[%s9] sm:$0x1]
        %v10495 = vld [vmem:[#allocation2] sm:$0xff]
        %v10496 = vld [vmem:[#allocation2 + $0x8] sm:$0xff]
        %v10497 = vld [vmem:[#allocation2 + $0x10] sm:$0xff]
        %v10498 = vld [vmem:[#allocation2 + $0x18] sm:$0xff]
        %v10499 = vld [vmem:[#allocation2 + $0x20] sm:$0xff]
        %v10500 = vld [vmem:[#allocation2 + $0x28] sm:$0xff]
        %v10501 = vld [vmem:[#allocation2 + $0x30] sm:$0xff]
        %v10502 = vld [vmem:[#allocation2 + $0x38] sm:$0xff]
        %v10503 = vld [vmem:[#allocation2 + $0x40] sm:$0xff]
        %v10504 = vld [vmem:[#allocation2 + $0x48] sm:$0xff]
        %v10505 = vld [vmem:[#allocation2 + $0x50] sm:$0xff]
        %v10506 = vld [vmem:[#allocation2 + $0x58] sm:$0xff]
        %v10507 = vld [vmem:[#allocation2 + $0x60] sm:$0xff]
        %v10508 = vld [vmem:[#allocation2 + $0x68] sm:$0xff]
        %v10509 = vld [vmem:[#allocation2 + $0x70] sm:$0xff]
        %v10510 = vld [vmem:[#allocation2 + $0x78] sm:$0xff]
        %v10511 = vld [vmem:[#allocation2 + $0x80] sm:$0xff]
        %v10512 = vld [vmem:[#allocation2 + $0x88] sm:$0xff]
        %v10513 = vld [vmem:[#allocation2 + $0x90] sm:$0xff]
        %v10514 = vld [vmem:[#allocation2 + $0x98] sm:$0xff]
        %v10515 = vld [vmem:[#allocation2 + $0xa0] sm:$0xff]
        %v10516 = vld [vmem:[#allocation2 + $0xa8] sm:$0xff]
        %v10517 = vld [vmem:[#allocation2 + $0xb0] sm:$0xff]
        %v10518 = vld [vmem:[#allocation2 + $0xb8] sm:$0xff]
        %v10519 = vld [vmem:[#allocation2 + $0xc0] sm:$0xff]
        %v10520 = vld [vmem:[#allocation2 + $0xc8] sm:$0xff]
        %v10521 = vld [vmem:[#allocation2 + $0xd0] sm:$0xff]
        %v10522 = vld [vmem:[#allocation2 + $0xd8] sm:$0xff]
        %v10523 = vld [vmem:[#allocation2 + $0xe0] sm:$0xff]
        %v10524 = vld [vmem:[#allocation2 + $0xe8] sm:$0xff]
        %v10525 = vld [vmem:[#allocation2 + $0xf0] sm:$0xff]
        %v10526 = vld [vmem:[#allocation2 + $0xf8] sm:$0xff]
        %v10527 = vpack.c.bf16 %v10496, %v10495
        %v10528 = vpack.c.bf16 %v10498, %v10497
        %v10529 = vpack.c.bf16 %v10500, %v10499
        %v10530 = vpack.c.bf16 %v10502, %v10501
        %v10531 = vpack.c.bf16 %v10504, %v10503
        %v10532 = vpack.c.bf16 %v10506, %v10505
        %v10533 = vpack.c.bf16 %v10508, %v10507
        %v10534 = vpack.c.bf16 %v10510, %v10509
        %v10535 = vpack.c.bf16 %v10512, %v10511
        %v10536 = vpack.c.bf16 %v10514, %v10513
        %v10537 = vpack.c.bf16 %v10516, %v10515
        %v10538 = vpack.c.bf16 %v10518, %v10517
        %v10539 = vpack.c.bf16 %v10520, %v10519
        %v10540 = vpack.c.bf16 %v10522, %v10521
        %v10541 = vpack.c.bf16 %v10524, %v10523
        %v10542 = vpack.c.bf16 %v10526, %v10525
        %v10544 = vlaneseq
        %v10545 = vshrl.u32 %v10544, 7
        %v10546 = vsub.s32 0, %v10545
        %v10547 = vrot.slane %v10494, %v10546
        %v10558 = vunpack.c.l.b16 %v10485
        %v10559 = vunpack.c.l.b16 %v10486
        %v10560 = vunpack.c.l.b16 %v10487
        %v10561 = vunpack.c.l.b16 %v10488
        %v10562 = vunpack.c.l.b16 %v10489
        %v10563 = vunpack.c.l.b16 %v10490
        %v10564 = vunpack.c.l.b16 %v10491
        %v10565 = vunpack.c.l.b16 %v10492
        %v10566 = vunpack.c.l.b16 %v10493
        %v10567 = vpack.c.b16 %v10559, %v10558
        %v10568 = vpack.c.b16 %v10561, %v10560
        %v10569 = vpack.c.b16 %v10563, %v10562
        %v10570 = vpack.c.b16 %v10565, %v10564
        %v10571 = vpack.c.b16 %v10566, %v10566
        %v10577 = vsel %vm3257, %v10527, 0
        %v10580 = vsel %vm3257, %v10528, 0
        %v10583 = vsel %vm3257, %v10529, 0
        %v10586 = vsel %vm3257, %v10530, 0
        %v10589 = vsel %vm3257, %v10531, 0
        %v10592 = vsel %vm3257, %v10532, 0
        %v10595 = vsel %vm3257, %v10533, 0
        %v10598 = vsel %vm3257, %v10534, 0
        %v10601 = vsel %vm3257, %v10535, 0
        %v10604 = vsel %vm3257, %v10536, 0
        %v10607 = vsel %vm3257, %v10537, 0
        %v10610 = vsel %vm3257, %v10538, 0
        %v10613 = vsel %vm3257, %v10539, 0
        %v10616 = vsel %vm3257, %v10540, 0
        %v10619 = vsel %vm3257, %v10541, 0
        %v10622 = vsel %vm3257, %v10542, 0
        %v10625 = vsel %vm751, %v10571, 0
        %10627 = vmatprep.subr.bf16.mxu0 0
        %10628 = vmatpush1.bf16.msra.mxu0 %v10567
        %10629 = vmatprep.subr.bf16.mxu0 0
        %10630 = vmatpush1.bf16.msra.mxu0 %v10568
        %10631 = vmatprep.subr.bf16.mxu0 0
        %10632 = vmatpush1.bf16.msra.mxu0 %v10569
        %10633 = vmatprep.subr.bf16.mxu0 0
        %10634 = vmatpush1.bf16.msra.mxu0 %v10570
        %10635 = vmatprep.subr.bf16.mxu0 0
        %10636 = vmatpush1.bf16.msra.mxu0 %v10625
        %10637 = vmatprep.subr.bf16.mxu0 0
        %10638 = vmatpush1.bf16.msra.mxu0 0
        %10639 = vmatprep.subr.bf16.mxu0 0
        %10640 = vmatpush1.bf16.msra.mxu0 0
        %10641 = vmatprep.subr.bf16.mxu0 0
        %10642 = vmatpush1.bf16.msra.mxu0 0
        %10643 = vmatprep.subr.bf16.mxu0 0
        %10644 = vmatpush1.bf16.msra.mxu0 0
        %10645 = vmatprep.subr.bf16.mxu0 0
        %10646 = vmatpush1.bf16.msra.mxu0 0
        %10647 = vmatprep.subr.bf16.mxu0 0
        %10648 = vmatpush1.bf16.msra.mxu0 0
        %10649 = vmatprep.subr.bf16.mxu0 0
        %10650 = vmatpush1.bf16.msra.mxu0 0
        %10651 = vmatprep.subr.bf16.mxu0 0
        %10652 = vmatpush1.bf16.msra.mxu0 0
        %10653 = vmatprep.subr.bf16.mxu0 0
        %10654 = vmatpush1.bf16.msra.mxu0 0
        %10655 = vmatprep.subr.bf16.mxu0 0
        %10656 = vmatpush1.bf16.msra.mxu0 0
        %10657 = vmatprep.subr.bf16.mxu0 0
        %10658 = vmatpush1.bf16.msra.mxu0 0
        %10659 = vmatprep.mubr.bf16.mxu0 0
        %10660 = vmatmul.mubr.bf16.gmra.mrb[0].mxu0 %v10577
        %v10661 = vpop.f32.mrb[0].mxu0
        %v10662 = vadd.f32 %v10547, %v10661
        %v10663 = vpop.f32.mrb[0].mxu0
        %v10664 = vpop.f32.mrb[0].mxu0
        %v10665 = vadd.f32 %v10547, %v10664
        %v10666 = vpop.f32.mrb[0].mxu0
        %10667 = vmatprep.mubr.bf16.mxu0 0
        %10668 = vmatmul.mubr.bf16.gmra.mrb[0].mxu0 %v10580
        %v10669 = vpop.f32.mrb[0].mxu0
        %v10670 = vadd.f32 %v10547, %v10669
        %v10671 = vpop.f32.mrb[0].mxu0
        %v10672 = vpop.f32.mrb[0].mxu0
        %v10673 = vadd.f32 %v10547, %v10672
        %v10674 = vpop.f32.mrb[0].mxu0
        %10675 = vmatprep.mubr.bf16.mxu0 0
        %10676 = vmatmul.mubr.bf16.gmra.mrb[0].mxu0 %v10583
        %v10677 = vpop.f32.mrb[0].mxu0
        %v10678 = vadd.f32 %v10547, %v10677
        %v10679 = vpop.f32.mrb[0].mxu0
        %v10680 = vpop.f32.mrb[0].mxu0
        %v10681 = vadd.f32 %v10547, %v10680
        %v10682 = vpop.f32.mrb[0].mxu0
        %10683 = vmatprep.mubr.bf16.mxu0 0
        %10684 = vmatmul.mubr.bf16.gmra.mrb[0].mxu0 %v10586
        %v10685 = vpop.f32.mrb[0].mxu0
        %v10686 = vadd.f32 %v10547, %v10685
        %v10687 = vpop.f32.mrb[0].mxu0
        %v10688 = vpop.f32.mrb[0].mxu0
        %v10689 = vadd.f32 %v10547, %v10688
        %v10690 = vpop.f32.mrb[0].mxu0
        %10691 = vmatprep.mubr.bf16.mxu0 0
        %10692 = vmatmul.mubr.bf16.gmra.mrb[0].mxu0 %v10589
        %v10693 = vpop.f32.mrb[0].mxu0
        %v10694 = vadd.f32 %v10547, %v10693
        %v10695 = vpop.f32.mrb[0].mxu0
        %v10696 = vpop.f32.mrb[0].mxu0
        %v10697 = vadd.f32 %v10547, %v10696
        %v10698 = vpop.f32.mrb[0].mxu0
        %10699 = vmatprep.mubr.bf16.mxu0 0
        %10700 = vmatmul.mubr.bf16.gmra.mrb[0].mxu0 %v10592
        %v10701 = vpop.f32.mrb[0].mxu0
        %v10702 = vadd.f32 %v10547, %v10701
        %v10703 = vpop.f32.mrb[0].mxu0
        %v10704 = vpop.f32.mrb[0].mxu0
        %v10705 = vadd.f32 %v10547, %v10704
        %v10706 = vpop.f32.mrb[0].mxu0
        %10707 = vmatprep.mubr.bf16.mxu0 0
        %10708 = vmatmul.mubr.bf16.gmra.mrb[0].mxu0 %v10595
        %v10709 = vpop.f32.mrb[0].mxu0
        %v10710 = vadd.f32 %v10547, %v10709
        %v10711 = vpop.f32.mrb[0].mxu0
        %v10712 = vpop.f32.mrb[0].mxu0
        %v10713 = vadd.f32 %v10547, %v10712
        %v10714 = vpop.f32.mrb[0].mxu0
        %10715 = vmatprep.mubr.bf16.mxu0 0
        %10716 = vmatmul.mubr.bf16.gmra.mrb[0].mxu0 %v10598
        %v10717 = vpop.f32.mrb[0].mxu0
        %v10718 = vadd.f32 %v10547, %v10717
        %v10719 = vpop.f32.mrb[0].mxu0
        %v10720 = vpop.f32.mrb[0].mxu0
        %v10721 = vadd.f32 %v10547, %v10720
        %v10722 = vpop.f32.mrb[0].mxu0
        %10723 = vmatprep.mubr.bf16.mxu0 0
        %10724 = vmatmul.mubr.bf16.gmra.mrb[0].mxu0 %v10601
        %v10725 = vpop.f32.mrb[0].mxu0
        %v10726 = vadd.f32 %v10547, %v10725
        %v10727 = vpop.f32.mrb[0].mxu0
        %v10728 = vpop.f32.mrb[0].mxu0
        %v10729 = vadd.f32 %v10547, %v10728
        %v10730 = vpop.f32.mrb[0].mxu0
        %10731 = vmatprep.mubr.bf16.mxu0 0
        %10732 = vmatmul.mubr.bf16.gmra.mrb[0].mxu0 %v10604
        %v10733 = vpop.f32.mrb[0].mxu0
        %v10734 = vadd.f32 %v10547, %v10733
        %v10735 = vpop.f32.mrb[0].mxu0
        %v10736 = vpop.f32.mrb[0].mxu0
        %v10737 = vadd.f32 %v10547, %v10736
        %v10738 = vpop.f32.mrb[0].mxu0
        %10739 = vmatprep.mubr.bf16.mxu0 0
        %10740 = vmatmul.mubr.bf16.gmra.mrb[0].mxu0 %v10607
        %v10741 = vpop.f32.mrb[0].mxu0
        %v10742 = vadd.f32 %v10547, %v10741
        %v10743 = vpop.f32.mrb[0].mxu0
        %v10744 = vpop.f32.mrb[0].mxu0
        %v10745 = vadd.f32 %v10547, %v10744
        %v10746 = vpop.f32.mrb[0].mxu0
        %10747 = vmatprep.mubr.bf16.mxu0 0
        %10748 = vmatmul.mubr.bf16.gmra.mrb[0].mxu0 %v10610
        %v10749 = vpop.f32.mrb[0].mxu0
        %v10750 = vadd.f32 %v10547, %v10749
        %v10751 = vpop.f32.mrb[0].mxu0
        %v10752 = vpop.f32.mrb[0].mxu0
        %v10753 = vadd.f32 %v10547, %v10752
        %v10754 = vpop.f32.mrb[0].mxu0
        %10755 = vmatprep.mubr.bf16.mxu0 0
        %10756 = vmatmul.mubr.bf16.gmra.mrb[0].mxu0 %v10613
        %v10757 = vpop.f32.mrb[0].mxu0
        %v10758 = vadd.f32 %v10547, %v10757
        %v10759 = vpop.f32.mrb[0].mxu0
        %v10760 = vpop.f32.mrb[0].mxu0
        %v10761 = vadd.f32 %v10547, %v10760
        %v10762 = vpop.f32.mrb[0].mxu0
        %10763 = vmatprep.mubr.bf16.mxu0 0
        %10764 = vmatmul.mubr.bf16.gmra.mrb[0].mxu0 %v10616
        %v10765 = vpop.f32.mrb[0].mxu0
        %v10766 = vadd.f32 %v10547, %v10765
        %v10767 = vpop.f32.mrb[0].mxu0
        %v10768 = vpop.f32.mrb[0].mxu0
        %v10769 = vadd.f32 %v10547, %v10768
        %v10770 = vpop.f32.mrb[0].mxu0
        %10771 = vmatprep.mubr.bf16.mxu0 0
        %10772 = vmatmul.mubr.bf16.gmra.mrb[0].mxu0 %v10619
        %v10773 = vpop.f32.mrb[0].mxu0
        %v10774 = vadd.f32 %v10547, %v10773
        %v10775 = vpop.f32.mrb[0].mxu0
        %v10776 = vpop.f32.mrb[0].mxu0
        %v10777 = vadd.f32 %v10547, %v10776
        %v10778 = vpop.f32.mrb[0].mxu0
        %10779 = vmatprep.mubr.bf16.mxu0 0
        %10780 = vmatmul.mubr.bf16.gmra.mrb[0].mxu0 %v10622
        %v10781 = vpop.f32.mrb[0].mxu0
        %v10782 = vadd.f32 %v10547, %v10781
        %v10783 = vpop.f32.mrb[0].mxu0
        %v10784 = vpop.f32.mrb[0].mxu0
        %v10785 = vadd.f32 %v10547, %v10784
        %v10786 = vpop.f32.mrb[0].mxu0
        %10787 = vdwg.mxu0
        %s10788 = sld [smem:[#allocation6 + $0x281]]
        %s10789 = sld [smem:[#allocation6 + $0x284]]
        %v10790 = vstv %s10788
        %v10791 = vmul.f32 %v10790, %v9172
        %v10792 = vmul.f32 %v10790, %v9173
        %v10793 = vmul.f32 %v10790, %v9174
        %v10794 = vmul.f32 %v10790, %v9175
        %v10795 = vmul.f32 %v10790, %v9176
        %v10796 = vmul.f32 %v10790, %v9177
        %v10797 = vmul.f32 %v10790, %v9178
        %v10798 = vmul.f32 %v10790, %v9179
        %v10799 = vmul.f32 %v10790, %v9180
        %v10800 = vmul.f32 %v10790, %v9181
        %v10801 = vmul.f32 %v10790, %v9182
        %v10802 = vmul.f32 %v10790, %v9183
        %v10803 = vmul.f32 %v10790, %v9184
        %v10804 = vmul.f32 %v10790, %v9185
        %v10805 = vmul.f32 %v10790, %v9186
        %v10806 = vmul.f32 %v10790, %v9187
        %v10807 = vmul.f32 %v10790, %v9188
        %v10808 = vmul.f32 %v10790, %v9189
        %v10809 = vmul.f32 %v10790, %v9190
        %v10810 = vmul.f32 %v10790, %v9191
        %v10811 = vmul.f32 %v10790, %v9192
        %v10812 = vmul.f32 %v10790, %v9193
        %v10813 = vmul.f32 %v10790, %v9194
        %v10814 = vmul.f32 %v10790, %v9195
        %v10815 = vmul.f32 %v10790, %v9196
        %v10816 = vmul.f32 %v10790, %v9197
        %v10817 = vmul.f32 %v10790, %v9198
        %v10818 = vmul.f32 %v10790, %v9199
        %v10819 = vmul.f32 %v10790, %v9200
        %v10820 = vmul.f32 %v10790, %v9201
        %v10821 = vmul.f32 %v10790, %v9202
        %v10822 = vmul.f32 %v10790, %v9203
        %v10823 = vadd.f32 %v10662, %v10791
        %v10824 = vadd.f32 %v10665, %v10792
        %v10825 = vadd.f32 %v10670, %v10793
        %v10826 = vadd.f32 %v10673, %v10794
        %v10827 = vadd.f32 %v10678, %v10795
        %v10828 = vadd.f32 %v10681, %v10796
        %v10829 = vadd.f32 %v10686, %v10797
        %v10830 = vadd.f32 %v10689, %v10798
        %v10831 = vadd.f32 %v10694, %v10799
        %v10832 = vadd.f32 %v10697, %v10800
        %v10833 = vadd.f32 %v10702, %v10801
        %v10834 = vadd.f32 %v10705, %v10802
        %v10835 = vadd.f32 %v10710, %v10803
        %v10836 = vadd.f32 %v10713, %v10804
        %v10837 = vadd.f32 %v10718, %v10805
        %v10838 = vadd.f32 %v10721, %v10806
        %v10839 = vadd.f32 %v10726, %v10807
        %v10840 = vadd.f32 %v10729, %v10808
        %v10841 = vadd.f32 %v10734, %v10809
        %v10842 = vadd.f32 %v10737, %v10810
        %v10843 = vadd.f32 %v10742, %v10811
        %v10844 = vadd.f32 %v10745, %v10812
        %v10845 = vadd.f32 %v10750, %v10813
        %v10846 = vadd.f32 %v10753, %v10814
        %v10847 = vadd.f32 %v10758, %v10815
        %v10848 = vadd.f32 %v10761, %v10816
        %v10849 = vadd.f32 %v10766, %v10817
        %v10850 = vadd.f32 %v10769, %v10818
        %v10851 = vadd.f32 %v10774, %v10819
        %v10852 = vadd.f32 %v10777, %v10820
        %v10853 = vadd.f32 %v10782, %v10821
        %v10854 = vadd.f32 %v10785, %v10822
        %v10855 = vstv %s10789
        %v10856 = vmul.f32 %v10855, %v10453
        %v10857 = vmul.f32 %v10855, %v10454
        %v10858 = vmul.f32 %v10855, %v10455
        %v10859 = vmul.f32 %v10855, %v10456
        %v10860 = vmul.f32 %v10855, %v10457
        %v10861 = vmul.f32 %v10855, %v10458
        %v10862 = vmul.f32 %v10855, %v10459
        %v10863 = vmul.f32 %v10855, %v10460
        %v10864 = vmul.f32 %v10855, %v10461
        %v10865 = vmul.f32 %v10855, %v10462
        %v10866 = vmul.f32 %v10855, %v10463
        %v10867 = vmul.f32 %v10855, %v10464
        %v10868 = vmul.f32 %v10855, %v10465
        %v10869 = vmul.f32 %v10855, %v10466
        %v10870 = vmul.f32 %v10855, %v10467
        %v10871 = vmul.f32 %v10855, %v10468
        %v10872 = vmul.f32 %v10855, %v10469
        %v10873 = vmul.f32 %v10855, %v10470
        %v10874 = vmul.f32 %v10855, %v10471
        %v10875 = vmul.f32 %v10855, %v10472
        %v10876 = vmul.f32 %v10855, %v10473
        %v10877 = vmul.f32 %v10855, %v10474
        %v10878 = vmul.f32 %v10855, %v10475
        %v10879 = vmul.f32 %v10855, %v10476
        %v10880 = vmul.f32 %v10855, %v10477
        %v10881 = vmul.f32 %v10855, %v10478
        %v10882 = vmul.f32 %v10855, %v10479
        %v10883 = vmul.f32 %v10855, %v10480
        %v10884 = vmul.f32 %v10855, %v10481
        %v10885 = vmul.f32 %v10855, %v10482
        %v10886 = vmul.f32 %v10855, %v10483
        %v10887 = vmul.f32 %v10855, %v10484
        %v10888 = vadd.f32 %v10823, %v10856
        %v10889 = vadd.f32 %v10824, %v10857
        %v10890 = vadd.f32 %v10825, %v10858
        %v10891 = vadd.f32 %v10826, %v10859
        %v10892 = vadd.f32 %v10827, %v10860
        %v10893 = vadd.f32 %v10828, %v10861
        %v10894 = vadd.f32 %v10829, %v10862
        %v10895 = vadd.f32 %v10830, %v10863
        %v10896 = vadd.f32 %v10831, %v10864
        %v10897 = vadd.f32 %v10832, %v10865
        %v10898 = vadd.f32 %v10833, %v10866
        %v10899 = vadd.f32 %v10834, %v10867
        %v10900 = vadd.f32 %v10835, %v10868
        %v10901 = vadd.f32 %v10836, %v10869
        %v10902 = vadd.f32 %v10837, %v10870
        %v10903 = vadd.f32 %v10838, %v10871
        %v10904 = vadd.f32 %v10839, %v10872
        %v10905 = vadd.f32 %v10840, %v10873
        %v10906 = vadd.f32 %v10841, %v10874
        %v10907 = vadd.f32 %v10842, %v10875
        %v10908 = vadd.f32 %v10843, %v10876
        %v10909 = vadd.f32 %v10844, %v10877
        %v10910 = vadd.f32 %v10845, %v10878
        %v10911 = vadd.f32 %v10846, %v10879
        %v10912 = vadd.f32 %v10847, %v10880
        %v10913 = vadd.f32 %v10848, %v10881
        %v10914 = vadd.f32 %v10849, %v10882
        %v10915 = vadd.f32 %v10850, %v10883
        %v10916 = vadd.f32 %v10851, %v10884
        %v10917 = vadd.f32 %v10852, %v10885
        %v10918 = vadd.f32 %v10853, %v10886
        %v10919 = vadd.f32 %v10854, %v10887
        %v10920 = vld [vmem:[%s373] sm:$0xff]
        %v10921 = vld [vmem:[%s373 + $0x8] sm:$0xff]
        %v10922 = vld [vmem:[%s373 + $0x10] sm:$0xff]
        %v10923 = vld [vmem:[%s373 + $0x18] sm:$0xff]
        %v10924 = vld [vmem:[%s373 + $0x20] sm:$0xff]
        %v10925 = vld [vmem:[%s373 + $0x28] sm:$0xff]
        %v10926 = vld [vmem:[%s373 + $0x30] sm:$0xff]
        %v10927 = vld [vmem:[%s373 + $0x38] sm:$0xff]
        %v10928 = vld [vmem:[%s373 + $0x40] sm:$0xff]
        %v10929 = vld [vmem:[%s373 + $0x48] sm:$0xff]
        %v10930 = vld [vmem:[%s373 + $0x50] sm:$0xff]
        %v10931 = vld [vmem:[%s373 + $0x58] sm:$0xff]
        %v10932 = vld [vmem:[%s373 + $0x60] sm:$0xff]
        %v10933 = vld [vmem:[%s373 + $0x68] sm:$0xff]
        %v10934 = vld [vmem:[%s373 + $0x70] sm:$0xff]
        %v10935 = vld [vmem:[%s373 + $0x78] sm:$0xff]
        %v10936 = vld [vmem:[%s373 + $0x80] sm:$0xff]
        %v10937 = vld [vmem:[%s373 + $0x88] sm:$0xff]
        %v10938 = vld [vmem:[%s373 + $0x90] sm:$0xff]
        %v10939 = vld [vmem:[%s373 + $0x98] sm:$0xff]
        %v10940 = vld [vmem:[%s373 + $0xa0] sm:$0xff]
        %v10941 = vld [vmem:[%s373 + $0xa8] sm:$0xff]
        %v10942 = vld [vmem:[%s373 + $0xb0] sm:$0xff]
        %v10943 = vld [vmem:[%s373 + $0xb8] sm:$0xff]
        %v10944 = vld [vmem:[%s373 + $0xc0] sm:$0xff]
        %v10945 = vld [vmem:[%s373 + $0xc8] sm:$0xff]
        %v10946 = vld [vmem:[%s373 + $0xd0] sm:$0xff]
        %v10947 = vld [vmem:[%s373 + $0xd8] sm:$0xff]
        %v10948 = vld [vmem:[%s373 + $0xe0] sm:$0xff]
        %v10949 = vld [vmem:[%s373 + $0xe8] sm:$0xff]
        %v10950 = vld [vmem:[%s373 + $0xf0] sm:$0xff]
        %v10951 = vld [vmem:[%s373 + $0xf8] sm:$0xff]
        %v10952 = vadd.f32 %v10920, %v10888
        %v10953 = vadd.f32 %v10921, %v10889
        %v10954 = vadd.f32 %v10922, %v10890
        %v10955 = vadd.f32 %v10923, %v10891
        %v10956 = vadd.f32 %v10924, %v10892
        %v10957 = vadd.f32 %v10925, %v10893
        %v10958 = vadd.f32 %v10926, %v10894
        %v10959 = vadd.f32 %v10927, %v10895
        %v10960 = vadd.f32 %v10928, %v10896
        %v10961 = vadd.f32 %v10929, %v10897
        %v10962 = vadd.f32 %v10930, %v10898
        %v10963 = vadd.f32 %v10931, %v10899
        %v10964 = vadd.f32 %v10932, %v10900
        %v10965 = vadd.f32 %v10933, %v10901
        %v10966 = vadd.f32 %v10934, %v10902
        %v10967 = vadd.f32 %v10935, %v10903
        %v10968 = vadd.f32 %v10936, %v10904
        %v10969 = vadd.f32 %v10937, %v10905
        %v10970 = vadd.f32 %v10938, %v10906
        %v10971 = vadd.f32 %v10939, %v10907
        %v10972 = vadd.f32 %v10940, %v10908
        %v10973 = vadd.f32 %v10941, %v10909
        %v10974 = vadd.f32 %v10942, %v10910
        %v10975 = vadd.f32 %v10943, %v10911
        %v10976 = vadd.f32 %v10944, %v10912
        %v10977 = vadd.f32 %v10945, %v10913
        %v10978 = vadd.f32 %v10946, %v10914
        %v10979 = vadd.f32 %v10947, %v10915
        %v10980 = vadd.f32 %v10948, %v10916
        %v10981 = vadd.f32 %v10949, %v10917
        %v10982 = vadd.f32 %v10950, %v10918
        %v10983 = vadd.f32 %v10951, %v10919
        %10984 = vst.msk [vmem:[%s373] sm:$0xff] %vm375, %v10952
        %10985 = vst.msk [vmem:[%s373 + $0x8] sm:$0xff] %vm375, %v10953
        %10986 = vst.msk [vmem:[%s373 + $0x10] sm:$0xff] %vm375, %v10954
        %10987 = vst.msk [vmem:[%s373 + $0x18] sm:$0xff] %vm375, %v10955
        %10988 = vst.msk [vmem:[%s373 + $0x20] sm:$0xff] %vm375, %v10956
        %10989 = vst.msk [vmem:[%s373 + $0x28] sm:$0xff] %vm375, %v10957
        %10990 = vst.msk [vmem:[%s373 + $0x30] sm:$0xff] %vm375, %v10958
        %10991 = vst.msk [vmem:[%s373 + $0x38] sm:$0xff] %vm375, %v10959
        %10992 = vst.msk [vmem:[%s373 + $0x40] sm:$0xff] %vm375, %v10960
        %10993 = vst.msk [vmem:[%s373 + $0x48] sm:$0xff] %vm375, %v10961
        %10994 = vst.msk [vmem:[%s373 + $0x50] sm:$0xff] %vm375, %v10962
        %10995 = vst.msk [vmem:[%s373 + $0x58] sm:$0xff] %vm375, %v10963
        %10996 = vst.msk [vmem:[%s373 + $0x60] sm:$0xff] %vm375, %v10964
        %10997 = vst.msk [vmem:[%s373 + $0x68] sm:$0xff] %vm375, %v10965
        %10998 = vst.msk [vmem:[%s373 + $0x70] sm:$0xff] %vm375, %v10966
        %10999 = vst.msk [vmem:[%s373 + $0x78] sm:$0xff] %vm375, %v10967
        %11000 = vst.msk [vmem:[%s373 + $0x80] sm:$0xff] %vm375, %v10968
        %11001 = vst.msk [vmem:[%s373 + $0x88] sm:$0xff] %vm375, %v10969
        %11002 = vst.msk [vmem:[%s373 + $0x90] sm:$0xff] %vm375, %v10970
        %11003 = vst.msk [vmem:[%s373 + $0x98] sm:$0xff] %vm375, %v10971
        %11004 = vst.msk [vmem:[%s373 + $0xa0] sm:$0xff] %vm375, %v10972
        %11005 = vst.msk [vmem:[%s373 + $0xa8] sm:$0xff] %vm375, %v10973
        %11006 = vst.msk [vmem:[%s373 + $0xb0] sm:$0xff] %vm375, %v10974
        %11007 = vst.msk [vmem:[%s373 + $0xb8] sm:$0xff] %vm375, %v10975
        %11008 = vst.msk [vmem:[%s373 + $0xc0] sm:$0xff] %vm375, %v10976
        %11009 = vst.msk [vmem:[%s373 + $0xc8] sm:$0xff] %vm375, %v10977
        %11010 = vst.msk [vmem:[%s373 + $0xd0] sm:$0xff] %vm375, %v10978
        %11011 = vst.msk [vmem:[%s373 + $0xd8] sm:$0xff] %vm375, %v10979
        %11012 = vst.msk [vmem:[%s373 + $0xe0] sm:$0xff] %vm375, %v10980
        %11013 = vst.msk [vmem:[%s373 + $0xe8] sm:$0xff] %vm375, %v10981
        %11014 = vst.msk [vmem:[%s373 + $0xf0] sm:$0xff] %vm375, %v10982
        %11015 = vst.msk [vmem:[%s373 + $0xf8] sm:$0xff] %vm375, %v10983
        %p11016 = scmp.lt.s32.totalorder %s22, 1
        %s11017 = scalar_select %p11016, %s22, 1
        %s11018 = smul.addr %s11017, 32
        %s11019 = smul.addr %s11018, 8
        %s11020 = scalar_lea.vmem %s10, %s11019
        // Predicated region
        $region65: #{cell_forward.1} parent=59 // pred_check
          %p11021 = pneg %p255
        $region66: #{cell_forward.1} parent=59 // pred_check_branch
          %11023 = sbr.rel (%p11021) target = $region68
        $region67: #{cell_forward.1} parent=59 // pred_region
          _
        $region68: #{cell_forward.1} parent=59 // pred_fallthru
          _
      $region60: #{cell_forward.1} parent=5 // pred_fallthru
        _
      %p11024 = scmp.le.s32.totalorder 2, %s17
      // Predicated region
      $region69: #{cell_forward.1} parent=5 // pred_check
        %p11025 = pneg %p11024
      $region70: #{cell_forward.1} parent=5 // pred_check_branch
        %11027 = sbr.rel (%p11025) target = $region72
      $region71: #{cell_forward.1} parent=5 // pred_region
        %s11028 = ssub.s32 %s17, 2
        // Predicated region
        $region73: #{cell_forward.1} parent=71 // pred_check
          %p11029 = pneg %p261
        $region74: #{cell_forward.1} parent=71 // pred_check_branch
          %11031 = sbr.rel (%p11029) target = $region76
        $region75: #{cell_forward.1} parent=71 // pred_region
          %p11032 = scmp.lt.s32.totalorder %s23, 1
          %s11033 = scalar_select %p11032, %s23, 1
          %s11034 = smul.addr %s11033, 32
          %s11035 = smul.addr %s11034, 8
          %s11036 = scalar_lea.vmem %s10, %s11035
        $region76: #{cell_forward.1} parent=71 // pred_fallthru
          _
      $region72: #{cell_forward.1} parent=5 // pred_fallthru
        _
    $region6: #{cell_forward.1} parent=1 // loop_footer
      %s21 = sadd.s32 1, %s17
    $region7: #{cell_forward.1} parent=1 // loop_footer_branch
      %16 = sbr.rel target = $region3
    $region8: #{cell_forward.1} parent=1 // loop_exit
      _
    %11037 = vsyncpa [#allocation7], 1
    %s11038 = scalar_lea.sflag [#allocation7], 1
    %11039 = vsyncpa %s11038, 1

</llo_original>
